<compile_context>
chip_gen: v6e
topology: v6e:2x2x1
jax: 0.10.0
libtpu: 0.0.40
codegen_flags: <defaults>
</compile_context>

<pallas_src>
import functools

import jax
import jax.numpy as jnp
from jax.experimental import pallas as pl
from jax.experimental.pallas import tpu as pltpu


# --------------------------------------------------------------------------
# Fused Pallas kernel: whole STGCN forward, BB samples per grid step
# --------------------------------------------------------------------------

def _stgcn_kernel(xh_ref,
                  wh_ref, bh_ref,
                  ms1_ref, bs1_ref,
                  wt2_ref, bt2_ref,
                  g3_ref, be3_ref,
                  wt4_ref, bt4_ref,
                  ms5_ref, bs5_ref,
                  wt6_ref, bt6_ref,
                  g7_ref, be7_ref,
                  wo1_ref, bo1_ref,
                  go_ref, beo_ref,
                  wfin_ref, bfin_ref,
                  o_ref, *, kt, bb):
    f32 = jnp.float32
    bf16 = jnp.bfloat16

    def mm(a, w):
        # bf16 operands on the MXU, f32 accumulation.
        return jnp.dot(a, w, preferred_element_type=f32)

    def relu_bf16(z):
        # single f32 relu, single cast to bf16 for the next MXU consumer
        return jnp.maximum(z, 0.0).astype(bf16)

    def temporal(x, nt_in, w_ref, b_ref):
        # x: (nt_in*bb, n*C) bf16, time-major rows (row = t*bb + b).
        # kt accumulating matmuls against per-tap block-diagonal weights
        # (residual 1x1 conv already folded into the last tap).
        nt_out = nt_in - kt + 1
        rows = nt_out * bb
        acc = mm(x[0:rows], w_ref[0])
        for k in range(1, kt):
            acc = acc + mm(x[k * bb:k * bb + rows], w_ref[k])
        return relu_bf16(acc + b_ref[...]), nt_out

    def spatial(x, m_ref, b_ref):
        # relu(A_hat @ X @ W + b) == relu(X_flat @ kron(A_hat.T, W) + b_flat)
        return relu_bf16(mm(x, m_ref[...]) + b_ref[...])

    def layer_norm(x, g_ref, b_ref):
        # LayerNorm([n, c]) == single lane-axis reduction over the flat row; f32 math.
        xf = x.astype(f32)
        mu = jnp.mean(xf, axis=1, keepdims=True)
        xc = xf - mu
        var = jnp.mean(xc * xc, axis=1, keepdims=True)
        y = xc * jax.lax.rsqrt(var + 1e-5) * g_ref[...] + b_ref[...]
        return y.astype(bf16)

    # ---- head temporal layer (c_in = 1): im2col was hoisted to the wrapper, so
    # the head is a single (tout0*bb, kt*n) x (kt*n, n*C) matmul.
    xh = xh_ref[0].astype(bf16)                            # (tout0*bb, kt*n)
    x = relu_bf16(mm(xh, wh_ref[...]) + bh_ref[...])       # (tout0*bb, n*C)
    nt = xh_ref.shape[1] // bb                             # tout0

    # ---- control_str = 'TSTNTSTN' (dropout after 'N' is identity at inference)
    x = spatial(x, ms1_ref, bs1_ref)                       # 'S'
    x, nt = temporal(x, nt, wt2_ref, bt2_ref)              # 'T'
    x = layer_norm(x, g3_ref, be3_ref)                     # 'N'
    x, nt = temporal(x, nt, wt4_ref, bt4_ref)              # 'T'
    x = spatial(x, ms5_ref, bs5_ref)                       # 'S'
    x, nt = temporal(x, nt, wt6_ref, bt6_ref)              # 'T'
    x = layer_norm(x, g7_ref, be7_ref)                     # 'N'

    # ---- OutputLayer: (t_last,1) conv via per-time-tap accumulation, then LN,
    # then the folded (1x1 conv -> fc -> Linear) chain as a single matmul.
    t_last = nt
    y = mm(x[0:bb], wo1_ref[0])
    for t in range(1, t_last):
        y = y + mm(x[t * bb:(t + 1) * bb], wo1_ref[t])
    y = y + bo1_ref[...]                                   # (bb, n*C) f32
    y = layer_norm(y, go_ref, beo_ref)                     # (bb, n*C) bf16
    o_ref[...] = mm(y, wfin_ref[...]) + bfin_ref[...]      # (bb, nclass) f32


def _full_spec(shape):
    zeros = (0,) * len(shape)
    return pl.BlockSpec(shape, lambda i: zeros)


_WEIGHT_NAMES = ("wh", "bh", "ms1", "bs1", "wt2", "bt2", "g3", "be3",
                 "wt4", "bt4", "ms5", "bs5", "wt6", "bt6", "g7", "be7",
                 "wo1", "bo1", "go", "beo", "wfin", "bfin")


def stgcn_forward(x_nchw, kin, *, kt, bb):
    """x_nchw: [B, 1, T, n] (PyTorch layout). Returns [B, num_class]."""
    B, _, T, n = x_nchw.shape
    assert B % bb == 0 and bb % 8 == 0, (B, bb)
    nblk = B // bb
    tout0 = T - kt + 1
    ktn = kt * n
    nclass = kin["bfin"].shape[1]
    weights = [kin[k] for k in _WEIGHT_NAMES]

    # Head im2col + (block, time, sample)-major regrouping, done once in XLA:
    #   xh[blk, t*bb + b, k*n + m] = x[blk*bb + b, t + k, m]
    x = x_nchw[:, 0, :, :].astype(jnp.float32)                      # (B, T, n)
    xh = jnp.concatenate([x[:, k:k + tout0, :] for k in range(kt)], axis=-1)
    xh = xh.reshape(nblk, bb, tout0, ktn).transpose(0, 2, 1, 3)
    xh = xh.reshape(nblk, tout0 * bb, ktn)

    out = pl.pallas_call(
        functools.partial(_stgcn_kernel, kt=kt, bb=bb),
        out_shape=jax.ShapeDtypeStruct((B, nclass), jnp.float32),
        grid=(nblk,),
        in_specs=[pl.BlockSpec((1, tout0 * bb, ktn), lambda i: (i, 0, 0))]
                 + [_full_spec(w.shape) for w in weights],
        out_specs=pl.BlockSpec((bb, nclass), lambda i: (i, 0)),
        compiler_params=pltpu.CompilerParams(
            dimension_semantics=("parallel",)),   # v7x: one TC per grid step
    )(xh, *weights)
    return out


# --------------------------------------------------------------------------
# "Module-like" parameters (synthetic) and expansion to kernel layouts
# --------------------------------------------------------------------------

def build_ahat(n):
    # TODO(synk): the real dgl.DGLGraph is not provided; use a ring graph with
    # self loops, symmetric-normalized (GraphConv 'both' norm).
    idx = jnp.arange(n)
    A = jnp.zeros((n, n), jnp.float32)
    A = A.at[idx, idx].set(1.0)
    A = A.at[idx, (idx + 1) % n].set(1.0)
    A = A.at[idx, (idx - 1) % n].set(1.0)
    dinv = 1.0 / jnp.sqrt(jnp.sum(A, axis=1))
    return A * dinv[:, None] * dinv[None, :]


def make_module_params(key, n, kt, C, T, nclass):
    # TODO(synk): TemporalConvLayer_Residual / SpatialConvLayer / OutputLayer
    # definitions are not in the snippet; standard STGCN semantics are used.
    ks = jax.random.split(key, 16)
    s = 0.1

    def tparams(k, cin):
        k1, k2, k3, k4 = jax.random.split(k, 4)
        return (s * jax.random.normal(k1, (kt, cin, C), jnp.float32),   # conv W
                s * jax.random.normal(k2, (1, C), jnp.float32),         # conv b
                s * jax.random.normal(k3, (cin, C), jnp.float32),       # 1x1 res W
                s * jax.random.normal(k4, (1, C), jnp.float32))         # res b

    def sparams(k):
        k1, k2 = jax.random.split(k)
        return (s * jax.random.normal(k1, (C, C), jnp.float32),
                s * jax.random.normal(k2, (1, C), jnp.float32))

    ln = lambda: (jnp.ones((n, C), jnp.float32), jnp.zeros((n, C), jnp.float32))
    t_last = T - 4 * (kt - 1)                     # 4 temporal layers in 'TSTNTSTN'
    return {
        "t0": tparams(ks[0], 1), "s1": sparams(ks[1]), "t2": tparams(ks[2], C),
        "n3": ln(),
        "t4": tparams(ks[3], C), "s5": sparams(ks[4]), "t6": tparams(ks[5], C),
        "n7": ln(),
        "o_tconv1": (s * jax.random.normal(ks[6], (t_last, C, C), jnp.float32),
                     s * jax.random.normal(ks[7], (1, C), jnp.float32)),
        "o_ln": ln(),
        "o_tconv2": (s * jax.random.normal(ks[8], (C, C), jnp.float32),
                     s * jax.random.normal(ks[9], (1, C), jnp.float32)),
        "o_fc": (s * jax.random.normal(ks[10], (C, 1), jnp.float32),
                 s * jax.random.normal(ks[11], (1, 1), jnp.float32)),
        "o_lin": (s * jax.random.normal(ks[12], (n, nclass), jnp.float32),
                  s * jax.random.normal(ks[13], (1, nclass), jnp.float32)),
    }


def prepare_kernel_inputs(p, ahat, n, C, kt):
    """Fold residuals / trailing linears into conv weights and expand everything
    to the flat lane-dense [*, n*C] layouts consumed by the fused kernel."""
    eye = jnp.eye(n, dtype=jnp.float32)
    bf16 = jnp.bfloat16

    def head(prm):                                 # c_in = 1 temporal layer
        wc, bc, wr, br = prm                       # (kt,1,C) (1,C) (1,C) (1,C)
        w_eff = wc[:, 0, :].at[kt - 1].add(wr[0])  # residual folded into last tap
        wh = jnp.einsum("ko,nm->knmo", w_eff, eye).reshape(kt * n, n * C)
        return wh.astype(bf16), jnp.tile(bc + br, (1, n))

    def temporal(prm):
        wc, bc, wr, br = prm                       # (kt,C,C) (1,C) (C,C) (1,C)
        wcomb = wc.at[kt - 1].add(wr)              # residual folded into last tap
        wt = jnp.einsum("kio,nm->knimo", wcomb, eye).reshape(kt, n * C, n * C)
        return wt.astype(bf16), jnp.tile(bc + br, (1, n))

    def spatial(prm):
        w, b = prm
        return jnp.kron(ahat.T, w).astype(bf16), jnp.tile(b, (1, n))

    def lnorm(prm):
        g, b = prm
        return g.reshape(1, n * C), b.reshape(1, n * C)

    wh, bh = head(p["t0"])
    ms1, bs1 = spatial(p["s1"])
    wt2, bt2 = temporal(p["t2"])
    g3, be3 = lnorm(p["n3"])
    wt4, bt4 = temporal(p["t4"])
    ms5, bs5 = spatial(p["s5"])
    wt6, bt6 = temporal(p["t6"])
    g7, be7 = lnorm(p["n7"])

    # OutputLayer (T,1) conv: per-time-tap block-diagonal weights
    w1, b1 = p["o_tconv1"]                          # (t_last, C, C), (1, C)
    t_last = w1.shape[0]
    wo1 = jnp.einsum("tio,nm->tnimo", w1, eye).reshape(t_last, n * C, n * C)
    wo1 = wo1.astype(bf16)
    bo1 = jnp.tile(b1, (1, n))
    go, beo = lnorm(p["o_ln"])

    # Exact fold of the trailing linear chain: 1x1 conv -> fc(C->1) -> Linear
    w2, b2 = p["o_tconv2"]                          # (C, C), (1, C)
    wo2e = jnp.kron(eye, w2)                        # (n*C, n*C)
    bo2f = jnp.tile(b2, (1, n))                     # (1, n*C)
    wfcv, bfc0 = p["o_fc"]                          # (C, 1), (1, 1)
    wfce = jnp.kron(eye, wfcv)                      # (n*C, n)
    bfcf = jnp.tile(bfc0, (1, n))                   # (1, n)
    wlin, blin = p["o_lin"]                         # (n, nclass), (1, nclass)
    wfin = (wo2e @ wfce @ wlin).astype(bf16)        # (n*C, nclass)
    bfin = bo2f @ wfce @ wlin + bfcf @ wlin + blin  # (1, nclass) f32

    return dict(wh=wh, bh=bh, ms1=ms1, bs1=bs1, wt2=wt2, bt2=bt2,
                g3=g3, be3=be3, wt4=wt4, bt4=bt4, ms5=ms5, bs5=bs5,
                wt6=wt6, bt6=bt6, g7=g7, be7=be7,
                wo1=wo1, bo1=bo1, go=go, beo=beo, wfin=wfin, bfin=bfin)


# --------------------------------------------------------------------------
# Pure-JAX f32 reference of the same layer semantics (for validation)
# --------------------------------------------------------------------------

def reference_forward(x_nchw, p, ahat, kt):
    x = x_nchw[:, 0].astype(jnp.float32)[..., None]          # (B, T, n, 1)

    def temporal(x, prm):
        wc, bc, wr, br = prm
        k = wc.shape[0]
        tout = x.shape[1] - k + 1
        conv = sum(jnp.einsum("btni,io->btno", x[:, j:j + tout], wc[j])
                   for j in range(k))
        res = jnp.einsum("btni,io->btno", x[:, k - 1:], wr)
        return jnp.maximum(conv + bc + res + br, 0.0)

    def spatial(x, prm):
        w, b = prm
        return jnp.maximum(jnp.einsum("nm,btmi,io->btno", ahat, x, w) + b, 0.0)

    def lnorm(x, prm, axes):
        g, b = prm
        mu = jnp.mean(x, axis=axes, keepdims=True)
        var = jnp.mean((x - mu) ** 2, axis=axes, keepdims=True)
        return (x - mu) * jax.lax.rsqrt(var + 1e-5) * g + b

    x = temporal(x, p["t0"]); x = spatial(x, p["s1"]); x = temporal(x, p["t2"])
    x = lnorm(x, p["n3"], (2, 3))
    x = temporal(x, p["t4"]); x = spatial(x, p["s5"]); x = temporal(x, p["t6"])
    x = lnorm(x, p["n7"], (2, 3))

    w1, b1 = p["o_tconv1"]
    y = jnp.einsum("btni,tio->bno", x, w1) + b1               # collapse time
    y = lnorm(y, p["o_ln"], (1, 2))
    w2, b2 = p["o_tconv2"]
    y = jnp.einsum("bni,io->bno", y, w2) + b2
    wfc, bfc = p["o_fc"]
    y = jnp.einsum("bni,ij->bnj", y, wfc)[..., 0] + bfc[0, 0]  # (B, n)
    wlin, blin = p["o_lin"]
    return y @ wlin + blin                                     # (B, nclass)


# --------------------------------------------------------------------------
# Main
# --------------------------------------------------------------------------

if __name__ == "__main__":
    # c = [1, 32, 32, 32, 32, 32, 32], control_str='TSTNTSTN', T=16, kt=3,
    # n=8 nodes, num_class=10; B=32 samples, BB=16 per grid step (2 grid steps
    # so both v7x TensorCores get work, M = 128..224 rows per matmul).
    B, T, N, kt, C, NCLASS = 32, 16, 8, 3, 32, 10
    BB = 16

    key = jax.random.PRNGKey(0)
    kx, kp = jax.random.split(key)
    x = jax.random.normal(kx, (B, 1, T, N), jnp.float32)       # PyTorch NCHW input
    ahat = build_ahat(N)
    params = make_module_params(kp, N, kt, C, T, NCLASS)
    kin = prepare_kernel_inputs(params, ahat, N, C, kt)

    fwd = jax.jit(functools.partial(stgcn_forward, kt=kt, bb=BB))
    out = jax.block_until_ready(fwd(x, kin))

    assert out.shape == (B, NCLASS), out.shape
    assert out.dtype == jnp.float32
    assert bool(jnp.all(jnp.isfinite(out)))

    ref = reference_forward(x, params, ahat, kt)
    # bf16 MXU operands / bf16 activations in the kernel -> loose tolerance
    # vs the f32 reference (structural bugs would produce O(1) differences).
    max_err = float(jnp.max(jnp.abs(out - ref)))
    assert bool(jnp.allclose(out, ref, rtol=1e-1, atol=1e-1)), max_err
    print("KERNEL_OK")
</pallas_src>

<mosaic_0001>
module attributes {stable_mosaic.version = 11 : i64} {
  func.func @_stgcn_kernel(%arg0: i32, %arg1: memref<1x224x24xf32, #tpu.memory_space<vmem>>, %arg2: memref<24x256xbf16, #tpu.memory_space<vmem>>, %arg3: memref<1x256xf32, #tpu.memory_space<vmem>>, %arg4: memref<256x256xbf16, #tpu.memory_space<vmem>>, %arg5: memref<1x256xf32, #tpu.memory_space<vmem>>, %arg6: memref<3x256x256xbf16, #tpu.memory_space<vmem>>, %arg7: memref<1x256xf32, #tpu.memory_space<vmem>>, %arg8: memref<1x256xf32, #tpu.memory_space<vmem>>, %arg9: memref<1x256xf32, #tpu.memory_space<vmem>>, %arg10: memref<3x256x256xbf16, #tpu.memory_space<vmem>>, %arg11: memref<1x256xf32, #tpu.memory_space<vmem>>, %arg12: memref<256x256xbf16, #tpu.memory_space<vmem>>, %arg13: memref<1x256xf32, #tpu.memory_space<vmem>>, %arg14: memref<3x256x256xbf16, #tpu.memory_space<vmem>>, %arg15: memref<1x256xf32, #tpu.memory_space<vmem>>, %arg16: memref<1x256xf32, #tpu.memory_space<vmem>>, %arg17: memref<1x256xf32, #tpu.memory_space<vmem>>, %arg18: memref<8x256x256xbf16, #tpu.memory_space<vmem>>, %arg19: memref<1x256xf32, #tpu.memory_space<vmem>>, %arg20: memref<1x256xf32, #tpu.memory_space<vmem>>, %arg21: memref<1x256xf32, #tpu.memory_space<vmem>>, %arg22: memref<256x10xbf16, #tpu.memory_space<vmem>>, %arg23: memref<1x10xf32, #tpu.memory_space<vmem>>, %arg24: memref<16x10xf32, #tpu.memory_space<vmem>>) attributes {dimension_semantics = [#tpu.dimension_semantics<parallel>], iteration_bounds = array<i64: 2>, scalar_prefetch = 0 : i64, scratch_operands = 0 : i64, tpu.core_type = #tpu.core_type<tc>, window_params = [{transform_indices = @transform_0, window_bounds = array<i64: 1, 224, 24>}, {pipeline_mode = #tpu.pipeline_mode<synchronous>, transform_indices = @transform_1, window_bounds = array<i64: 24, 256>}, {pipeline_mode = #tpu.pipeline_mode<synchronous>, transform_indices = @transform_2, window_bounds = array<i64: 1, 256>}, {pipeline_mode = #tpu.pipeline_mode<synchronous>, transform_indices = @transform_3, window_bounds = array<i64: 256, 256>}, {pipeline_mode = #tpu.pipeline_mode<synchronous>, transform_indices = @transform_4, window_bounds = array<i64: 1, 256>}, {pipeline_mode = #tpu.pipeline_mode<synchronous>, transform_indices = @transform_5, window_bounds = array<i64: 3, 256, 256>}, {pipeline_mode = #tpu.pipeline_mode<synchronous>, transform_indices = @transform_6, window_bounds = array<i64: 1, 256>}, {pipeline_mode = #tpu.pipeline_mode<synchronous>, transform_indices = @transform_7, window_bounds = array<i64: 1, 256>}, {pipeline_mode = #tpu.pipeline_mode<synchronous>, transform_indices = @transform_8, window_bounds = array<i64: 1, 256>}, {pipeline_mode = #tpu.pipeline_mode<synchronous>, transform_indices = @transform_9, window_bounds = array<i64: 3, 256, 256>}, {pipeline_mode = #tpu.pipeline_mode<synchronous>, transform_indices = @transform_10, window_bounds = array<i64: 1, 256>}, {pipeline_mode = #tpu.pipeline_mode<synchronous>, transform_indices = @transform_11, window_bounds = array<i64: 256, 256>}, {pipeline_mode = #tpu.pipeline_mode<synchronous>, transform_indices = @transform_12, window_bounds = array<i64: 1, 256>}, {pipeline_mode = #tpu.pipeline_mode<synchronous>, transform_indices = @transform_13, window_bounds = array<i64: 3, 256, 256>}, {pipeline_mode = #tpu.pipeline_mode<synchronous>, transform_indices = @transform_14, window_bounds = array<i64: 1, 256>}, {pipeline_mode = #tpu.pipeline_mode<synchronous>, transform_indices = @transform_15, window_bounds = array<i64: 1, 256>}, {pipeline_mode = #tpu.pipeline_mode<synchronous>, transform_indices = @transform_16, window_bounds = array<i64: 1, 256>}, {pipeline_mode = #tpu.pipeline_mode<synchronous>, transform_indices = @transform_17, window_bounds = array<i64: 8, 256, 256>}, {pipeline_mode = #tpu.pipeline_mode<synchronous>, transform_indices = @transform_18, window_bounds = array<i64: 1, 256>}, {pipeline_mode = #tpu.pipeline_mode<synchronous>, transform_indices = @transform_19, window_bounds = array<i64: 1, 256>}, {pipeline_mode = #tpu.pipeline_mode<synchronous>, transform_indices = @transform_20, window_bounds = array<i64: 1, 256>}, {pipeline_mode = #tpu.pipeline_mode<synchronous>, transform_indices = @transform_21, window_bounds = array<i64: 256, 10>}, {pipeline_mode = #tpu.pipeline_mode<synchronous>, transform_indices = @transform_22, window_bounds = array<i64: 1, 10>}, {transform_indices = @transform_23, window_bounds = array<i64: 16, 10>}]} {
    %c0 = arith.constant 0 : index
    %c0_0 = arith.constant 0 : index
    %c0_1 = arith.constant 0 : index
    %0 = vector.load %arg1[%c0, %c0_0, %c0_1] : memref<1x224x24xf32, #tpu.memory_space<vmem>>, vector<1x224x24xf32>
    %1 = vector.shape_cast %0 : vector<1x224x24xf32> to vector<224x24xf32>
    %2 = arith.truncf %1 : vector<224x24xf32> to vector<224x24xbf16>
    %c0_2 = arith.constant 0 : index
    %c0_3 = arith.constant 0 : index
    %3 = vector.load %arg2[%c0_2, %c0_3] : memref<24x256xbf16, #tpu.memory_space<vmem>>, vector<24x256xbf16>
    %cst = arith.constant dense<0.000000e+00> : vector<224x256xf32>
    %4 = tpu.matmul %2, %3, %cst {dimension_numbers = #tpu.dot_dimension_numbers<[1], [0], [0], [1], [0, 0, 1, 1], [], []>} : vector<224x24xbf16>, vector<24x256xbf16>, vector<224x256xf32> -> vector<224x256xf32>
    %c0_4 = arith.constant 0 : index
    %c0_5 = arith.constant 0 : index
    %5 = vector.load %arg3[%c0_4, %c0_5] : memref<1x256xf32, #tpu.memory_space<vmem>>, vector<1x256xf32>
    %6 = vector.broadcast %5 : vector<1x256xf32> to vector<224x256xf32>
    %7 = arith.addf %4, %6 : vector<224x256xf32>
    %cst_6 = arith.constant 0.000000e+00 : f32
    %8 = vector.broadcast %cst_6 : f32 to vector<224x256xf32>
    %9 = arith.maximumf %7, %8 : vector<224x256xf32>
    %10 = arith.truncf %9 : vector<224x256xf32> to vector<224x256xbf16>
    %c0_7 = arith.constant 0 : index
    %c0_8 = arith.constant 0 : index
    %11 = vector.load %arg4[%c0_7, %c0_8] : memref<256x256xbf16, #tpu.memory_space<vmem>>, vector<256x256xbf16>
    %cst_9 = arith.constant dense<0.000000e+00> : vector<224x256xf32>
    %12 = tpu.matmul %10, %11, %cst_9 {dimension_numbers = #tpu.dot_dimension_numbers<[1], [0], [0], [1], [0, 0, 1, 1], [], []>} : vector<224x256xbf16>, vector<256x256xbf16>, vector<224x256xf32> -> vector<224x256xf32>
    %c0_10 = arith.constant 0 : index
    %c0_11 = arith.constant 0 : index
    %13 = vector.load %arg5[%c0_10, %c0_11] : memref<1x256xf32, #tpu.memory_space<vmem>>, vector<1x256xf32>
    %14 = vector.broadcast %13 : vector<1x256xf32> to vector<224x256xf32>
    %15 = arith.addf %12, %14 : vector<224x256xf32>
    %cst_12 = arith.constant 0.000000e+00 : f32
    %16 = vector.broadcast %cst_12 : f32 to vector<224x256xf32>
    %17 = arith.maximumf %15, %16 : vector<224x256xf32>
    %18 = arith.truncf %17 : vector<224x256xf32> to vector<224x256xbf16>
    %19 = vector.extract_strided_slice %18 {offsets = [0, 0], sizes = [192, 256], strides = [1, 1]} : vector<224x256xbf16> to vector<192x256xbf16>
    %c0_13 = arith.constant 0 : index
    %c0_14 = arith.constant 0 : index
    %c0_15 = arith.constant 0 : index
    %20 = vector.load %arg6[%c0_13, %c0_14, %c0_15] : memref<3x256x256xbf16, #tpu.memory_space<vmem>>, vector<1x256x256xbf16>
    %21 = vector.shape_cast %20 : vector<1x256x256xbf16> to vector<256x256xbf16>
    %cst_16 = arith.constant dense<0.000000e+00> : vector<192x256xf32>
    %22 = tpu.matmul %19, %21, %cst_16 {dimension_numbers = #tpu.dot_dimension_numbers<[1], [0], [0], [1], [0, 0, 1, 1], [], []>} : vector<192x256xbf16>, vector<256x256xbf16>, vector<192x256xf32> -> vector<192x256xf32>
    %23 = vector.extract_strided_slice %18 {offsets = [16, 0], sizes = [192, 256], strides = [1, 1]} : vector<224x256xbf16> to vector<192x256xbf16>
    %c1 = arith.constant 1 : index
    %c0_17 = arith.constant 0 : index
    %c0_18 = arith.constant 0 : index
    %24 = vector.load %arg6[%c1, %c0_17, %c0_18] : memref<3x256x256xbf16, #tpu.memory_space<vmem>>, vector<1x256x256xbf16>
    %25 = vector.shape_cast %24 : vector<1x256x256xbf16> to vector<256x256xbf16>
    %cst_19 = arith.constant dense<0.000000e+00> : vector<192x256xf32>
    %26 = tpu.matmul %23, %25, %cst_19 {dimension_numbers = #tpu.dot_dimension_numbers<[1], [0], [0], [1], [0, 0, 1, 1], [], []>} : vector<192x256xbf16>, vector<256x256xbf16>, vector<192x256xf32> -> vector<192x256xf32>
    %27 = arith.addf %22, %26 : vector<192x256xf32>
    %28 = vector.extract_strided_slice %18 {offsets = [32, 0], sizes = [192, 256], strides = [1, 1]} : vector<224x256xbf16> to vector<192x256xbf16>
    %c2 = arith.constant 2 : index
    %c0_20 = arith.constant 0 : index
    %c0_21 = arith.constant 0 : index
    %29 = vector.load %arg6[%c2, %c0_20, %c0_21] : memref<3x256x256xbf16, #tpu.memory_space<vmem>>, vector<1x256x256xbf16>
    %30 = vector.shape_cast %29 : vector<1x256x256xbf16> to vector<256x256xbf16>
    %cst_22 = arith.constant dense<0.000000e+00> : vector<192x256xf32>
    %31 = tpu.matmul %28, %30, %cst_22 {dimension_numbers = #tpu.dot_dimension_numbers<[1], [0], [0], [1], [0, 0, 1, 1], [], []>} : vector<192x256xbf16>, vector<256x256xbf16>, vector<192x256xf32> -> vector<192x256xf32>
    %32 = arith.addf %27, %31 : vector<192x256xf32>
    %c0_23 = arith.constant 0 : index
    %c0_24 = arith.constant 0 : index
    %33 = vector.load %arg7[%c0_23, %c0_24] : memref<1x256xf32, #tpu.memory_space<vmem>>, vector<1x256xf32>
    %34 = vector.broadcast %33 : vector<1x256xf32> to vector<192x256xf32>
    %35 = arith.addf %32, %34 : vector<192x256xf32>
    %cst_25 = arith.constant 0.000000e+00 : f32
    %36 = vector.broadcast %cst_25 : f32 to vector<192x256xf32>
    %37 = arith.maximumf %35, %36 : vector<192x256xf32>
    %38 = arith.truncf %37 : vector<192x256xf32> to vector<192x256xbf16>
    %39 = arith.extf %38 : vector<192x256xbf16> to vector<192x256xf32>
    %cst_26 = arith.constant dense<0.000000e+00> : vector<192xf32>
    %40 = vector.multi_reduction <add>, %39, %cst_26 [1] : vector<192x256xf32> to vector<192xf32>
    %41 = vector.shape_cast %40 : vector<192xf32> to vector<192x1xf32>
    %cst_27 = arith.constant 2.560000e+02 : f32
    %42 = vector.broadcast %cst_27 : f32 to vector<192x1xf32>
    %43 = arith.divf %41, %42 : vector<192x1xf32>
    %44 = vector.broadcast %43 : vector<192x1xf32> to vector<192x256xf32>
    %45 = arith.subf %39, %44 : vector<192x256xf32>
    %46 = arith.mulf %45, %45 : vector<192x256xf32>
    %cst_28 = arith.constant dense<0.000000e+00> : vector<192xf32>
    %47 = vector.multi_reduction <add>, %46, %cst_28 [1] : vector<192x256xf32> to vector<192xf32>
    %48 = vector.shape_cast %47 : vector<192xf32> to vector<192x1xf32>
    %cst_29 = arith.constant 2.560000e+02 : f32
    %49 = vector.broadcast %cst_29 : f32 to vector<192x1xf32>
    %50 = arith.divf %48, %49 : vector<192x1xf32>
    %cst_30 = arith.constant 9.99999974E-6 : f32
    %51 = vector.broadcast %cst_30 : f32 to vector<192x1xf32>
    %52 = arith.addf %50, %51 : vector<192x1xf32>
    %53 = math.rsqrt %52 : vector<192x1xf32>
    %54 = vector.broadcast %53 : vector<192x1xf32> to vector<192x256xf32>
    %55 = arith.mulf %45, %54 : vector<192x256xf32>
    %c0_31 = arith.constant 0 : index
    %c0_32 = arith.constant 0 : index
    %56 = vector.load %arg8[%c0_31, %c0_32] : memref<1x256xf32, #tpu.memory_space<vmem>>, vector<1x256xf32>
    %57 = vector.broadcast %56 : vector<1x256xf32> to vector<192x256xf32>
    %58 = arith.mulf %55, %57 : vector<192x256xf32>
    %c0_33 = arith.constant 0 : index
    %c0_34 = arith.constant 0 : index
    %59 = vector.load %arg9[%c0_33, %c0_34] : memref<1x256xf32, #tpu.memory_space<vmem>>, vector<1x256xf32>
    %60 = vector.broadcast %59 : vector<1x256xf32> to vector<192x256xf32>
    %61 = arith.addf %58, %60 : vector<192x256xf32>
    %62 = arith.truncf %61 : vector<192x256xf32> to vector<192x256xbf16>
    %63 = vector.extract_strided_slice %62 {offsets = [0, 0], sizes = [160, 256], strides = [1, 1]} : vector<192x256xbf16> to vector<160x256xbf16>
    %c0_35 = arith.constant 0 : index
    %c0_36 = arith.constant 0 : index
    %c0_37 = arith.constant 0 : index
    %64 = vector.load %arg10[%c0_35, %c0_36, %c0_37] : memref<3x256x256xbf16, #tpu.memory_space<vmem>>, vector<1x256x256xbf16>
    %65 = vector.shape_cast %64 : vector<1x256x256xbf16> to vector<256x256xbf16>
    %cst_38 = arith.constant dense<0.000000e+00> : vector<160x256xf32>
    %66 = tpu.matmul %63, %65, %cst_38 {dimension_numbers = #tpu.dot_dimension_numbers<[1], [0], [0], [1], [0, 0, 1, 1], [], []>} : vector<160x256xbf16>, vector<256x256xbf16>, vector<160x256xf32> -> vector<160x256xf32>
    %67 = vector.extract_strided_slice %62 {offsets = [16, 0], sizes = [160, 256], strides = [1, 1]} : vector<192x256xbf16> to vector<160x256xbf16>
    %c1_39 = arith.constant 1 : index
    %c0_40 = arith.constant 0 : index
    %c0_41 = arith.constant 0 : index
    %68 = vector.load %arg10[%c1_39, %c0_40, %c0_41] : memref<3x256x256xbf16, #tpu.memory_space<vmem>>, vector<1x256x256xbf16>
    %69 = vector.shape_cast %68 : vector<1x256x256xbf16> to vector<256x256xbf16>
    %cst_42 = arith.constant dense<0.000000e+00> : vector<160x256xf32>
    %70 = tpu.matmul %67, %69, %cst_42 {dimension_numbers = #tpu.dot_dimension_numbers<[1], [0], [0], [1], [0, 0, 1, 1], [], []>} : vector<160x256xbf16>, vector<256x256xbf16>, vector<160x256xf32> -> vector<160x256xf32>
    %71 = arith.addf %66, %70 : vector<160x256xf32>
    %72 = vector.extract_strided_slice %62 {offsets = [32, 0], sizes = [160, 256], strides = [1, 1]} : vector<192x256xbf16> to vector<160x256xbf16>
    %c2_43 = arith.constant 2 : index
    %c0_44 = arith.constant 0 : index
    %c0_45 = arith.constant 0 : index
    %73 = vector.load %arg10[%c2_43, %c0_44, %c0_45] : memref<3x256x256xbf16, #tpu.memory_space<vmem>>, vector<1x256x256xbf16>
    %74 = vector.shape_cast %73 : vector<1x256x256xbf16> to vector<256x256xbf16>
    %cst_46 = arith.constant dense<0.000000e+00> : vector<160x256xf32>
    %75 = tpu.matmul %72, %74, %cst_46 {dimension_numbers = #tpu.dot_dimension_numbers<[1], [0], [0], [1], [0, 0, 1, 1], [], []>} : vector<160x256xbf16>, vector<256x256xbf16>, vector<160x256xf32> -> vector<160x256xf32>
    %76 = arith.addf %71, %75 : vector<160x256xf32>
    %c0_47 = arith.constant 0 : index
    %c0_48 = arith.constant 0 : index
    %77 = vector.load %arg11[%c0_47, %c0_48] : memref<1x256xf32, #tpu.memory_space<vmem>>, vector<1x256xf32>
    %78 = vector.broadcast %77 : vector<1x256xf32> to vector<160x256xf32>
    %79 = arith.addf %76, %78 : vector<160x256xf32>
    %cst_49 = arith.constant 0.000000e+00 : f32
    %80 = vector.broadcast %cst_49 : f32 to vector<160x256xf32>
    %81 = arith.maximumf %79, %80 : vector<160x256xf32>
    %82 = arith.truncf %81 : vector<160x256xf32> to vector<160x256xbf16>
    %c0_50 = arith.constant 0 : index
    %c0_51 = arith.constant 0 : index
    %83 = vector.load %arg12[%c0_50, %c0_51] : memref<256x256xbf16, #tpu.memory_space<vmem>>, vector<256x256xbf16>
    %cst_52 = arith.constant dense<0.000000e+00> : vector<160x256xf32>
    %84 = tpu.matmul %82, %83, %cst_52 {dimension_numbers = #tpu.dot_dimension_numbers<[1], [0], [0], [1], [0, 0, 1, 1], [], []>} : vector<160x256xbf16>, vector<256x256xbf16>, vector<160x256xf32> -> vector<160x256xf32>
    %c0_53 = arith.constant 0 : index
    %c0_54 = arith.constant 0 : index
    %85 = vector.load %arg13[%c0_53, %c0_54] : memref<1x256xf32, #tpu.memory_space<vmem>>, vector<1x256xf32>
    %86 = vector.broadcast %85 : vector<1x256xf32> to vector<160x256xf32>
    %87 = arith.addf %84, %86 : vector<160x256xf32>
    %cst_55 = arith.constant 0.000000e+00 : f32
    %88 = vector.broadcast %cst_55 : f32 to vector<160x256xf32>
    %89 = arith.maximumf %87, %88 : vector<160x256xf32>
    %90 = arith.truncf %89 : vector<160x256xf32> to vector<160x256xbf16>
    %91 = vector.extract_strided_slice %90 {offsets = [0, 0], sizes = [128, 256], strides = [1, 1]} : vector<160x256xbf16> to vector<128x256xbf16>
    %c0_56 = arith.constant 0 : index
    %c0_57 = arith.constant 0 : index
    %c0_58 = arith.constant 0 : index
    %92 = vector.load %arg14[%c0_56, %c0_57, %c0_58] : memref<3x256x256xbf16, #tpu.memory_space<vmem>>, vector<1x256x256xbf16>
    %93 = vector.shape_cast %92 : vector<1x256x256xbf16> to vector<256x256xbf16>
    %cst_59 = arith.constant dense<0.000000e+00> : vector<128x256xf32>
    %94 = tpu.matmul %91, %93, %cst_59 {dimension_numbers = #tpu.dot_dimension_numbers<[1], [0], [0], [1], [0, 0, 1, 1], [], []>} : vector<128x256xbf16>, vector<256x256xbf16>, vector<128x256xf32> -> vector<128x256xf32>
    %95 = vector.extract_strided_slice %90 {offsets = [16, 0], sizes = [128, 256], strides = [1, 1]} : vector<160x256xbf16> to vector<128x256xbf16>
    %c1_60 = arith.constant 1 : index
    %c0_61 = arith.constant 0 : index
    %c0_62 = arith.constant 0 : index
    %96 = vector.load %arg14[%c1_60, %c0_61, %c0_62] : memref<3x256x256xbf16, #tpu.memory_space<vmem>>, vector<1x256x256xbf16>
    %97 = vector.shape_cast %96 : vector<1x256x256xbf16> to vector<256x256xbf16>
    %cst_63 = arith.constant dense<0.000000e+00> : vector<128x256xf32>
    %98 = tpu.matmul %95, %97, %cst_63 {dimension_numbers = #tpu.dot_dimension_numbers<[1], [0], [0], [1], [0, 0, 1, 1], [], []>} : vector<128x256xbf16>, vector<256x256xbf16>, vector<128x256xf32> -> vector<128x256xf32>
    %99 = arith.addf %94, %98 : vector<128x256xf32>
    %100 = vector.extract_strided_slice %90 {offsets = [32, 0], sizes = [128, 256], strides = [1, 1]} : vector<160x256xbf16> to vector<128x256xbf16>
    %c2_64 = arith.constant 2 : index
    %c0_65 = arith.constant 0 : index
    %c0_66 = arith.constant 0 : index
    %101 = vector.load %arg14[%c2_64, %c0_65, %c0_66] : memref<3x256x256xbf16, #tpu.memory_space<vmem>>, vector<1x256x256xbf16>
    %102 = vector.shape_cast %101 : vector<1x256x256xbf16> to vector<256x256xbf16>
    %cst_67 = arith.constant dense<0.000000e+00> : vector<128x256xf32>
    %103 = tpu.matmul %100, %102, %cst_67 {dimension_numbers = #tpu.dot_dimension_numbers<[1], [0], [0], [1], [0, 0, 1, 1], [], []>} : vector<128x256xbf16>, vector<256x256xbf16>, vector<128x256xf32> -> vector<128x256xf32>
    %104 = arith.addf %99, %103 : vector<128x256xf32>
    %c0_68 = arith.constant 0 : index
    %c0_69 = arith.constant 0 : index
    %105 = vector.load %arg15[%c0_68, %c0_69] : memref<1x256xf32, #tpu.memory_space<vmem>>, vector<1x256xf32>
    %106 = vector.broadcast %105 : vector<1x256xf32> to vector<128x256xf32>
    %107 = arith.addf %104, %106 : vector<128x256xf32>
    %cst_70 = arith.constant 0.000000e+00 : f32
    %108 = vector.broadcast %cst_70 : f32 to vector<128x256xf32>
    %109 = arith.maximumf %107, %108 : vector<128x256xf32>
    %110 = arith.truncf %109 : vector<128x256xf32> to vector<128x256xbf16>
    %111 = arith.extf %110 : vector<128x256xbf16> to vector<128x256xf32>
    %cst_71 = arith.constant dense<0.000000e+00> : vector<128xf32>
    %112 = vector.multi_reduction <add>, %111, %cst_71 [1] : vector<128x256xf32> to vector<128xf32>
    %113 = vector.shape_cast %112 : vector<128xf32> to vector<128x1xf32>
    %cst_72 = arith.constant 2.560000e+02 : f32
    %114 = vector.broadcast %cst_72 : f32 to vector<128x1xf32>
    %115 = arith.divf %113, %114 : vector<128x1xf32>
    %116 = vector.broadcast %115 : vector<128x1xf32> to vector<128x256xf32>
    %117 = arith.subf %111, %116 : vector<128x256xf32>
    %118 = arith.mulf %117, %117 : vector<128x256xf32>
    %cst_73 = arith.constant dense<0.000000e+00> : vector<128xf32>
    %119 = vector.multi_reduction <add>, %118, %cst_73 [1] : vector<128x256xf32> to vector<128xf32>
    %120 = vector.shape_cast %119 : vector<128xf32> to vector<128x1xf32>
    %cst_74 = arith.constant 2.560000e+02 : f32
    %121 = vector.broadcast %cst_74 : f32 to vector<128x1xf32>
    %122 = arith.divf %120, %121 : vector<128x1xf32>
    %cst_75 = arith.constant 9.99999974E-6 : f32
    %123 = vector.broadcast %cst_75 : f32 to vector<128x1xf32>
    %124 = arith.addf %122, %123 : vector<128x1xf32>
    %125 = math.rsqrt %124 : vector<128x1xf32>
    %126 = vector.broadcast %125 : vector<128x1xf32> to vector<128x256xf32>
    %127 = arith.mulf %117, %126 : vector<128x256xf32>
    %c0_76 = arith.constant 0 : index
    %c0_77 = arith.constant 0 : index
    %128 = vector.load %arg16[%c0_76, %c0_77] : memref<1x256xf32, #tpu.memory_space<vmem>>, vector<1x256xf32>
    %129 = vector.broadcast %128 : vector<1x256xf32> to vector<128x256xf32>
    %130 = arith.mulf %127, %129 : vector<128x256xf32>
    %c0_78 = arith.constant 0 : index
    %c0_79 = arith.constant 0 : index
    %131 = vector.load %arg17[%c0_78, %c0_79] : memref<1x256xf32, #tpu.memory_space<vmem>>, vector<1x256xf32>
    %132 = vector.broadcast %131 : vector<1x256xf32> to vector<128x256xf32>
    %133 = arith.addf %130, %132 : vector<128x256xf32>
    %134 = arith.truncf %133 : vector<128x256xf32> to vector<128x256xbf16>
    %135 = vector.extract_strided_slice %134 {offsets = [0, 0], sizes = [16, 256], strides = [1, 1]} : vector<128x256xbf16> to vector<16x256xbf16>
    %c0_80 = arith.constant 0 : index
    %c0_81 = arith.constant 0 : index
    %c0_82 = arith.constant 0 : index
    %136 = vector.load %arg18[%c0_80, %c0_81, %c0_82] : memref<8x256x256xbf16, #tpu.memory_space<vmem>>, vector<1x256x256xbf16>
    %137 = vector.shape_cast %136 : vector<1x256x256xbf16> to vector<256x256xbf16>
    %cst_83 = arith.constant dense<0.000000e+00> : vector<16x256xf32>
    %138 = tpu.matmul %135, %137, %cst_83 {dimension_numbers = #tpu.dot_dimension_numbers<[1], [0], [0], [1], [0, 0, 1, 1], [], []>} : vector<16x256xbf16>, vector<256x256xbf16>, vector<16x256xf32> -> vector<16x256xf32>
    %139 = vector.extract_strided_slice %134 {offsets = [16, 0], sizes = [16, 256], strides = [1, 1]} : vector<128x256xbf16> to vector<16x256xbf16>
    %c1_84 = arith.constant 1 : index
    %c0_85 = arith.constant 0 : index
    %c0_86 = arith.constant 0 : index
    %140 = vector.load %arg18[%c1_84, %c0_85, %c0_86] : memref<8x256x256xbf16, #tpu.memory_space<vmem>>, vector<1x256x256xbf16>
    %141 = vector.shape_cast %140 : vector<1x256x256xbf16> to vector<256x256xbf16>
    %cst_87 = arith.constant dense<0.000000e+00> : vector<16x256xf32>
    %142 = tpu.matmul %139, %141, %cst_87 {dimension_numbers = #tpu.dot_dimension_numbers<[1], [0], [0], [1], [0, 0, 1, 1], [], []>} : vector<16x256xbf16>, vector<256x256xbf16>, vector<16x256xf32> -> vector<16x256xf32>
    %143 = arith.addf %138, %142 : vector<16x256xf32>
    %144 = vector.extract_strided_slice %134 {offsets = [32, 0], sizes = [16, 256], strides = [1, 1]} : vector<128x256xbf16> to vector<16x256xbf16>
    %c2_88 = arith.constant 2 : index
    %c0_89 = arith.constant 0 : index
    %c0_90 = arith.constant 0 : index
    %145 = vector.load %arg18[%c2_88, %c0_89, %c0_90] : memref<8x256x256xbf16, #tpu.memory_space<vmem>>, vector<1x256x256xbf16>
    %146 = vector.shape_cast %145 : vector<1x256x256xbf16> to vector<256x256xbf16>
    %cst_91 = arith.constant dense<0.000000e+00> : vector<16x256xf32>
    %147 = tpu.matmul %144, %146, %cst_91 {dimension_numbers = #tpu.dot_dimension_numbers<[1], [0], [0], [1], [0, 0, 1, 1], [], []>} : vector<16x256xbf16>, vector<256x256xbf16>, vector<16x256xf32> -> vector<16x256xf32>
    %148 = arith.addf %143, %147 : vector<16x256xf32>
    %149 = vector.extract_strided_slice %134 {offsets = [48, 0], sizes = [16, 256], strides = [1, 1]} : vector<128x256xbf16> to vector<16x256xbf16>
    %c3 = arith.constant 3 : index
    %c0_92 = arith.constant 0 : index
    %c0_93 = arith.constant 0 : index
    %150 = vector.load %arg18[%c3, %c0_92, %c0_93] : memref<8x256x256xbf16, #tpu.memory_space<vmem>>, vector<1x256x256xbf16>
    %151 = vector.shape_cast %150 : vector<1x256x256xbf16> to vector<256x256xbf16>
    %cst_94 = arith.constant dense<0.000000e+00> : vector<16x256xf32>
    %152 = tpu.matmul %149, %151, %cst_94 {dimension_numbers = #tpu.dot_dimension_numbers<[1], [0], [0], [1], [0, 0, 1, 1], [], []>} : vector<16x256xbf16>, vector<256x256xbf16>, vector<16x256xf32> -> vector<16x256xf32>
    %153 = arith.addf %148, %152 : vector<16x256xf32>
    %154 = vector.extract_strided_slice %134 {offsets = [64, 0], sizes = [16, 256], strides = [1, 1]} : vector<128x256xbf16> to vector<16x256xbf16>
    %c4 = arith.constant 4 : index
    %c0_95 = arith.constant 0 : index
    %c0_96 = arith.constant 0 : index
    %155 = vector.load %arg18[%c4, %c0_95, %c0_96] : memref<8x256x256xbf16, #tpu.memory_space<vmem>>, vector<1x256x256xbf16>
    %156 = vector.shape_cast %155 : vector<1x256x256xbf16> to vector<256x256xbf16>
    %cst_97 = arith.constant dense<0.000000e+00> : vector<16x256xf32>
    %157 = tpu.matmul %154, %156, %cst_97 {dimension_numbers = #tpu.dot_dimension_numbers<[1], [0], [0], [1], [0, 0, 1, 1], [], []>} : vector<16x256xbf16>, vector<256x256xbf16>, vector<16x256xf32> -> vector<16x256xf32>
    %158 = arith.addf %153, %157 : vector<16x256xf32>
    %159 = vector.extract_strided_slice %134 {offsets = [80, 0], sizes = [16, 256], strides = [1, 1]} : vector<128x256xbf16> to vector<16x256xbf16>
    %c5 = arith.constant 5 : index
    %c0_98 = arith.constant 0 : index
    %c0_99 = arith.constant 0 : index
    %160 = vector.load %arg18[%c5, %c0_98, %c0_99] : memref<8x256x256xbf16, #tpu.memory_space<vmem>>, vector<1x256x256xbf16>
    %161 = vector.shape_cast %160 : vector<1x256x256xbf16> to vector<256x256xbf16>
    %cst_100 = arith.constant dense<0.000000e+00> : vector<16x256xf32>
    %162 = tpu.matmul %159, %161, %cst_100 {dimension_numbers = #tpu.dot_dimension_numbers<[1], [0], [0], [1], [0, 0, 1, 1], [], []>} : vector<16x256xbf16>, vector<256x256xbf16>, vector<16x256xf32> -> vector<16x256xf32>
    %163 = arith.addf %158, %162 : vector<16x256xf32>
    %164 = vector.extract_strided_slice %134 {offsets = [96, 0], sizes = [16, 256], strides = [1, 1]} : vector<128x256xbf16> to vector<16x256xbf16>
    %c6 = arith.constant 6 : index
    %c0_101 = arith.constant 0 : index
    %c0_102 = arith.constant 0 : index
    %165 = vector.load %arg18[%c6, %c0_101, %c0_102] : memref<8x256x256xbf16, #tpu.memory_space<vmem>>, vector<1x256x256xbf16>
    %166 = vector.shape_cast %165 : vector<1x256x256xbf16> to vector<256x256xbf16>
    %cst_103 = arith.constant dense<0.000000e+00> : vector<16x256xf32>
    %167 = tpu.matmul %164, %166, %cst_103 {dimension_numbers = #tpu.dot_dimension_numbers<[1], [0], [0], [1], [0, 0, 1, 1], [], []>} : vector<16x256xbf16>, vector<256x256xbf16>, vector<16x256xf32> -> vector<16x256xf32>
    %168 = arith.addf %163, %167 : vector<16x256xf32>
    %169 = vector.extract_strided_slice %134 {offsets = [112, 0], sizes = [16, 256], strides = [1, 1]} : vector<128x256xbf16> to vector<16x256xbf16>
    %c7 = arith.constant 7 : index
    %c0_104 = arith.constant 0 : index
    %c0_105 = arith.constant 0 : index
    %170 = vector.load %arg18[%c7, %c0_104, %c0_105] : memref<8x256x256xbf16, #tpu.memory_space<vmem>>, vector<1x256x256xbf16>
    %171 = vector.shape_cast %170 : vector<1x256x256xbf16> to vector<256x256xbf16>
    %cst_106 = arith.constant dense<0.000000e+00> : vector<16x256xf32>
    %172 = tpu.matmul %169, %171, %cst_106 {dimension_numbers = #tpu.dot_dimension_numbers<[1], [0], [0], [1], [0, 0, 1, 1], [], []>} : vector<16x256xbf16>, vector<256x256xbf16>, vector<16x256xf32> -> vector<16x256xf32>
    %173 = arith.addf %168, %172 : vector<16x256xf32>
    %c0_107 = arith.constant 0 : index
    %c0_108 = arith.constant 0 : index
    %174 = vector.load %arg19[%c0_107, %c0_108] : memref<1x256xf32, #tpu.memory_space<vmem>>, vector<1x256xf32>
    %175 = vector.broadcast %174 : vector<1x256xf32> to vector<16x256xf32>
    %176 = arith.addf %173, %175 : vector<16x256xf32>
    %cst_109 = arith.constant dense<0.000000e+00> : vector<16xf32>
    %177 = vector.multi_reduction <add>, %176, %cst_109 [1] : vector<16x256xf32> to vector<16xf32>
    %178 = vector.shape_cast %177 : vector<16xf32> to vector<16x1xf32>
    %cst_110 = arith.constant 2.560000e+02 : f32
    %179 = vector.broadcast %cst_110 : f32 to vector<16x1xf32>
    %180 = arith.divf %178, %179 : vector<16x1xf32>
    %181 = vector.broadcast %180 : vector<16x1xf32> to vector<16x256xf32>
    %182 = arith.subf %176, %181 : vector<16x256xf32>
    %183 = arith.mulf %182, %182 : vector<16x256xf32>
    %cst_111 = arith.constant dense<0.000000e+00> : vector<16xf32>
    %184 = vector.multi_reduction <add>, %183, %cst_111 [1] : vector<16x256xf32> to vector<16xf32>
    %185 = vector.shape_cast %184 : vector<16xf32> to vector<16x1xf32>
    %cst_112 = arith.constant 2.560000e+02 : f32
    %186 = vector.broadcast %cst_112 : f32 to vector<16x1xf32>
    %187 = arith.divf %185, %186 : vector<16x1xf32>
    %cst_113 = arith.constant 9.99999974E-6 : f32
    %188 = vector.broadcast %cst_113 : f32 to vector<16x1xf32>
    %189 = arith.addf %187, %188 : vector<16x1xf32>
    %190 = math.rsqrt %189 : vector<16x1xf32>
    %191 = vector.broadcast %190 : vector<16x1xf32> to vector<16x256xf32>
    %192 = arith.mulf %182, %191 : vector<16x256xf32>
    %c0_114 = arith.constant 0 : index
    %c0_115 = arith.constant 0 : index
    %193 = vector.load %arg20[%c0_114, %c0_115] : memref<1x256xf32, #tpu.memory_space<vmem>>, vector<1x256xf32>
    %194 = vector.broadcast %193 : vector<1x256xf32> to vector<16x256xf32>
    %195 = arith.mulf %192, %194 : vector<16x256xf32>
    %c0_116 = arith.constant 0 : index
    %c0_117 = arith.constant 0 : index
    %196 = vector.load %arg21[%c0_116, %c0_117] : memref<1x256xf32, #tpu.memory_space<vmem>>, vector<1x256xf32>
    %197 = vector.broadcast %196 : vector<1x256xf32> to vector<16x256xf32>
    %198 = arith.addf %195, %197 : vector<16x256xf32>
    %199 = arith.truncf %198 : vector<16x256xf32> to vector<16x256xbf16>
    %c0_118 = arith.constant 0 : index
    %c0_119 = arith.constant 0 : index
    %200 = vector.load %arg22[%c0_118, %c0_119] : memref<256x10xbf16, #tpu.memory_space<vmem>>, vector<256x10xbf16>
    %cst_120 = arith.constant dense<0.000000e+00> : vector<16x10xf32>
    %201 = tpu.matmul %199, %200, %cst_120 {dimension_numbers = #tpu.dot_dimension_numbers<[1], [0], [0], [1], [0, 0, 1, 1], [], []>} : vector<16x256xbf16>, vector<256x10xbf16>, vector<16x10xf32> -> vector<16x10xf32>
    %c0_121 = arith.constant 0 : index
    %c0_122 = arith.constant 0 : index
    %202 = vector.load %arg23[%c0_121, %c0_122] : memref<1x10xf32, #tpu.memory_space<vmem>>, vector<1x10xf32>
    %203 = vector.broadcast %202 : vector<1x10xf32> to vector<16x10xf32>
    %204 = arith.addf %201, %203 : vector<16x10xf32>
    %c0_123 = arith.constant 0 : index
    %c0_124 = arith.constant 0 : index
    %205 = vector.load %arg24[%c0_123, %c0_124] : memref<16x10xf32, #tpu.memory_space<vmem>>, vector<16x10xf32>
    tpu.vector_store %arg24[%c0_123, %c0_124], %204 {strides = array<i32>} : memref<16x10xf32, #tpu.memory_space<vmem>>, vector<16x10xf32>,
    return
  }
  func.func @transform_0(%arg0: i32) -> (i32, i32, i32) {
    %c0_i32 = arith.constant 0 : i32
    %c0_i32_0 = arith.constant 0 : i32
    %c0_i32_1 = arith.constant 0 : i32
    return %arg0, %c0_i32, %c0_i32_0 : i32, i32, i32
  }
  func.func @transform_1(%arg0: i32) -> (i32, i32) {
    %c0_i32 = arith.constant 0 : i32
    %c0_i32_0 = arith.constant 0 : i32
    %c0_i32_1 = arith.constant 0 : i32
    return %c0_i32, %c0_i32_0 : i32, i32
  }
  func.func @transform_2(%arg0: i32) -> (i32, i32) {
    %c0_i32 = arith.constant 0 : i32
    %c0_i32_0 = arith.constant 0 : i32
    %c0_i32_1 = arith.constant 0 : i32
    return %c0_i32, %c0_i32_0 : i32, i32
  }
  func.func @transform_3(%arg0: i32) -> (i32, i32) {
    %c0_i32 = arith.constant 0 : i32
    %c0_i32_0 = arith.constant 0 : i32
    %c0_i32_1 = arith.constant 0 : i32
    return %c0_i32, %c0_i32_0 : i32, i32
  }
  func.func @transform_4(%arg0: i32) -> (i32, i32) {
    %c0_i32 = arith.constant 0 : i32
    %c0_i32_0 = arith.constant 0 : i32
    %c0_i32_1 = arith.constant 0 : i32
    return %c0_i32, %c0_i32_0 : i32, i32
  }
  func.func @transform_5(%arg0: i32) -> (i32, i32, i32) {
    %c0_i32 = arith.constant 0 : i32
    %c0_i32_0 = arith.constant 0 : i32
    %c0_i32_1 = arith.constant 0 : i32
    %c0_i32_2 = arith.constant 0 : i32
    return %c0_i32, %c0_i32_0, %c0_i32_1 : i32, i32, i32
  }
  func.func @transform_6(%arg0: i32) -> (i32, i32) {
    %c0_i32 = arith.constant 0 : i32
    %c0_i32_0 = arith.constant 0 : i32
    %c0_i32_1 = arith.constant 0 : i32
    return %c0_i32, %c0_i32_0 : i32, i32
  }
  func.func @transform_7(%arg0: i32) -> (i32, i32) {
    %c0_i32 = arith.constant 0 : i32
    %c0_i32_0 = arith.constant 0 : i32
    %c0_i32_1 = arith.constant 0 : i32
    return %c0_i32, %c0_i32_0 : i32, i32
  }
  func.func @transform_8(%arg0: i32) -> (i32, i32) {
    %c0_i32 = arith.constant 0 : i32
    %c0_i32_0 = arith.constant 0 : i32
    %c0_i32_1 = arith.constant 0 : i32
    return %c0_i32, %c0_i32_0 : i32, i32
  }
  func.func @transform_9(%arg0: i32) -> (i32, i32, i32) {
    %c0_i32 = arith.constant 0 : i32
    %c0_i32_0 = arith.constant 0 : i32
    %c0_i32_1 = arith.constant 0 : i32
    %c0_i32_2 = arith.constant 0 : i32
    return %c0_i32, %c0_i32_0, %c0_i32_1 : i32, i32, i32
  }
  func.func @transform_10(%arg0: i32) -> (i32, i32) {
    %c0_i32 = arith.constant 0 : i32
    %c0_i32_0 = arith.constant 0 : i32
    %c0_i32_1 = arith.constant 0 : i32
    return %c0_i32, %c0_i32_0 : i32, i32
  }
  func.func @transform_11(%arg0: i32) -> (i32, i32) {
    %c0_i32 = arith.constant 0 : i32
    %c0_i32_0 = arith.constant 0 : i32
    %c0_i32_1 = arith.constant 0 : i32
    return %c0_i32, %c0_i32_0 : i32, i32
  }
  func.func @transform_12(%arg0: i32) -> (i32, i32) {
    %c0_i32 = arith.constant 0 : i32
    %c0_i32_0 = arith.constant 0 : i32
    %c0_i32_1 = arith.constant 0 : i32
    return %c0_i32, %c0_i32_0 : i32, i32
  }
  func.func @transform_13(%arg0: i32) -> (i32, i32, i32) {
    %c0_i32 = arith.constant 0 : i32
    %c0_i32_0 = arith.constant 0 : i32
    %c0_i32_1 = arith.constant 0 : i32
    %c0_i32_2 = arith.constant 0 : i32
    return %c0_i32, %c0_i32_0, %c0_i32_1 : i32, i32, i32
  }
  func.func @transform_14(%arg0: i32) -> (i32, i32) {
    %c0_i32 = arith.constant 0 : i32
    %c0_i32_0 = arith.constant 0 : i32
    %c0_i32_1 = arith.constant 0 : i32
    return %c0_i32, %c0_i32_0 : i32, i32
  }
  func.func @transform_15(%arg0: i32) -> (i32, i32) {
    %c0_i32 = arith.constant 0 : i32
    %c0_i32_0 = arith.constant 0 : i32
    %c0_i32_1 = arith.constant 0 : i32
    return %c0_i32, %c0_i32_0 : i32, i32
  }
  func.func @transform_16(%arg0: i32) -> (i32, i32) {
    %c0_i32 = arith.constant 0 : i32
    %c0_i32_0 = arith.constant 0 : i32
    %c0_i32_1 = arith.constant 0 : i32
    return %c0_i32, %c0_i32_0 : i32, i32
  }
  func.func @transform_17(%arg0: i32) -> (i32, i32, i32) {
    %c0_i32 = arith.constant 0 : i32
    %c0_i32_0 = arith.constant 0 : i32
    %c0_i32_1 = arith.constant 0 : i32
    %c0_i32_2 = arith.constant 0 : i32
    return %c0_i32, %c0_i32_0, %c0_i32_1 : i32, i32, i32
  }
  func.func @transform_18(%arg0: i32) -> (i32, i32) {
    %c0_i32 = arith.constant 0 : i32
    %c0_i32_0 = arith.constant 0 : i32
    %c0_i32_1 = arith.constant 0 : i32
    return %c0_i32, %c0_i32_0 : i32, i32
  }
  func.func @transform_19(%arg0: i32) -> (i32, i32) {
    %c0_i32 = arith.constant 0 : i32
    %c0_i32_0 = arith.constant 0 : i32
    %c0_i32_1 = arith.constant 0 : i32
    return %c0_i32, %c0_i32_0 : i32, i32
  }
  func.func @transform_20(%arg0: i32) -> (i32, i32) {
    %c0_i32 = arith.constant 0 : i32
    %c0_i32_0 = arith.constant 0 : i32
    %c0_i32_1 = arith.constant 0 : i32
    return %c0_i32, %c0_i32_0 : i32, i32
  }
  func.func @transform_21(%arg0: i32) -> (i32, i32) {
    %c0_i32 = arith.constant 0 : i32
    %c0_i32_0 = arith.constant 0 : i32
    %c0_i32_1 = arith.constant 0 : i32
    return %c0_i32, %c0_i32_0 : i32, i32
  }
  func.func @transform_22(%arg0: i32) -> (i32, i32) {
    %c0_i32 = arith.constant 0 : i32
    %c0_i32_0 = arith.constant 0 : i32
    %c0_i32_1 = arith.constant 0 : i32
    return %c0_i32, %c0_i32_0 : i32, i32
  }
  func.func @transform_23(%arg0: i32) -> (i32, i32) {
    %c0_i32 = arith.constant 0 : i32
    %c0_i32_0 = arith.constant 0 : i32
    return %arg0, %c0_i32 : i32, i32
  }
}

</mosaic_0001>

<llo_original>
// kernel: stgcn_forward.1
$region0: #{stgcn_forward.1}
  #allocation0 [shape = 'u32[]', space=smem, size = 0x4, offset = 0x4, fixed_abs, tag = 'smem constant byte address 0x4 - core index']
  #allocation1 [shape = 'u32[144,128]{1,0:T(1,128)}', space=vmem, size = 0x12000, scoped, tag = 'internal scratch']
  %s0 = inlined_call_operand.vmem [shape: f32[2,224,24], index: 0, kind: input, shape index: {}]
  %s1 = inlined_call_operand.vmem [shape: bf16[24,256], index: 1, kind: input, shape index: {}]
  %s2 = inlined_call_operand.vmem [shape: f32[1,256], index: 2, kind: input, shape index: {}]
  %s3 = inlined_call_operand.vmem [shape: bf16[256,256], index: 3, kind: input, shape index: {}]
  %s4 = inlined_call_operand.vmem [shape: f32[1,256], index: 4, kind: input, shape index: {}]
  %s5 = inlined_call_operand.vmem [shape: bf16[3,256,256], index: 5, kind: input, shape index: {}]
  %s6 = inlined_call_operand.vmem [shape: f32[1,256], index: 6, kind: input, shape index: {}]
  %s7 = inlined_call_operand.vmem [shape: f32[1,256], index: 7, kind: input, shape index: {}]
  %s8 = inlined_call_operand.vmem [shape: f32[1,256], index: 8, kind: input, shape index: {}]
  %s9 = inlined_call_operand.vmem [shape: bf16[3,256,256], index: 9, kind: input, shape index: {}]
  %s10 = inlined_call_operand.vmem [shape: f32[1,256], index: 10, kind: input, shape index: {}]
  %s11 = inlined_call_operand.vmem [shape: bf16[256,256], index: 11, kind: input, shape index: {}]
  %s12 = inlined_call_operand.vmem [shape: f32[1,256], index: 12, kind: input, shape index: {}]
  %s13 = inlined_call_operand.vmem [shape: bf16[3,256,256], index: 13, kind: input, shape index: {}]
  %s14 = inlined_call_operand.vmem [shape: f32[1,256], index: 14, kind: input, shape index: {}]
  %s15 = inlined_call_operand.vmem [shape: f32[1,256], index: 15, kind: input, shape index: {}]
  %s16 = inlined_call_operand.vmem [shape: f32[1,256], index: 16, kind: input, shape index: {}]
  %s17 = inlined_call_operand.vmem [shape: bf16[8,256,256], index: 17, kind: input, shape index: {}]
  %s18 = inlined_call_operand.vmem [shape: f32[1,256], index: 18, kind: input, shape index: {}]
  %s19 = inlined_call_operand.vmem [shape: f32[1,256], index: 19, kind: input, shape index: {}]
  %s20 = inlined_call_operand.vmem [shape: f32[1,256], index: 20, kind: input, shape index: {}]
  %s21 = inlined_call_operand.vmem [shape: bf16[256,10], index: 21, kind: input, shape index: {}]
  %s22 = inlined_call_operand.vmem [shape: f32[1,10], index: 22, kind: input, shape index: {}]
  %s23 = inlined_call_operand.vmem [shape: f32[32,10], index: 23, kind: output, shape index: {}]
  %s24 = sld [smem:[#allocation0]]
  $region125: #{stgcn_forward.1} parent=0
    _
  %s26 = ssub.s32 1, %s24
  %s27 = scalar_select 0, %s26, %s24
  loop: start=0, step=1, limit=4
  $region2: #{stgcn_forward.1} parent=0 // loop_pre_header
    _
  $region3: #{stgcn_forward.1} parent=0 // loop_header
    %s29 = sphi 0, %s33
    %p30 = scmp.ge.s32.totalorder %s29, 4
    %s39 = sphi 0, %s41
    %s42 = sphi 0, %s39
    %s43 = sphi 0, %s42
    %s59 = sphi 0, %s43
    %s63 = sphi 0, %s63
    %s65 = sphi 0, %s63
    %s66 = sphi 0, %s65
    %s80 = sphi 0, %s66
    %s84 = sphi 0, %s84
    %s86 = sphi 0, %s84
    %s87 = sphi 0, %s86
    %s101 = sphi 0, %s87
    %s105 = sphi 0, %s105
    %s107 = sphi 0, %s105
    %s108 = sphi 0, %s107
    %s122 = sphi 0, %s108
    %s126 = sphi 0, %s126
    %s128 = sphi 0, %s126
    %s129 = sphi 0, %s128
    %s143 = sphi 0, %s129
    %s147 = sphi 0, %s147
    %s149 = sphi 0, %s147
    %s150 = sphi 0, %s149
    %s164 = sphi 0, %s150
    %s168 = sphi 0, %s168
    %s170 = sphi 0, %s168
    %s171 = sphi 0, %s170
    %s185 = sphi 0, %s171
    %s189 = sphi 0, %s189
    %s191 = sphi 0, %s189
    %s192 = sphi 0, %s191
    %s206 = sphi 0, %s192
    %s210 = sphi 0, %s210
    %s212 = sphi 0, %s210
    %s213 = sphi 0, %s212
    %s227 = sphi 0, %s213
    %s231 = sphi 0, %s231
    %s233 = sphi 0, %s231
    %s234 = sphi 0, %s233
    %s248 = sphi 0, %s234
    %s252 = sphi 0, %s252
    %s254 = sphi 0, %s252
    %s255 = sphi 0, %s254
    %s269 = sphi 0, %s255
    %s273 = sphi 0, %s273
    %s275 = sphi 0, %s273
    %s276 = sphi 0, %s275
    %s290 = sphi 0, %s276
    %s294 = sphi 0, %s294
    %s296 = sphi 0, %s294
    %s297 = sphi 0, %s296
    %s311 = sphi 0, %s297
    %s315 = sphi 0, %s315
    %s317 = sphi 0, %s315
    %s318 = sphi 0, %s317
    %s332 = sphi 0, %s318
    %s336 = sphi 0, %s336
    %s338 = sphi 0, %s336
    %s339 = sphi 0, %s338
    %s353 = sphi 0, %s339
    %s357 = sphi 0, %s357
    %s359 = sphi 0, %s357
    %s360 = sphi 0, %s359
    %s374 = sphi 0, %s360
    %s378 = sphi 0, %s378
    %s380 = sphi 0, %s378
    %s381 = sphi 0, %s380
    %s395 = sphi 0, %s381
    %s399 = sphi 0, %s399
    %s401 = sphi 0, %s399
    %s402 = sphi 0, %s401
    %s416 = sphi 0, %s402
    %s420 = sphi 0, %s420
    %s422 = sphi 0, %s420
    %s423 = sphi 0, %s422
    %s437 = sphi 0, %s423
    %s441 = sphi 0, %s441
    %s443 = sphi 0, %s441
    %s444 = sphi 0, %s443
    %s458 = sphi 0, %s444
    %s462 = sphi 0, %s462
    %s464 = sphi 0, %s462
    %s465 = sphi 0, %s464
    %s479 = sphi 0, %s465
    %s483 = sphi 0, %s483
    %s485 = sphi 0, %s483
    %s486 = sphi 0, %s485
    %s500 = sphi 0, %s486
    %s504 = sphi 0, %s504
    %s506 = sphi 0, %s504
    %s507 = sphi 0, %s506
    %s521 = sphi 0, %s507
    %s527 = sphi 0, %s529
    %s530 = sphi 0, %s527
    %s531 = sphi 0, %s530
    %s547 = sphi 0, %s531
  $region4: #{stgcn_forward.1} parent=0 // loop_header_branch
    %32 = sbr.rel (%p30) target = $region8
  $region5: #{stgcn_forward.1} parent=0 // loop_body
    %s34 = ssub.s32 %s29, 1
    %s35 = ssub.s32 %s29, 2
    %s36 = sadd.s32 %s29, 1
    %s37 = ssub.s32 %s29, %s36
    %p38 = scmp.eq.s32.totalorder %s37, 0
    %s40 = sadd.s32 %s39, 1
    %s41 = scalar_select %p38, %s39, %s40
    %p44 = pneg %p38
    %p45 = scmp.eq.s32.totalorder %s29, 1
    %p46 = por %p44, %p45
    %p47 = scmp.ne.s32.totalorder %s39, %s42
    %p48 = scmp.eq.s32.totalorder %s29, 0
    %p49 = por %p47, %p48
    %p50 = scmp.ne.s32.totalorder %s39, %s42
    %p51 = scmp.eq.s32.totalorder %s34, 1
    %p52 = por %p50, %p51
    %p53 = scmp.ne.s32.totalorder %s42, %s43
    %p54 = scmp.eq.s32.totalorder %s34, 0
    %p55 = por %p53, %p54
    %p56 = scmp.ne.s32.totalorder %s42, %s43
    %p57 = scmp.eq.s32.totalorder %s35, 1
    %p58 = por %p56, %p57
    %p60 = scmp.ne.s32.totalorder %s43, %s59
    %p61 = scmp.eq.s32.totalorder %s35, 0
    %p62 = por %p60, %p61
    %s64 = sadd.s32 %s63, 1
    %p67 = scmp.eq.s32.totalorder %s29, 1
    %p68 = scmp.ne.s32.totalorder %s63, %s65
    %p69 = scmp.eq.s32.totalorder %s29, 0
    %p70 = por %p68, %p69
    %p71 = scmp.ne.s32.totalorder %s63, %s65
    %p72 = scmp.eq.s32.totalorder %s34, 1
    %p73 = por %p71, %p72
    %p74 = scmp.ne.s32.totalorder %s65, %s66
    %p75 = scmp.eq.s32.totalorder %s34, 0
    %p76 = por %p74, %p75
    %p77 = scmp.ne.s32.totalorder %s65, %s66
    %p78 = scmp.eq.s32.totalorder %s35, 1
    %p79 = por %p77, %p78
    %p81 = scmp.ne.s32.totalorder %s66, %s80
    %p82 = scmp.eq.s32.totalorder %s35, 0
    %p83 = por %p81, %p82
    %s85 = sadd.s32 %s84, 1
    %p88 = scmp.eq.s32.totalorder %s29, 1
    %p89 = scmp.ne.s32.totalorder %s84, %s86
    %p90 = scmp.eq.s32.totalorder %s29, 0
    %p91 = por %p89, %p90
    %p92 = scmp.ne.s32.totalorder %s84, %s86
    %p93 = scmp.eq.s32.totalorder %s34, 1
    %p94 = por %p92, %p93
    %p95 = scmp.ne.s32.totalorder %s86, %s87
    %p96 = scmp.eq.s32.totalorder %s34, 0
    %p97 = por %p95, %p96
    %p98 = scmp.ne.s32.totalorder %s86, %s87
    %p99 = scmp.eq.s32.totalorder %s35, 1
    %p100 = por %p98, %p99
    %p102 = scmp.ne.s32.totalorder %s87, %s101
    %p103 = scmp.eq.s32.totalorder %s35, 0
    %p104 = por %p102, %p103
    %s106 = sadd.s32 %s105, 1
    %p109 = scmp.eq.s32.totalorder %s29, 1
    %p110 = scmp.ne.s32.totalorder %s105, %s107
    %p111 = scmp.eq.s32.totalorder %s29, 0
    %p112 = por %p110, %p111
    %p113 = scmp.ne.s32.totalorder %s105, %s107
    %p114 = scmp.eq.s32.totalorder %s34, 1
    %p115 = por %p113, %p114
    %p116 = scmp.ne.s32.totalorder %s107, %s108
    %p117 = scmp.eq.s32.totalorder %s34, 0
    %p118 = por %p116, %p117
    %p119 = scmp.ne.s32.totalorder %s107, %s108
    %p120 = scmp.eq.s32.totalorder %s35, 1
    %p121 = por %p119, %p120
    %p123 = scmp.ne.s32.totalorder %s108, %s122
    %p124 = scmp.eq.s32.totalorder %s35, 0
    %p125 = por %p123, %p124
    %s127 = sadd.s32 %s126, 1
    %p130 = scmp.eq.s32.totalorder %s29, 1
    %p131 = scmp.ne.s32.totalorder %s126, %s128
    %p132 = scmp.eq.s32.totalorder %s29, 0
    %p133 = por %p131, %p132
    %p134 = scmp.ne.s32.totalorder %s126, %s128
    %p135 = scmp.eq.s32.totalorder %s34, 1
    %p136 = por %p134, %p135
    %p137 = scmp.ne.s32.totalorder %s128, %s129
    %p138 = scmp.eq.s32.totalorder %s34, 0
    %p139 = por %p137, %p138
    %p140 = scmp.ne.s32.totalorder %s128, %s129
    %p141 = scmp.eq.s32.totalorder %s35, 1
    %p142 = por %p140, %p141
    %p144 = scmp.ne.s32.totalorder %s129, %s143
    %p145 = scmp.eq.s32.totalorder %s35, 0
    %p146 = por %p144, %p145
    %s148 = sadd.s32 %s147, 1
    %p151 = scmp.eq.s32.totalorder %s29, 1
    %p152 = scmp.ne.s32.totalorder %s147, %s149
    %p153 = scmp.eq.s32.totalorder %s29, 0
    %p154 = por %p152, %p153
    %p155 = scmp.ne.s32.totalorder %s147, %s149
    %p156 = scmp.eq.s32.totalorder %s34, 1
    %p157 = por %p155, %p156
    %p158 = scmp.ne.s32.totalorder %s149, %s150
    %p159 = scmp.eq.s32.totalorder %s34, 0
    %p160 = por %p158, %p159
    %p161 = scmp.ne.s32.totalorder %s149, %s150
    %p162 = scmp.eq.s32.totalorder %s35, 1
    %p163 = por %p161, %p162
    %p165 = scmp.ne.s32.totalorder %s150, %s164
    %p166 = scmp.eq.s32.totalorder %s35, 0
    %p167 = por %p165, %p166
    %s169 = sadd.s32 %s168, 1
    %p172 = scmp.eq.s32.totalorder %s29, 1
    %p173 = scmp.ne.s32.totalorder %s168, %s170
    %p174 = scmp.eq.s32.totalorder %s29, 0
    %p175 = por %p173, %p174
    %p176 = scmp.ne.s32.totalorder %s168, %s170
    %p177 = scmp.eq.s32.totalorder %s34, 1
    %p178 = por %p176, %p177
    %p179 = scmp.ne.s32.totalorder %s170, %s171
    %p180 = scmp.eq.s32.totalorder %s34, 0
    %p181 = por %p179, %p180
    %p182 = scmp.ne.s32.totalorder %s170, %s171
    %p183 = scmp.eq.s32.totalorder %s35, 1
    %p184 = por %p182, %p183
    %p186 = scmp.ne.s32.totalorder %s171, %s185
    %p187 = scmp.eq.s32.totalorder %s35, 0
    %p188 = por %p186, %p187
    %s190 = sadd.s32 %s189, 1
    %p193 = scmp.eq.s32.totalorder %s29, 1
    %p194 = scmp.ne.s32.totalorder %s189, %s191
    %p195 = scmp.eq.s32.totalorder %s29, 0
    %p196 = por %p194, %p195
    %p197 = scmp.ne.s32.totalorder %s189, %s191
    %p198 = scmp.eq.s32.totalorder %s34, 1
    %p199 = por %p197, %p198
    %p200 = scmp.ne.s32.totalorder %s191, %s192
    %p201 = scmp.eq.s32.totalorder %s34, 0
    %p202 = por %p200, %p201
    %p203 = scmp.ne.s32.totalorder %s191, %s192
    %p204 = scmp.eq.s32.totalorder %s35, 1
    %p205 = por %p203, %p204
    %p207 = scmp.ne.s32.totalorder %s192, %s206
    %p208 = scmp.eq.s32.totalorder %s35, 0
    %p209 = por %p207, %p208
    %s211 = sadd.s32 %s210, 1
    %p214 = scmp.eq.s32.totalorder %s29, 1
    %p215 = scmp.ne.s32.totalorder %s210, %s212
    %p216 = scmp.eq.s32.totalorder %s29, 0
    %p217 = por %p215, %p216
    %p218 = scmp.ne.s32.totalorder %s210, %s212
    %p219 = scmp.eq.s32.totalorder %s34, 1
    %p220 = por %p218, %p219
    %p221 = scmp.ne.s32.totalorder %s212, %s213
    %p222 = scmp.eq.s32.totalorder %s34, 0
    %p223 = por %p221, %p222
    %p224 = scmp.ne.s32.totalorder %s212, %s213
    %p225 = scmp.eq.s32.totalorder %s35, 1
    %p226 = por %p224, %p225
    %p228 = scmp.ne.s32.totalorder %s213, %s227
    %p229 = scmp.eq.s32.totalorder %s35, 0
    %p230 = por %p228, %p229
    %s232 = sadd.s32 %s231, 1
    %p235 = scmp.eq.s32.totalorder %s29, 1
    %p236 = scmp.ne.s32.totalorder %s231, %s233
    %p237 = scmp.eq.s32.totalorder %s29, 0
    %p238 = por %p236, %p237
    %p239 = scmp.ne.s32.totalorder %s231, %s233
    %p240 = scmp.eq.s32.totalorder %s34, 1
    %p241 = por %p239, %p240
    %p242 = scmp.ne.s32.totalorder %s233, %s234
    %p243 = scmp.eq.s32.totalorder %s34, 0
    %p244 = por %p242, %p243
    %p245 = scmp.ne.s32.totalorder %s233, %s234
    %p246 = scmp.eq.s32.totalorder %s35, 1
    %p247 = por %p245, %p246
    %p249 = scmp.ne.s32.totalorder %s234, %s248
    %p250 = scmp.eq.s32.totalorder %s35, 0
    %p251 = por %p249, %p250
    %s253 = sadd.s32 %s252, 1
    %p256 = scmp.eq.s32.totalorder %s29, 1
    %p257 = scmp.ne.s32.totalorder %s252, %s254
    %p258 = scmp.eq.s32.totalorder %s29, 0
    %p259 = por %p257, %p258
    %p260 = scmp.ne.s32.totalorder %s252, %s254
    %p261 = scmp.eq.s32.totalorder %s34, 1
    %p262 = por %p260, %p261
    %p263 = scmp.ne.s32.totalorder %s254, %s255
    %p264 = scmp.eq.s32.totalorder %s34, 0
    %p265 = por %p263, %p264
    %p266 = scmp.ne.s32.totalorder %s254, %s255
    %p267 = scmp.eq.s32.totalorder %s35, 1
    %p268 = por %p266, %p267
    %p270 = scmp.ne.s32.totalorder %s255, %s269
    %p271 = scmp.eq.s32.totalorder %s35, 0
    %p272 = por %p270, %p271
    %s274 = sadd.s32 %s273, 1
    %p277 = scmp.eq.s32.totalorder %s29, 1
    %p278 = scmp.ne.s32.totalorder %s273, %s275
    %p279 = scmp.eq.s32.totalorder %s29, 0
    %p280 = por %p278, %p279
    %p281 = scmp.ne.s32.totalorder %s273, %s275
    %p282 = scmp.eq.s32.totalorder %s34, 1
    %p283 = por %p281, %p282
    %p284 = scmp.ne.s32.totalorder %s275, %s276
    %p285 = scmp.eq.s32.totalorder %s34, 0
    %p286 = por %p284, %p285
    %p287 = scmp.ne.s32.totalorder %s275, %s276
    %p288 = scmp.eq.s32.totalorder %s35, 1
    %p289 = por %p287, %p288
    %p291 = scmp.ne.s32.totalorder %s276, %s290
    %p292 = scmp.eq.s32.totalorder %s35, 0
    %p293 = por %p291, %p292
    %s295 = sadd.s32 %s294, 1
    %p298 = scmp.eq.s32.totalorder %s29, 1
    %p299 = scmp.ne.s32.totalorder %s294, %s296
    %p300 = scmp.eq.s32.totalorder %s29, 0
    %p301 = por %p299, %p300
    %p302 = scmp.ne.s32.totalorder %s294, %s296
    %p303 = scmp.eq.s32.totalorder %s34, 1
    %p304 = por %p302, %p303
    %p305 = scmp.ne.s32.totalorder %s296, %s297
    %p306 = scmp.eq.s32.totalorder %s34, 0
    %p307 = por %p305, %p306
    %p308 = scmp.ne.s32.totalorder %s296, %s297
    %p309 = scmp.eq.s32.totalorder %s35, 1
    %p310 = por %p308, %p309
    %p312 = scmp.ne.s32.totalorder %s297, %s311
    %p313 = scmp.eq.s32.totalorder %s35, 0
    %p314 = por %p312, %p313
    %s316 = sadd.s32 %s315, 1
    %p319 = scmp.eq.s32.totalorder %s29, 1
    %p320 = scmp.ne.s32.totalorder %s315, %s317
    %p321 = scmp.eq.s32.totalorder %s29, 0
    %p322 = por %p320, %p321
    %p323 = scmp.ne.s32.totalorder %s315, %s317
    %p324 = scmp.eq.s32.totalorder %s34, 1
    %p325 = por %p323, %p324
    %p326 = scmp.ne.s32.totalorder %s317, %s318
    %p327 = scmp.eq.s32.totalorder %s34, 0
    %p328 = por %p326, %p327
    %p329 = scmp.ne.s32.totalorder %s317, %s318
    %p330 = scmp.eq.s32.totalorder %s35, 1
    %p331 = por %p329, %p330
    %p333 = scmp.ne.s32.totalorder %s318, %s332
    %p334 = scmp.eq.s32.totalorder %s35, 0
    %p335 = por %p333, %p334
    %s337 = sadd.s32 %s336, 1
    %p340 = scmp.eq.s32.totalorder %s29, 1
    %p341 = scmp.ne.s32.totalorder %s336, %s338
    %p342 = scmp.eq.s32.totalorder %s29, 0
    %p343 = por %p341, %p342
    %p344 = scmp.ne.s32.totalorder %s336, %s338
    %p345 = scmp.eq.s32.totalorder %s34, 1
    %p346 = por %p344, %p345
    %p347 = scmp.ne.s32.totalorder %s338, %s339
    %p348 = scmp.eq.s32.totalorder %s34, 0
    %p349 = por %p347, %p348
    %p350 = scmp.ne.s32.totalorder %s338, %s339
    %p351 = scmp.eq.s32.totalorder %s35, 1
    %p352 = por %p350, %p351
    %p354 = scmp.ne.s32.totalorder %s339, %s353
    %p355 = scmp.eq.s32.totalorder %s35, 0
    %p356 = por %p354, %p355
    %s358 = sadd.s32 %s357, 1
    %p361 = scmp.eq.s32.totalorder %s29, 1
    %p362 = scmp.ne.s32.totalorder %s357, %s359
    %p363 = scmp.eq.s32.totalorder %s29, 0
    %p364 = por %p362, %p363
    %p365 = scmp.ne.s32.totalorder %s357, %s359
    %p366 = scmp.eq.s32.totalorder %s34, 1
    %p367 = por %p365, %p366
    %p368 = scmp.ne.s32.totalorder %s359, %s360
    %p369 = scmp.eq.s32.totalorder %s34, 0
    %p370 = por %p368, %p369
    %p371 = scmp.ne.s32.totalorder %s359, %s360
    %p372 = scmp.eq.s32.totalorder %s35, 1
    %p373 = por %p371, %p372
    %p375 = scmp.ne.s32.totalorder %s360, %s374
    %p376 = scmp.eq.s32.totalorder %s35, 0
    %p377 = por %p375, %p376
    %s379 = sadd.s32 %s378, 1
    %p382 = scmp.eq.s32.totalorder %s29, 1
    %p383 = scmp.ne.s32.totalorder %s378, %s380
    %p384 = scmp.eq.s32.totalorder %s29, 0
    %p385 = por %p383, %p384
    %p386 = scmp.ne.s32.totalorder %s378, %s380
    %p387 = scmp.eq.s32.totalorder %s34, 1
    %p388 = por %p386, %p387
    %p389 = scmp.ne.s32.totalorder %s380, %s381
    %p390 = scmp.eq.s32.totalorder %s34, 0
    %p391 = por %p389, %p390
    %p392 = scmp.ne.s32.totalorder %s380, %s381
    %p393 = scmp.eq.s32.totalorder %s35, 1
    %p394 = por %p392, %p393
    %p396 = scmp.ne.s32.totalorder %s381, %s395
    %p397 = scmp.eq.s32.totalorder %s35, 0
    %p398 = por %p396, %p397
    %s400 = sadd.s32 %s399, 1
    %p403 = scmp.eq.s32.totalorder %s29, 1
    %p404 = scmp.ne.s32.totalorder %s399, %s401
    %p405 = scmp.eq.s32.totalorder %s29, 0
    %p406 = por %p404, %p405
    %p407 = scmp.ne.s32.totalorder %s399, %s401
    %p408 = scmp.eq.s32.totalorder %s34, 1
    %p409 = por %p407, %p408
    %p410 = scmp.ne.s32.totalorder %s401, %s402
    %p411 = scmp.eq.s32.totalorder %s34, 0
    %p412 = por %p410, %p411
    %p413 = scmp.ne.s32.totalorder %s401, %s402
    %p414 = scmp.eq.s32.totalorder %s35, 1
    %p415 = por %p413, %p414
    %p417 = scmp.ne.s32.totalorder %s402, %s416
    %p418 = scmp.eq.s32.totalorder %s35, 0
    %p419 = por %p417, %p418
    %s421 = sadd.s32 %s420, 1
    %p424 = scmp.eq.s32.totalorder %s29, 1
    %p425 = scmp.ne.s32.totalorder %s420, %s422
    %p426 = scmp.eq.s32.totalorder %s29, 0
    %p427 = por %p425, %p426
    %p428 = scmp.ne.s32.totalorder %s420, %s422
    %p429 = scmp.eq.s32.totalorder %s34, 1
    %p430 = por %p428, %p429
    %p431 = scmp.ne.s32.totalorder %s422, %s423
    %p432 = scmp.eq.s32.totalorder %s34, 0
    %p433 = por %p431, %p432
    %p434 = scmp.ne.s32.totalorder %s422, %s423
    %p435 = scmp.eq.s32.totalorder %s35, 1
    %p436 = por %p434, %p435
    %p438 = scmp.ne.s32.totalorder %s423, %s437
    %p439 = scmp.eq.s32.totalorder %s35, 0
    %p440 = por %p438, %p439
    %s442 = sadd.s32 %s441, 1
    %p445 = scmp.eq.s32.totalorder %s29, 1
    %p446 = scmp.ne.s32.totalorder %s441, %s443
    %p447 = scmp.eq.s32.totalorder %s29, 0
    %p448 = por %p446, %p447
    %p449 = scmp.ne.s32.totalorder %s441, %s443
    %p450 = scmp.eq.s32.totalorder %s34, 1
    %p451 = por %p449, %p450
    %p452 = scmp.ne.s32.totalorder %s443, %s444
    %p453 = scmp.eq.s32.totalorder %s34, 0
    %p454 = por %p452, %p453
    %p455 = scmp.ne.s32.totalorder %s443, %s444
    %p456 = scmp.eq.s32.totalorder %s35, 1
    %p457 = por %p455, %p456
    %p459 = scmp.ne.s32.totalorder %s444, %s458
    %p460 = scmp.eq.s32.totalorder %s35, 0
    %p461 = por %p459, %p460
    %s463 = sadd.s32 %s462, 1
    %p466 = scmp.eq.s32.totalorder %s29, 1
    %p467 = scmp.ne.s32.totalorder %s462, %s464
    %p468 = scmp.eq.s32.totalorder %s29, 0
    %p469 = por %p467, %p468
    %p470 = scmp.ne.s32.totalorder %s462, %s464
    %p471 = scmp.eq.s32.totalorder %s34, 1
    %p472 = por %p470, %p471
    %p473 = scmp.ne.s32.totalorder %s464, %s465
    %p474 = scmp.eq.s32.totalorder %s34, 0
    %p475 = por %p473, %p474
    %p476 = scmp.ne.s32.totalorder %s464, %s465
    %p477 = scmp.eq.s32.totalorder %s35, 1
    %p478 = por %p476, %p477
    %p480 = scmp.ne.s32.totalorder %s465, %s479
    %p481 = scmp.eq.s32.totalorder %s35, 0
    %p482 = por %p480, %p481
    %s484 = sadd.s32 %s483, 1
    %p487 = scmp.eq.s32.totalorder %s29, 1
    %p488 = scmp.ne.s32.totalorder %s483, %s485
    %p489 = scmp.eq.s32.totalorder %s29, 0
    %p490 = por %p488, %p489
    %p491 = scmp.ne.s32.totalorder %s483, %s485
    %p492 = scmp.eq.s32.totalorder %s34, 1
    %p493 = por %p491, %p492
    %p494 = scmp.ne.s32.totalorder %s485, %s486
    %p495 = scmp.eq.s32.totalorder %s34, 0
    %p496 = por %p494, %p495
    %p497 = scmp.ne.s32.totalorder %s485, %s486
    %p498 = scmp.eq.s32.totalorder %s35, 1
    %p499 = por %p497, %p498
    %p501 = scmp.ne.s32.totalorder %s486, %s500
    %p502 = scmp.eq.s32.totalorder %s35, 0
    %p503 = por %p501, %p502
    %s505 = sadd.s32 %s504, 1
    %p508 = scmp.eq.s32.totalorder %s29, 1
    %p509 = scmp.ne.s32.totalorder %s504, %s506
    %p510 = scmp.eq.s32.totalorder %s29, 0
    %p511 = por %p509, %p510
    %p512 = scmp.ne.s32.totalorder %s504, %s506
    %p513 = scmp.eq.s32.totalorder %s34, 1
    %p514 = por %p512, %p513
    %p515 = scmp.ne.s32.totalorder %s506, %s507
    %p516 = scmp.eq.s32.totalorder %s34, 0
    %p517 = por %p515, %p516
    %p518 = scmp.ne.s32.totalorder %s506, %s507
    %p519 = scmp.eq.s32.totalorder %s35, 1
    %p520 = por %p518, %p519
    %p522 = scmp.ne.s32.totalorder %s507, %s521
    %p523 = scmp.eq.s32.totalorder %s35, 0
    %p524 = por %p522, %p523
    %s525 = ssub.s32 %s29, %s36
    %p526 = scmp.eq.s32.totalorder %s525, 0
    %s528 = sadd.s32 %s527, 1
    %s529 = scalar_select %p526, %s527, %s528
    %p532 = pneg %p526
    %p533 = scmp.eq.s32.totalorder %s29, 1
    %p534 = por %p532, %p533
    %p535 = scmp.ne.s32.totalorder %s527, %s530
    %p536 = scmp.eq.s32.totalorder %s29, 0
    %p537 = por %p535, %p536
    %p538 = scmp.ne.s32.totalorder %s527, %s530
    %p539 = scmp.eq.s32.totalorder %s34, 1
    %p540 = por %p538, %p539
    %p541 = scmp.ne.s32.totalorder %s530, %s531
    %p542 = scmp.eq.s32.totalorder %s34, 0
    %p543 = por %p541, %p542
    %p544 = scmp.ne.s32.totalorder %s530, %s531
    %p545 = scmp.eq.s32.totalorder %s35, 1
    %p546 = por %p544, %p545
    %p548 = scmp.ne.s32.totalorder %s531, %s547
    %p549 = scmp.eq.s32.totalorder %s35, 0
    %p550 = por %p548, %p549
    %p551 = scmp.le.s32.totalorder 1, %s29
    %p552 = scmp.lt.s32.totalorder %s29, 3
    %p553 = pnand %p551, %p552
    %p554 = pneg %p553
    // Predicated region
    $region9: #{stgcn_forward.1} parent=5 // pred_check
      _
    $region10: #{stgcn_forward.1} parent=5 // pred_check_branch
      %556 = sbr.rel (%p553) target = $region12
    $region11: #{stgcn_forward.1} parent=5 // pred_region
      %s557 = ssub.s32 %s29, 1
      // Predicated region
      $region13: #{stgcn_forward.1} parent=11 // pred_check
        %p558 = pneg %p76
      $region14: #{stgcn_forward.1} parent=11 // pred_check_branch
        %560 = sbr.rel (%p558) target = $region16
      $region15: #{stgcn_forward.1} parent=11 // pred_region
        _
      $region16: #{stgcn_forward.1} parent=11 // pred_fallthru
        _
      // Predicated region
      $region17: #{stgcn_forward.1} parent=11 // pred_check
        %p561 = pneg %p97
      $region18: #{stgcn_forward.1} parent=11 // pred_check_branch
        %563 = sbr.rel (%p561) target = $region20
      $region19: #{stgcn_forward.1} parent=11 // pred_region
        _
      $region20: #{stgcn_forward.1} parent=11 // pred_fallthru
        _
      // Predicated region
      $region21: #{stgcn_forward.1} parent=11 // pred_check
        %p564 = pneg %p118
      $region22: #{stgcn_forward.1} parent=11 // pred_check_branch
        %566 = sbr.rel (%p564) target = $region24
      $region23: #{stgcn_forward.1} parent=11 // pred_region
        _
      $region24: #{stgcn_forward.1} parent=11 // pred_fallthru
        _
      // Predicated region
      $region25: #{stgcn_forward.1} parent=11 // pred_check
        %p567 = pneg %p139
      $region26: #{stgcn_forward.1} parent=11 // pred_check_branch
        %569 = sbr.rel (%p567) target = $region28
      $region27: #{stgcn_forward.1} parent=11 // pred_region
        _
      $region28: #{stgcn_forward.1} parent=11 // pred_fallthru
        _
      // Predicated region
      $region29: #{stgcn_forward.1} parent=11 // pred_check
        %p570 = pneg %p160
      $region30: #{stgcn_forward.1} parent=11 // pred_check_branch
        %572 = sbr.rel (%p570) target = $region32
      $region31: #{stgcn_forward.1} parent=11 // pred_region
        _
      $region32: #{stgcn_forward.1} parent=11 // pred_fallthru
        _
      // Predicated region
      $region33: #{stgcn_forward.1} parent=11 // pred_check
        %p573 = pneg %p181
      $region34: #{stgcn_forward.1} parent=11 // pred_check_branch
        %575 = sbr.rel (%p573) target = $region36
      $region35: #{stgcn_forward.1} parent=11 // pred_region
        _
      $region36: #{stgcn_forward.1} parent=11 // pred_fallthru
        _
      // Predicated region
      $region37: #{stgcn_forward.1} parent=11 // pred_check
        %p576 = pneg %p202
      $region38: #{stgcn_forward.1} parent=11 // pred_check_branch
        %578 = sbr.rel (%p576) target = $region40
      $region39: #{stgcn_forward.1} parent=11 // pred_region
        _
      $region40: #{stgcn_forward.1} parent=11 // pred_fallthru
        _
      // Predicated region
      $region41: #{stgcn_forward.1} parent=11 // pred_check
        %p579 = pneg %p223
      $region42: #{stgcn_forward.1} parent=11 // pred_check_branch
        %581 = sbr.rel (%p579) target = $region44
      $region43: #{stgcn_forward.1} parent=11 // pred_region
        _
      $region44: #{stgcn_forward.1} parent=11 // pred_fallthru
        _
      // Predicated region
      $region45: #{stgcn_forward.1} parent=11 // pred_check
        %p582 = pneg %p244
      $region46: #{stgcn_forward.1} parent=11 // pred_check_branch
        %584 = sbr.rel (%p582) target = $region48
      $region47: #{stgcn_forward.1} parent=11 // pred_region
        _
      $region48: #{stgcn_forward.1} parent=11 // pred_fallthru
        _
      // Predicated region
      $region49: #{stgcn_forward.1} parent=11 // pred_check
        %p585 = pneg %p265
      $region50: #{stgcn_forward.1} parent=11 // pred_check_branch
        %587 = sbr.rel (%p585) target = $region52
      $region51: #{stgcn_forward.1} parent=11 // pred_region
        _
      $region52: #{stgcn_forward.1} parent=11 // pred_fallthru
        _
      // Predicated region
      $region53: #{stgcn_forward.1} parent=11 // pred_check
        %p588 = pneg %p286
      $region54: #{stgcn_forward.1} parent=11 // pred_check_branch
        %590 = sbr.rel (%p588) target = $region56
      $region55: #{stgcn_forward.1} parent=11 // pred_region
        _
      $region56: #{stgcn_forward.1} parent=11 // pred_fallthru
        _
      // Predicated region
      $region57: #{stgcn_forward.1} parent=11 // pred_check
        %p591 = pneg %p307
      $region58: #{stgcn_forward.1} parent=11 // pred_check_branch
        %593 = sbr.rel (%p591) target = $region60
      $region59: #{stgcn_forward.1} parent=11 // pred_region
        _
      $region60: #{stgcn_forward.1} parent=11 // pred_fallthru
        _
      // Predicated region
      $region61: #{stgcn_forward.1} parent=11 // pred_check
        %p594 = pneg %p328
      $region62: #{stgcn_forward.1} parent=11 // pred_check_branch
        %596 = sbr.rel (%p594) target = $region64
      $region63: #{stgcn_forward.1} parent=11 // pred_region
        _
      $region64: #{stgcn_forward.1} parent=11 // pred_fallthru
        _
      // Predicated region
      $region65: #{stgcn_forward.1} parent=11 // pred_check
        %p597 = pneg %p349
      $region66: #{stgcn_forward.1} parent=11 // pred_check_branch
        %599 = sbr.rel (%p597) target = $region68
      $region67: #{stgcn_forward.1} parent=11 // pred_region
        _
      $region68: #{stgcn_forward.1} parent=11 // pred_fallthru
        _
      // Predicated region
      $region69: #{stgcn_forward.1} parent=11 // pred_check
        %p600 = pneg %p370
      $region70: #{stgcn_forward.1} parent=11 // pred_check_branch
        %602 = sbr.rel (%p600) target = $region72
      $region71: #{stgcn_forward.1} parent=11 // pred_region
        _
      $region72: #{stgcn_forward.1} parent=11 // pred_fallthru
        _
      // Predicated region
      $region73: #{stgcn_forward.1} parent=11 // pred_check
        %p603 = pneg %p391
      $region74: #{stgcn_forward.1} parent=11 // pred_check_branch
        %605 = sbr.rel (%p603) target = $region76
      $region75: #{stgcn_forward.1} parent=11 // pred_region
        _
      $region76: #{stgcn_forward.1} parent=11 // pred_fallthru
        _
      // Predicated region
      $region77: #{stgcn_forward.1} parent=11 // pred_check
        %p606 = pneg %p412
      $region78: #{stgcn_forward.1} parent=11 // pred_check_branch
        %608 = sbr.rel (%p606) target = $region80
      $region79: #{stgcn_forward.1} parent=11 // pred_region
        _
      $region80: #{stgcn_forward.1} parent=11 // pred_fallthru
        _
      // Predicated region
      $region81: #{stgcn_forward.1} parent=11 // pred_check
        %p609 = pneg %p433
      $region82: #{stgcn_forward.1} parent=11 // pred_check_branch
        %611 = sbr.rel (%p609) target = $region84
      $region83: #{stgcn_forward.1} parent=11 // pred_region
        _
      $region84: #{stgcn_forward.1} parent=11 // pred_fallthru
        _
      // Predicated region
      $region85: #{stgcn_forward.1} parent=11 // pred_check
        %p612 = pneg %p454
      $region86: #{stgcn_forward.1} parent=11 // pred_check_branch
        %614 = sbr.rel (%p612) target = $region88
      $region87: #{stgcn_forward.1} parent=11 // pred_region
        _
      $region88: #{stgcn_forward.1} parent=11 // pred_fallthru
        _
      // Predicated region
      $region89: #{stgcn_forward.1} parent=11 // pred_check
        %p615 = pneg %p475
      $region90: #{stgcn_forward.1} parent=11 // pred_check_branch
        %617 = sbr.rel (%p615) target = $region92
      $region91: #{stgcn_forward.1} parent=11 // pred_region
        _
      $region92: #{stgcn_forward.1} parent=11 // pred_fallthru
        _
      // Predicated region
      $region93: #{stgcn_forward.1} parent=11 // pred_check
        %p618 = pneg %p496
      $region94: #{stgcn_forward.1} parent=11 // pred_check_branch
        %620 = sbr.rel (%p618) target = $region96
      $region95: #{stgcn_forward.1} parent=11 // pred_region
        _
      $region96: #{stgcn_forward.1} parent=11 // pred_fallthru
        _
      // Predicated region
      $region97: #{stgcn_forward.1} parent=11 // pred_check
        %p621 = pneg %p517
      $region98: #{stgcn_forward.1} parent=11 // pred_check_branch
        %623 = sbr.rel (%p621) target = $region100
      $region99: #{stgcn_forward.1} parent=11 // pred_region
        _
      $region100: #{stgcn_forward.1} parent=11 // pred_fallthru
        _
    $region12: #{stgcn_forward.1} parent=5 // pred_fallthru
      _
    %p624 = scmp.lt.s32.totalorder %s29, 2
    // Predicated region
    $region101: #{stgcn_forward.1} parent=5 // pred_check
      %p625 = pneg %p624
    $region102: #{stgcn_forward.1} parent=5 // pred_check_branch
      %627 = sbr.rel (%p625) target = $region104
    $region103: #{stgcn_forward.1} parent=5 // pred_region
      // Predicated region
      $region105: #{stgcn_forward.1} parent=103 // pred_check
        %p628 = pneg %p49
      $region106: #{stgcn_forward.1} parent=103 // pred_check_branch
        %630 = sbr.rel (%p628) target = $region108
      $region107: #{stgcn_forward.1} parent=103 // pred_region
        %p631 = scmp.lt.s32.totalorder %s29, 1
        %s632 = scalar_select %p631, %s29, 1
        %s633 = smul.addr %s632, 28
        %s634 = smul.addr %s633, 8
        %s635 = scalar_lea.vmem %s0, %s634
      $region108: #{stgcn_forward.1} parent=103 // pred_fallthru
        _
    $region104: #{stgcn_forward.1} parent=5 // pred_fallthru
      _
    %p636 = scmp.le.s32.totalorder 1, %s29
    %p637 = scmp.lt.s32.totalorder %s29, 3
    %p638 = pnand %p636, %p637
    %p639 = pneg %p638
    // Predicated region
    $region109: #{stgcn_forward.1} parent=5 // pred_check
      _
    $region110: #{stgcn_forward.1} parent=5 // pred_check_branch
      %641 = sbr.rel (%p638) target = $region112
    $region111: #{stgcn_forward.1} parent=5 // pred_region
      %s642 = ssub.s32 %s29, 1
      %p643 = scmp.lt.s32.totalorder %s34, 1
      %s644 = scalar_select %p643, %s34, 1
      %s645 = smul.addr %s644, 28
      %s646 = smul.addr %s645, 8
      %s647 = scalar_lea.vmem %s0, %s646
      %p648 = pneg %p55
      %p649 = pneg %p52
      %p650 = pneg %p76
      %p651 = pneg %p73
      %p652 = pneg %p97
      %p653 = pneg %p94
      %p654 = pneg %p118
      %p655 = pneg %p115
      %p656 = pneg %p139
      %p657 = pneg %p136
      %p658 = pneg %p160
      %p659 = pneg %p157
      %p660 = pneg %p181
      %p661 = pneg %p178
      %p662 = pneg %p202
      %p663 = pneg %p199
      %p664 = pneg %p223
      %p665 = pneg %p220
      %p666 = pneg %p244
      %p667 = pneg %p241
      %p668 = pneg %p265
      %p669 = pneg %p262
      %p670 = pneg %p286
      %p671 = pneg %p283
      %p672 = pneg %p307
      %p673 = pneg %p304
      %p674 = pneg %p328
      %p675 = pneg %p325
      %p676 = pneg %p349
      %p677 = pneg %p346
      %p678 = pneg %p370
      %p679 = pneg %p367
      %p680 = pneg %p391
      %p681 = pneg %p388
      %p682 = pneg %p412
      %p683 = pneg %p409
      %p684 = pneg %p433
      %p685 = pneg %p430
      %p686 = pneg %p454
      %p687 = pneg %p451
      %p688 = pneg %p475
      %p689 = pneg %p472
      %p690 = pneg %p496
      %p691 = pneg %p493
      %p692 = pneg %p517
      %p693 = pneg %p514
      %p694 = pneg %p543
      %p695 = pneg %p540
      %s696 = smul.u32 2, %s34
      %p697 = scmp.lt.s32.totalorder %s696, 3
      %s698 = scalar_select %p697, %s696, 3
      %s699 = smul.addr %s698, 8
      %s700 = scalar_lea.vmem %s23, %s699
      %p701 = scmp.lt.s32.totalorder %s34, 1
      %s702 = scalar_select %p701, %s34, 1
      %s703 = smul.addr %s702, 28
      %s704 = smul.addr %s703, 8
      %s705 = scalar_lea.vmem %s0, %s704
      %s706 = smul.u32 2, %s34
      %p707 = scmp.lt.s32.totalorder %s706, 3
      %s708 = scalar_select %p707, %s706, 3
      %s709 = smul.addr %s708, 8
      %s710 = scalar_lea.vmem %s23, %s709
      %s711 = smul.u32 2, %s34
      %v713 = vld [vmem:[%s705] sm:$0xff]
      %v714 = vld [vmem:[%s705 + $0x8] sm:$0xff]
      %v715 = vld [vmem:[%s705 + $0x10] sm:$0xff]
      %v716 = vld [vmem:[%s705 + $0x18] sm:$0xff]
      %v717 = vld [vmem:[%s705 + $0x20] sm:$0xff]
      %v718 = vld [vmem:[%s705 + $0x28] sm:$0xff]
      %v719 = vld [vmem:[%s705 + $0x30] sm:$0xff]
      %v720 = vld [vmem:[%s705 + $0x38] sm:$0xff]
      %v721 = vld [vmem:[%s705 + $0x40] sm:$0xff]
      %v722 = vld [vmem:[%s705 + $0x48] sm:$0xff]
      %v723 = vld [vmem:[%s705 + $0x50] sm:$0xff]
      %v724 = vld [vmem:[%s705 + $0x58] sm:$0xff]
      %v725 = vld [vmem:[%s705 + $0x60] sm:$0xff]
      %v726 = vld [vmem:[%s705 + $0x68] sm:$0xff]
      %v727 = vld [vmem:[%s705 + $0x70] sm:$0xff]
      %v728 = vld [vmem:[%s705 + $0x78] sm:$0xff]
      %v729 = vld [vmem:[%s705 + $0x80] sm:$0xff]
      %v730 = vld [vmem:[%s705 + $0x88] sm:$0xff]
      %v731 = vld [vmem:[%s705 + $0x90] sm:$0xff]
      %v732 = vld [vmem:[%s705 + $0x98] sm:$0xff]
      %v733 = vld [vmem:[%s705 + $0xa0] sm:$0xff]
      %v734 = vld [vmem:[%s705 + $0xa8] sm:$0xff]
      %v735 = vld [vmem:[%s705 + $0xb0] sm:$0xff]
      %v736 = vld [vmem:[%s705 + $0xb8] sm:$0xff]
      %v737 = vld [vmem:[%s705 + $0xc0] sm:$0xff]
      %v738 = vld [vmem:[%s705 + $0xc8] sm:$0xff]
      %v739 = vld [vmem:[%s705 + $0xd0] sm:$0xff]
      %v740 = vld [vmem:[%s705 + $0xd8] sm:$0xff]
      %v741 = vpack.c.bf16 %v714, %v713
      %v742 = vpack.c.bf16 %v716, %v715
      %v743 = vpack.c.bf16 %v718, %v717
      %v744 = vpack.c.bf16 %v720, %v719
      %v745 = vpack.c.bf16 %v722, %v721
      %v746 = vpack.c.bf16 %v724, %v723
      %v747 = vpack.c.bf16 %v726, %v725
      %v748 = vpack.c.bf16 %v728, %v727
      %v749 = vpack.c.bf16 %v730, %v729
      %v750 = vpack.c.bf16 %v732, %v731
      %v751 = vpack.c.bf16 %v734, %v733
      %v752 = vpack.c.bf16 %v736, %v735
      %v753 = vpack.c.bf16 %v738, %v737
      %v754 = vpack.c.bf16 %v740, %v739
      %v755 = vld [vmem:[%s1] sm:$0xff]
      %v756 = vld [vmem:[%s1 + $0x8] sm:$0xff]
      %v757 = vld [vmem:[%s1 + $0x10] sm:$0xff]
      %v758 = vld [vmem:[%s2] sm:$0x3]
      %v760 = vlaneseq
      %v761 = vshrl.u32 %v760, 7
      %v762 = vsub.s32 0, %v761
      %v763 = vrot.slane %v758, %v762
      %v764 = vlaneseq
      %v765 = vshrl.u32 %v764, 7
      %v766 = vsub.s32 1, %v765
      %v767 = vrot.slane %v758, %v766
      %v773 = vunpack.c.l.b16 %v755
      %v774 = vunpack.c.h.b16 %v755
      %v775 = vunpack.c.l.b16 %v756
      %v776 = vunpack.c.h.b16 %v756
      %v777 = vunpack.c.l.b16 %v757
      %v778 = vunpack.c.h.b16 %v757
      %v779 = vpack.c.b16 %v775, %v773
      %v780 = vpack.c.b16 %v776, %v774
      %v781 = vpack.c.b16 %v777, %v777
      %v782 = vpack.c.b16 %v778, %v778
      %vm785 = vcmask 195584
      %v787 = vsel %vm785, %v741, 0
      %v790 = vsel %vm785, %v742, 0
      %v793 = vsel %vm785, %v743, 0
      %v796 = vsel %vm785, %v744, 0
      %v799 = vsel %vm785, %v745, 0
      %v802 = vsel %vm785, %v746, 0
      %v805 = vsel %vm785, %v747, 0
      %v808 = vsel %vm785, %v748, 0
      %v811 = vsel %vm785, %v749, 0
      %v814 = vsel %vm785, %v750, 0
      %v817 = vsel %vm785, %v751, 0
      %v820 = vsel %vm785, %v752, 0
      %v823 = vsel %vm785, %v753, 0
      %v826 = vsel %vm785, %v754, 0
      %vm828 = vcmask 1043456
      %v830 = vsel %vm828, %v781, 0
      %v833 = vsel %vm828, %v782, 0
      %835 = vmatprep.subr.bf16.mxu0 0
      %836 = vmatpush1.bf16.msra.mxu0 0
      %837 = vmatprep.subr.bf16.mxu0 0
      %838 = vmatpush1.bf16.msra.mxu0 0
      %839 = vmatprep.subr.bf16.mxu0 0
      %840 = vmatpush1.bf16.msra.mxu0 0
      %841 = vmatprep.subr.bf16.mxu0 0
      %842 = vmatpush1.bf16.msra.mxu0 0
      %843 = vmatprep.subr.bf16.mxu0 0
      %844 = vmatpush1.bf16.msra.mxu0 0
      %845 = vmatprep.subr.bf16.mxu0 0
      %846 = vmatpush1.bf16.msra.mxu0 0
      %847 = vmatprep.subr.bf16.mxu0 %v833
      %848 = vmatpush1.bf16.msra.mxu0 %v830
      %849 = vmatprep.subr.bf16.mxu0 %v780
      %850 = vmatpush1.bf16.msra.mxu0 %v779
      %851 = vmatprep.subr.bf16.mxu0 0
      %852 = vmatpush2.bf16.msra.mxu0 0
      %853 = vmatprep.subr.bf16.mxu0 0
      %854 = vmatpush2.bf16.msra.mxu0 0
      %855 = vmatprep.subr.bf16.mxu0 0
      %856 = vmatpush2.bf16.msra.mxu0 0
      %857 = vmatprep.subr.bf16.mxu0 0
      %858 = vmatpush2.bf16.msra.mxu0 0
      %859 = vmatprep.subr.bf16.mxu0 0
      %860 = vmatpush2.bf16.msra.mxu0 0
      %861 = vmatprep.subr.bf16.mxu0 0
      %862 = vmatpush2.bf16.msra.mxu0 0
      %863 = vmatprep.subr.bf16.mxu0 0
      %864 = vmatpush2.bf16.msra.mxu0 0
      %865 = vmatprep.subr.bf16.mxu0 0
      %866 = vmatpush2.bf16.msra.mxu0 0
      %867 = vmatprep.mubr.bf16.mxu0 0
      %868 = vmatmul.mubr.bf16.gmra.mxu0 %v787
      %v869 = vpop.f32.mrf.mxu0
      %v870 = vadd.f32 %v763, %v869
      %v871 = vpop.f32.mrf.mxu0
      %v872 = vadd.f32 %v767, %v871
      %v873 = vpop.f32.mrf.mxu0
      %v874 = vadd.f32 %v763, %v873
      %v875 = vpop.f32.mrf.mxu0
      %v876 = vadd.f32 %v767, %v875
      %877 = vmatprep.mubr.bf16.mxu0 0
      %878 = vmatmul.mubr.bf16.gmra.mxu0 %v790
      %v879 = vpop.f32.mrf.mxu0
      %v880 = vadd.f32 %v763, %v879
      %v881 = vpop.f32.mrf.mxu0
      %v882 = vadd.f32 %v767, %v881
      %v883 = vpop.f32.mrf.mxu0
      %v884 = vadd.f32 %v763, %v883
      %v885 = vpop.f32.mrf.mxu0
      %v886 = vadd.f32 %v767, %v885
      %887 = vmatprep.mubr.bf16.mxu0 0
      %888 = vmatmul.mubr.bf16.gmra.mxu0 %v793
      %v889 = vpop.f32.mrf.mxu0
      %v890 = vadd.f32 %v763, %v889
      %v891 = vpop.f32.mrf.mxu0
      %v892 = vadd.f32 %v767, %v891
      %v893 = vpop.f32.mrf.mxu0
      %v894 = vadd.f32 %v763, %v893
      %v895 = vpop.f32.mrf.mxu0
      %v896 = vadd.f32 %v767, %v895
      %897 = vmatprep.mubr.bf16.mxu0 0
      %898 = vmatmul.mubr.bf16.gmra.mxu0 %v796
      %v899 = vpop.f32.mrf.mxu0
      %v900 = vadd.f32 %v763, %v899
      %v901 = vpop.f32.mrf.mxu0
      %v902 = vadd.f32 %v767, %v901
      %v903 = vpop.f32.mrf.mxu0
      %v904 = vadd.f32 %v763, %v903
      %v905 = vpop.f32.mrf.mxu0
      %v906 = vadd.f32 %v767, %v905
      %907 = vmatprep.mubr.bf16.mxu0 0
      %908 = vmatmul.mubr.bf16.gmra.mxu0 %v799
      %v909 = vpop.f32.mrf.mxu0
      %v910 = vadd.f32 %v763, %v909
      %v911 = vpop.f32.mrf.mxu0
      %v912 = vadd.f32 %v767, %v911
      %v913 = vpop.f32.mrf.mxu0
      %v914 = vadd.f32 %v763, %v913
      %v915 = vpop.f32.mrf.mxu0
      %v916 = vadd.f32 %v767, %v915
      %917 = vmatprep.mubr.bf16.mxu0 0
      %918 = vmatmul.mubr.bf16.gmra.mxu0 %v802
      %v919 = vpop.f32.mrf.mxu0
      %v920 = vadd.f32 %v763, %v919
      %v921 = vpop.f32.mrf.mxu0
      %v922 = vadd.f32 %v767, %v921
      %v923 = vpop.f32.mrf.mxu0
      %v924 = vadd.f32 %v763, %v923
      %v925 = vpop.f32.mrf.mxu0
      %v926 = vadd.f32 %v767, %v925
      %927 = vmatprep.mubr.bf16.mxu0 0
      %928 = vmatmul.mubr.bf16.gmra.mxu0 %v805
      %v929 = vpop.f32.mrf.mxu0
      %v930 = vadd.f32 %v763, %v929
      %v931 = vpop.f32.mrf.mxu0
      %v932 = vadd.f32 %v767, %v931
      %v933 = vpop.f32.mrf.mxu0
      %v934 = vadd.f32 %v763, %v933
      %v935 = vpop.f32.mrf.mxu0
      %v936 = vadd.f32 %v767, %v935
      %937 = vmatprep.mubr.bf16.mxu0 0
      %938 = vmatmul.mubr.bf16.gmra.mxu0 %v808
      %v939 = vpop.f32.mrf.mxu0
      %v940 = vadd.f32 %v763, %v939
      %v941 = vpop.f32.mrf.mxu0
      %v942 = vadd.f32 %v767, %v941
      %v943 = vpop.f32.mrf.mxu0
      %v944 = vadd.f32 %v763, %v943
      %v945 = vpop.f32.mrf.mxu0
      %v946 = vadd.f32 %v767, %v945
      %947 = vmatprep.mubr.bf16.mxu0 0
      %948 = vmatmul.mubr.bf16.gmra.mxu0 %v811
      %v949 = vpop.f32.mrf.mxu0
      %v950 = vadd.f32 %v763, %v949
      %v951 = vpop.f32.mrf.mxu0
      %v952 = vadd.f32 %v767, %v951
      %v953 = vpop.f32.mrf.mxu0
      %v954 = vadd.f32 %v763, %v953
      %v955 = vpop.f32.mrf.mxu0
      %v956 = vadd.f32 %v767, %v955
      %957 = vmatprep.mubr.bf16.mxu0 0
      %958 = vmatmul.mubr.bf16.gmra.mxu0 %v814
      %v959 = vpop.f32.mrf.mxu0
      %v960 = vadd.f32 %v763, %v959
      %v961 = vpop.f32.mrf.mxu0
      %v962 = vadd.f32 %v767, %v961
      %v963 = vpop.f32.mrf.mxu0
      %v964 = vadd.f32 %v763, %v963
      %v965 = vpop.f32.mrf.mxu0
      %v966 = vadd.f32 %v767, %v965
      %967 = vmatprep.mubr.bf16.mxu0 0
      %968 = vmatmul.mubr.bf16.gmra.mxu0 %v817
      %v969 = vpop.f32.mrf.mxu0
      %v970 = vadd.f32 %v763, %v969
      %v971 = vpop.f32.mrf.mxu0
      %v972 = vadd.f32 %v767, %v971
      %v973 = vpop.f32.mrf.mxu0
      %v974 = vadd.f32 %v763, %v973
      %v975 = vpop.f32.mrf.mxu0
      %v976 = vadd.f32 %v767, %v975
      %977 = vmatprep.mubr.bf16.mxu0 0
      %978 = vmatmul.mubr.bf16.gmra.mxu0 %v820
      %v979 = vpop.f32.mrf.mxu0
      %v980 = vadd.f32 %v763, %v979
      %v981 = vpop.f32.mrf.mxu0
      %v982 = vadd.f32 %v767, %v981
      %v983 = vpop.f32.mrf.mxu0
      %v984 = vadd.f32 %v763, %v983
      %v985 = vpop.f32.mrf.mxu0
      %v986 = vadd.f32 %v767, %v985
      %987 = vmatprep.mubr.bf16.mxu0 0
      %988 = vmatmul.mubr.bf16.gmra.mxu0 %v823
      %v989 = vpop.f32.mrf.mxu0
      %v990 = vadd.f32 %v763, %v989
      %v991 = vpop.f32.mrf.mxu0
      %v992 = vadd.f32 %v767, %v991
      %v993 = vpop.f32.mrf.mxu0
      %v994 = vadd.f32 %v763, %v993
      %v995 = vpop.f32.mrf.mxu0
      %v996 = vadd.f32 %v767, %v995
      %997 = vmatprep.mubr.bf16.mxu0 0
      %998 = vmatmul.mubr.bf16.gmra.mxu0 %v826
      %v999 = vpop.f32.mrf.mxu0
      %v1000 = vadd.f32 %v763, %v999
      %v1001 = vpop.f32.mrf.mxu0
      %v1002 = vadd.f32 %v767, %v1001
      %v1003 = vpop.f32.mrf.mxu0
      %v1004 = vadd.f32 %v763, %v1003
      %v1005 = vpop.f32.mrf.mxu0
      %v1006 = vadd.f32 %v767, %v1005
      %1007 = vdwg.mxu0
      %v1008 = vmax.f32 %v870, 0.0
      %v1009 = vmax.f32 %v872, 0.0
      %v1010 = vmax.f32 %v874, 0.0
      %v1011 = vmax.f32 %v876, 0.0
      %v1012 = vmax.f32 %v880, 0.0
      %v1013 = vmax.f32 %v882, 0.0
      %v1014 = vmax.f32 %v884, 0.0
      %v1015 = vmax.f32 %v886, 0.0
      %v1016 = vmax.f32 %v890, 0.0
      %v1017 = vmax.f32 %v892, 0.0
      %v1018 = vmax.f32 %v894, 0.0
      %v1019 = vmax.f32 %v896, 0.0
      %v1020 = vmax.f32 %v900, 0.0
      %v1021 = vmax.f32 %v902, 0.0
      %v1022 = vmax.f32 %v904, 0.0
      %v1023 = vmax.f32 %v906, 0.0
      %v1024 = vmax.f32 %v910, 0.0
      %v1025 = vmax.f32 %v912, 0.0
      %v1026 = vmax.f32 %v914, 0.0
      %v1027 = vmax.f32 %v916, 0.0
      %v1028 = vmax.f32 %v920, 0.0
      %v1029 = vmax.f32 %v922, 0.0
      %v1030 = vmax.f32 %v924, 0.0
      %v1031 = vmax.f32 %v926, 0.0
      %v1032 = vmax.f32 %v930, 0.0
      %v1033 = vmax.f32 %v932, 0.0
      %v1034 = vmax.f32 %v934, 0.0
      %v1035 = vmax.f32 %v936, 0.0
      %v1036 = vmax.f32 %v940, 0.0
      %v1037 = vmax.f32 %v942, 0.0
      %v1038 = vmax.f32 %v944, 0.0
      %v1039 = vmax.f32 %v946, 0.0
      %v1040 = vmax.f32 %v950, 0.0
      %v1041 = vmax.f32 %v952, 0.0
      %v1042 = vmax.f32 %v954, 0.0
      %v1043 = vmax.f32 %v956, 0.0
      %v1044 = vmax.f32 %v960, 0.0
      %v1045 = vmax.f32 %v962, 0.0
      %v1046 = vmax.f32 %v964, 0.0
      %v1047 = vmax.f32 %v966, 0.0
      %v1048 = vmax.f32 %v970, 0.0
      %v1049 = vmax.f32 %v972, 0.0
      %v1050 = vmax.f32 %v974, 0.0
      %v1051 = vmax.f32 %v976, 0.0
      %v1052 = vmax.f32 %v980, 0.0
      %v1053 = vmax.f32 %v982, 0.0
      %v1054 = vmax.f32 %v984, 0.0
      %v1055 = vmax.f32 %v986, 0.0
      %v1056 = vmax.f32 %v990, 0.0
      %v1057 = vmax.f32 %v992, 0.0
      %v1058 = vmax.f32 %v994, 0.0
      %v1059 = vmax.f32 %v996, 0.0
      %v1060 = vmax.f32 %v1000, 0.0
      %v1061 = vmax.f32 %v1002, 0.0
      %v1062 = vmax.f32 %v1004, 0.0
      %v1063 = vmax.f32 %v1006, 0.0
      %v1064 = vpack.c.bf16 %v1010, %v1008
      %v1065 = vpack.c.bf16 %v1011, %v1009
      %v1066 = vpack.c.bf16 %v1014, %v1012
      %v1067 = vpack.c.bf16 %v1015, %v1013
      %v1068 = vpack.c.bf16 %v1018, %v1016
      %v1069 = vpack.c.bf16 %v1019, %v1017
      %v1070 = vpack.c.bf16 %v1022, %v1020
      %v1071 = vpack.c.bf16 %v1023, %v1021
      %v1072 = vpack.c.bf16 %v1026, %v1024
      %v1073 = vpack.c.bf16 %v1027, %v1025
      %v1074 = vpack.c.bf16 %v1030, %v1028
      %v1075 = vpack.c.bf16 %v1031, %v1029
      %v1076 = vpack.c.bf16 %v1034, %v1032
      %v1077 = vpack.c.bf16 %v1035, %v1033
      %v1078 = vpack.c.bf16 %v1038, %v1036
      %v1079 = vpack.c.bf16 %v1039, %v1037
      %v1080 = vpack.c.bf16 %v1042, %v1040
      %v1081 = vpack.c.bf16 %v1043, %v1041
      %v1082 = vpack.c.bf16 %v1046, %v1044
      %v1083 = vpack.c.bf16 %v1047, %v1045
      %v1084 = vpack.c.bf16 %v1050, %v1048
      %v1085 = vpack.c.bf16 %v1051, %v1049
      %v1086 = vpack.c.bf16 %v1054, %v1052
      %v1087 = vpack.c.bf16 %v1055, %v1053
      %v1088 = vpack.c.bf16 %v1058, %v1056
      %v1089 = vpack.c.bf16 %v1059, %v1057
      %v1090 = vpack.c.bf16 %v1062, %v1060
      %v1091 = vpack.c.bf16 %v1063, %v1061
      %v1092 = vld [vmem:[%s3] sm:$0xff]
      %v1093 = vld [vmem:[%s3 + $0x8] sm:$0xff]
      %v1094 = vld [vmem:[%s3 + $0x10] sm:$0xff]
      %v1095 = vld [vmem:[%s3 + $0x18] sm:$0xff]
      %v1096 = vld [vmem:[%s3 + $0x20] sm:$0xff]
      %v1097 = vld [vmem:[%s3 + $0x28] sm:$0xff]
      %v1098 = vld [vmem:[%s3 + $0x30] sm:$0xff]
      %v1099 = vld [vmem:[%s3 + $0x38] sm:$0xff]
      %v1100 = vld [vmem:[%s3 + $0x40] sm:$0xff]
      %v1101 = vld [vmem:[%s3 + $0x48] sm:$0xff]
      %v1102 = vld [vmem:[%s3 + $0x50] sm:$0xff]
      %v1103 = vld [vmem:[%s3 + $0x58] sm:$0xff]
      %v1104 = vld [vmem:[%s3 + $0x60] sm:$0xff]
      %v1105 = vld [vmem:[%s3 + $0x68] sm:$0xff]
      %v1106 = vld [vmem:[%s3 + $0x70] sm:$0xff]
      %v1107 = vld [vmem:[%s3 + $0x78] sm:$0xff]
      %v1108 = vld [vmem:[%s3 + $0x80] sm:$0xff]
      %v1109 = vld [vmem:[%s3 + $0x88] sm:$0xff]
      %v1110 = vld [vmem:[%s3 + $0x90] sm:$0xff]
      %v1111 = vld [vmem:[%s3 + $0x98] sm:$0xff]
      %v1112 = vld [vmem:[%s3 + $0xa0] sm:$0xff]
      %v1113 = vld [vmem:[%s3 + $0xa8] sm:$0xff]
      %v1114 = vld [vmem:[%s3 + $0xb0] sm:$0xff]
      %v1115 = vld [vmem:[%s3 + $0xb8] sm:$0xff]
      %v1116 = vld [vmem:[%s3 + $0xc0] sm:$0xff]
      %v1117 = vld [vmem:[%s3 + $0xc8] sm:$0xff]
      %v1118 = vld [vmem:[%s3 + $0xd0] sm:$0xff]
      %v1119 = vld [vmem:[%s3 + $0xd8] sm:$0xff]
      %v1120 = vld [vmem:[%s3 + $0xe0] sm:$0xff]
      %v1121 = vld [vmem:[%s3 + $0xe8] sm:$0xff]
      %v1122 = vld [vmem:[%s3 + $0xf0] sm:$0xff]
      %v1123 = vld [vmem:[%s3 + $0xf8] sm:$0xff]
      %v1124 = vld [vmem:[%s4] sm:$0x3]
      %v1126 = vlaneseq
      %v1127 = vshrl.u32 %v1126, 7
      %v1128 = vsub.s32 0, %v1127
      %v1129 = vrot.slane %v1124, %v1128
      %v1130 = vlaneseq
      %v1131 = vshrl.u32 %v1130, 7
      %v1132 = vsub.s32 1, %v1131
      %v1133 = vrot.slane %v1124, %v1132
      %v1168 = vunpack.c.l.b16 %v1092
      %v1169 = vunpack.c.h.b16 %v1092
      %v1170 = vunpack.c.l.b16 %v1093
      %v1171 = vunpack.c.h.b16 %v1093
      %v1172 = vunpack.c.l.b16 %v1094
      %v1173 = vunpack.c.h.b16 %v1094
      %v1174 = vunpack.c.l.b16 %v1095
      %v1175 = vunpack.c.h.b16 %v1095
      %v1176 = vunpack.c.l.b16 %v1096
      %v1177 = vunpack.c.h.b16 %v1096
      %v1178 = vunpack.c.l.b16 %v1097
      %v1179 = vunpack.c.h.b16 %v1097
      %v1180 = vunpack.c.l.b16 %v1098
      %v1181 = vunpack.c.h.b16 %v1098
      %v1182 = vunpack.c.l.b16 %v1099
      %v1183 = vunpack.c.h.b16 %v1099
      %v1184 = vunpack.c.l.b16 %v1100
      %v1185 = vunpack.c.h.b16 %v1100
      %v1186 = vunpack.c.l.b16 %v1101
      %v1187 = vunpack.c.h.b16 %v1101
      %v1188 = vunpack.c.l.b16 %v1102
      %v1189 = vunpack.c.h.b16 %v1102
      %v1190 = vunpack.c.l.b16 %v1103
      %v1191 = vunpack.c.h.b16 %v1103
      %v1192 = vunpack.c.l.b16 %v1104
      %v1193 = vunpack.c.h.b16 %v1104
      %v1194 = vunpack.c.l.b16 %v1105
      %v1195 = vunpack.c.h.b16 %v1105
      %v1196 = vunpack.c.l.b16 %v1106
      %v1197 = vunpack.c.h.b16 %v1106
      %v1198 = vunpack.c.l.b16 %v1107
      %v1199 = vunpack.c.h.b16 %v1107
      %v1200 = vunpack.c.l.b16 %v1108
      %v1201 = vunpack.c.h.b16 %v1108
      %v1202 = vunpack.c.l.b16 %v1109
      %v1203 = vunpack.c.h.b16 %v1109
      %v1204 = vunpack.c.l.b16 %v1110
      %v1205 = vunpack.c.h.b16 %v1110
      %v1206 = vunpack.c.l.b16 %v1111
      %v1207 = vunpack.c.h.b16 %v1111
      %v1208 = vunpack.c.l.b16 %v1112
      %v1209 = vunpack.c.h.b16 %v1112
      %v1210 = vunpack.c.l.b16 %v1113
      %v1211 = vunpack.c.h.b16 %v1113
      %v1212 = vunpack.c.l.b16 %v1114
      %v1213 = vunpack.c.h.b16 %v1114
      %v1214 = vunpack.c.l.b16 %v1115
      %v1215 = vunpack.c.h.b16 %v1115
      %v1216 = vunpack.c.l.b16 %v1116
      %v1217 = vunpack.c.h.b16 %v1116
      %v1218 = vunpack.c.l.b16 %v1117
      %v1219 = vunpack.c.h.b16 %v1117
      %v1220 = vunpack.c.l.b16 %v1118
      %v1221 = vunpack.c.h.b16 %v1118
      %v1222 = vunpack.c.l.b16 %v1119
      %v1223 = vunpack.c.h.b16 %v1119
      %v1224 = vunpack.c.l.b16 %v1120
      %v1225 = vunpack.c.h.b16 %v1120
      %v1226 = vunpack.c.l.b16 %v1121
      %v1227 = vunpack.c.h.b16 %v1121
      %v1228 = vunpack.c.l.b16 %v1122
      %v1229 = vunpack.c.h.b16 %v1122
      %v1230 = vunpack.c.l.b16 %v1123
      %v1231 = vunpack.c.h.b16 %v1123
      %v1232 = vpack.c.b16 %v1170, %v1168
      %v1233 = vpack.c.b16 %v1171, %v1169
      %v1234 = vpack.c.b16 %v1174, %v1172
      %v1235 = vpack.c.b16 %v1175, %v1173
      %v1236 = vpack.c.b16 %v1178, %v1176
      %v1237 = vpack.c.b16 %v1179, %v1177
      %v1238 = vpack.c.b16 %v1182, %v1180
      %v1239 = vpack.c.b16 %v1183, %v1181
      %v1240 = vpack.c.b16 %v1186, %v1184
      %v1241 = vpack.c.b16 %v1187, %v1185
      %v1242 = vpack.c.b16 %v1190, %v1188
      %v1243 = vpack.c.b16 %v1191, %v1189
      %v1244 = vpack.c.b16 %v1194, %v1192
      %v1245 = vpack.c.b16 %v1195, %v1193
      %v1246 = vpack.c.b16 %v1198, %v1196
      %v1247 = vpack.c.b16 %v1199, %v1197
      %v1248 = vpack.c.b16 %v1202, %v1200
      %v1249 = vpack.c.b16 %v1203, %v1201
      %v1250 = vpack.c.b16 %v1206, %v1204
      %v1251 = vpack.c.b16 %v1207, %v1205
      %v1252 = vpack.c.b16 %v1210, %v1208
      %v1253 = vpack.c.b16 %v1211, %v1209
      %v1254 = vpack.c.b16 %v1214, %v1212
      %v1255 = vpack.c.b16 %v1215, %v1213
      %v1256 = vpack.c.b16 %v1218, %v1216
      %v1257 = vpack.c.b16 %v1219, %v1217
      %v1258 = vpack.c.b16 %v1222, %v1220
      %v1259 = vpack.c.b16 %v1223, %v1221
      %v1260 = vpack.c.b16 %v1226, %v1224
      %v1261 = vpack.c.b16 %v1227, %v1225
      %v1262 = vpack.c.b16 %v1230, %v1228
      %v1263 = vpack.c.b16 %v1231, %v1229
      %1296 = vmatprep.subr.bf16.mxu0 %v1247
      %1297 = vmatpush1.bf16.msra.mxu0 %v1246
      %1298 = vmatprep.subr.bf16.mxu0 %v1245
      %1299 = vmatpush1.bf16.msra.mxu0 %v1244
      %1300 = vmatprep.subr.bf16.mxu0 %v1243
      %1301 = vmatpush1.bf16.msra.mxu0 %v1242
      %1302 = vmatprep.subr.bf16.mxu0 %v1241
      %1303 = vmatpush1.bf16.msra.mxu0 %v1240
      %1304 = vmatprep.subr.bf16.mxu0 %v1239
      %1305 = vmatpush1.bf16.msra.mxu0 %v1238
      %1306 = vmatprep.subr.bf16.mxu0 %v1237
      %1307 = vmatpush1.bf16.msra.mxu0 %v1236
      %1308 = vmatprep.subr.bf16.mxu0 %v1235
      %1309 = vmatpush1.bf16.msra.mxu0 %v1234
      %1310 = vmatprep.subr.bf16.mxu0 %v1233
      %1311 = vmatpush1.bf16.msra.mxu0 %v1232
      %1312 = vmatprep.subr.bf16.mxu0 %v1263
      %1313 = vmatpush2.bf16.msra.mxu0 %v1262
      %1314 = vmatprep.subr.bf16.mxu0 %v1261
      %1315 = vmatpush2.bf16.msra.mxu0 %v1260
      %1316 = vmatprep.subr.bf16.mxu0 %v1259
      %1317 = vmatpush2.bf16.msra.mxu0 %v1258
      %1318 = vmatprep.subr.bf16.mxu0 %v1257
      %1319 = vmatpush2.bf16.msra.mxu0 %v1256
      %1320 = vmatprep.subr.bf16.mxu0 %v1255
      %1321 = vmatpush2.bf16.msra.mxu0 %v1254
      %1322 = vmatprep.subr.bf16.mxu0 %v1253
      %1323 = vmatpush2.bf16.msra.mxu0 %v1252
      %1324 = vmatprep.subr.bf16.mxu0 %v1251
      %1325 = vmatpush2.bf16.msra.mxu0 %v1250
      %1326 = vmatprep.subr.bf16.mxu0 %v1249
      %1327 = vmatpush2.bf16.msra.mxu0 %v1248
      %1328 = vmatprep.mubr.bf16.mxu0 %v1065
      %1329 = vmatmul.mubr.bf16.gmra.mxu0 %v1064
      %v1330 = vpop.f32.mrf.mxu0
      %v1331 = vadd.f32 %v1129, %v1330
      %v1332 = vpop.f32.mrf.mxu0
      %v1333 = vadd.f32 %v1133, %v1332
      %v1334 = vpop.f32.mrf.mxu0
      %v1335 = vadd.f32 %v1129, %v1334
      %v1336 = vpop.f32.mrf.mxu0
      %v1337 = vadd.f32 %v1133, %v1336
      %1338 = vmatprep.mubr.bf16.mxu0 %v1067
      %1339 = vmatmul.mubr.bf16.gmra.mxu0 %v1066
      %v1340 = vpop.f32.mrf.mxu0
      %v1341 = vadd.f32 %v1129, %v1340
      %v1342 = vpop.f32.mrf.mxu0
      %v1343 = vadd.f32 %v1133, %v1342
      %v1344 = vpop.f32.mrf.mxu0
      %v1345 = vadd.f32 %v1129, %v1344
      %v1346 = vpop.f32.mrf.mxu0
      %v1347 = vadd.f32 %v1133, %v1346
      %1348 = vmatprep.mubr.bf16.mxu0 %v1069
      %1349 = vmatmul.mubr.bf16.gmra.mxu0 %v1068
      %v1350 = vpop.f32.mrf.mxu0
      %v1351 = vadd.f32 %v1129, %v1350
      %v1352 = vpop.f32.mrf.mxu0
      %v1353 = vadd.f32 %v1133, %v1352
      %v1354 = vpop.f32.mrf.mxu0
      %v1355 = vadd.f32 %v1129, %v1354
      %v1356 = vpop.f32.mrf.mxu0
      %v1357 = vadd.f32 %v1133, %v1356
      %1358 = vmatprep.mubr.bf16.mxu0 %v1071
      %1359 = vmatmul.mubr.bf16.gmra.mxu0 %v1070
      %v1360 = vpop.f32.mrf.mxu0
      %v1361 = vadd.f32 %v1129, %v1360
      %v1362 = vpop.f32.mrf.mxu0
      %v1363 = vadd.f32 %v1133, %v1362
      %v1364 = vpop.f32.mrf.mxu0
      %v1365 = vadd.f32 %v1129, %v1364
      %v1366 = vpop.f32.mrf.mxu0
      %v1367 = vadd.f32 %v1133, %v1366
      %1368 = vmatprep.mubr.bf16.mxu0 %v1073
      %1369 = vmatmul.mubr.bf16.gmra.mxu0 %v1072
      %v1370 = vpop.f32.mrf.mxu0
      %v1371 = vadd.f32 %v1129, %v1370
      %v1372 = vpop.f32.mrf.mxu0
      %v1373 = vadd.f32 %v1133, %v1372
      %v1374 = vpop.f32.mrf.mxu0
      %v1375 = vadd.f32 %v1129, %v1374
      %v1376 = vpop.f32.mrf.mxu0
      %v1377 = vadd.f32 %v1133, %v1376
      %1378 = vmatprep.mubr.bf16.mxu0 %v1075
      %1379 = vmatmul.mubr.bf16.gmra.mxu0 %v1074
      %v1380 = vpop.f32.mrf.mxu0
      %v1381 = vadd.f32 %v1129, %v1380
      %v1382 = vpop.f32.mrf.mxu0
      %v1383 = vadd.f32 %v1133, %v1382
      %v1384 = vpop.f32.mrf.mxu0
      %v1385 = vadd.f32 %v1129, %v1384
      %v1386 = vpop.f32.mrf.mxu0
      %v1387 = vadd.f32 %v1133, %v1386
      %1388 = vmatprep.mubr.bf16.mxu0 %v1077
      %1389 = vmatmul.mubr.bf16.gmra.mxu0 %v1076
      %v1390 = vpop.f32.mrf.mxu0
      %v1391 = vadd.f32 %v1129, %v1390
      %v1392 = vpop.f32.mrf.mxu0
      %v1393 = vadd.f32 %v1133, %v1392
      %v1394 = vpop.f32.mrf.mxu0
      %v1395 = vadd.f32 %v1129, %v1394
      %v1396 = vpop.f32.mrf.mxu0
      %v1397 = vadd.f32 %v1133, %v1396
      %1398 = vmatprep.mubr.bf16.mxu0 %v1079
      %1399 = vmatmul.mubr.bf16.gmra.mxu0 %v1078
      %v1400 = vpop.f32.mrf.mxu0
      %v1401 = vadd.f32 %v1129, %v1400
      %v1402 = vpop.f32.mrf.mxu0
      %v1403 = vadd.f32 %v1133, %v1402
      %v1404 = vpop.f32.mrf.mxu0
      %v1405 = vadd.f32 %v1129, %v1404
      %v1406 = vpop.f32.mrf.mxu0
      %v1407 = vadd.f32 %v1133, %v1406
      %1408 = vmatprep.mubr.bf16.mxu0 %v1081
      %1409 = vmatmul.mubr.bf16.gmra.mxu0 %v1080
      %v1410 = vpop.f32.mrf.mxu0
      %v1411 = vadd.f32 %v1129, %v1410
      %v1412 = vpop.f32.mrf.mxu0
      %v1413 = vadd.f32 %v1133, %v1412
      %v1414 = vpop.f32.mrf.mxu0
      %v1415 = vadd.f32 %v1129, %v1414
      %v1416 = vpop.f32.mrf.mxu0
      %v1417 = vadd.f32 %v1133, %v1416
      %1418 = vmatprep.mubr.bf16.mxu0 %v1083
      %1419 = vmatmul.mubr.bf16.gmra.mxu0 %v1082
      %v1420 = vpop.f32.mrf.mxu0
      %v1421 = vadd.f32 %v1129, %v1420
      %v1422 = vpop.f32.mrf.mxu0
      %v1423 = vadd.f32 %v1133, %v1422
      %v1424 = vpop.f32.mrf.mxu0
      %v1425 = vadd.f32 %v1129, %v1424
      %v1426 = vpop.f32.mrf.mxu0
      %v1427 = vadd.f32 %v1133, %v1426
      %1428 = vmatprep.mubr.bf16.mxu0 %v1085
      %1429 = vmatmul.mubr.bf16.gmra.mxu0 %v1084
      %v1430 = vpop.f32.mrf.mxu0
      %v1431 = vadd.f32 %v1129, %v1430
      %v1432 = vpop.f32.mrf.mxu0
      %v1433 = vadd.f32 %v1133, %v1432
      %v1434 = vpop.f32.mrf.mxu0
      %v1435 = vadd.f32 %v1129, %v1434
      %v1436 = vpop.f32.mrf.mxu0
      %v1437 = vadd.f32 %v1133, %v1436
      %1438 = vmatprep.mubr.bf16.mxu0 %v1087
      %1439 = vmatmul.mubr.bf16.gmra.mxu0 %v1086
      %v1440 = vpop.f32.mrf.mxu0
      %v1441 = vadd.f32 %v1129, %v1440
      %v1442 = vpop.f32.mrf.mxu0
      %v1443 = vadd.f32 %v1133, %v1442
      %v1444 = vpop.f32.mrf.mxu0
      %v1445 = vadd.f32 %v1129, %v1444
      %v1446 = vpop.f32.mrf.mxu0
      %v1447 = vadd.f32 %v1133, %v1446
      %1448 = vmatprep.mubr.bf16.mxu0 %v1089
      %1449 = vmatmul.mubr.bf16.gmra.mxu0 %v1088
      %v1450 = vpop.f32.mrf.mxu0
      %v1451 = vadd.f32 %v1129, %v1450
      %v1452 = vpop.f32.mrf.mxu0
      %v1453 = vadd.f32 %v1133, %v1452
      %v1454 = vpop.f32.mrf.mxu0
      %v1455 = vadd.f32 %v1129, %v1454
      %v1456 = vpop.f32.mrf.mxu0
      %v1457 = vadd.f32 %v1133, %v1456
      %1458 = vmatprep.mubr.bf16.mxu0 %v1091
      %1459 = vmatmul.mubr.bf16.gmra.mxu0 %v1090
      %v1460 = vpop.f32.mrf.mxu0
      %v1461 = vadd.f32 %v1129, %v1460
      %v1462 = vpop.f32.mrf.mxu0
      %v1463 = vadd.f32 %v1133, %v1462
      %v1464 = vpop.f32.mrf.mxu0
      %v1465 = vadd.f32 %v1129, %v1464
      %v1466 = vpop.f32.mrf.mxu0
      %v1467 = vadd.f32 %v1133, %v1466
      %1468 = vdwg.mxu0
      %v1469 = vmax.f32 %v1331, 0.0
      %v1470 = vmax.f32 %v1333, 0.0
      %v1471 = vmax.f32 %v1335, 0.0
      %v1472 = vmax.f32 %v1337, 0.0
      %v1473 = vmax.f32 %v1341, 0.0
      %v1474 = vmax.f32 %v1343, 0.0
      %v1475 = vmax.f32 %v1345, 0.0
      %v1476 = vmax.f32 %v1347, 0.0
      %v1477 = vmax.f32 %v1351, 0.0
      %v1478 = vmax.f32 %v1353, 0.0
      %v1479 = vmax.f32 %v1355, 0.0
      %v1480 = vmax.f32 %v1357, 0.0
      %v1481 = vmax.f32 %v1361, 0.0
      %v1482 = vmax.f32 %v1363, 0.0
      %v1483 = vmax.f32 %v1365, 0.0
      %v1484 = vmax.f32 %v1367, 0.0
      %v1485 = vmax.f32 %v1371, 0.0
      %v1486 = vmax.f32 %v1373, 0.0
      %v1487 = vmax.f32 %v1375, 0.0
      %v1488 = vmax.f32 %v1377, 0.0
      %v1489 = vmax.f32 %v1381, 0.0
      %v1490 = vmax.f32 %v1383, 0.0
      %v1491 = vmax.f32 %v1385, 0.0
      %v1492 = vmax.f32 %v1387, 0.0
      %v1493 = vmax.f32 %v1391, 0.0
      %v1494 = vmax.f32 %v1393, 0.0
      %v1495 = vmax.f32 %v1395, 0.0
      %v1496 = vmax.f32 %v1397, 0.0
      %v1497 = vmax.f32 %v1401, 0.0
      %v1498 = vmax.f32 %v1403, 0.0
      %v1499 = vmax.f32 %v1405, 0.0
      %v1500 = vmax.f32 %v1407, 0.0
      %v1501 = vmax.f32 %v1411, 0.0
      %v1502 = vmax.f32 %v1413, 0.0
      %v1503 = vmax.f32 %v1415, 0.0
      %v1504 = vmax.f32 %v1417, 0.0
      %v1505 = vmax.f32 %v1421, 0.0
      %v1506 = vmax.f32 %v1423, 0.0
      %v1507 = vmax.f32 %v1425, 0.0
      %v1508 = vmax.f32 %v1427, 0.0
      %v1509 = vmax.f32 %v1431, 0.0
      %v1510 = vmax.f32 %v1433, 0.0
      %v1511 = vmax.f32 %v1435, 0.0
      %v1512 = vmax.f32 %v1437, 0.0
      %v1513 = vmax.f32 %v1441, 0.0
      %v1514 = vmax.f32 %v1443, 0.0
      %v1515 = vmax.f32 %v1445, 0.0
      %v1516 = vmax.f32 %v1447, 0.0
      %v1517 = vmax.f32 %v1451, 0.0
      %v1518 = vmax.f32 %v1453, 0.0
      %v1519 = vmax.f32 %v1455, 0.0
      %v1520 = vmax.f32 %v1457, 0.0
      %v1521 = vmax.f32 %v1461, 0.0
      %v1522 = vmax.f32 %v1463, 0.0
      %v1523 = vmax.f32 %v1465, 0.0
      %v1524 = vmax.f32 %v1467, 0.0
      %v1525 = vpack.c.bf16 %v1471, %v1469
      %v1526 = vpack.c.bf16 %v1472, %v1470
      %v1527 = vpack.c.bf16 %v1475, %v1473
      %v1528 = vpack.c.bf16 %v1476, %v1474
      %v1529 = vpack.c.bf16 %v1479, %v1477
      %v1530 = vpack.c.bf16 %v1480, %v1478
      %v1531 = vpack.c.bf16 %v1483, %v1481
      %v1532 = vpack.c.bf16 %v1484, %v1482
      %v1533 = vpack.c.bf16 %v1487, %v1485
      %v1534 = vpack.c.bf16 %v1488, %v1486
      %v1535 = vpack.c.bf16 %v1491, %v1489
      %v1536 = vpack.c.bf16 %v1492, %v1490
      %v1537 = vpack.c.bf16 %v1495, %v1493
      %v1538 = vpack.c.bf16 %v1496, %v1494
      %v1539 = vpack.c.bf16 %v1499, %v1497
      %v1540 = vpack.c.bf16 %v1500, %v1498
      %v1541 = vpack.c.bf16 %v1503, %v1501
      %v1542 = vpack.c.bf16 %v1504, %v1502
      %v1543 = vpack.c.bf16 %v1507, %v1505
      %v1544 = vpack.c.bf16 %v1508, %v1506
      %v1545 = vpack.c.bf16 %v1511, %v1509
      %v1546 = vpack.c.bf16 %v1512, %v1510
      %v1547 = vpack.c.bf16 %v1515, %v1513
      %v1548 = vpack.c.bf16 %v1516, %v1514
      %v1549 = vpack.c.bf16 %v1519, %v1517
      %v1550 = vpack.c.bf16 %v1520, %v1518
      %v1551 = vpack.c.bf16 %v1523, %v1521
      %v1552 = vpack.c.bf16 %v1524, %v1522
      %v1553 = vld [vmem:[%s5] sm:$0xff]
      %v1554 = vld [vmem:[%s5 + $0x8] sm:$0xff]
      %v1555 = vld [vmem:[%s5 + $0x10] sm:$0xff]
      %v1556 = vld [vmem:[%s5 + $0x18] sm:$0xff]
      %v1557 = vld [vmem:[%s5 + $0x20] sm:$0xff]
      %v1558 = vld [vmem:[%s5 + $0x28] sm:$0xff]
      %v1559 = vld [vmem:[%s5 + $0x30] sm:$0xff]
      %v1560 = vld [vmem:[%s5 + $0x38] sm:$0xff]
      %v1561 = vld [vmem:[%s5 + $0x40] sm:$0xff]
      %v1562 = vld [vmem:[%s5 + $0x48] sm:$0xff]
      %v1563 = vld [vmem:[%s5 + $0x50] sm:$0xff]
      %v1564 = vld [vmem:[%s5 + $0x58] sm:$0xff]
      %v1565 = vld [vmem:[%s5 + $0x60] sm:$0xff]
      %v1566 = vld [vmem:[%s5 + $0x68] sm:$0xff]
      %v1567 = vld [vmem:[%s5 + $0x70] sm:$0xff]
      %v1568 = vld [vmem:[%s5 + $0x78] sm:$0xff]
      %v1569 = vld [vmem:[%s5 + $0x80] sm:$0xff]
      %v1570 = vld [vmem:[%s5 + $0x88] sm:$0xff]
      %v1571 = vld [vmem:[%s5 + $0x90] sm:$0xff]
      %v1572 = vld [vmem:[%s5 + $0x98] sm:$0xff]
      %v1573 = vld [vmem:[%s5 + $0xa0] sm:$0xff]
      %v1574 = vld [vmem:[%s5 + $0xa8] sm:$0xff]
      %v1575 = vld [vmem:[%s5 + $0xb0] sm:$0xff]
      %v1576 = vld [vmem:[%s5 + $0xb8] sm:$0xff]
      %v1577 = vld [vmem:[%s5 + $0xc0] sm:$0xff]
      %v1578 = vld [vmem:[%s5 + $0xc8] sm:$0xff]
      %v1579 = vld [vmem:[%s5 + $0xd0] sm:$0xff]
      %v1580 = vld [vmem:[%s5 + $0xd8] sm:$0xff]
      %v1581 = vld [vmem:[%s5 + $0xe0] sm:$0xff]
      %v1582 = vld [vmem:[%s5 + $0xe8] sm:$0xff]
      %v1583 = vld [vmem:[%s5 + $0xf0] sm:$0xff]
      %v1584 = vld [vmem:[%s5 + $0xf8] sm:$0xff]
      %s1585 = scalar_lea.vmem %s5, 256
      %v1586 = vld [vmem:[%s1585] sm:$0xff]
      %v1587 = vld [vmem:[%s1585 + $0x8] sm:$0xff]
      %v1588 = vld [vmem:[%s1585 + $0x10] sm:$0xff]
      %v1589 = vld [vmem:[%s1585 + $0x18] sm:$0xff]
      %v1590 = vld [vmem:[%s1585 + $0x20] sm:$0xff]
      %v1591 = vld [vmem:[%s1585 + $0x28] sm:$0xff]
      %v1592 = vld [vmem:[%s1585 + $0x30] sm:$0xff]
      %v1593 = vld [vmem:[%s1585 + $0x38] sm:$0xff]
      %v1594 = vld [vmem:[%s1585 + $0x40] sm:$0xff]
      %v1595 = vld [vmem:[%s1585 + $0x48] sm:$0xff]
      %v1596 = vld [vmem:[%s1585 + $0x50] sm:$0xff]
      %v1597 = vld [vmem:[%s1585 + $0x58] sm:$0xff]
      %v1598 = vld [vmem:[%s1585 + $0x60] sm:$0xff]
      %v1599 = vld [vmem:[%s1585 + $0x68] sm:$0xff]
      %v1600 = vld [vmem:[%s1585 + $0x70] sm:$0xff]
      %v1601 = vld [vmem:[%s1585 + $0x78] sm:$0xff]
      %v1602 = vld [vmem:[%s1585 + $0x80] sm:$0xff]
      %v1603 = vld [vmem:[%s1585 + $0x88] sm:$0xff]
      %v1604 = vld [vmem:[%s1585 + $0x90] sm:$0xff]
      %v1605 = vld [vmem:[%s1585 + $0x98] sm:$0xff]
      %v1606 = vld [vmem:[%s1585 + $0xa0] sm:$0xff]
      %v1607 = vld [vmem:[%s1585 + $0xa8] sm:$0xff]
      %v1608 = vld [vmem:[%s1585 + $0xb0] sm:$0xff]
      %v1609 = vld [vmem:[%s1585 + $0xb8] sm:$0xff]
      %v1610 = vld [vmem:[%s1585 + $0xc0] sm:$0xff]
      %v1611 = vld [vmem:[%s1585 + $0xc8] sm:$0xff]
      %v1612 = vld [vmem:[%s1585 + $0xd0] sm:$0xff]
      %v1613 = vld [vmem:[%s1585 + $0xd8] sm:$0xff]
      %v1614 = vld [vmem:[%s1585 + $0xe0] sm:$0xff]
      %v1615 = vld [vmem:[%s1585 + $0xe8] sm:$0xff]
      %v1616 = vld [vmem:[%s1585 + $0xf0] sm:$0xff]
      %v1617 = vld [vmem:[%s1585 + $0xf8] sm:$0xff]
      %v1650 = vunpack.c.l.b16 %v1586
      %v1651 = vunpack.c.h.b16 %v1586
      %v1652 = vunpack.c.l.b16 %v1587
      %v1653 = vunpack.c.h.b16 %v1587
      %v1654 = vunpack.c.l.b16 %v1588
      %v1655 = vunpack.c.h.b16 %v1588
      %v1656 = vunpack.c.l.b16 %v1589
      %v1657 = vunpack.c.h.b16 %v1589
      %v1658 = vunpack.c.l.b16 %v1590
      %v1659 = vunpack.c.h.b16 %v1590
      %v1660 = vunpack.c.l.b16 %v1591
      %v1661 = vunpack.c.h.b16 %v1591
      %v1662 = vunpack.c.l.b16 %v1592
      %v1663 = vunpack.c.h.b16 %v1592
      %v1664 = vunpack.c.l.b16 %v1593
      %v1665 = vunpack.c.h.b16 %v1593
      %v1666 = vunpack.c.l.b16 %v1594
      %v1667 = vunpack.c.h.b16 %v1594
      %v1668 = vunpack.c.l.b16 %v1595
      %v1669 = vunpack.c.h.b16 %v1595
      %v1670 = vunpack.c.l.b16 %v1596
      %v1671 = vunpack.c.h.b16 %v1596
      %v1672 = vunpack.c.l.b16 %v1597
      %v1673 = vunpack.c.h.b16 %v1597
      %v1674 = vunpack.c.l.b16 %v1598
      %v1675 = vunpack.c.h.b16 %v1598
      %v1676 = vunpack.c.l.b16 %v1599
      %v1677 = vunpack.c.h.b16 %v1599
      %v1678 = vunpack.c.l.b16 %v1600
      %v1679 = vunpack.c.h.b16 %v1600
      %v1680 = vunpack.c.l.b16 %v1601
      %v1681 = vunpack.c.h.b16 %v1601
      %v1682 = vunpack.c.l.b16 %v1602
      %v1683 = vunpack.c.h.b16 %v1602
      %v1684 = vunpack.c.l.b16 %v1603
      %v1685 = vunpack.c.h.b16 %v1603
      %v1686 = vunpack.c.l.b16 %v1604
      %v1687 = vunpack.c.h.b16 %v1604
      %v1688 = vunpack.c.l.b16 %v1605
      %v1689 = vunpack.c.h.b16 %v1605
      %v1690 = vunpack.c.l.b16 %v1606
      %v1691 = vunpack.c.h.b16 %v1606
      %v1692 = vunpack.c.l.b16 %v1607
      %v1693 = vunpack.c.h.b16 %v1607
      %v1694 = vunpack.c.l.b16 %v1608
      %v1695 = vunpack.c.h.b16 %v1608
      %v1696 = vunpack.c.l.b16 %v1609
      %v1697 = vunpack.c.h.b16 %v1609
      %v1698 = vunpack.c.l.b16 %v1610
      %v1699 = vunpack.c.h.b16 %v1610
      %v1700 = vunpack.c.l.b16 %v1611
      %v1701 = vunpack.c.h.b16 %v1611
      %v1702 = vunpack.c.l.b16 %v1612
      %v1703 = vunpack.c.h.b16 %v1612
      %v1704 = vunpack.c.l.b16 %v1613
      %v1705 = vunpack.c.h.b16 %v1613
      %v1706 = vunpack.c.l.b16 %v1614
      %v1707 = vunpack.c.h.b16 %v1614
      %v1708 = vunpack.c.l.b16 %v1615
      %v1709 = vunpack.c.h.b16 %v1615
      %v1710 = vunpack.c.l.b16 %v1616
      %v1711 = vunpack.c.h.b16 %v1616
      %v1712 = vunpack.c.l.b16 %v1617
      %v1713 = vunpack.c.h.b16 %v1617
      %v1714 = vpack.c.b16 %v1652, %v1650
      %v1715 = vpack.c.b16 %v1653, %v1651
      %v1716 = vpack.c.b16 %v1656, %v1654
      %v1717 = vpack.c.b16 %v1657, %v1655
      %v1718 = vpack.c.b16 %v1660, %v1658
      %v1719 = vpack.c.b16 %v1661, %v1659
      %v1720 = vpack.c.b16 %v1664, %v1662
      %v1721 = vpack.c.b16 %v1665, %v1663
      %v1722 = vpack.c.b16 %v1668, %v1666
      %v1723 = vpack.c.b16 %v1669, %v1667
      %v1724 = vpack.c.b16 %v1672, %v1670
      %v1725 = vpack.c.b16 %v1673, %v1671
      %v1726 = vpack.c.b16 %v1676, %v1674
      %v1727 = vpack.c.b16 %v1677, %v1675
      %v1728 = vpack.c.b16 %v1680, %v1678
      %v1729 = vpack.c.b16 %v1681, %v1679
      %v1730 = vpack.c.b16 %v1684, %v1682
      %v1731 = vpack.c.b16 %v1685, %v1683
      %v1732 = vpack.c.b16 %v1688, %v1686
      %v1733 = vpack.c.b16 %v1689, %v1687
      %v1734 = vpack.c.b16 %v1692, %v1690
      %v1735 = vpack.c.b16 %v1693, %v1691
      %v1736 = vpack.c.b16 %v1696, %v1694
      %v1737 = vpack.c.b16 %v1697, %v1695
      %v1738 = vpack.c.b16 %v1700, %v1698
      %v1739 = vpack.c.b16 %v1701, %v1699
      %v1740 = vpack.c.b16 %v1704, %v1702
      %v1741 = vpack.c.b16 %v1705, %v1703
      %v1742 = vpack.c.b16 %v1708, %v1706
      %v1743 = vpack.c.b16 %v1709, %v1707
      %v1744 = vpack.c.b16 %v1712, %v1710
      %v1745 = vpack.c.b16 %v1713, %v1711
      %1778 = vmatprep.subr.bf16.mxu0 %v1729
      %1779 = vmatpush1.bf16.msra.mxu0 %v1728
      %1780 = vmatprep.subr.bf16.mxu0 %v1727
      %1781 = vmatpush1.bf16.msra.mxu0 %v1726
      %1782 = vmatprep.subr.bf16.mxu0 %v1725
      %1783 = vmatpush1.bf16.msra.mxu0 %v1724
      %1784 = vmatprep.subr.bf16.mxu0 %v1723
      %1785 = vmatpush1.bf16.msra.mxu0 %v1722
      %1786 = vmatprep.subr.bf16.mxu0 %v1721
      %1787 = vmatpush1.bf16.msra.mxu0 %v1720
      %1788 = vmatprep.subr.bf16.mxu0 %v1719
      %1789 = vmatpush1.bf16.msra.mxu0 %v1718
      %1790 = vmatprep.subr.bf16.mxu0 %v1717
      %1791 = vmatpush1.bf16.msra.mxu0 %v1716
      %1792 = vmatprep.subr.bf16.mxu0 %v1715
      %1793 = vmatpush1.bf16.msra.mxu0 %v1714
      %1794 = vmatprep.subr.bf16.mxu0 %v1745
      %1795 = vmatpush2.bf16.msra.mxu0 %v1744
      %1796 = vmatprep.subr.bf16.mxu0 %v1743
      %1797 = vmatpush2.bf16.msra.mxu0 %v1742
      %1798 = vmatprep.subr.bf16.mxu0 %v1741
      %1799 = vmatpush2.bf16.msra.mxu0 %v1740
      %1800 = vmatprep.subr.bf16.mxu0 %v1739
      %1801 = vmatpush2.bf16.msra.mxu0 %v1738
      %1802 = vmatprep.subr.bf16.mxu0 %v1737
      %1803 = vmatpush2.bf16.msra.mxu0 %v1736
      %1804 = vmatprep.subr.bf16.mxu0 %v1735
      %1805 = vmatpush2.bf16.msra.mxu0 %v1734
      %1806 = vmatprep.subr.bf16.mxu0 %v1733
      %1807 = vmatpush2.bf16.msra.mxu0 %v1732
      %1808 = vmatprep.subr.bf16.mxu0 %v1731
      %1809 = vmatpush2.bf16.msra.mxu0 %v1730
      %1810 = vmatprep.mubr.bf16.mxu0 %v1528
      %1811 = vmatmul.mubr.bf16.gmra.mxu0 %v1527
      %v1812 = vpop.f32.mrf.mxu0
      %v1813 = vadd.f32 0.0, %v1812
      %v1814 = vpop.f32.mrf.mxu0
      %v1815 = vadd.f32 0.0, %v1814
      %v1816 = vpop.f32.mrf.mxu0
      %v1817 = vadd.f32 0.0, %v1816
      %v1818 = vpop.f32.mrf.mxu0
      %v1819 = vadd.f32 0.0, %v1818
      %1820 = vmatprep.mubr.bf16.mxu0 %v1530
      %1821 = vmatmul.mubr.bf16.gmra.mxu0 %v1529
      %v1822 = vpop.f32.mrf.mxu0
      %v1823 = vadd.f32 0.0, %v1822
      %v1824 = vpop.f32.mrf.mxu0
      %v1825 = vadd.f32 0.0, %v1824
      %v1826 = vpop.f32.mrf.mxu0
      %v1827 = vadd.f32 0.0, %v1826
      %v1828 = vpop.f32.mrf.mxu0
      %v1829 = vadd.f32 0.0, %v1828
      %1830 = vmatprep.mubr.bf16.mxu0 %v1532
      %1831 = vmatmul.mubr.bf16.gmra.mxu0 %v1531
      %v1832 = vpop.f32.mrf.mxu0
      %v1833 = vadd.f32 0.0, %v1832
      %v1834 = vpop.f32.mrf.mxu0
      %v1835 = vadd.f32 0.0, %v1834
      %v1836 = vpop.f32.mrf.mxu0
      %v1837 = vadd.f32 0.0, %v1836
      %v1838 = vpop.f32.mrf.mxu0
      %v1839 = vadd.f32 0.0, %v1838
      %1840 = vmatprep.mubr.bf16.mxu0 %v1534
      %1841 = vmatmul.mubr.bf16.gmra.mxu0 %v1533
      %v1842 = vpop.f32.mrf.mxu0
      %v1843 = vadd.f32 0.0, %v1842
      %v1844 = vpop.f32.mrf.mxu0
      %v1845 = vadd.f32 0.0, %v1844
      %v1846 = vpop.f32.mrf.mxu0
      %v1847 = vadd.f32 0.0, %v1846
      %v1848 = vpop.f32.mrf.mxu0
      %v1849 = vadd.f32 0.0, %v1848
      %1850 = vmatprep.mubr.bf16.mxu0 %v1536
      %1851 = vmatmul.mubr.bf16.gmra.mxu0 %v1535
      %v1852 = vpop.f32.mrf.mxu0
      %v1853 = vadd.f32 0.0, %v1852
      %v1854 = vpop.f32.mrf.mxu0
      %v1855 = vadd.f32 0.0, %v1854
      %v1856 = vpop.f32.mrf.mxu0
      %v1857 = vadd.f32 0.0, %v1856
      %v1858 = vpop.f32.mrf.mxu0
      %v1859 = vadd.f32 0.0, %v1858
      %1860 = vmatprep.mubr.bf16.mxu0 %v1538
      %1861 = vmatmul.mubr.bf16.gmra.mxu0 %v1537
      %v1862 = vpop.f32.mrf.mxu0
      %v1863 = vadd.f32 0.0, %v1862
      %v1864 = vpop.f32.mrf.mxu0
      %v1865 = vadd.f32 0.0, %v1864
      %v1866 = vpop.f32.mrf.mxu0
      %v1867 = vadd.f32 0.0, %v1866
      %v1868 = vpop.f32.mrf.mxu0
      %v1869 = vadd.f32 0.0, %v1868
      %1870 = vmatprep.mubr.bf16.mxu0 %v1540
      %1871 = vmatmul.mubr.bf16.gmra.mxu0 %v1539
      %v1872 = vpop.f32.mrf.mxu0
      %v1873 = vadd.f32 0.0, %v1872
      %v1874 = vpop.f32.mrf.mxu0
      %v1875 = vadd.f32 0.0, %v1874
      %v1876 = vpop.f32.mrf.mxu0
      %v1877 = vadd.f32 0.0, %v1876
      %v1878 = vpop.f32.mrf.mxu0
      %v1879 = vadd.f32 0.0, %v1878
      %1880 = vmatprep.mubr.bf16.mxu0 %v1542
      %1881 = vmatmul.mubr.bf16.gmra.mxu0 %v1541
      %v1882 = vpop.f32.mrf.mxu0
      %v1883 = vadd.f32 0.0, %v1882
      %v1884 = vpop.f32.mrf.mxu0
      %v1885 = vadd.f32 0.0, %v1884
      %v1886 = vpop.f32.mrf.mxu0
      %v1887 = vadd.f32 0.0, %v1886
      %v1888 = vpop.f32.mrf.mxu0
      %v1889 = vadd.f32 0.0, %v1888
      %1890 = vmatprep.mubr.bf16.mxu0 %v1544
      %1891 = vmatmul.mubr.bf16.gmra.mxu0 %v1543
      %v1892 = vpop.f32.mrf.mxu0
      %v1893 = vadd.f32 0.0, %v1892
      %v1894 = vpop.f32.mrf.mxu0
      %v1895 = vadd.f32 0.0, %v1894
      %v1896 = vpop.f32.mrf.mxu0
      %v1897 = vadd.f32 0.0, %v1896
      %v1898 = vpop.f32.mrf.mxu0
      %v1899 = vadd.f32 0.0, %v1898
      %1900 = vmatprep.mubr.bf16.mxu0 %v1546
      %1901 = vmatmul.mubr.bf16.gmra.mxu0 %v1545
      %v1902 = vpop.f32.mrf.mxu0
      %v1903 = vadd.f32 0.0, %v1902
      %v1904 = vpop.f32.mrf.mxu0
      %v1905 = vadd.f32 0.0, %v1904
      %v1906 = vpop.f32.mrf.mxu0
      %v1907 = vadd.f32 0.0, %v1906
      %v1908 = vpop.f32.mrf.mxu0
      %v1909 = vadd.f32 0.0, %v1908
      %1910 = vmatprep.mubr.bf16.mxu0 %v1548
      %1911 = vmatmul.mubr.bf16.gmra.mxu0 %v1547
      %v1912 = vpop.f32.mrf.mxu0
      %v1913 = vadd.f32 0.0, %v1912
      %v1914 = vpop.f32.mrf.mxu0
      %v1915 = vadd.f32 0.0, %v1914
      %v1916 = vpop.f32.mrf.mxu0
      %v1917 = vadd.f32 0.0, %v1916
      %v1918 = vpop.f32.mrf.mxu0
      %v1919 = vadd.f32 0.0, %v1918
      %1920 = vmatprep.mubr.bf16.mxu0 %v1550
      %1921 = vmatmul.mubr.bf16.gmra.mxu0 %v1549
      %v1922 = vpop.f32.mrf.mxu0
      %v1923 = vadd.f32 0.0, %v1922
      %v1924 = vpop.f32.mrf.mxu0
      %v1925 = vadd.f32 0.0, %v1924
      %v1926 = vpop.f32.mrf.mxu0
      %v1927 = vadd.f32 0.0, %v1926
      %v1928 = vpop.f32.mrf.mxu0
      %v1929 = vadd.f32 0.0, %v1928
      %1930 = vdwg.mxu0
      %v1963 = vunpack.c.l.b16 %v1553
      %v1964 = vunpack.c.h.b16 %v1553
      %v1965 = vunpack.c.l.b16 %v1554
      %v1966 = vunpack.c.h.b16 %v1554
      %v1967 = vunpack.c.l.b16 %v1555
      %v1968 = vunpack.c.h.b16 %v1555
      %v1969 = vunpack.c.l.b16 %v1556
      %v1970 = vunpack.c.h.b16 %v1556
      %v1971 = vunpack.c.l.b16 %v1557
      %v1972 = vunpack.c.h.b16 %v1557
      %v1973 = vunpack.c.l.b16 %v1558
      %v1974 = vunpack.c.h.b16 %v1558
      %v1975 = vunpack.c.l.b16 %v1559
      %v1976 = vunpack.c.h.b16 %v1559
      %v1977 = vunpack.c.l.b16 %v1560
      %v1978 = vunpack.c.h.b16 %v1560
      %v1979 = vunpack.c.l.b16 %v1561
      %v1980 = vunpack.c.h.b16 %v1561
      %v1981 = vunpack.c.l.b16 %v1562
      %v1982 = vunpack.c.h.b16 %v1562
      %v1983 = vunpack.c.l.b16 %v1563
      %v1984 = vunpack.c.h.b16 %v1563
      %v1985 = vunpack.c.l.b16 %v1564
      %v1986 = vunpack.c.h.b16 %v1564
      %v1987 = vunpack.c.l.b16 %v1565
      %v1988 = vunpack.c.h.b16 %v1565
      %v1989 = vunpack.c.l.b16 %v1566
      %v1990 = vunpack.c.h.b16 %v1566
      %v1991 = vunpack.c.l.b16 %v1567
      %v1992 = vunpack.c.h.b16 %v1567
      %v1993 = vunpack.c.l.b16 %v1568
      %v1994 = vunpack.c.h.b16 %v1568
      %v1995 = vunpack.c.l.b16 %v1569
      %v1996 = vunpack.c.h.b16 %v1569
      %v1997 = vunpack.c.l.b16 %v1570
      %v1998 = vunpack.c.h.b16 %v1570
      %v1999 = vunpack.c.l.b16 %v1571
      %v2000 = vunpack.c.h.b16 %v1571
      %v2001 = vunpack.c.l.b16 %v1572
      %v2002 = vunpack.c.h.b16 %v1572
      %v2003 = vunpack.c.l.b16 %v1573
      %v2004 = vunpack.c.h.b16 %v1573
      %v2005 = vunpack.c.l.b16 %v1574
      %v2006 = vunpack.c.h.b16 %v1574
      %v2007 = vunpack.c.l.b16 %v1575
      %v2008 = vunpack.c.h.b16 %v1575
      %v2009 = vunpack.c.l.b16 %v1576
      %v2010 = vunpack.c.h.b16 %v1576
      %v2011 = vunpack.c.l.b16 %v1577
      %v2012 = vunpack.c.h.b16 %v1577
      %v2013 = vunpack.c.l.b16 %v1578
      %v2014 = vunpack.c.h.b16 %v1578
      %v2015 = vunpack.c.l.b16 %v1579
      %v2016 = vunpack.c.h.b16 %v1579
      %v2017 = vunpack.c.l.b16 %v1580
      %v2018 = vunpack.c.h.b16 %v1580
      %v2019 = vunpack.c.l.b16 %v1581
      %v2020 = vunpack.c.h.b16 %v1581
      %v2021 = vunpack.c.l.b16 %v1582
      %v2022 = vunpack.c.h.b16 %v1582
      %v2023 = vunpack.c.l.b16 %v1583
      %v2024 = vunpack.c.h.b16 %v1583
      %v2025 = vunpack.c.l.b16 %v1584
      %v2026 = vunpack.c.h.b16 %v1584
      %v2027 = vpack.c.b16 %v1965, %v1963
      %v2028 = vpack.c.b16 %v1966, %v1964
      %v2029 = vpack.c.b16 %v1969, %v1967
      %v2030 = vpack.c.b16 %v1970, %v1968
      %v2031 = vpack.c.b16 %v1973, %v1971
      %v2032 = vpack.c.b16 %v1974, %v1972
      %v2033 = vpack.c.b16 %v1977, %v1975
      %v2034 = vpack.c.b16 %v1978, %v1976
      %v2035 = vpack.c.b16 %v1981, %v1979
      %v2036 = vpack.c.b16 %v1982, %v1980
      %v2037 = vpack.c.b16 %v1985, %v1983
      %v2038 = vpack.c.b16 %v1986, %v1984
      %v2039 = vpack.c.b16 %v1989, %v1987
      %v2040 = vpack.c.b16 %v1990, %v1988
      %v2041 = vpack.c.b16 %v1993, %v1991
      %v2042 = vpack.c.b16 %v1994, %v1992
      %v2043 = vpack.c.b16 %v1997, %v1995
      %v2044 = vpack.c.b16 %v1998, %v1996
      %v2045 = vpack.c.b16 %v2001, %v1999
      %v2046 = vpack.c.b16 %v2002, %v2000
      %v2047 = vpack.c.b16 %v2005, %v2003
      %v2048 = vpack.c.b16 %v2006, %v2004
      %v2049 = vpack.c.b16 %v2009, %v2007
      %v2050 = vpack.c.b16 %v2010, %v2008
      %v2051 = vpack.c.b16 %v2013, %v2011
      %v2052 = vpack.c.b16 %v2014, %v2012
      %v2053 = vpack.c.b16 %v2017, %v2015
      %v2054 = vpack.c.b16 %v2018, %v2016
      %v2055 = vpack.c.b16 %v2021, %v2019
      %v2056 = vpack.c.b16 %v2022, %v2020
      %v2057 = vpack.c.b16 %v2025, %v2023
      %v2058 = vpack.c.b16 %v2026, %v2024
      %2091 = vmatprep.subr.bf16.mxu0 %v2042
      %2092 = vmatpush1.bf16.msra.mxu0 %v2041
      %2093 = vmatprep.subr.bf16.mxu0 %v2040
      %2094 = vmatpush1.bf16.msra.mxu0 %v2039
      %2095 = vmatprep.subr.bf16.mxu0 %v2038
      %2096 = vmatpush1.bf16.msra.mxu0 %v2037
      %2097 = vmatprep.subr.bf16.mxu0 %v2036
      %2098 = vmatpush1.bf16.msra.mxu0 %v2035
      %2099 = vmatprep.subr.bf16.mxu0 %v2034
      %2100 = vmatpush1.bf16.msra.mxu0 %v2033
      %2101 = vmatprep.subr.bf16.mxu0 %v2032
      %2102 = vmatpush1.bf16.msra.mxu0 %v2031
      %2103 = vmatprep.subr.bf16.mxu0 %v2030
      %2104 = vmatpush1.bf16.msra.mxu0 %v2029
      %2105 = vmatprep.subr.bf16.mxu0 %v2028
      %2106 = vmatpush1.bf16.msra.mxu0 %v2027
      %2107 = vmatprep.subr.bf16.mxu0 %v2058
      %2108 = vmatpush2.bf16.msra.mxu0 %v2057
      %2109 = vmatprep.subr.bf16.mxu0 %v2056
      %2110 = vmatpush2.bf16.msra.mxu0 %v2055
      %2111 = vmatprep.subr.bf16.mxu0 %v2054
      %2112 = vmatpush2.bf16.msra.mxu0 %v2053
      %2113 = vmatprep.subr.bf16.mxu0 %v2052
      %2114 = vmatpush2.bf16.msra.mxu0 %v2051
      %2115 = vmatprep.subr.bf16.mxu0 %v2050
      %2116 = vmatpush2.bf16.msra.mxu0 %v2049
      %2117 = vmatprep.subr.bf16.mxu0 %v2048
      %2118 = vmatpush2.bf16.msra.mxu0 %v2047
      %2119 = vmatprep.subr.bf16.mxu0 %v2046
      %2120 = vmatpush2.bf16.msra.mxu0 %v2045
      %2121 = vmatprep.subr.bf16.mxu0 %v2044
      %2122 = vmatpush2.bf16.msra.mxu0 %v2043
      %2123 = vmatprep.mubr.bf16.mxu0 %v1526
      %2124 = vmatmul.mubr.bf16.gmra.mxu0 %v1525
      %v2125 = vpop.f32.mrf.mxu0
      %v2126 = vadd.f32 %v1813, %v2125
      %v2127 = vpop.f32.mrf.mxu0
      %v2128 = vadd.f32 %v1815, %v2127
      %v2129 = vpop.f32.mrf.mxu0
      %v2130 = vadd.f32 %v1817, %v2129
      %v2131 = vpop.f32.mrf.mxu0
      %v2132 = vadd.f32 %v1819, %v2131
      %2133 = vmatprep.mubr.bf16.mxu0 %v1528
      %2134 = vmatmul.mubr.bf16.gmra.mxu0 %v1527
      %v2135 = vpop.f32.mrf.mxu0
      %v2136 = vadd.f32 %v1823, %v2135
      %v2137 = vpop.f32.mrf.mxu0
      %v2138 = vadd.f32 %v1825, %v2137
      %v2139 = vpop.f32.mrf.mxu0
      %v2140 = vadd.f32 %v1827, %v2139
      %v2141 = vpop.f32.mrf.mxu0
      %v2142 = vadd.f32 %v1829, %v2141
      %2143 = vmatprep.mubr.bf16.mxu0 %v1530
      %2144 = vmatmul.mubr.bf16.gmra.mxu0 %v1529
      %v2145 = vpop.f32.mrf.mxu0
      %v2146 = vadd.f32 %v1833, %v2145
      %v2147 = vpop.f32.mrf.mxu0
      %v2148 = vadd.f32 %v1835, %v2147
      %v2149 = vpop.f32.mrf.mxu0
      %v2150 = vadd.f32 %v1837, %v2149
      %v2151 = vpop.f32.mrf.mxu0
      %v2152 = vadd.f32 %v1839, %v2151
      %2153 = vmatprep.mubr.bf16.mxu0 %v1532
      %2154 = vmatmul.mubr.bf16.gmra.mxu0 %v1531
      %v2155 = vpop.f32.mrf.mxu0
      %v2156 = vadd.f32 %v1843, %v2155
      %v2157 = vpop.f32.mrf.mxu0
      %v2158 = vadd.f32 %v1845, %v2157
      %v2159 = vpop.f32.mrf.mxu0
      %v2160 = vadd.f32 %v1847, %v2159
      %v2161 = vpop.f32.mrf.mxu0
      %v2162 = vadd.f32 %v1849, %v2161
      %2163 = vmatprep.mubr.bf16.mxu0 %v1534
      %2164 = vmatmul.mubr.bf16.gmra.mxu0 %v1533
      %v2165 = vpop.f32.mrf.mxu0
      %v2166 = vadd.f32 %v1853, %v2165
      %v2167 = vpop.f32.mrf.mxu0
      %v2168 = vadd.f32 %v1855, %v2167
      %v2169 = vpop.f32.mrf.mxu0
      %v2170 = vadd.f32 %v1857, %v2169
      %v2171 = vpop.f32.mrf.mxu0
      %v2172 = vadd.f32 %v1859, %v2171
      %2173 = vmatprep.mubr.bf16.mxu0 %v1536
      %2174 = vmatmul.mubr.bf16.gmra.mxu0 %v1535
      %v2175 = vpop.f32.mrf.mxu0
      %v2176 = vadd.f32 %v1863, %v2175
      %v2177 = vpop.f32.mrf.mxu0
      %v2178 = vadd.f32 %v1865, %v2177
      %v2179 = vpop.f32.mrf.mxu0
      %v2180 = vadd.f32 %v1867, %v2179
      %v2181 = vpop.f32.mrf.mxu0
      %v2182 = vadd.f32 %v1869, %v2181
      %2183 = vmatprep.mubr.bf16.mxu0 %v1538
      %2184 = vmatmul.mubr.bf16.gmra.mxu0 %v1537
      %v2185 = vpop.f32.mrf.mxu0
      %v2186 = vadd.f32 %v1873, %v2185
      %v2187 = vpop.f32.mrf.mxu0
      %v2188 = vadd.f32 %v1875, %v2187
      %v2189 = vpop.f32.mrf.mxu0
      %v2190 = vadd.f32 %v1877, %v2189
      %v2191 = vpop.f32.mrf.mxu0
      %v2192 = vadd.f32 %v1879, %v2191
      %2193 = vmatprep.mubr.bf16.mxu0 %v1540
      %2194 = vmatmul.mubr.bf16.gmra.mxu0 %v1539
      %v2195 = vpop.f32.mrf.mxu0
      %v2196 = vadd.f32 %v1883, %v2195
      %v2197 = vpop.f32.mrf.mxu0
      %v2198 = vadd.f32 %v1885, %v2197
      %v2199 = vpop.f32.mrf.mxu0
      %v2200 = vadd.f32 %v1887, %v2199
      %v2201 = vpop.f32.mrf.mxu0
      %v2202 = vadd.f32 %v1889, %v2201
      %2203 = vmatprep.mubr.bf16.mxu0 %v1542
      %2204 = vmatmul.mubr.bf16.gmra.mxu0 %v1541
      %v2205 = vpop.f32.mrf.mxu0
      %v2206 = vadd.f32 %v1893, %v2205
      %v2207 = vpop.f32.mrf.mxu0
      %v2208 = vadd.f32 %v1895, %v2207
      %v2209 = vpop.f32.mrf.mxu0
      %v2210 = vadd.f32 %v1897, %v2209
      %v2211 = vpop.f32.mrf.mxu0
      %v2212 = vadd.f32 %v1899, %v2211
      %2213 = vmatprep.mubr.bf16.mxu0 %v1544
      %2214 = vmatmul.mubr.bf16.gmra.mxu0 %v1543
      %v2215 = vpop.f32.mrf.mxu0
      %v2216 = vadd.f32 %v1903, %v2215
      %v2217 = vpop.f32.mrf.mxu0
      %v2218 = vadd.f32 %v1905, %v2217
      %v2219 = vpop.f32.mrf.mxu0
      %v2220 = vadd.f32 %v1907, %v2219
      %v2221 = vpop.f32.mrf.mxu0
      %v2222 = vadd.f32 %v1909, %v2221
      %2223 = vmatprep.mubr.bf16.mxu0 %v1546
      %2224 = vmatmul.mubr.bf16.gmra.mxu0 %v1545
      %v2225 = vpop.f32.mrf.mxu0
      %v2226 = vadd.f32 %v1913, %v2225
      %v2227 = vpop.f32.mrf.mxu0
      %v2228 = vadd.f32 %v1915, %v2227
      %v2229 = vpop.f32.mrf.mxu0
      %v2230 = vadd.f32 %v1917, %v2229
      %v2231 = vpop.f32.mrf.mxu0
      %v2232 = vadd.f32 %v1919, %v2231
      %2233 = vmatprep.mubr.bf16.mxu0 %v1548
      %2234 = vmatmul.mubr.bf16.gmra.mxu0 %v1547
      %v2235 = vpop.f32.mrf.mxu0
      %v2236 = vadd.f32 %v1923, %v2235
      %v2237 = vpop.f32.mrf.mxu0
      %v2238 = vadd.f32 %v1925, %v2237
      %v2239 = vpop.f32.mrf.mxu0
      %v2240 = vadd.f32 %v1927, %v2239
      %v2241 = vpop.f32.mrf.mxu0
      %v2242 = vadd.f32 %v1929, %v2241
      %2243 = vdwg.mxu0
      %s2244 = scalar_lea.vmem %s5, 512
      %v2245 = vld [vmem:[%s2244] sm:$0xff]
      %v2246 = vld [vmem:[%s2244 + $0x8] sm:$0xff]
      %v2247 = vld [vmem:[%s2244 + $0x10] sm:$0xff]
      %v2248 = vld [vmem:[%s2244 + $0x18] sm:$0xff]
      %v2249 = vld [vmem:[%s2244 + $0x20] sm:$0xff]
      %v2250 = vld [vmem:[%s2244 + $0x28] sm:$0xff]
      %v2251 = vld [vmem:[%s2244 + $0x30] sm:$0xff]
      %v2252 = vld [vmem:[%s2244 + $0x38] sm:$0xff]
      %v2253 = vld [vmem:[%s2244 + $0x40] sm:$0xff]
      %v2254 = vld [vmem:[%s2244 + $0x48] sm:$0xff]
      %v2255 = vld [vmem:[%s2244 + $0x50] sm:$0xff]
      %v2256 = vld [vmem:[%s2244 + $0x58] sm:$0xff]
      %v2257 = vld [vmem:[%s2244 + $0x60] sm:$0xff]
      %v2258 = vld [vmem:[%s2244 + $0x68] sm:$0xff]
      %v2259 = vld [vmem:[%s2244 + $0x70] sm:$0xff]
      %v2260 = vld [vmem:[%s2244 + $0x78] sm:$0xff]
      %v2261 = vld [vmem:[%s2244 + $0x80] sm:$0xff]
      %v2262 = vld [vmem:[%s2244 + $0x88] sm:$0xff]
      %v2263 = vld [vmem:[%s2244 + $0x90] sm:$0xff]
      %v2264 = vld [vmem:[%s2244 + $0x98] sm:$0xff]
      %v2265 = vld [vmem:[%s2244 + $0xa0] sm:$0xff]
      %v2266 = vld [vmem:[%s2244 + $0xa8] sm:$0xff]
      %v2267 = vld [vmem:[%s2244 + $0xb0] sm:$0xff]
      %v2268 = vld [vmem:[%s2244 + $0xb8] sm:$0xff]
      %v2269 = vld [vmem:[%s2244 + $0xc0] sm:$0xff]
      %v2270 = vld [vmem:[%s2244 + $0xc8] sm:$0xff]
      %v2271 = vld [vmem:[%s2244 + $0xd0] sm:$0xff]
      %v2272 = vld [vmem:[%s2244 + $0xd8] sm:$0xff]
      %v2273 = vld [vmem:[%s2244 + $0xe0] sm:$0xff]
      %v2274 = vld [vmem:[%s2244 + $0xe8] sm:$0xff]
      %v2275 = vld [vmem:[%s2244 + $0xf0] sm:$0xff]
      %v2276 = vld [vmem:[%s2244 + $0xf8] sm:$0xff]
      %v2309 = vunpack.c.l.b16 %v2245
      %v2310 = vunpack.c.h.b16 %v2245
      %v2311 = vunpack.c.l.b16 %v2246
      %v2312 = vunpack.c.h.b16 %v2246
      %v2313 = vunpack.c.l.b16 %v2247
      %v2314 = vunpack.c.h.b16 %v2247
      %v2315 = vunpack.c.l.b16 %v2248
      %v2316 = vunpack.c.h.b16 %v2248
      %v2317 = vunpack.c.l.b16 %v2249
      %v2318 = vunpack.c.h.b16 %v2249
      %v2319 = vunpack.c.l.b16 %v2250
      %v2320 = vunpack.c.h.b16 %v2250
      %v2321 = vunpack.c.l.b16 %v2251
      %v2322 = vunpack.c.h.b16 %v2251
      %v2323 = vunpack.c.l.b16 %v2252
      %v2324 = vunpack.c.h.b16 %v2252
      %v2325 = vunpack.c.l.b16 %v2253
      %v2326 = vunpack.c.h.b16 %v2253
      %v2327 = vunpack.c.l.b16 %v2254
      %v2328 = vunpack.c.h.b16 %v2254
      %v2329 = vunpack.c.l.b16 %v2255
      %v2330 = vunpack.c.h.b16 %v2255
      %v2331 = vunpack.c.l.b16 %v2256
      %v2332 = vunpack.c.h.b16 %v2256
      %v2333 = vunpack.c.l.b16 %v2257
      %v2334 = vunpack.c.h.b16 %v2257
      %v2335 = vunpack.c.l.b16 %v2258
      %v2336 = vunpack.c.h.b16 %v2258
      %v2337 = vunpack.c.l.b16 %v2259
      %v2338 = vunpack.c.h.b16 %v2259
      %v2339 = vunpack.c.l.b16 %v2260
      %v2340 = vunpack.c.h.b16 %v2260
      %v2341 = vunpack.c.l.b16 %v2261
      %v2342 = vunpack.c.h.b16 %v2261
      %v2343 = vunpack.c.l.b16 %v2262
      %v2344 = vunpack.c.h.b16 %v2262
      %v2345 = vunpack.c.l.b16 %v2263
      %v2346 = vunpack.c.h.b16 %v2263
      %v2347 = vunpack.c.l.b16 %v2264
      %v2348 = vunpack.c.h.b16 %v2264
      %v2349 = vunpack.c.l.b16 %v2265
      %v2350 = vunpack.c.h.b16 %v2265
      %v2351 = vunpack.c.l.b16 %v2266
      %v2352 = vunpack.c.h.b16 %v2266
      %v2353 = vunpack.c.l.b16 %v2267
      %v2354 = vunpack.c.h.b16 %v2267
      %v2355 = vunpack.c.l.b16 %v2268
      %v2356 = vunpack.c.h.b16 %v2268
      %v2357 = vunpack.c.l.b16 %v2269
      %v2358 = vunpack.c.h.b16 %v2269
      %v2359 = vunpack.c.l.b16 %v2270
      %v2360 = vunpack.c.h.b16 %v2270
      %v2361 = vunpack.c.l.b16 %v2271
      %v2362 = vunpack.c.h.b16 %v2271
      %v2363 = vunpack.c.l.b16 %v2272
      %v2364 = vunpack.c.h.b16 %v2272
      %v2365 = vunpack.c.l.b16 %v2273
      %v2366 = vunpack.c.h.b16 %v2273
      %v2367 = vunpack.c.l.b16 %v2274
      %v2368 = vunpack.c.h.b16 %v2274
      %v2369 = vunpack.c.l.b16 %v2275
      %v2370 = vunpack.c.h.b16 %v2275
      %v2371 = vunpack.c.l.b16 %v2276
      %v2372 = vunpack.c.h.b16 %v2276
      %v2373 = vpack.c.b16 %v2311, %v2309
      %v2374 = vpack.c.b16 %v2312, %v2310
      %v2375 = vpack.c.b16 %v2315, %v2313
      %v2376 = vpack.c.b16 %v2316, %v2314
      %v2377 = vpack.c.b16 %v2319, %v2317
      %v2378 = vpack.c.b16 %v2320, %v2318
      %v2379 = vpack.c.b16 %v2323, %v2321
      %v2380 = vpack.c.b16 %v2324, %v2322
      %v2381 = vpack.c.b16 %v2327, %v2325
      %v2382 = vpack.c.b16 %v2328, %v2326
      %v2383 = vpack.c.b16 %v2331, %v2329
      %v2384 = vpack.c.b16 %v2332, %v2330
      %v2385 = vpack.c.b16 %v2335, %v2333
      %v2386 = vpack.c.b16 %v2336, %v2334
      %v2387 = vpack.c.b16 %v2339, %v2337
      %v2388 = vpack.c.b16 %v2340, %v2338
      %v2389 = vpack.c.b16 %v2343, %v2341
      %v2390 = vpack.c.b16 %v2344, %v2342
      %v2391 = vpack.c.b16 %v2347, %v2345
      %v2392 = vpack.c.b16 %v2348, %v2346
      %v2393 = vpack.c.b16 %v2351, %v2349
      %v2394 = vpack.c.b16 %v2352, %v2350
      %v2395 = vpack.c.b16 %v2355, %v2353
      %v2396 = vpack.c.b16 %v2356, %v2354
      %v2397 = vpack.c.b16 %v2359, %v2357
      %v2398 = vpack.c.b16 %v2360, %v2358
      %v2399 = vpack.c.b16 %v2363, %v2361
      %v2400 = vpack.c.b16 %v2364, %v2362
      %v2401 = vpack.c.b16 %v2367, %v2365
      %v2402 = vpack.c.b16 %v2368, %v2366
      %v2403 = vpack.c.b16 %v2371, %v2369
      %v2404 = vpack.c.b16 %v2372, %v2370
      %2437 = vmatprep.subr.bf16.mxu0 %v2388
      %2438 = vmatpush1.bf16.msra.mxu0 %v2387
      %2439 = vmatprep.subr.bf16.mxu0 %v2386
      %2440 = vmatpush1.bf16.msra.mxu0 %v2385
      %2441 = vmatprep.subr.bf16.mxu0 %v2384
      %2442 = vmatpush1.bf16.msra.mxu0 %v2383
      %2443 = vmatprep.subr.bf16.mxu0 %v2382
      %2444 = vmatpush1.bf16.msra.mxu0 %v2381
      %2445 = vmatprep.subr.bf16.mxu0 %v2380
      %2446 = vmatpush1.bf16.msra.mxu0 %v2379
      %2447 = vmatprep.subr.bf16.mxu0 %v2378
      %2448 = vmatpush1.bf16.msra.mxu0 %v2377
      %2449 = vmatprep.subr.bf16.mxu0 %v2376
      %2450 = vmatpush1.bf16.msra.mxu0 %v2375
      %2451 = vmatprep.subr.bf16.mxu0 %v2374
      %2452 = vmatpush1.bf16.msra.mxu0 %v2373
      %2453 = vmatprep.subr.bf16.mxu0 %v2404
      %2454 = vmatpush2.bf16.msra.mxu0 %v2403
      %2455 = vmatprep.subr.bf16.mxu0 %v2402
      %2456 = vmatpush2.bf16.msra.mxu0 %v2401
      %2457 = vmatprep.subr.bf16.mxu0 %v2400
      %2458 = vmatpush2.bf16.msra.mxu0 %v2399
      %2459 = vmatprep.subr.bf16.mxu0 %v2398
      %2460 = vmatpush2.bf16.msra.mxu0 %v2397
      %2461 = vmatprep.subr.bf16.mxu0 %v2396
      %2462 = vmatpush2.bf16.msra.mxu0 %v2395
      %2463 = vmatprep.subr.bf16.mxu0 %v2394
      %2464 = vmatpush2.bf16.msra.mxu0 %v2393
      %2465 = vmatprep.subr.bf16.mxu0 %v2392
      %2466 = vmatpush2.bf16.msra.mxu0 %v2391
      %2467 = vmatprep.subr.bf16.mxu0 %v2390
      %2468 = vmatpush2.bf16.msra.mxu0 %v2389
      %2469 = vmatprep.mubr.bf16.mxu0 %v1530
      %2470 = vmatmul.mubr.bf16.gmra.mxu0 %v1529
      %v2471 = vpop.f32.mrf.mxu0
      %v2472 = vadd.f32 0.0, %v2471
      %v2473 = vpop.f32.mrf.mxu0
      %v2474 = vadd.f32 0.0, %v2473
      %v2475 = vpop.f32.mrf.mxu0
      %v2476 = vadd.f32 0.0, %v2475
      %v2477 = vpop.f32.mrf.mxu0
      %v2478 = vadd.f32 0.0, %v2477
      %2479 = vmatprep.mubr.bf16.mxu0 %v1532
      %2480 = vmatmul.mubr.bf16.gmra.mxu0 %v1531
      %v2481 = vpop.f32.mrf.mxu0
      %v2482 = vadd.f32 0.0, %v2481
      %v2483 = vpop.f32.mrf.mxu0
      %v2484 = vadd.f32 0.0, %v2483
      %v2485 = vpop.f32.mrf.mxu0
      %v2486 = vadd.f32 0.0, %v2485
      %v2487 = vpop.f32.mrf.mxu0
      %v2488 = vadd.f32 0.0, %v2487
      %2489 = vmatprep.mubr.bf16.mxu0 %v1534
      %2490 = vmatmul.mubr.bf16.gmra.mxu0 %v1533
      %v2491 = vpop.f32.mrf.mxu0
      %v2492 = vadd.f32 0.0, %v2491
      %v2493 = vpop.f32.mrf.mxu0
      %v2494 = vadd.f32 0.0, %v2493
      %v2495 = vpop.f32.mrf.mxu0
      %v2496 = vadd.f32 0.0, %v2495
      %v2497 = vpop.f32.mrf.mxu0
      %v2498 = vadd.f32 0.0, %v2497
      %2499 = vmatprep.mubr.bf16.mxu0 %v1536
      %2500 = vmatmul.mubr.bf16.gmra.mxu0 %v1535
      %v2501 = vpop.f32.mrf.mxu0
      %v2502 = vadd.f32 0.0, %v2501
      %v2503 = vpop.f32.mrf.mxu0
      %v2504 = vadd.f32 0.0, %v2503
      %v2505 = vpop.f32.mrf.mxu0
      %v2506 = vadd.f32 0.0, %v2505
      %v2507 = vpop.f32.mrf.mxu0
      %v2508 = vadd.f32 0.0, %v2507
      %2509 = vmatprep.mubr.bf16.mxu0 %v1538
      %2510 = vmatmul.mubr.bf16.gmra.mxu0 %v1537
      %v2511 = vpop.f32.mrf.mxu0
      %v2512 = vadd.f32 0.0, %v2511
      %v2513 = vpop.f32.mrf.mxu0
      %v2514 = vadd.f32 0.0, %v2513
      %v2515 = vpop.f32.mrf.mxu0
      %v2516 = vadd.f32 0.0, %v2515
      %v2517 = vpop.f32.mrf.mxu0
      %v2518 = vadd.f32 0.0, %v2517
      %2519 = vmatprep.mubr.bf16.mxu0 %v1540
      %2520 = vmatmul.mubr.bf16.gmra.mxu0 %v1539
      %v2521 = vpop.f32.mrf.mxu0
      %v2522 = vadd.f32 0.0, %v2521
      %v2523 = vpop.f32.mrf.mxu0
      %v2524 = vadd.f32 0.0, %v2523
      %v2525 = vpop.f32.mrf.mxu0
      %v2526 = vadd.f32 0.0, %v2525
      %v2527 = vpop.f32.mrf.mxu0
      %v2528 = vadd.f32 0.0, %v2527
      %2529 = vmatprep.mubr.bf16.mxu0 %v1542
      %2530 = vmatmul.mubr.bf16.gmra.mxu0 %v1541
      %v2531 = vpop.f32.mrf.mxu0
      %v2532 = vadd.f32 0.0, %v2531
      %v2533 = vpop.f32.mrf.mxu0
      %v2534 = vadd.f32 0.0, %v2533
      %v2535 = vpop.f32.mrf.mxu0
      %v2536 = vadd.f32 0.0, %v2535
      %v2537 = vpop.f32.mrf.mxu0
      %v2538 = vadd.f32 0.0, %v2537
      %2539 = vmatprep.mubr.bf16.mxu0 %v1544
      %2540 = vmatmul.mubr.bf16.gmra.mxu0 %v1543
      %v2541 = vpop.f32.mrf.mxu0
      %v2542 = vadd.f32 0.0, %v2541
      %v2543 = vpop.f32.mrf.mxu0
      %v2544 = vadd.f32 0.0, %v2543
      %v2545 = vpop.f32.mrf.mxu0
      %v2546 = vadd.f32 0.0, %v2545
      %v2547 = vpop.f32.mrf.mxu0
      %v2548 = vadd.f32 0.0, %v2547
      %2549 = vmatprep.mubr.bf16.mxu0 %v1546
      %2550 = vmatmul.mubr.bf16.gmra.mxu0 %v1545
      %v2551 = vpop.f32.mrf.mxu0
      %v2552 = vadd.f32 0.0, %v2551
      %v2553 = vpop.f32.mrf.mxu0
      %v2554 = vadd.f32 0.0, %v2553
      %v2555 = vpop.f32.mrf.mxu0
      %v2556 = vadd.f32 0.0, %v2555
      %v2557 = vpop.f32.mrf.mxu0
      %v2558 = vadd.f32 0.0, %v2557
      %2559 = vmatprep.mubr.bf16.mxu0 %v1548
      %2560 = vmatmul.mubr.bf16.gmra.mxu0 %v1547
      %v2561 = vpop.f32.mrf.mxu0
      %v2562 = vadd.f32 0.0, %v2561
      %v2563 = vpop.f32.mrf.mxu0
      %v2564 = vadd.f32 0.0, %v2563
      %v2565 = vpop.f32.mrf.mxu0
      %v2566 = vadd.f32 0.0, %v2565
      %v2567 = vpop.f32.mrf.mxu0
      %v2568 = vadd.f32 0.0, %v2567
      %2569 = vmatprep.mubr.bf16.mxu0 %v1550
      %2570 = vmatmul.mubr.bf16.gmra.mxu0 %v1549
      %v2571 = vpop.f32.mrf.mxu0
      %v2572 = vadd.f32 0.0, %v2571
      %v2573 = vpop.f32.mrf.mxu0
      %v2574 = vadd.f32 0.0, %v2573
      %v2575 = vpop.f32.mrf.mxu0
      %v2576 = vadd.f32 0.0, %v2575
      %v2577 = vpop.f32.mrf.mxu0
      %v2578 = vadd.f32 0.0, %v2577
      %2579 = vmatprep.mubr.bf16.mxu0 %v1552
      %2580 = vmatmul.mubr.bf16.gmra.mxu0 %v1551
      %v2581 = vpop.f32.mrf.mxu0
      %v2582 = vadd.f32 0.0, %v2581
      %v2583 = vpop.f32.mrf.mxu0
      %v2584 = vadd.f32 0.0, %v2583
      %v2585 = vpop.f32.mrf.mxu0
      %v2586 = vadd.f32 0.0, %v2585
      %v2587 = vpop.f32.mrf.mxu0
      %v2588 = vadd.f32 0.0, %v2587
      %2589 = vdwg.mxu0
      %v2590 = vadd.f32 %v2126, %v2472
      %v2591 = vadd.f32 %v2128, %v2474
      %v2592 = vadd.f32 %v2130, %v2476
      %v2593 = vadd.f32 %v2132, %v2478
      %v2594 = vadd.f32 %v2136, %v2482
      %v2595 = vadd.f32 %v2138, %v2484
      %v2596 = vadd.f32 %v2140, %v2486
      %v2597 = vadd.f32 %v2142, %v2488
      %v2598 = vadd.f32 %v2146, %v2492
      %v2599 = vadd.f32 %v2148, %v2494
      %v2600 = vadd.f32 %v2150, %v2496
      %v2601 = vadd.f32 %v2152, %v2498
      %v2602 = vadd.f32 %v2156, %v2502
      %v2603 = vadd.f32 %v2158, %v2504
      %v2604 = vadd.f32 %v2160, %v2506
      %v2605 = vadd.f32 %v2162, %v2508
      %v2606 = vadd.f32 %v2166, %v2512
      %v2607 = vadd.f32 %v2168, %v2514
      %v2608 = vadd.f32 %v2170, %v2516
      %v2609 = vadd.f32 %v2172, %v2518
      %v2610 = vadd.f32 %v2176, %v2522
      %v2611 = vadd.f32 %v2178, %v2524
      %v2612 = vadd.f32 %v2180, %v2526
      %v2613 = vadd.f32 %v2182, %v2528
      %v2614 = vadd.f32 %v2186, %v2532
      %v2615 = vadd.f32 %v2188, %v2534
      %v2616 = vadd.f32 %v2190, %v2536
      %v2617 = vadd.f32 %v2192, %v2538
      %v2618 = vadd.f32 %v2196, %v2542
      %v2619 = vadd.f32 %v2198, %v2544
      %v2620 = vadd.f32 %v2200, %v2546
      %v2621 = vadd.f32 %v2202, %v2548
      %v2622 = vadd.f32 %v2206, %v2552
      %v2623 = vadd.f32 %v2208, %v2554
      %v2624 = vadd.f32 %v2210, %v2556
      %v2625 = vadd.f32 %v2212, %v2558
      %v2626 = vadd.f32 %v2216, %v2562
      %v2627 = vadd.f32 %v2218, %v2564
      %v2628 = vadd.f32 %v2220, %v2566
      %v2629 = vadd.f32 %v2222, %v2568
      %v2630 = vadd.f32 %v2226, %v2572
      %v2631 = vadd.f32 %v2228, %v2574
      %v2632 = vadd.f32 %v2230, %v2576
      %v2633 = vadd.f32 %v2232, %v2578
      %v2634 = vadd.f32 %v2236, %v2582
      %v2635 = vadd.f32 %v2238, %v2584
      %v2636 = vadd.f32 %v2240, %v2586
      %v2637 = vadd.f32 %v2242, %v2588
      %v2638 = vld [vmem:[%s6] sm:$0x3]
      %v2640 = vlaneseq
      %v2641 = vshrl.u32 %v2640, 7
      %v2642 = vsub.s32 0, %v2641
      %v2643 = vrot.slane %v2638, %v2642
      %v2644 = vlaneseq
      %v2645 = vshrl.u32 %v2644, 7
      %v2646 = vsub.s32 1, %v2645
      %v2647 = vrot.slane %v2638, %v2646
      %v2650 = vadd.f32 %v2590, %v2643
      %v2651 = vadd.f32 %v2591, %v2647
      %v2652 = vadd.f32 %v2592, %v2643
      %v2653 = vadd.f32 %v2593, %v2647
      %v2654 = vadd.f32 %v2594, %v2643
      %v2655 = vadd.f32 %v2595, %v2647
      %v2656 = vadd.f32 %v2596, %v2643
      %v2657 = vadd.f32 %v2597, %v2647
      %v2658 = vadd.f32 %v2598, %v2643
      %v2659 = vadd.f32 %v2599, %v2647
      %v2660 = vadd.f32 %v2600, %v2643
      %v2661 = vadd.f32 %v2601, %v2647
      %v2662 = vadd.f32 %v2602, %v2643
      %v2663 = vadd.f32 %v2603, %v2647
      %v2664 = vadd.f32 %v2604, %v2643
      %v2665 = vadd.f32 %v2605, %v2647
      %v2666 = vadd.f32 %v2606, %v2643
      %v2667 = vadd.f32 %v2607, %v2647
      %v2668 = vadd.f32 %v2608, %v2643
      %v2669 = vadd.f32 %v2609, %v2647
      %v2670 = vadd.f32 %v2610, %v2643
      %v2671 = vadd.f32 %v2611, %v2647
      %v2672 = vadd.f32 %v2612, %v2643
      %v2673 = vadd.f32 %v2613, %v2647
      %v2674 = vadd.f32 %v2614, %v2643
      %v2675 = vadd.f32 %v2615, %v2647
      %v2676 = vadd.f32 %v2616, %v2643
      %v2677 = vadd.f32 %v2617, %v2647
      %v2678 = vadd.f32 %v2618, %v2643
      %v2679 = vadd.f32 %v2619, %v2647
      %v2680 = vadd.f32 %v2620, %v2643
      %v2681 = vadd.f32 %v2621, %v2647
      %v2682 = vadd.f32 %v2622, %v2643
      %v2683 = vadd.f32 %v2623, %v2647
      %v2684 = vadd.f32 %v2624, %v2643
      %v2685 = vadd.f32 %v2625, %v2647
      %v2686 = vadd.f32 %v2626, %v2643
      %v2687 = vadd.f32 %v2627, %v2647
      %v2688 = vadd.f32 %v2628, %v2643
      %v2689 = vadd.f32 %v2629, %v2647
      %v2690 = vadd.f32 %v2630, %v2643
      %v2691 = vadd.f32 %v2631, %v2647
      %v2692 = vadd.f32 %v2632, %v2643
      %v2693 = vadd.f32 %v2633, %v2647
      %v2694 = vadd.f32 %v2634, %v2643
      %v2695 = vadd.f32 %v2635, %v2647
      %v2696 = vadd.f32 %v2636, %v2643
      %v2697 = vadd.f32 %v2637, %v2647
      %v2698 = vmax.f32 %v2650, 0.0
      %v2699 = vmax.f32 %v2651, 0.0
      %v2700 = vmax.f32 %v2652, 0.0
      %v2701 = vmax.f32 %v2653, 0.0
      %v2702 = vmax.f32 %v2654, 0.0
      %v2703 = vmax.f32 %v2655, 0.0
      %v2704 = vmax.f32 %v2656, 0.0
      %v2705 = vmax.f32 %v2657, 0.0
      %v2706 = vmax.f32 %v2658, 0.0
      %v2707 = vmax.f32 %v2659, 0.0
      %v2708 = vmax.f32 %v2660, 0.0
      %v2709 = vmax.f32 %v2661, 0.0
      %v2710 = vmax.f32 %v2662, 0.0
      %v2711 = vmax.f32 %v2663, 0.0
      %v2712 = vmax.f32 %v2664, 0.0
      %v2713 = vmax.f32 %v2665, 0.0
      %v2714 = vmax.f32 %v2666, 0.0
      %v2715 = vmax.f32 %v2667, 0.0
      %v2716 = vmax.f32 %v2668, 0.0
      %v2717 = vmax.f32 %v2669, 0.0
      %v2718 = vmax.f32 %v2670, 0.0
      %v2719 = vmax.f32 %v2671, 0.0
      %v2720 = vmax.f32 %v2672, 0.0
      %v2721 = vmax.f32 %v2673, 0.0
      %v2722 = vmax.f32 %v2674, 0.0
      %v2723 = vmax.f32 %v2675, 0.0
      %v2724 = vmax.f32 %v2676, 0.0
      %v2725 = vmax.f32 %v2677, 0.0
      %v2726 = vmax.f32 %v2678, 0.0
      %v2727 = vmax.f32 %v2679, 0.0
      %v2728 = vmax.f32 %v2680, 0.0
      %v2729 = vmax.f32 %v2681, 0.0
      %v2730 = vmax.f32 %v2682, 0.0
      %v2731 = vmax.f32 %v2683, 0.0
      %v2732 = vmax.f32 %v2684, 0.0
      %v2733 = vmax.f32 %v2685, 0.0
      %v2734 = vmax.f32 %v2686, 0.0
      %v2735 = vmax.f32 %v2687, 0.0
      %v2736 = vmax.f32 %v2688, 0.0
      %v2737 = vmax.f32 %v2689, 0.0
      %v2738 = vmax.f32 %v2690, 0.0
      %v2739 = vmax.f32 %v2691, 0.0
      %v2740 = vmax.f32 %v2692, 0.0
      %v2741 = vmax.f32 %v2693, 0.0
      %v2742 = vmax.f32 %v2694, 0.0
      %v2743 = vmax.f32 %v2695, 0.0
      %v2744 = vmax.f32 %v2696, 0.0
      %v2745 = vmax.f32 %v2697, 0.0
      %v2746 = vpack.c.bf16 %v2700, %v2698
      %v2747 = vpack.c.bf16 %v2701, %v2699
      %v2748 = vpack.c.bf16 %v2704, %v2702
      %v2749 = vpack.c.bf16 %v2705, %v2703
      %v2750 = vpack.c.bf16 %v2708, %v2706
      %v2751 = vpack.c.bf16 %v2709, %v2707
      %v2752 = vpack.c.bf16 %v2712, %v2710
      %v2753 = vpack.c.bf16 %v2713, %v2711
      %v2754 = vpack.c.bf16 %v2716, %v2714
      %v2755 = vpack.c.bf16 %v2717, %v2715
      %v2756 = vpack.c.bf16 %v2720, %v2718
      %v2757 = vpack.c.bf16 %v2721, %v2719
      %v2758 = vpack.c.bf16 %v2724, %v2722
      %v2759 = vpack.c.bf16 %v2725, %v2723
      %v2760 = vpack.c.bf16 %v2728, %v2726
      %v2761 = vpack.c.bf16 %v2729, %v2727
      %v2762 = vpack.c.bf16 %v2732, %v2730
      %v2763 = vpack.c.bf16 %v2733, %v2731
      %v2764 = vpack.c.bf16 %v2736, %v2734
      %v2765 = vpack.c.bf16 %v2737, %v2735
      %v2766 = vpack.c.bf16 %v2740, %v2738
      %v2767 = vpack.c.bf16 %v2741, %v2739
      %v2768 = vpack.c.bf16 %v2744, %v2742
      %v2769 = vpack.c.bf16 %v2745, %v2743
      %v2770 = vunpack.c.l.bf16 %v2746
      %v2771 = vunpack.c.l.bf16 %v2747
      %v2772 = vunpack.c.h.bf16 %v2746
      %v2773 = vunpack.c.h.bf16 %v2747
      %v2774 = vunpack.c.l.bf16 %v2748
      %v2775 = vunpack.c.l.bf16 %v2749
      %v2776 = vunpack.c.h.bf16 %v2748
      %v2777 = vunpack.c.h.bf16 %v2749
      %v2778 = vunpack.c.l.bf16 %v2750
      %v2779 = vunpack.c.l.bf16 %v2751
      %v2780 = vunpack.c.h.bf16 %v2750
      %v2781 = vunpack.c.h.bf16 %v2751
      %v2782 = vunpack.c.l.bf16 %v2752
      %v2783 = vunpack.c.l.bf16 %v2753
      %v2784 = vunpack.c.h.bf16 %v2752
      %v2785 = vunpack.c.h.bf16 %v2753
      %v2786 = vunpack.c.l.bf16 %v2754
      %v2787 = vunpack.c.l.bf16 %v2755
      %v2788 = vunpack.c.h.bf16 %v2754
      %v2789 = vunpack.c.h.bf16 %v2755
      %v2790 = vunpack.c.l.bf16 %v2756
      %v2791 = vunpack.c.l.bf16 %v2757
      %v2792 = vunpack.c.h.bf16 %v2756
      %v2793 = vunpack.c.h.bf16 %v2757
      %v2794 = vunpack.c.l.bf16 %v2758
      %v2795 = vunpack.c.l.bf16 %v2759
      %v2796 = vunpack.c.h.bf16 %v2758
      %v2797 = vunpack.c.h.bf16 %v2759
      %v2798 = vunpack.c.l.bf16 %v2760
      %v2799 = vunpack.c.l.bf16 %v2761
      %v2800 = vunpack.c.h.bf16 %v2760
      %v2801 = vunpack.c.h.bf16 %v2761
      %v2802 = vunpack.c.l.bf16 %v2762
      %v2803 = vunpack.c.l.bf16 %v2763
      %v2804 = vunpack.c.h.bf16 %v2762
      %v2805 = vunpack.c.h.bf16 %v2763
      %v2806 = vunpack.c.l.bf16 %v2764
      %v2807 = vunpack.c.l.bf16 %v2765
      %v2808 = vunpack.c.h.bf16 %v2764
      %v2809 = vunpack.c.h.bf16 %v2765
      %v2810 = vunpack.c.l.bf16 %v2766
      %v2811 = vunpack.c.l.bf16 %v2767
      %v2812 = vunpack.c.h.bf16 %v2766
      %v2813 = vunpack.c.h.bf16 %v2767
      %v2814 = vunpack.c.l.bf16 %v2768
      %v2815 = vunpack.c.l.bf16 %v2769
      %v2816 = vunpack.c.h.bf16 %v2768
      %v2817 = vunpack.c.h.bf16 %v2769
      %v2818 = vadd.f32 %v2770, %v2771
      %2819 = vadd.xlane.f32.xlu0 %v2818
      %v2820 = vpop.xlane.xlu0 %2819
      %v2821 = vadd.f32 %v2772, %v2773
      %2822 = vadd.xlane.f32.xlu0 %v2821
      %v2823 = vpop.xlane.xlu0 %2822
      %v2824 = vadd.f32 %v2774, %v2775
      %2825 = vadd.xlane.f32.xlu0 %v2824
      %v2826 = vpop.xlane.xlu0 %2825
      %v2827 = vadd.f32 %v2776, %v2777
      %2828 = vadd.xlane.f32.xlu0 %v2827
      %v2829 = vpop.xlane.xlu0 %2828
      %v2830 = vadd.f32 %v2778, %v2779
      %2831 = vadd.xlane.f32.xlu0 %v2830
      %v2832 = vpop.xlane.xlu0 %2831
      %v2833 = vadd.f32 %v2780, %v2781
      %2834 = vadd.xlane.f32.xlu0 %v2833
      %v2835 = vpop.xlane.xlu0 %2834
      %v2836 = vadd.f32 %v2782, %v2783
      %2837 = vadd.xlane.f32.xlu0 %v2836
      %v2838 = vpop.xlane.xlu0 %2837
      %v2839 = vadd.f32 %v2784, %v2785
      %2840 = vadd.xlane.f32.xlu0 %v2839
      %v2841 = vpop.xlane.xlu0 %2840
      %v2842 = vadd.f32 %v2786, %v2787
      %2843 = vadd.xlane.f32.xlu0 %v2842
      %v2844 = vpop.xlane.xlu0 %2843
      %v2845 = vadd.f32 %v2788, %v2789
      %2846 = vadd.xlane.f32.xlu0 %v2845
      %v2847 = vpop.xlane.xlu0 %2846
      %v2848 = vadd.f32 %v2790, %v2791
      %2849 = vadd.xlane.f32.xlu0 %v2848
      %v2850 = vpop.xlane.xlu0 %2849
      %v2851 = vadd.f32 %v2792, %v2793
      %2852 = vadd.xlane.f32.xlu0 %v2851
      %v2853 = vpop.xlane.xlu0 %2852
      %v2854 = vadd.f32 %v2794, %v2795
      %2855 = vadd.xlane.f32.xlu0 %v2854
      %v2856 = vpop.xlane.xlu0 %2855
      %v2857 = vadd.f32 %v2796, %v2797
      %2858 = vadd.xlane.f32.xlu0 %v2857
      %v2859 = vpop.xlane.xlu0 %2858
      %v2860 = vadd.f32 %v2798, %v2799
      %2861 = vadd.xlane.f32.xlu0 %v2860
      %v2862 = vpop.xlane.xlu0 %2861
      %v2863 = vadd.f32 %v2800, %v2801
      %2864 = vadd.xlane.f32.xlu0 %v2863
      %v2865 = vpop.xlane.xlu0 %2864
      %v2866 = vadd.f32 %v2802, %v2803
      %2867 = vadd.xlane.f32.xlu0 %v2866
      %v2868 = vpop.xlane.xlu0 %2867
      %v2869 = vadd.f32 %v2804, %v2805
      %2870 = vadd.xlane.f32.xlu0 %v2869
      %v2871 = vpop.xlane.xlu0 %2870
      %v2872 = vadd.f32 %v2806, %v2807
      %2873 = vadd.xlane.f32.xlu0 %v2872
      %v2874 = vpop.xlane.xlu0 %2873
      %v2875 = vadd.f32 %v2808, %v2809
      %2876 = vadd.xlane.f32.xlu0 %v2875
      %v2877 = vpop.xlane.xlu0 %2876
      %v2878 = vadd.f32 %v2810, %v2811
      %2879 = vadd.xlane.f32.xlu0 %v2878
      %v2880 = vpop.xlane.xlu0 %2879
      %v2881 = vadd.f32 %v2812, %v2813
      %2882 = vadd.xlane.f32.xlu0 %v2881
      %v2883 = vpop.xlane.xlu0 %2882
      %v2884 = vadd.f32 %v2814, %v2815
      %2885 = vadd.xlane.f32.xlu0 %v2884
      %v2886 = vpop.xlane.xlu0 %2885
      %v2887 = vadd.f32 %v2816, %v2817
      %2888 = vadd.xlane.f32.xlu0 %v2887
      %v2889 = vpop.xlane.xlu0 %2888
      %v2890 = vrcp.pop 256.0
      %v2891 = vmul.f32 %v2820, %v2890
      %v2892 = vmul.f32 %v2823, %v2890
      %v2893 = vmul.f32 %v2826, %v2890
      %v2894 = vmul.f32 %v2829, %v2890
      %v2895 = vmul.f32 %v2832, %v2890
      %v2896 = vmul.f32 %v2835, %v2890
      %v2897 = vmul.f32 %v2838, %v2890
      %v2898 = vmul.f32 %v2841, %v2890
      %v2899 = vmul.f32 %v2844, %v2890
      %v2900 = vmul.f32 %v2847, %v2890
      %v2901 = vmul.f32 %v2850, %v2890
      %v2902 = vmul.f32 %v2853, %v2890
      %v2903 = vmul.f32 %v2856, %v2890
      %v2904 = vmul.f32 %v2859, %v2890
      %v2905 = vmul.f32 %v2862, %v2890
      %v2906 = vmul.f32 %v2865, %v2890
      %v2907 = vmul.f32 %v2868, %v2890
      %v2908 = vmul.f32 %v2871, %v2890
      %v2909 = vmul.f32 %v2874, %v2890
      %v2910 = vmul.f32 %v2877, %v2890
      %v2911 = vmul.f32 %v2880, %v2890
      %v2912 = vmul.f32 %v2883, %v2890
      %v2913 = vmul.f32 %v2886, %v2890
      %v2914 = vmul.f32 %v2889, %v2890
      %v2915 = vsub.f32 %v2770, %v2891
      %v2916 = vsub.f32 %v2771, %v2891
      %v2917 = vsub.f32 %v2772, %v2892
      %v2918 = vsub.f32 %v2773, %v2892
      %v2919 = vsub.f32 %v2774, %v2893
      %v2920 = vsub.f32 %v2775, %v2893
      %v2921 = vsub.f32 %v2776, %v2894
      %v2922 = vsub.f32 %v2777, %v2894
      %v2923 = vsub.f32 %v2778, %v2895
      %v2924 = vsub.f32 %v2779, %v2895
      %v2925 = vsub.f32 %v2780, %v2896
      %v2926 = vsub.f32 %v2781, %v2896
      %v2927 = vsub.f32 %v2782, %v2897
      %v2928 = vsub.f32 %v2783, %v2897
      %v2929 = vsub.f32 %v2784, %v2898
      %v2930 = vsub.f32 %v2785, %v2898
      %v2931 = vsub.f32 %v2786, %v2899
      %v2932 = vsub.f32 %v2787, %v2899
      %v2933 = vsub.f32 %v2788, %v2900
      %v2934 = vsub.f32 %v2789, %v2900
      %v2935 = vsub.f32 %v2790, %v2901
      %v2936 = vsub.f32 %v2791, %v2901
      %v2937 = vsub.f32 %v2792, %v2902
      %v2938 = vsub.f32 %v2793, %v2902
      %v2939 = vsub.f32 %v2794, %v2903
      %v2940 = vsub.f32 %v2795, %v2903
      %v2941 = vsub.f32 %v2796, %v2904
      %v2942 = vsub.f32 %v2797, %v2904
      %v2943 = vsub.f32 %v2798, %v2905
      %v2944 = vsub.f32 %v2799, %v2905
      %v2945 = vsub.f32 %v2800, %v2906
      %v2946 = vsub.f32 %v2801, %v2906
      %v2947 = vsub.f32 %v2802, %v2907
      %v2948 = vsub.f32 %v2803, %v2907
      %v2949 = vsub.f32 %v2804, %v2908
      %v2950 = vsub.f32 %v2805, %v2908
      %v2951 = vsub.f32 %v2806, %v2909
      %v2952 = vsub.f32 %v2807, %v2909
      %v2953 = vsub.f32 %v2808, %v2910
      %v2954 = vsub.f32 %v2809, %v2910
      %v2955 = vsub.f32 %v2810, %v2911
      %v2956 = vsub.f32 %v2811, %v2911
      %v2957 = vsub.f32 %v2812, %v2912
      %v2958 = vsub.f32 %v2813, %v2912
      %v2959 = vsub.f32 %v2814, %v2913
      %v2960 = vsub.f32 %v2815, %v2913
      %v2961 = vsub.f32 %v2816, %v2914
      %v2962 = vsub.f32 %v2817, %v2914
      %v2963 = vmul.f32 %v2915, %v2915
      %v2964 = vmul.f32 %v2916, %v2916
      %v2965 = vmul.f32 %v2917, %v2917
      %v2966 = vmul.f32 %v2918, %v2918
      %v2967 = vmul.f32 %v2919, %v2919
      %v2968 = vmul.f32 %v2920, %v2920
      %v2969 = vmul.f32 %v2921, %v2921
      %v2970 = vmul.f32 %v2922, %v2922
      %v2971 = vmul.f32 %v2923, %v2923
      %v2972 = vmul.f32 %v2924, %v2924
      %v2973 = vmul.f32 %v2925, %v2925
      %v2974 = vmul.f32 %v2926, %v2926
      %v2975 = vmul.f32 %v2927, %v2927
      %v2976 = vmul.f32 %v2928, %v2928
      %v2977 = vmul.f32 %v2929, %v2929
      %v2978 = vmul.f32 %v2930, %v2930
      %v2979 = vmul.f32 %v2931, %v2931
      %v2980 = vmul.f32 %v2932, %v2932
      %v2981 = vmul.f32 %v2933, %v2933
      %v2982 = vmul.f32 %v2934, %v2934
      %v2983 = vmul.f32 %v2935, %v2935
      %v2984 = vmul.f32 %v2936, %v2936
      %v2985 = vmul.f32 %v2937, %v2937
      %v2986 = vmul.f32 %v2938, %v2938
      %v2987 = vmul.f32 %v2939, %v2939
      %v2988 = vmul.f32 %v2940, %v2940
      %v2989 = vmul.f32 %v2941, %v2941
      %v2990 = vmul.f32 %v2942, %v2942
      %v2991 = vmul.f32 %v2943, %v2943
      %v2992 = vmul.f32 %v2944, %v2944
      %v2993 = vmul.f32 %v2945, %v2945
      %v2994 = vmul.f32 %v2946, %v2946
      %v2995 = vmul.f32 %v2947, %v2947
      %v2996 = vmul.f32 %v2948, %v2948
      %v2997 = vmul.f32 %v2949, %v2949
      %v2998 = vmul.f32 %v2950, %v2950
      %v2999 = vmul.f32 %v2951, %v2951
      %v3000 = vmul.f32 %v2952, %v2952
      %v3001 = vmul.f32 %v2953, %v2953
      %v3002 = vmul.f32 %v2954, %v2954
      %v3003 = vmul.f32 %v2955, %v2955
      %v3004 = vmul.f32 %v2956, %v2956
      %v3005 = vmul.f32 %v2957, %v2957
      %v3006 = vmul.f32 %v2958, %v2958
      %v3007 = vmul.f32 %v2959, %v2959
      %v3008 = vmul.f32 %v2960, %v2960
      %v3009 = vmul.f32 %v2961, %v2961
      %v3010 = vmul.f32 %v2962, %v2962
      %v3011 = vadd.f32 %v2963, %v2964
      %3012 = vadd.xlane.f32.xlu0 %v3011
      %v3013 = vpop.xlane.xlu0 %3012
      %v3014 = vadd.f32 %v2965, %v2966
      %3015 = vadd.xlane.f32.xlu0 %v3014
      %v3016 = vpop.xlane.xlu0 %3015
      %v3017 = vadd.f32 %v2967, %v2968
      %3018 = vadd.xlane.f32.xlu0 %v3017
      %v3019 = vpop.xlane.xlu0 %3018
      %v3020 = vadd.f32 %v2969, %v2970
      %3021 = vadd.xlane.f32.xlu0 %v3020
      %v3022 = vpop.xlane.xlu0 %3021
      %v3023 = vadd.f32 %v2971, %v2972
      %3024 = vadd.xlane.f32.xlu0 %v3023
      %v3025 = vpop.xlane.xlu0 %3024
      %v3026 = vadd.f32 %v2973, %v2974
      %3027 = vadd.xlane.f32.xlu0 %v3026
      %v3028 = vpop.xlane.xlu0 %3027
      %v3029 = vadd.f32 %v2975, %v2976
      %3030 = vadd.xlane.f32.xlu0 %v3029
      %v3031 = vpop.xlane.xlu0 %3030
      %v3032 = vadd.f32 %v2977, %v2978
      %3033 = vadd.xlane.f32.xlu0 %v3032
      %v3034 = vpop.xlane.xlu0 %3033
      %v3035 = vadd.f32 %v2979, %v2980
      %3036 = vadd.xlane.f32.xlu0 %v3035
      %v3037 = vpop.xlane.xlu0 %3036
      %v3038 = vadd.f32 %v2981, %v2982
      %3039 = vadd.xlane.f32.xlu0 %v3038
      %v3040 = vpop.xlane.xlu0 %3039
      %v3041 = vadd.f32 %v2983, %v2984
      %3042 = vadd.xlane.f32.xlu0 %v3041
      %v3043 = vpop.xlane.xlu0 %3042
      %v3044 = vadd.f32 %v2985, %v2986
      %3045 = vadd.xlane.f32.xlu0 %v3044
      %v3046 = vpop.xlane.xlu0 %3045
      %v3047 = vadd.f32 %v2987, %v2988
      %3048 = vadd.xlane.f32.xlu0 %v3047
      %v3049 = vpop.xlane.xlu0 %3048
      %v3050 = vadd.f32 %v2989, %v2990
      %3051 = vadd.xlane.f32.xlu0 %v3050
      %v3052 = vpop.xlane.xlu0 %3051
      %v3053 = vadd.f32 %v2991, %v2992
      %3054 = vadd.xlane.f32.xlu0 %v3053
      %v3055 = vpop.xlane.xlu0 %3054
      %v3056 = vadd.f32 %v2993, %v2994
      %3057 = vadd.xlane.f32.xlu0 %v3056
      %v3058 = vpop.xlane.xlu0 %3057
      %v3059 = vadd.f32 %v2995, %v2996
      %3060 = vadd.xlane.f32.xlu0 %v3059
      %v3061 = vpop.xlane.xlu0 %3060
      %v3062 = vadd.f32 %v2997, %v2998
      %3063 = vadd.xlane.f32.xlu0 %v3062
      %v3064 = vpop.xlane.xlu0 %3063
      %v3065 = vadd.f32 %v2999, %v3000
      %3066 = vadd.xlane.f32.xlu0 %v3065
      %v3067 = vpop.xlane.xlu0 %3066
      %v3068 = vadd.f32 %v3001, %v3002
      %3069 = vadd.xlane.f32.xlu0 %v3068
      %v3070 = vpop.xlane.xlu0 %3069
      %v3071 = vadd.f32 %v3003, %v3004
      %3072 = vadd.xlane.f32.xlu0 %v3071
      %v3073 = vpop.xlane.xlu0 %3072
      %v3074 = vadd.f32 %v3005, %v3006
      %3075 = vadd.xlane.f32.xlu0 %v3074
      %v3076 = vpop.xlane.xlu0 %3075
      %v3077 = vadd.f32 %v3007, %v3008
      %3078 = vadd.xlane.f32.xlu0 %v3077
      %v3079 = vpop.xlane.xlu0 %3078
      %v3080 = vadd.f32 %v3009, %v3010
      %3081 = vadd.xlane.f32.xlu0 %v3080
      %v3082 = vpop.xlane.xlu0 %3081
      %v3083 = vmul.f32 %v3013, %v2890
      %v3084 = vmul.f32 %v3016, %v2890
      %v3085 = vmul.f32 %v3019, %v2890
      %v3086 = vmul.f32 %v3022, %v2890
      %v3087 = vmul.f32 %v3025, %v2890
      %v3088 = vmul.f32 %v3028, %v2890
      %v3089 = vmul.f32 %v3031, %v2890
      %v3090 = vmul.f32 %v3034, %v2890
      %v3091 = vmul.f32 %v3037, %v2890
      %v3092 = vmul.f32 %v3040, %v2890
      %v3093 = vmul.f32 %v3043, %v2890
      %v3094 = vmul.f32 %v3046, %v2890
      %v3095 = vmul.f32 %v3049, %v2890
      %v3096 = vmul.f32 %v3052, %v2890
      %v3097 = vmul.f32 %v3055, %v2890
      %v3098 = vmul.f32 %v3058, %v2890
      %v3099 = vmul.f32 %v3061, %v2890
      %v3100 = vmul.f32 %v3064, %v2890
      %v3101 = vmul.f32 %v3067, %v2890
      %v3102 = vmul.f32 %v3070, %v2890
      %v3103 = vmul.f32 %v3073, %v2890
      %v3104 = vmul.f32 %v3076, %v2890
      %v3105 = vmul.f32 %v3079, %v2890
      %v3106 = vmul.f32 %v3082, %v2890
      %v3107 = vadd.f32 %v3083, 1e-05
      %v3108 = vadd.f32 %v3084, 1e-05
      %v3109 = vadd.f32 %v3085, 1e-05
      %v3110 = vadd.f32 %v3086, 1e-05
      %v3111 = vadd.f32 %v3087, 1e-05
      %v3112 = vadd.f32 %v3088, 1e-05
      %v3113 = vadd.f32 %v3089, 1e-05
      %v3114 = vadd.f32 %v3090, 1e-05
      %v3115 = vadd.f32 %v3091, 1e-05
      %v3116 = vadd.f32 %v3092, 1e-05
      %v3117 = vadd.f32 %v3093, 1e-05
      %v3118 = vadd.f32 %v3094, 1e-05
      %v3119 = vadd.f32 %v3095, 1e-05
      %v3120 = vadd.f32 %v3096, 1e-05
      %v3121 = vadd.f32 %v3097, 1e-05
      %v3122 = vadd.f32 %v3098, 1e-05
      %v3123 = vadd.f32 %v3099, 1e-05
      %v3124 = vadd.f32 %v3100, 1e-05
      %v3125 = vadd.f32 %v3101, 1e-05
      %v3126 = vadd.f32 %v3102, 1e-05
      %v3127 = vadd.f32 %v3103, 1e-05
      %v3128 = vadd.f32 %v3104, 1e-05
      %v3129 = vadd.f32 %v3105, 1e-05
      %v3130 = vadd.f32 %v3106, 1e-05
      %v3131 = vrsqrt.pop %v3107
      %v3132 = vrsqrt.pop %v3108
      %v3133 = vrsqrt.pop %v3109
      %v3134 = vrsqrt.pop %v3110
      %v3135 = vrsqrt.pop %v3111
      %v3136 = vrsqrt.pop %v3112
      %v3137 = vrsqrt.pop %v3113
      %v3138 = vrsqrt.pop %v3114
      %v3139 = vrsqrt.pop %v3115
      %v3140 = vrsqrt.pop %v3116
      %v3141 = vrsqrt.pop %v3117
      %v3142 = vrsqrt.pop %v3118
      %v3143 = vrsqrt.pop %v3119
      %v3144 = vrsqrt.pop %v3120
      %v3145 = vrsqrt.pop %v3121
      %v3146 = vrsqrt.pop %v3122
      %v3147 = vrsqrt.pop %v3123
      %v3148 = vrsqrt.pop %v3124
      %v3149 = vrsqrt.pop %v3125
      %v3150 = vrsqrt.pop %v3126
      %v3151 = vrsqrt.pop %v3127
      %v3152 = vrsqrt.pop %v3128
      %v3153 = vrsqrt.pop %v3129
      %v3154 = vrsqrt.pop %v3130
      %v3155 = vmul.f32 %v2915, %v3131
      %v3156 = vmul.f32 %v2916, %v3131
      %v3157 = vmul.f32 %v2917, %v3132
      %v3158 = vmul.f32 %v2918, %v3132
      %v3159 = vmul.f32 %v2919, %v3133
      %v3160 = vmul.f32 %v2920, %v3133
      %v3161 = vmul.f32 %v2921, %v3134
      %v3162 = vmul.f32 %v2922, %v3134
      %v3163 = vmul.f32 %v2923, %v3135
      %v3164 = vmul.f32 %v2924, %v3135
      %v3165 = vmul.f32 %v2925, %v3136
      %v3166 = vmul.f32 %v2926, %v3136
      %v3167 = vmul.f32 %v2927, %v3137
      %v3168 = vmul.f32 %v2928, %v3137
      %v3169 = vmul.f32 %v2929, %v3138
      %v3170 = vmul.f32 %v2930, %v3138
      %v3171 = vmul.f32 %v2931, %v3139
      %v3172 = vmul.f32 %v2932, %v3139
      %v3173 = vmul.f32 %v2933, %v3140
      %v3174 = vmul.f32 %v2934, %v3140
      %v3175 = vmul.f32 %v2935, %v3141
      %v3176 = vmul.f32 %v2936, %v3141
      %v3177 = vmul.f32 %v2937, %v3142
      %v3178 = vmul.f32 %v2938, %v3142
      %v3179 = vmul.f32 %v2939, %v3143
      %v3180 = vmul.f32 %v2940, %v3143
      %v3181 = vmul.f32 %v2941, %v3144
      %v3182 = vmul.f32 %v2942, %v3144
      %v3183 = vmul.f32 %v2943, %v3145
      %v3184 = vmul.f32 %v2944, %v3145
      %v3185 = vmul.f32 %v2945, %v3146
      %v3186 = vmul.f32 %v2946, %v3146
      %v3187 = vmul.f32 %v2947, %v3147
      %v3188 = vmul.f32 %v2948, %v3147
      %v3189 = vmul.f32 %v2949, %v3148
      %v3190 = vmul.f32 %v2950, %v3148
      %v3191 = vmul.f32 %v2951, %v3149
      %v3192 = vmul.f32 %v2952, %v3149
      %v3193 = vmul.f32 %v2953, %v3150
      %v3194 = vmul.f32 %v2954, %v3150
      %v3195 = vmul.f32 %v2955, %v3151
      %v3196 = vmul.f32 %v2956, %v3151
      %v3197 = vmul.f32 %v2957, %v3152
      %v3198 = vmul.f32 %v2958, %v3152
      %v3199 = vmul.f32 %v2959, %v3153
      %v3200 = vmul.f32 %v2960, %v3153
      %v3201 = vmul.f32 %v2961, %v3154
      %v3202 = vmul.f32 %v2962, %v3154
      %v3203 = vld [vmem:[%s7] sm:$0x3]
      %v3205 = vlaneseq
      %v3206 = vshrl.u32 %v3205, 7
      %v3207 = vsub.s32 0, %v3206
      %v3208 = vrot.slane %v3203, %v3207
      %v3209 = vlaneseq
      %v3210 = vshrl.u32 %v3209, 7
      %v3211 = vsub.s32 1, %v3210
      %v3212 = vrot.slane %v3203, %v3211
      %v3215 = vmul.f32 %v3155, %v3208
      %v3216 = vmul.f32 %v3156, %v3212
      %v3217 = vmul.f32 %v3157, %v3208
      %v3218 = vmul.f32 %v3158, %v3212
      %v3219 = vmul.f32 %v3159, %v3208
      %v3220 = vmul.f32 %v3160, %v3212
      %v3221 = vmul.f32 %v3161, %v3208
      %v3222 = vmul.f32 %v3162, %v3212
      %v3223 = vmul.f32 %v3163, %v3208
      %v3224 = vmul.f32 %v3164, %v3212
      %v3225 = vmul.f32 %v3165, %v3208
      %v3226 = vmul.f32 %v3166, %v3212
      %v3227 = vmul.f32 %v3167, %v3208
      %v3228 = vmul.f32 %v3168, %v3212
      %v3229 = vmul.f32 %v3169, %v3208
      %v3230 = vmul.f32 %v3170, %v3212
      %v3231 = vmul.f32 %v3171, %v3208
      %v3232 = vmul.f32 %v3172, %v3212
      %v3233 = vmul.f32 %v3173, %v3208
      %v3234 = vmul.f32 %v3174, %v3212
      %v3235 = vmul.f32 %v3175, %v3208
      %v3236 = vmul.f32 %v3176, %v3212
      %v3237 = vmul.f32 %v3177, %v3208
      %v3238 = vmul.f32 %v3178, %v3212
      %v3239 = vmul.f32 %v3179, %v3208
      %v3240 = vmul.f32 %v3180, %v3212
      %v3241 = vmul.f32 %v3181, %v3208
      %v3242 = vmul.f32 %v3182, %v3212
      %v3243 = vmul.f32 %v3183, %v3208
      %v3244 = vmul.f32 %v3184, %v3212
      %v3245 = vmul.f32 %v3185, %v3208
      %v3246 = vmul.f32 %v3186, %v3212
      %v3247 = vmul.f32 %v3187, %v3208
      %v3248 = vmul.f32 %v3188, %v3212
      %v3249 = vmul.f32 %v3189, %v3208
      %v3250 = vmul.f32 %v3190, %v3212
      %v3251 = vmul.f32 %v3191, %v3208
      %v3252 = vmul.f32 %v3192, %v3212
      %v3253 = vmul.f32 %v3193, %v3208
      %v3254 = vmul.f32 %v3194, %v3212
      %v3255 = vmul.f32 %v3195, %v3208
      %v3256 = vmul.f32 %v3196, %v3212
      %v3257 = vmul.f32 %v3197, %v3208
      %v3258 = vmul.f32 %v3198, %v3212
      %v3259 = vmul.f32 %v3199, %v3208
      %v3260 = vmul.f32 %v3200, %v3212
      %v3261 = vmul.f32 %v3201, %v3208
      %v3262 = vmul.f32 %v3202, %v3212
      %v3263 = vld [vmem:[%s8] sm:$0x3]
      %v3265 = vlaneseq
      %v3266 = vshrl.u32 %v3265, 7
      %v3267 = vsub.s32 0, %v3266
      %v3268 = vrot.slane %v3263, %v3267
      %v3269 = vlaneseq
      %v3270 = vshrl.u32 %v3269, 7
      %v3271 = vsub.s32 1, %v3270
      %v3272 = vrot.slane %v3263, %v3271
      %v3275 = vadd.f32 %v3215, %v3268
      %v3276 = vadd.f32 %v3216, %v3272
      %v3277 = vadd.f32 %v3217, %v3268
      %v3278 = vadd.f32 %v3218, %v3272
      %v3279 = vadd.f32 %v3219, %v3268
      %v3280 = vadd.f32 %v3220, %v3272
      %v3281 = vadd.f32 %v3221, %v3268
      %v3282 = vadd.f32 %v3222, %v3272
      %v3283 = vadd.f32 %v3223, %v3268
      %v3284 = vadd.f32 %v3224, %v3272
      %v3285 = vadd.f32 %v3225, %v3268
      %v3286 = vadd.f32 %v3226, %v3272
      %v3287 = vadd.f32 %v3227, %v3268
      %v3288 = vadd.f32 %v3228, %v3272
      %v3289 = vadd.f32 %v3229, %v3268
      %v3290 = vadd.f32 %v3230, %v3272
      %v3291 = vadd.f32 %v3231, %v3268
      %v3292 = vadd.f32 %v3232, %v3272
      %v3293 = vadd.f32 %v3233, %v3268
      %v3294 = vadd.f32 %v3234, %v3272
      %v3295 = vadd.f32 %v3235, %v3268
      %v3296 = vadd.f32 %v3236, %v3272
      %v3297 = vadd.f32 %v3237, %v3268
      %v3298 = vadd.f32 %v3238, %v3272
      %v3299 = vadd.f32 %v3239, %v3268
      %v3300 = vadd.f32 %v3240, %v3272
      %v3301 = vadd.f32 %v3241, %v3268
      %v3302 = vadd.f32 %v3242, %v3272
      %v3303 = vadd.f32 %v3243, %v3268
      %v3304 = vadd.f32 %v3244, %v3272
      %v3305 = vadd.f32 %v3245, %v3268
      %v3306 = vadd.f32 %v3246, %v3272
      %v3307 = vadd.f32 %v3247, %v3268
      %v3308 = vadd.f32 %v3248, %v3272
      %v3309 = vadd.f32 %v3249, %v3268
      %v3310 = vadd.f32 %v3250, %v3272
      %v3311 = vadd.f32 %v3251, %v3268
      %v3312 = vadd.f32 %v3252, %v3272
      %v3313 = vadd.f32 %v3253, %v3268
      %v3314 = vadd.f32 %v3254, %v3272
      %v3315 = vadd.f32 %v3255, %v3268
      %v3316 = vadd.f32 %v3256, %v3272
      %v3317 = vadd.f32 %v3257, %v3268
      %v3318 = vadd.f32 %v3258, %v3272
      %v3319 = vadd.f32 %v3259, %v3268
      %v3320 = vadd.f32 %v3260, %v3272
      %v3321 = vadd.f32 %v3261, %v3268
      %v3322 = vadd.f32 %v3262, %v3272
      %v3323 = vpack.c.bf16 %v3277, %v3275
      %v3324 = vpack.c.bf16 %v3278, %v3276
      %v3325 = vpack.c.bf16 %v3281, %v3279
      %v3326 = vpack.c.bf16 %v3282, %v3280
      %v3327 = vpack.c.bf16 %v3285, %v3283
      %v3328 = vpack.c.bf16 %v3286, %v3284
      %v3329 = vpack.c.bf16 %v3289, %v3287
      %v3330 = vpack.c.bf16 %v3290, %v3288
      %v3331 = vpack.c.bf16 %v3293, %v3291
      %v3332 = vpack.c.bf16 %v3294, %v3292
      %v3333 = vpack.c.bf16 %v3297, %v3295
      %v3334 = vpack.c.bf16 %v3298, %v3296
      %v3335 = vpack.c.bf16 %v3301, %v3299
      %v3336 = vpack.c.bf16 %v3302, %v3300
      %v3337 = vpack.c.bf16 %v3305, %v3303
      %v3338 = vpack.c.bf16 %v3306, %v3304
      %v3339 = vpack.c.bf16 %v3309, %v3307
      %v3340 = vpack.c.bf16 %v3310, %v3308
      %v3341 = vpack.c.bf16 %v3313, %v3311
      %v3342 = vpack.c.bf16 %v3314, %v3312
      %v3343 = vpack.c.bf16 %v3317, %v3315
      %v3344 = vpack.c.bf16 %v3318, %v3316
      %v3345 = vpack.c.bf16 %v3321, %v3319
      %v3346 = vpack.c.bf16 %v3322, %v3320
      %v3347 = vld [vmem:[%s9] sm:$0xff]
      %v3348 = vld [vmem:[%s9 + $0x8] sm:$0xff]
      %v3349 = vld [vmem:[%s9 + $0x10] sm:$0xff]
      %v3350 = vld [vmem:[%s9 + $0x18] sm:$0xff]
      %v3351 = vld [vmem:[%s9 + $0x20] sm:$0xff]
      %v3352 = vld [vmem:[%s9 + $0x28] sm:$0xff]
      %v3353 = vld [vmem:[%s9 + $0x30] sm:$0xff]
      %v3354 = vld [vmem:[%s9 + $0x38] sm:$0xff]
      %v3355 = vld [vmem:[%s9 + $0x40] sm:$0xff]
      %v3356 = vld [vmem:[%s9 + $0x48] sm:$0xff]
      %v3357 = vld [vmem:[%s9 + $0x50] sm:$0xff]
      %v3358 = vld [vmem:[%s9 + $0x58] sm:$0xff]
      %v3359 = vld [vmem:[%s9 + $0x60] sm:$0xff]
      %v3360 = vld [vmem:[%s9 + $0x68] sm:$0xff]
      %v3361 = vld [vmem:[%s9 + $0x70] sm:$0xff]
      %v3362 = vld [vmem:[%s9 + $0x78] sm:$0xff]
      %v3363 = vld [vmem:[%s9 + $0x80] sm:$0xff]
      %v3364 = vld [vmem:[%s9 + $0x88] sm:$0xff]
      %v3365 = vld [vmem:[%s9 + $0x90] sm:$0xff]
      %v3366 = vld [vmem:[%s9 + $0x98] sm:$0xff]
      %v3367 = vld [vmem:[%s9 + $0xa0] sm:$0xff]
      %v3368 = vld [vmem:[%s9 + $0xa8] sm:$0xff]
      %v3369 = vld [vmem:[%s9 + $0xb0] sm:$0xff]
      %v3370 = vld [vmem:[%s9 + $0xb8] sm:$0xff]
      %v3371 = vld [vmem:[%s9 + $0xc0] sm:$0xff]
      %v3372 = vld [vmem:[%s9 + $0xc8] sm:$0xff]
      %v3373 = vld [vmem:[%s9 + $0xd0] sm:$0xff]
      %v3374 = vld [vmem:[%s9 + $0xd8] sm:$0xff]
      %v3375 = vld [vmem:[%s9 + $0xe0] sm:$0xff]
      %v3376 = vld [vmem:[%s9 + $0xe8] sm:$0xff]
      %v3377 = vld [vmem:[%s9 + $0xf0] sm:$0xff]
      %v3378 = vld [vmem:[%s9 + $0xf8] sm:$0xff]
      %s3379 = scalar_lea.vmem %s9, 256
      %v3380 = vld [vmem:[%s3379] sm:$0xff]
      %v3381 = vld [vmem:[%s3379 + $0x8] sm:$0xff]
      %v3382 = vld [vmem:[%s3379 + $0x10] sm:$0xff]
      %v3383 = vld [vmem:[%s3379 + $0x18] sm:$0xff]
      %v3384 = vld [vmem:[%s3379 + $0x20] sm:$0xff]
      %v3385 = vld [vmem:[%s3379 + $0x28] sm:$0xff]
      %v3386 = vld [vmem:[%s3379 + $0x30] sm:$0xff]
      %v3387 = vld [vmem:[%s3379 + $0x38] sm:$0xff]
      %v3388 = vld [vmem:[%s3379 + $0x40] sm:$0xff]
      %v3389 = vld [vmem:[%s3379 + $0x48] sm:$0xff]
      %v3390 = vld [vmem:[%s3379 + $0x50] sm:$0xff]
      %v3391 = vld [vmem:[%s3379 + $0x58] sm:$0xff]
      %v3392 = vld [vmem:[%s3379 + $0x60] sm:$0xff]
      %v3393 = vld [vmem:[%s3379 + $0x68] sm:$0xff]
      %v3394 = vld [vmem:[%s3379 + $0x70] sm:$0xff]
      %v3395 = vld [vmem:[%s3379 + $0x78] sm:$0xff]
      %v3396 = vld [vmem:[%s3379 + $0x80] sm:$0xff]
      %v3397 = vld [vmem:[%s3379 + $0x88] sm:$0xff]
      %v3398 = vld [vmem:[%s3379 + $0x90] sm:$0xff]
      %v3399 = vld [vmem:[%s3379 + $0x98] sm:$0xff]
      %v3400 = vld [vmem:[%s3379 + $0xa0] sm:$0xff]
      %v3401 = vld [vmem:[%s3379 + $0xa8] sm:$0xff]
      %v3402 = vld [vmem:[%s3379 + $0xb0] sm:$0xff]
      %v3403 = vld [vmem:[%s3379 + $0xb8] sm:$0xff]
      %v3404 = vld [vmem:[%s3379 + $0xc0] sm:$0xff]
      %v3405 = vld [vmem:[%s3379 + $0xc8] sm:$0xff]
      %v3406 = vld [vmem:[%s3379 + $0xd0] sm:$0xff]
      %v3407 = vld [vmem:[%s3379 + $0xd8] sm:$0xff]
      %v3408 = vld [vmem:[%s3379 + $0xe0] sm:$0xff]
      %v3409 = vld [vmem:[%s3379 + $0xe8] sm:$0xff]
      %v3410 = vld [vmem:[%s3379 + $0xf0] sm:$0xff]
      %v3411 = vld [vmem:[%s3379 + $0xf8] sm:$0xff]
      %v3444 = vunpack.c.l.b16 %v3380
      %v3445 = vunpack.c.h.b16 %v3380
      %v3446 = vunpack.c.l.b16 %v3381
      %v3447 = vunpack.c.h.b16 %v3381
      %v3448 = vunpack.c.l.b16 %v3382
      %v3449 = vunpack.c.h.b16 %v3382
      %v3450 = vunpack.c.l.b16 %v3383
      %v3451 = vunpack.c.h.b16 %v3383
      %v3452 = vunpack.c.l.b16 %v3384
      %v3453 = vunpack.c.h.b16 %v3384
      %v3454 = vunpack.c.l.b16 %v3385
      %v3455 = vunpack.c.h.b16 %v3385
      %v3456 = vunpack.c.l.b16 %v3386
      %v3457 = vunpack.c.h.b16 %v3386
      %v3458 = vunpack.c.l.b16 %v3387
      %v3459 = vunpack.c.h.b16 %v3387
      %v3460 = vunpack.c.l.b16 %v3388
      %v3461 = vunpack.c.h.b16 %v3388
      %v3462 = vunpack.c.l.b16 %v3389
      %v3463 = vunpack.c.h.b16 %v3389
      %v3464 = vunpack.c.l.b16 %v3390
      %v3465 = vunpack.c.h.b16 %v3390
      %v3466 = vunpack.c.l.b16 %v3391
      %v3467 = vunpack.c.h.b16 %v3391
      %v3468 = vunpack.c.l.b16 %v3392
      %v3469 = vunpack.c.h.b16 %v3392
      %v3470 = vunpack.c.l.b16 %v3393
      %v3471 = vunpack.c.h.b16 %v3393
      %v3472 = vunpack.c.l.b16 %v3394
      %v3473 = vunpack.c.h.b16 %v3394
      %v3474 = vunpack.c.l.b16 %v3395
      %v3475 = vunpack.c.h.b16 %v3395
      %v3476 = vunpack.c.l.b16 %v3396
      %v3477 = vunpack.c.h.b16 %v3396
      %v3478 = vunpack.c.l.b16 %v3397
      %v3479 = vunpack.c.h.b16 %v3397
      %v3480 = vunpack.c.l.b16 %v3398
      %v3481 = vunpack.c.h.b16 %v3398
      %v3482 = vunpack.c.l.b16 %v3399
      %v3483 = vunpack.c.h.b16 %v3399
      %v3484 = vunpack.c.l.b16 %v3400
      %v3485 = vunpack.c.h.b16 %v3400
      %v3486 = vunpack.c.l.b16 %v3401
      %v3487 = vunpack.c.h.b16 %v3401
      %v3488 = vunpack.c.l.b16 %v3402
      %v3489 = vunpack.c.h.b16 %v3402
      %v3490 = vunpack.c.l.b16 %v3403
      %v3491 = vunpack.c.h.b16 %v3403
      %v3492 = vunpack.c.l.b16 %v3404
      %v3493 = vunpack.c.h.b16 %v3404
      %v3494 = vunpack.c.l.b16 %v3405
      %v3495 = vunpack.c.h.b16 %v3405
      %v3496 = vunpack.c.l.b16 %v3406
      %v3497 = vunpack.c.h.b16 %v3406
      %v3498 = vunpack.c.l.b16 %v3407
      %v3499 = vunpack.c.h.b16 %v3407
      %v3500 = vunpack.c.l.b16 %v3408
      %v3501 = vunpack.c.h.b16 %v3408
      %v3502 = vunpack.c.l.b16 %v3409
      %v3503 = vunpack.c.h.b16 %v3409
      %v3504 = vunpack.c.l.b16 %v3410
      %v3505 = vunpack.c.h.b16 %v3410
      %v3506 = vunpack.c.l.b16 %v3411
      %v3507 = vunpack.c.h.b16 %v3411
      %v3508 = vpack.c.b16 %v3446, %v3444
      %v3509 = vpack.c.b16 %v3447, %v3445
      %v3510 = vpack.c.b16 %v3450, %v3448
      %v3511 = vpack.c.b16 %v3451, %v3449
      %v3512 = vpack.c.b16 %v3454, %v3452
      %v3513 = vpack.c.b16 %v3455, %v3453
      %v3514 = vpack.c.b16 %v3458, %v3456
      %v3515 = vpack.c.b16 %v3459, %v3457
      %v3516 = vpack.c.b16 %v3462, %v3460
      %v3517 = vpack.c.b16 %v3463, %v3461
      %v3518 = vpack.c.b16 %v3466, %v3464
      %v3519 = vpack.c.b16 %v3467, %v3465
      %v3520 = vpack.c.b16 %v3470, %v3468
      %v3521 = vpack.c.b16 %v3471, %v3469
      %v3522 = vpack.c.b16 %v3474, %v3472
      %v3523 = vpack.c.b16 %v3475, %v3473
      %v3524 = vpack.c.b16 %v3478, %v3476
      %v3525 = vpack.c.b16 %v3479, %v3477
      %v3526 = vpack.c.b16 %v3482, %v3480
      %v3527 = vpack.c.b16 %v3483, %v3481
      %v3528 = vpack.c.b16 %v3486, %v3484
      %v3529 = vpack.c.b16 %v3487, %v3485
      %v3530 = vpack.c.b16 %v3490, %v3488
      %v3531 = vpack.c.b16 %v3491, %v3489
      %v3532 = vpack.c.b16 %v3494, %v3492
      %v3533 = vpack.c.b16 %v3495, %v3493
      %v3534 = vpack.c.b16 %v3498, %v3496
      %v3535 = vpack.c.b16 %v3499, %v3497
      %v3536 = vpack.c.b16 %v3502, %v3500
      %v3537 = vpack.c.b16 %v3503, %v3501
      %v3538 = vpack.c.b16 %v3506, %v3504
      %v3539 = vpack.c.b16 %v3507, %v3505
      %3572 = vmatprep.subr.bf16.mxu0 %v3523
      %3573 = vmatpush1.bf16.msra.mxu0 %v3522
      %3574 = vmatprep.subr.bf16.mxu0 %v3521
      %3575 = vmatpush1.bf16.msra.mxu0 %v3520
      %3576 = vmatprep.subr.bf16.mxu0 %v3519
      %3577 = vmatpush1.bf16.msra.mxu0 %v3518
      %3578 = vmatprep.subr.bf16.mxu0 %v3517
      %3579 = vmatpush1.bf16.msra.mxu0 %v3516
      %3580 = vmatprep.subr.bf16.mxu0 %v3515
      %3581 = vmatpush1.bf16.msra.mxu0 %v3514
      %3582 = vmatprep.subr.bf16.mxu0 %v3513
      %3583 = vmatpush1.bf16.msra.mxu0 %v3512
      %3584 = vmatprep.subr.bf16.mxu0 %v3511
      %3585 = vmatpush1.bf16.msra.mxu0 %v3510
      %3586 = vmatprep.subr.bf16.mxu0 %v3509
      %3587 = vmatpush1.bf16.msra.mxu0 %v3508
      %3588 = vmatprep.subr.bf16.mxu0 %v3539
      %3589 = vmatpush2.bf16.msra.mxu0 %v3538
      %3590 = vmatprep.subr.bf16.mxu0 %v3537
      %3591 = vmatpush2.bf16.msra.mxu0 %v3536
      %3592 = vmatprep.subr.bf16.mxu0 %v3535
      %3593 = vmatpush2.bf16.msra.mxu0 %v3534
      %3594 = vmatprep.subr.bf16.mxu0 %v3533
      %3595 = vmatpush2.bf16.msra.mxu0 %v3532
      %3596 = vmatprep.subr.bf16.mxu0 %v3531
      %3597 = vmatpush2.bf16.msra.mxu0 %v3530
      %3598 = vmatprep.subr.bf16.mxu0 %v3529
      %3599 = vmatpush2.bf16.msra.mxu0 %v3528
      %3600 = vmatprep.subr.bf16.mxu0 %v3527
      %3601 = vmatpush2.bf16.msra.mxu0 %v3526
      %3602 = vmatprep.subr.bf16.mxu0 %v3525
      %3603 = vmatpush2.bf16.msra.mxu0 %v3524
      %3604 = vmatprep.mubr.bf16.mxu0 %v3326
      %3605 = vmatmul.mubr.bf16.gmra.mxu0 %v3325
      %v3606 = vpop.f32.mrf.mxu0
      %v3607 = vadd.f32 0.0, %v3606
      %v3608 = vpop.f32.mrf.mxu0
      %v3609 = vadd.f32 0.0, %v3608
      %v3610 = vpop.f32.mrf.mxu0
      %v3611 = vadd.f32 0.0, %v3610
      %v3612 = vpop.f32.mrf.mxu0
      %v3613 = vadd.f32 0.0, %v3612
      %3614 = vmatprep.mubr.bf16.mxu0 %v3328
      %3615 = vmatmul.mubr.bf16.gmra.mxu0 %v3327
      %v3616 = vpop.f32.mrf.mxu0
      %v3617 = vadd.f32 0.0, %v3616
      %v3618 = vpop.f32.mrf.mxu0
      %v3619 = vadd.f32 0.0, %v3618
      %v3620 = vpop.f32.mrf.mxu0
      %v3621 = vadd.f32 0.0, %v3620
      %v3622 = vpop.f32.mrf.mxu0
      %v3623 = vadd.f32 0.0, %v3622
      %3624 = vmatprep.mubr.bf16.mxu0 %v3330
      %3625 = vmatmul.mubr.bf16.gmra.mxu0 %v3329
      %v3626 = vpop.f32.mrf.mxu0
      %v3627 = vadd.f32 0.0, %v3626
      %v3628 = vpop.f32.mrf.mxu0
      %v3629 = vadd.f32 0.0, %v3628
      %v3630 = vpop.f32.mrf.mxu0
      %v3631 = vadd.f32 0.0, %v3630
      %v3632 = vpop.f32.mrf.mxu0
      %v3633 = vadd.f32 0.0, %v3632
      %3634 = vmatprep.mubr.bf16.mxu0 %v3332
      %3635 = vmatmul.mubr.bf16.gmra.mxu0 %v3331
      %v3636 = vpop.f32.mrf.mxu0
      %v3637 = vadd.f32 0.0, %v3636
      %v3638 = vpop.f32.mrf.mxu0
      %v3639 = vadd.f32 0.0, %v3638
      %v3640 = vpop.f32.mrf.mxu0
      %v3641 = vadd.f32 0.0, %v3640
      %v3642 = vpop.f32.mrf.mxu0
      %v3643 = vadd.f32 0.0, %v3642
      %3644 = vmatprep.mubr.bf16.mxu0 %v3334
      %3645 = vmatmul.mubr.bf16.gmra.mxu0 %v3333
      %v3646 = vpop.f32.mrf.mxu0
      %v3647 = vadd.f32 0.0, %v3646
      %v3648 = vpop.f32.mrf.mxu0
      %v3649 = vadd.f32 0.0, %v3648
      %v3650 = vpop.f32.mrf.mxu0
      %v3651 = vadd.f32 0.0, %v3650
      %v3652 = vpop.f32.mrf.mxu0
      %v3653 = vadd.f32 0.0, %v3652
      %3654 = vmatprep.mubr.bf16.mxu0 %v3336
      %3655 = vmatmul.mubr.bf16.gmra.mxu0 %v3335
      %v3656 = vpop.f32.mrf.mxu0
      %v3657 = vadd.f32 0.0, %v3656
      %v3658 = vpop.f32.mrf.mxu0
      %v3659 = vadd.f32 0.0, %v3658
      %v3660 = vpop.f32.mrf.mxu0
      %v3661 = vadd.f32 0.0, %v3660
      %v3662 = vpop.f32.mrf.mxu0
      %v3663 = vadd.f32 0.0, %v3662
      %3664 = vmatprep.mubr.bf16.mxu0 %v3338
      %3665 = vmatmul.mubr.bf16.gmra.mxu0 %v3337
      %v3666 = vpop.f32.mrf.mxu0
      %v3667 = vadd.f32 0.0, %v3666
      %v3668 = vpop.f32.mrf.mxu0
      %v3669 = vadd.f32 0.0, %v3668
      %v3670 = vpop.f32.mrf.mxu0
      %v3671 = vadd.f32 0.0, %v3670
      %v3672 = vpop.f32.mrf.mxu0
      %v3673 = vadd.f32 0.0, %v3672
      %3674 = vmatprep.mubr.bf16.mxu0 %v3340
      %3675 = vmatmul.mubr.bf16.gmra.mxu0 %v3339
      %v3676 = vpop.f32.mrf.mxu0
      %v3677 = vadd.f32 0.0, %v3676
      %v3678 = vpop.f32.mrf.mxu0
      %v3679 = vadd.f32 0.0, %v3678
      %v3680 = vpop.f32.mrf.mxu0
      %v3681 = vadd.f32 0.0, %v3680
      %v3682 = vpop.f32.mrf.mxu0
      %v3683 = vadd.f32 0.0, %v3682
      %3684 = vmatprep.mubr.bf16.mxu0 %v3342
      %3685 = vmatmul.mubr.bf16.gmra.mxu0 %v3341
      %v3686 = vpop.f32.mrf.mxu0
      %v3687 = vadd.f32 0.0, %v3686
      %v3688 = vpop.f32.mrf.mxu0
      %v3689 = vadd.f32 0.0, %v3688
      %v3690 = vpop.f32.mrf.mxu0
      %v3691 = vadd.f32 0.0, %v3690
      %v3692 = vpop.f32.mrf.mxu0
      %v3693 = vadd.f32 0.0, %v3692
      %3694 = vmatprep.mubr.bf16.mxu0 %v3344
      %3695 = vmatmul.mubr.bf16.gmra.mxu0 %v3343
      %v3696 = vpop.f32.mrf.mxu0
      %v3697 = vadd.f32 0.0, %v3696
      %v3698 = vpop.f32.mrf.mxu0
      %v3699 = vadd.f32 0.0, %v3698
      %v3700 = vpop.f32.mrf.mxu0
      %v3701 = vadd.f32 0.0, %v3700
      %v3702 = vpop.f32.mrf.mxu0
      %v3703 = vadd.f32 0.0, %v3702
      %3704 = vdwg.mxu0
      %v3737 = vunpack.c.l.b16 %v3347
      %v3738 = vunpack.c.h.b16 %v3347
      %v3739 = vunpack.c.l.b16 %v3348
      %v3740 = vunpack.c.h.b16 %v3348
      %v3741 = vunpack.c.l.b16 %v3349
      %v3742 = vunpack.c.h.b16 %v3349
      %v3743 = vunpack.c.l.b16 %v3350
      %v3744 = vunpack.c.h.b16 %v3350
      %v3745 = vunpack.c.l.b16 %v3351
      %v3746 = vunpack.c.h.b16 %v3351
      %v3747 = vunpack.c.l.b16 %v3352
      %v3748 = vunpack.c.h.b16 %v3352
      %v3749 = vunpack.c.l.b16 %v3353
      %v3750 = vunpack.c.h.b16 %v3353
      %v3751 = vunpack.c.l.b16 %v3354
      %v3752 = vunpack.c.h.b16 %v3354
      %v3753 = vunpack.c.l.b16 %v3355
      %v3754 = vunpack.c.h.b16 %v3355
      %v3755 = vunpack.c.l.b16 %v3356
      %v3756 = vunpack.c.h.b16 %v3356
      %v3757 = vunpack.c.l.b16 %v3357
      %v3758 = vunpack.c.h.b16 %v3357
      %v3759 = vunpack.c.l.b16 %v3358
      %v3760 = vunpack.c.h.b16 %v3358
      %v3761 = vunpack.c.l.b16 %v3359
      %v3762 = vunpack.c.h.b16 %v3359
      %v3763 = vunpack.c.l.b16 %v3360
      %v3764 = vunpack.c.h.b16 %v3360
      %v3765 = vunpack.c.l.b16 %v3361
      %v3766 = vunpack.c.h.b16 %v3361
      %v3767 = vunpack.c.l.b16 %v3362
      %v3768 = vunpack.c.h.b16 %v3362
      %v3769 = vunpack.c.l.b16 %v3363
      %v3770 = vunpack.c.h.b16 %v3363
      %v3771 = vunpack.c.l.b16 %v3364
      %v3772 = vunpack.c.h.b16 %v3364
      %v3773 = vunpack.c.l.b16 %v3365
      %v3774 = vunpack.c.h.b16 %v3365
      %v3775 = vunpack.c.l.b16 %v3366
      %v3776 = vunpack.c.h.b16 %v3366
      %v3777 = vunpack.c.l.b16 %v3367
      %v3778 = vunpack.c.h.b16 %v3367
      %v3779 = vunpack.c.l.b16 %v3368
      %v3780 = vunpack.c.h.b16 %v3368
      %v3781 = vunpack.c.l.b16 %v3369
      %v3782 = vunpack.c.h.b16 %v3369
      %v3783 = vunpack.c.l.b16 %v3370
      %v3784 = vunpack.c.h.b16 %v3370
      %v3785 = vunpack.c.l.b16 %v3371
      %v3786 = vunpack.c.h.b16 %v3371
      %v3787 = vunpack.c.l.b16 %v3372
      %v3788 = vunpack.c.h.b16 %v3372
      %v3789 = vunpack.c.l.b16 %v3373
      %v3790 = vunpack.c.h.b16 %v3373
      %v3791 = vunpack.c.l.b16 %v3374
      %v3792 = vunpack.c.h.b16 %v3374
      %v3793 = vunpack.c.l.b16 %v3375
      %v3794 = vunpack.c.h.b16 %v3375
      %v3795 = vunpack.c.l.b16 %v3376
      %v3796 = vunpack.c.h.b16 %v3376
      %v3797 = vunpack.c.l.b16 %v3377
      %v3798 = vunpack.c.h.b16 %v3377
      %v3799 = vunpack.c.l.b16 %v3378
      %v3800 = vunpack.c.h.b16 %v3378
      %v3801 = vpack.c.b16 %v3739, %v3737
      %v3802 = vpack.c.b16 %v3740, %v3738
      %v3803 = vpack.c.b16 %v3743, %v3741
      %v3804 = vpack.c.b16 %v3744, %v3742
      %v3805 = vpack.c.b16 %v3747, %v3745
      %v3806 = vpack.c.b16 %v3748, %v3746
      %v3807 = vpack.c.b16 %v3751, %v3749
      %v3808 = vpack.c.b16 %v3752, %v3750
      %v3809 = vpack.c.b16 %v3755, %v3753
      %v3810 = vpack.c.b16 %v3756, %v3754
      %v3811 = vpack.c.b16 %v3759, %v3757
      %v3812 = vpack.c.b16 %v3760, %v3758
      %v3813 = vpack.c.b16 %v3763, %v3761
      %v3814 = vpack.c.b16 %v3764, %v3762
      %v3815 = vpack.c.b16 %v3767, %v3765
      %v3816 = vpack.c.b16 %v3768, %v3766
      %v3817 = vpack.c.b16 %v3771, %v3769
      %v3818 = vpack.c.b16 %v3772, %v3770
      %v3819 = vpack.c.b16 %v3775, %v3773
      %v3820 = vpack.c.b16 %v3776, %v3774
      %v3821 = vpack.c.b16 %v3779, %v3777
      %v3822 = vpack.c.b16 %v3780, %v3778
      %v3823 = vpack.c.b16 %v3783, %v3781
      %v3824 = vpack.c.b16 %v3784, %v3782
      %v3825 = vpack.c.b16 %v3787, %v3785
      %v3826 = vpack.c.b16 %v3788, %v3786
      %v3827 = vpack.c.b16 %v3791, %v3789
      %v3828 = vpack.c.b16 %v3792, %v3790
      %v3829 = vpack.c.b16 %v3795, %v3793
      %v3830 = vpack.c.b16 %v3796, %v3794
      %v3831 = vpack.c.b16 %v3799, %v3797
      %v3832 = vpack.c.b16 %v3800, %v3798
      %3865 = vmatprep.subr.bf16.mxu0 %v3816
      %3866 = vmatpush1.bf16.msra.mxu0 %v3815
      %3867 = vmatprep.subr.bf16.mxu0 %v3814
      %3868 = vmatpush1.bf16.msra.mxu0 %v3813
      %3869 = vmatprep.subr.bf16.mxu0 %v3812
      %3870 = vmatpush1.bf16.msra.mxu0 %v3811
      %3871 = vmatprep.subr.bf16.mxu0 %v3810
      %3872 = vmatpush1.bf16.msra.mxu0 %v3809
      %3873 = vmatprep.subr.bf16.mxu0 %v3808
      %3874 = vmatpush1.bf16.msra.mxu0 %v3807
      %3875 = vmatprep.subr.bf16.mxu0 %v3806
      %3876 = vmatpush1.bf16.msra.mxu0 %v3805
      %3877 = vmatprep.subr.bf16.mxu0 %v3804
      %3878 = vmatpush1.bf16.msra.mxu0 %v3803
      %3879 = vmatprep.subr.bf16.mxu0 %v3802
      %3880 = vmatpush1.bf16.msra.mxu0 %v3801
      %3881 = vmatprep.subr.bf16.mxu0 %v3832
      %3882 = vmatpush2.bf16.msra.mxu0 %v3831
      %3883 = vmatprep.subr.bf16.mxu0 %v3830
      %3884 = vmatpush2.bf16.msra.mxu0 %v3829
      %3885 = vmatprep.subr.bf16.mxu0 %v3828
      %3886 = vmatpush2.bf16.msra.mxu0 %v3827
      %3887 = vmatprep.subr.bf16.mxu0 %v3826
      %3888 = vmatpush2.bf16.msra.mxu0 %v3825
      %3889 = vmatprep.subr.bf16.mxu0 %v3824
      %3890 = vmatpush2.bf16.msra.mxu0 %v3823
      %3891 = vmatprep.subr.bf16.mxu0 %v3822
      %3892 = vmatpush2.bf16.msra.mxu0 %v3821
      %3893 = vmatprep.subr.bf16.mxu0 %v3820
      %3894 = vmatpush2.bf16.msra.mxu0 %v3819
      %3895 = vmatprep.subr.bf16.mxu0 %v3818
      %3896 = vmatpush2.bf16.msra.mxu0 %v3817
      %3897 = vmatprep.mubr.bf16.mxu0 %v3324
      %3898 = vmatmul.mubr.bf16.gmra.mxu0 %v3323
      %v3899 = vpop.f32.mrf.mxu0
      %v3900 = vadd.f32 %v3607, %v3899
      %v3901 = vpop.f32.mrf.mxu0
      %v3902 = vadd.f32 %v3609, %v3901
      %v3903 = vpop.f32.mrf.mxu0
      %v3904 = vadd.f32 %v3611, %v3903
      %v3905 = vpop.f32.mrf.mxu0
      %v3906 = vadd.f32 %v3613, %v3905
      %3907 = vmatprep.mubr.bf16.mxu0 %v3326
      %3908 = vmatmul.mubr.bf16.gmra.mxu0 %v3325
      %v3909 = vpop.f32.mrf.mxu0
      %v3910 = vadd.f32 %v3617, %v3909
      %v3911 = vpop.f32.mrf.mxu0
      %v3912 = vadd.f32 %v3619, %v3911
      %v3913 = vpop.f32.mrf.mxu0
      %v3914 = vadd.f32 %v3621, %v3913
      %v3915 = vpop.f32.mrf.mxu0
      %v3916 = vadd.f32 %v3623, %v3915
      %3917 = vmatprep.mubr.bf16.mxu0 %v3328
      %3918 = vmatmul.mubr.bf16.gmra.mxu0 %v3327
      %v3919 = vpop.f32.mrf.mxu0
      %v3920 = vadd.f32 %v3627, %v3919
      %v3921 = vpop.f32.mrf.mxu0
      %v3922 = vadd.f32 %v3629, %v3921
      %v3923 = vpop.f32.mrf.mxu0
      %v3924 = vadd.f32 %v3631, %v3923
      %v3925 = vpop.f32.mrf.mxu0
      %v3926 = vadd.f32 %v3633, %v3925
      %3927 = vmatprep.mubr.bf16.mxu0 %v3330
      %3928 = vmatmul.mubr.bf16.gmra.mxu0 %v3329
      %v3929 = vpop.f32.mrf.mxu0
      %v3930 = vadd.f32 %v3637, %v3929
      %v3931 = vpop.f32.mrf.mxu0
      %v3932 = vadd.f32 %v3639, %v3931
      %v3933 = vpop.f32.mrf.mxu0
      %v3934 = vadd.f32 %v3641, %v3933
      %v3935 = vpop.f32.mrf.mxu0
      %v3936 = vadd.f32 %v3643, %v3935
      %3937 = vmatprep.mubr.bf16.mxu0 %v3332
      %3938 = vmatmul.mubr.bf16.gmra.mxu0 %v3331
      %v3939 = vpop.f32.mrf.mxu0
      %v3940 = vadd.f32 %v3647, %v3939
      %v3941 = vpop.f32.mrf.mxu0
      %v3942 = vadd.f32 %v3649, %v3941
      %v3943 = vpop.f32.mrf.mxu0
      %v3944 = vadd.f32 %v3651, %v3943
      %v3945 = vpop.f32.mrf.mxu0
      %v3946 = vadd.f32 %v3653, %v3945
      %3947 = vmatprep.mubr.bf16.mxu0 %v3334
      %3948 = vmatmul.mubr.bf16.gmra.mxu0 %v3333
      %v3949 = vpop.f32.mrf.mxu0
      %v3950 = vadd.f32 %v3657, %v3949
      %v3951 = vpop.f32.mrf.mxu0
      %v3952 = vadd.f32 %v3659, %v3951
      %v3953 = vpop.f32.mrf.mxu0
      %v3954 = vadd.f32 %v3661, %v3953
      %v3955 = vpop.f32.mrf.mxu0
      %v3956 = vadd.f32 %v3663, %v3955
      %3957 = vmatprep.mubr.bf16.mxu0 %v3336
      %3958 = vmatmul.mubr.bf16.gmra.mxu0 %v3335
      %v3959 = vpop.f32.mrf.mxu0
      %v3960 = vadd.f32 %v3667, %v3959
      %v3961 = vpop.f32.mrf.mxu0
      %v3962 = vadd.f32 %v3669, %v3961
      %v3963 = vpop.f32.mrf.mxu0
      %v3964 = vadd.f32 %v3671, %v3963
      %v3965 = vpop.f32.mrf.mxu0
      %v3966 = vadd.f32 %v3673, %v3965
      %3967 = vmatprep.mubr.bf16.mxu0 %v3338
      %3968 = vmatmul.mubr.bf16.gmra.mxu0 %v3337
      %v3969 = vpop.f32.mrf.mxu0
      %v3970 = vadd.f32 %v3677, %v3969
      %v3971 = vpop.f32.mrf.mxu0
      %v3972 = vadd.f32 %v3679, %v3971
      %v3973 = vpop.f32.mrf.mxu0
      %v3974 = vadd.f32 %v3681, %v3973
      %v3975 = vpop.f32.mrf.mxu0
      %v3976 = vadd.f32 %v3683, %v3975
      %3977 = vmatprep.mubr.bf16.mxu0 %v3340
      %3978 = vmatmul.mubr.bf16.gmra.mxu0 %v3339
      %v3979 = vpop.f32.mrf.mxu0
      %v3980 = vadd.f32 %v3687, %v3979
      %v3981 = vpop.f32.mrf.mxu0
      %v3982 = vadd.f32 %v3689, %v3981
      %v3983 = vpop.f32.mrf.mxu0
      %v3984 = vadd.f32 %v3691, %v3983
      %v3985 = vpop.f32.mrf.mxu0
      %v3986 = vadd.f32 %v3693, %v3985
      %3987 = vmatprep.mubr.bf16.mxu0 %v3342
      %3988 = vmatmul.mubr.bf16.gmra.mxu0 %v3341
      %v3989 = vpop.f32.mrf.mxu0
      %v3990 = vadd.f32 %v3697, %v3989
      %v3991 = vpop.f32.mrf.mxu0
      %v3992 = vadd.f32 %v3699, %v3991
      %v3993 = vpop.f32.mrf.mxu0
      %v3994 = vadd.f32 %v3701, %v3993
      %v3995 = vpop.f32.mrf.mxu0
      %v3996 = vadd.f32 %v3703, %v3995
      %3997 = vdwg.mxu0
      %s3998 = scalar_lea.vmem %s9, 512
      %v3999 = vld [vmem:[%s3998] sm:$0xff]
      %v4000 = vld [vmem:[%s3998 + $0x8] sm:$0xff]
      %v4001 = vld [vmem:[%s3998 + $0x10] sm:$0xff]
      %v4002 = vld [vmem:[%s3998 + $0x18] sm:$0xff]
      %v4003 = vld [vmem:[%s3998 + $0x20] sm:$0xff]
      %v4004 = vld [vmem:[%s3998 + $0x28] sm:$0xff]
      %v4005 = vld [vmem:[%s3998 + $0x30] sm:$0xff]
      %v4006 = vld [vmem:[%s3998 + $0x38] sm:$0xff]
      %v4007 = vld [vmem:[%s3998 + $0x40] sm:$0xff]
      %v4008 = vld [vmem:[%s3998 + $0x48] sm:$0xff]
      %v4009 = vld [vmem:[%s3998 + $0x50] sm:$0xff]
      %v4010 = vld [vmem:[%s3998 + $0x58] sm:$0xff]
      %v4011 = vld [vmem:[%s3998 + $0x60] sm:$0xff]
      %v4012 = vld [vmem:[%s3998 + $0x68] sm:$0xff]
      %v4013 = vld [vmem:[%s3998 + $0x70] sm:$0xff]
      %v4014 = vld [vmem:[%s3998 + $0x78] sm:$0xff]
      %v4015 = vld [vmem:[%s3998 + $0x80] sm:$0xff]
      %v4016 = vld [vmem:[%s3998 + $0x88] sm:$0xff]
      %v4017 = vld [vmem:[%s3998 + $0x90] sm:$0xff]
      %v4018 = vld [vmem:[%s3998 + $0x98] sm:$0xff]
      %v4019 = vld [vmem:[%s3998 + $0xa0] sm:$0xff]
      %v4020 = vld [vmem:[%s3998 + $0xa8] sm:$0xff]
      %v4021 = vld [vmem:[%s3998 + $0xb0] sm:$0xff]
      %v4022 = vld [vmem:[%s3998 + $0xb8] sm:$0xff]
      %v4023 = vld [vmem:[%s3998 + $0xc0] sm:$0xff]
      %v4024 = vld [vmem:[%s3998 + $0xc8] sm:$0xff]
      %v4025 = vld [vmem:[%s3998 + $0xd0] sm:$0xff]
      %v4026 = vld [vmem:[%s3998 + $0xd8] sm:$0xff]
      %v4027 = vld [vmem:[%s3998 + $0xe0] sm:$0xff]
      %v4028 = vld [vmem:[%s3998 + $0xe8] sm:$0xff]
      %v4029 = vld [vmem:[%s3998 + $0xf0] sm:$0xff]
      %v4030 = vld [vmem:[%s3998 + $0xf8] sm:$0xff]
      %v4063 = vunpack.c.l.b16 %v3999
      %v4064 = vunpack.c.h.b16 %v3999
      %v4065 = vunpack.c.l.b16 %v4000
      %v4066 = vunpack.c.h.b16 %v4000
      %v4067 = vunpack.c.l.b16 %v4001
      %v4068 = vunpack.c.h.b16 %v4001
      %v4069 = vunpack.c.l.b16 %v4002
      %v4070 = vunpack.c.h.b16 %v4002
      %v4071 = vunpack.c.l.b16 %v4003
      %v4072 = vunpack.c.h.b16 %v4003
      %v4073 = vunpack.c.l.b16 %v4004
      %v4074 = vunpack.c.h.b16 %v4004
      %v4075 = vunpack.c.l.b16 %v4005
      %v4076 = vunpack.c.h.b16 %v4005
      %v4077 = vunpack.c.l.b16 %v4006
      %v4078 = vunpack.c.h.b16 %v4006
      %v4079 = vunpack.c.l.b16 %v4007
      %v4080 = vunpack.c.h.b16 %v4007
      %v4081 = vunpack.c.l.b16 %v4008
      %v4082 = vunpack.c.h.b16 %v4008
      %v4083 = vunpack.c.l.b16 %v4009
      %v4084 = vunpack.c.h.b16 %v4009
      %v4085 = vunpack.c.l.b16 %v4010
      %v4086 = vunpack.c.h.b16 %v4010
      %v4087 = vunpack.c.l.b16 %v4011
      %v4088 = vunpack.c.h.b16 %v4011
      %v4089 = vunpack.c.l.b16 %v4012
      %v4090 = vunpack.c.h.b16 %v4012
      %v4091 = vunpack.c.l.b16 %v4013
      %v4092 = vunpack.c.h.b16 %v4013
      %v4093 = vunpack.c.l.b16 %v4014
      %v4094 = vunpack.c.h.b16 %v4014
      %v4095 = vunpack.c.l.b16 %v4015
      %v4096 = vunpack.c.h.b16 %v4015
      %v4097 = vunpack.c.l.b16 %v4016
      %v4098 = vunpack.c.h.b16 %v4016
      %v4099 = vunpack.c.l.b16 %v4017
      %v4100 = vunpack.c.h.b16 %v4017
      %v4101 = vunpack.c.l.b16 %v4018
      %v4102 = vunpack.c.h.b16 %v4018
      %v4103 = vunpack.c.l.b16 %v4019
      %v4104 = vunpack.c.h.b16 %v4019
      %v4105 = vunpack.c.l.b16 %v4020
      %v4106 = vunpack.c.h.b16 %v4020
      %v4107 = vunpack.c.l.b16 %v4021
      %v4108 = vunpack.c.h.b16 %v4021
      %v4109 = vunpack.c.l.b16 %v4022
      %v4110 = vunpack.c.h.b16 %v4022
      %v4111 = vunpack.c.l.b16 %v4023
      %v4112 = vunpack.c.h.b16 %v4023
      %v4113 = vunpack.c.l.b16 %v4024
      %v4114 = vunpack.c.h.b16 %v4024
      %v4115 = vunpack.c.l.b16 %v4025
      %v4116 = vunpack.c.h.b16 %v4025
      %v4117 = vunpack.c.l.b16 %v4026
      %v4118 = vunpack.c.h.b16 %v4026
      %v4119 = vunpack.c.l.b16 %v4027
      %v4120 = vunpack.c.h.b16 %v4027
      %v4121 = vunpack.c.l.b16 %v4028
      %v4122 = vunpack.c.h.b16 %v4028
      %v4123 = vunpack.c.l.b16 %v4029
      %v4124 = vunpack.c.h.b16 %v4029
      %v4125 = vunpack.c.l.b16 %v4030
      %v4126 = vunpack.c.h.b16 %v4030
      %v4127 = vpack.c.b16 %v4065, %v4063
      %v4128 = vpack.c.b16 %v4066, %v4064
      %v4129 = vpack.c.b16 %v4069, %v4067
      %v4130 = vpack.c.b16 %v4070, %v4068
      %v4131 = vpack.c.b16 %v4073, %v4071
      %v4132 = vpack.c.b16 %v4074, %v4072
      %v4133 = vpack.c.b16 %v4077, %v4075
      %v4134 = vpack.c.b16 %v4078, %v4076
      %v4135 = vpack.c.b16 %v4081, %v4079
      %v4136 = vpack.c.b16 %v4082, %v4080
      %v4137 = vpack.c.b16 %v4085, %v4083
      %v4138 = vpack.c.b16 %v4086, %v4084
      %v4139 = vpack.c.b16 %v4089, %v4087
      %v4140 = vpack.c.b16 %v4090, %v4088
      %v4141 = vpack.c.b16 %v4093, %v4091
      %v4142 = vpack.c.b16 %v4094, %v4092
      %v4143 = vpack.c.b16 %v4097, %v4095
      %v4144 = vpack.c.b16 %v4098, %v4096
      %v4145 = vpack.c.b16 %v4101, %v4099
      %v4146 = vpack.c.b16 %v4102, %v4100
      %v4147 = vpack.c.b16 %v4105, %v4103
      %v4148 = vpack.c.b16 %v4106, %v4104
      %v4149 = vpack.c.b16 %v4109, %v4107
      %v4150 = vpack.c.b16 %v4110, %v4108
      %v4151 = vpack.c.b16 %v4113, %v4111
      %v4152 = vpack.c.b16 %v4114, %v4112
      %v4153 = vpack.c.b16 %v4117, %v4115
      %v4154 = vpack.c.b16 %v4118, %v4116
      %v4155 = vpack.c.b16 %v4121, %v4119
      %v4156 = vpack.c.b16 %v4122, %v4120
      %v4157 = vpack.c.b16 %v4125, %v4123
      %v4158 = vpack.c.b16 %v4126, %v4124
      %4191 = vmatprep.subr.bf16.mxu0 %v4142
      %4192 = vmatpush1.bf16.msra.mxu0 %v4141
      %4193 = vmatprep.subr.bf16.mxu0 %v4140
      %4194 = vmatpush1.bf16.msra.mxu0 %v4139
      %4195 = vmatprep.subr.bf16.mxu0 %v4138
      %4196 = vmatpush1.bf16.msra.mxu0 %v4137
      %4197 = vmatprep.subr.bf16.mxu0 %v4136
      %4198 = vmatpush1.bf16.msra.mxu0 %v4135
      %4199 = vmatprep.subr.bf16.mxu0 %v4134
      %4200 = vmatpush1.bf16.msra.mxu0 %v4133
      %4201 = vmatprep.subr.bf16.mxu0 %v4132
      %4202 = vmatpush1.bf16.msra.mxu0 %v4131
      %4203 = vmatprep.subr.bf16.mxu0 %v4130
      %4204 = vmatpush1.bf16.msra.mxu0 %v4129
      %4205 = vmatprep.subr.bf16.mxu0 %v4128
      %4206 = vmatpush1.bf16.msra.mxu0 %v4127
      %4207 = vmatprep.subr.bf16.mxu0 %v4158
      %4208 = vmatpush2.bf16.msra.mxu0 %v4157
      %4209 = vmatprep.subr.bf16.mxu0 %v4156
      %4210 = vmatpush2.bf16.msra.mxu0 %v4155
      %4211 = vmatprep.subr.bf16.mxu0 %v4154
      %4212 = vmatpush2.bf16.msra.mxu0 %v4153
      %4213 = vmatprep.subr.bf16.mxu0 %v4152
      %4214 = vmatpush2.bf16.msra.mxu0 %v4151
      %4215 = vmatprep.subr.bf16.mxu0 %v4150
      %4216 = vmatpush2.bf16.msra.mxu0 %v4149
      %4217 = vmatprep.subr.bf16.mxu0 %v4148
      %4218 = vmatpush2.bf16.msra.mxu0 %v4147
      %4219 = vmatprep.subr.bf16.mxu0 %v4146
      %4220 = vmatpush2.bf16.msra.mxu0 %v4145
      %4221 = vmatprep.subr.bf16.mxu0 %v4144
      %4222 = vmatpush2.bf16.msra.mxu0 %v4143
      %4223 = vmatprep.mubr.bf16.mxu0 %v3328
      %4224 = vmatmul.mubr.bf16.gmra.mxu0 %v3327
      %v4225 = vpop.f32.mrf.mxu0
      %v4226 = vadd.f32 0.0, %v4225
      %v4227 = vpop.f32.mrf.mxu0
      %v4228 = vadd.f32 0.0, %v4227
      %v4229 = vpop.f32.mrf.mxu0
      %v4230 = vadd.f32 0.0, %v4229
      %v4231 = vpop.f32.mrf.mxu0
      %v4232 = vadd.f32 0.0, %v4231
      %4233 = vmatprep.mubr.bf16.mxu0 %v3330
      %4234 = vmatmul.mubr.bf16.gmra.mxu0 %v3329
      %v4235 = vpop.f32.mrf.mxu0
      %v4236 = vadd.f32 0.0, %v4235
      %v4237 = vpop.f32.mrf.mxu0
      %v4238 = vadd.f32 0.0, %v4237
      %v4239 = vpop.f32.mrf.mxu0
      %v4240 = vadd.f32 0.0, %v4239
      %v4241 = vpop.f32.mrf.mxu0
      %v4242 = vadd.f32 0.0, %v4241
      %4243 = vmatprep.mubr.bf16.mxu0 %v3332
      %4244 = vmatmul.mubr.bf16.gmra.mxu0 %v3331
      %v4245 = vpop.f32.mrf.mxu0
      %v4246 = vadd.f32 0.0, %v4245
      %v4247 = vpop.f32.mrf.mxu0
      %v4248 = vadd.f32 0.0, %v4247
      %v4249 = vpop.f32.mrf.mxu0
      %v4250 = vadd.f32 0.0, %v4249
      %v4251 = vpop.f32.mrf.mxu0
      %v4252 = vadd.f32 0.0, %v4251
      %4253 = vmatprep.mubr.bf16.mxu0 %v3334
      %4254 = vmatmul.mubr.bf16.gmra.mxu0 %v3333
      %v4255 = vpop.f32.mrf.mxu0
      %v4256 = vadd.f32 0.0, %v4255
      %v4257 = vpop.f32.mrf.mxu0
      %v4258 = vadd.f32 0.0, %v4257
      %v4259 = vpop.f32.mrf.mxu0
      %v4260 = vadd.f32 0.0, %v4259
      %v4261 = vpop.f32.mrf.mxu0
      %v4262 = vadd.f32 0.0, %v4261
      %4263 = vmatprep.mubr.bf16.mxu0 %v3336
      %4264 = vmatmul.mubr.bf16.gmra.mxu0 %v3335
      %v4265 = vpop.f32.mrf.mxu0
      %v4266 = vadd.f32 0.0, %v4265
      %v4267 = vpop.f32.mrf.mxu0
      %v4268 = vadd.f32 0.0, %v4267
      %v4269 = vpop.f32.mrf.mxu0
      %v4270 = vadd.f32 0.0, %v4269
      %v4271 = vpop.f32.mrf.mxu0
      %v4272 = vadd.f32 0.0, %v4271
      %4273 = vmatprep.mubr.bf16.mxu0 %v3338
      %4274 = vmatmul.mubr.bf16.gmra.mxu0 %v3337
      %v4275 = vpop.f32.mrf.mxu0
      %v4276 = vadd.f32 0.0, %v4275
      %v4277 = vpop.f32.mrf.mxu0
      %v4278 = vadd.f32 0.0, %v4277
      %v4279 = vpop.f32.mrf.mxu0
      %v4280 = vadd.f32 0.0, %v4279
      %v4281 = vpop.f32.mrf.mxu0
      %v4282 = vadd.f32 0.0, %v4281
      %4283 = vmatprep.mubr.bf16.mxu0 %v3340
      %4284 = vmatmul.mubr.bf16.gmra.mxu0 %v3339
      %v4285 = vpop.f32.mrf.mxu0
      %v4286 = vadd.f32 0.0, %v4285
      %v4287 = vpop.f32.mrf.mxu0
      %v4288 = vadd.f32 0.0, %v4287
      %v4289 = vpop.f32.mrf.mxu0
      %v4290 = vadd.f32 0.0, %v4289
      %v4291 = vpop.f32.mrf.mxu0
      %v4292 = vadd.f32 0.0, %v4291
      %4293 = vmatprep.mubr.bf16.mxu0 %v3342
      %4294 = vmatmul.mubr.bf16.gmra.mxu0 %v3341
      %v4295 = vpop.f32.mrf.mxu0
      %v4296 = vadd.f32 0.0, %v4295
      %v4297 = vpop.f32.mrf.mxu0
      %v4298 = vadd.f32 0.0, %v4297
      %v4299 = vpop.f32.mrf.mxu0
      %v4300 = vadd.f32 0.0, %v4299
      %v4301 = vpop.f32.mrf.mxu0
      %v4302 = vadd.f32 0.0, %v4301
      %4303 = vmatprep.mubr.bf16.mxu0 %v3344
      %4304 = vmatmul.mubr.bf16.gmra.mxu0 %v3343
      %v4305 = vpop.f32.mrf.mxu0
      %v4306 = vadd.f32 0.0, %v4305
      %v4307 = vpop.f32.mrf.mxu0
      %v4308 = vadd.f32 0.0, %v4307
      %v4309 = vpop.f32.mrf.mxu0
      %v4310 = vadd.f32 0.0, %v4309
      %v4311 = vpop.f32.mrf.mxu0
      %v4312 = vadd.f32 0.0, %v4311
      %4313 = vmatprep.mubr.bf16.mxu0 %v3346
      %4314 = vmatmul.mubr.bf16.gmra.mxu0 %v3345
      %v4315 = vpop.f32.mrf.mxu0
      %v4316 = vadd.f32 0.0, %v4315
      %v4317 = vpop.f32.mrf.mxu0
      %v4318 = vadd.f32 0.0, %v4317
      %v4319 = vpop.f32.mrf.mxu0
      %v4320 = vadd.f32 0.0, %v4319
      %v4321 = vpop.f32.mrf.mxu0
      %v4322 = vadd.f32 0.0, %v4321
      %4323 = vdwg.mxu0
      %v4324 = vadd.f32 %v3900, %v4226
      %v4325 = vadd.f32 %v3902, %v4228
      %v4326 = vadd.f32 %v3904, %v4230
      %v4327 = vadd.f32 %v3906, %v4232
      %v4328 = vadd.f32 %v3910, %v4236
      %v4329 = vadd.f32 %v3912, %v4238
      %v4330 = vadd.f32 %v3914, %v4240
      %v4331 = vadd.f32 %v3916, %v4242
      %v4332 = vadd.f32 %v3920, %v4246
      %v4333 = vadd.f32 %v3922, %v4248
      %v4334 = vadd.f32 %v3924, %v4250
      %v4335 = vadd.f32 %v3926, %v4252
      %v4336 = vadd.f32 %v3930, %v4256
      %v4337 = vadd.f32 %v3932, %v4258
      %v4338 = vadd.f32 %v3934, %v4260
      %v4339 = vadd.f32 %v3936, %v4262
      %v4340 = vadd.f32 %v3940, %v4266
      %v4341 = vadd.f32 %v3942, %v4268
      %v4342 = vadd.f32 %v3944, %v4270
      %v4343 = vadd.f32 %v3946, %v4272
      %v4344 = vadd.f32 %v3950, %v4276
      %v4345 = vadd.f32 %v3952, %v4278
      %v4346 = vadd.f32 %v3954, %v4280
      %v4347 = vadd.f32 %v3956, %v4282
      %v4348 = vadd.f32 %v3960, %v4286
      %v4349 = vadd.f32 %v3962, %v4288
      %v4350 = vadd.f32 %v3964, %v4290
      %v4351 = vadd.f32 %v3966, %v4292
      %v4352 = vadd.f32 %v3970, %v4296
      %v4353 = vadd.f32 %v3972, %v4298
      %v4354 = vadd.f32 %v3974, %v4300
      %v4355 = vadd.f32 %v3976, %v4302
      %v4356 = vadd.f32 %v3980, %v4306
      %v4357 = vadd.f32 %v3982, %v4308
      %v4358 = vadd.f32 %v3984, %v4310
      %v4359 = vadd.f32 %v3986, %v4312
      %v4360 = vadd.f32 %v3990, %v4316
      %v4361 = vadd.f32 %v3992, %v4318
      %v4362 = vadd.f32 %v3994, %v4320
      %v4363 = vadd.f32 %v3996, %v4322
      %v4364 = vld [vmem:[%s10] sm:$0x3]
      %v4366 = vlaneseq
      %v4367 = vshrl.u32 %v4366, 7
      %v4368 = vsub.s32 0, %v4367
      %v4369 = vrot.slane %v4364, %v4368
      %v4370 = vlaneseq
      %v4371 = vshrl.u32 %v4370, 7
      %v4372 = vsub.s32 1, %v4371
      %v4373 = vrot.slane %v4364, %v4372
      %v4376 = vadd.f32 %v4324, %v4369
      %v4377 = vadd.f32 %v4325, %v4373
      %v4378 = vadd.f32 %v4326, %v4369
      %v4379 = vadd.f32 %v4327, %v4373
      %v4380 = vadd.f32 %v4328, %v4369
      %v4381 = vadd.f32 %v4329, %v4373
      %v4382 = vadd.f32 %v4330, %v4369
      %v4383 = vadd.f32 %v4331, %v4373
      %v4384 = vadd.f32 %v4332, %v4369
      %v4385 = vadd.f32 %v4333, %v4373
      %v4386 = vadd.f32 %v4334, %v4369
      %v4387 = vadd.f32 %v4335, %v4373
      %v4388 = vadd.f32 %v4336, %v4369
      %v4389 = vadd.f32 %v4337, %v4373
      %v4390 = vadd.f32 %v4338, %v4369
      %v4391 = vadd.f32 %v4339, %v4373
      %v4392 = vadd.f32 %v4340, %v4369
      %v4393 = vadd.f32 %v4341, %v4373
      %v4394 = vadd.f32 %v4342, %v4369
      %v4395 = vadd.f32 %v4343, %v4373
      %v4396 = vadd.f32 %v4344, %v4369
      %v4397 = vadd.f32 %v4345, %v4373
      %v4398 = vadd.f32 %v4346, %v4369
      %v4399 = vadd.f32 %v4347, %v4373
      %v4400 = vadd.f32 %v4348, %v4369
      %v4401 = vadd.f32 %v4349, %v4373
      %v4402 = vadd.f32 %v4350, %v4369
      %v4403 = vadd.f32 %v4351, %v4373
      %v4404 = vadd.f32 %v4352, %v4369
      %v4405 = vadd.f32 %v4353, %v4373
      %v4406 = vadd.f32 %v4354, %v4369
      %v4407 = vadd.f32 %v4355, %v4373
      %v4408 = vadd.f32 %v4356, %v4369
      %v4409 = vadd.f32 %v4357, %v4373
      %v4410 = vadd.f32 %v4358, %v4369
      %v4411 = vadd.f32 %v4359, %v4373
      %v4412 = vadd.f32 %v4360, %v4369
      %v4413 = vadd.f32 %v4361, %v4373
      %v4414 = vadd.f32 %v4362, %v4369
      %v4415 = vadd.f32 %v4363, %v4373
      %v4416 = vmax.f32 %v4376, 0.0
      %v4417 = vmax.f32 %v4377, 0.0
      %v4418 = vmax.f32 %v4378, 0.0
      %v4419 = vmax.f32 %v4379, 0.0
      %v4420 = vmax.f32 %v4380, 0.0
      %v4421 = vmax.f32 %v4381, 0.0
      %v4422 = vmax.f32 %v4382, 0.0
      %v4423 = vmax.f32 %v4383, 0.0
      %v4424 = vmax.f32 %v4384, 0.0
      %v4425 = vmax.f32 %v4385, 0.0
      %v4426 = vmax.f32 %v4386, 0.0
      %v4427 = vmax.f32 %v4387, 0.0
      %v4428 = vmax.f32 %v4388, 0.0
      %v4429 = vmax.f32 %v4389, 0.0
      %v4430 = vmax.f32 %v4390, 0.0
      %v4431 = vmax.f32 %v4391, 0.0
      %v4432 = vmax.f32 %v4392, 0.0
      %v4433 = vmax.f32 %v4393, 0.0
      %v4434 = vmax.f32 %v4394, 0.0
      %v4435 = vmax.f32 %v4395, 0.0
      %v4436 = vmax.f32 %v4396, 0.0
      %v4437 = vmax.f32 %v4397, 0.0
      %v4438 = vmax.f32 %v4398, 0.0
      %v4439 = vmax.f32 %v4399, 0.0
      %v4440 = vmax.f32 %v4400, 0.0
      %v4441 = vmax.f32 %v4401, 0.0
      %v4442 = vmax.f32 %v4402, 0.0
      %v4443 = vmax.f32 %v4403, 0.0
      %v4444 = vmax.f32 %v4404, 0.0
      %v4445 = vmax.f32 %v4405, 0.0
      %v4446 = vmax.f32 %v4406, 0.0
      %v4447 = vmax.f32 %v4407, 0.0
      %v4448 = vmax.f32 %v4408, 0.0
      %v4449 = vmax.f32 %v4409, 0.0
      %v4450 = vmax.f32 %v4410, 0.0
      %v4451 = vmax.f32 %v4411, 0.0
      %v4452 = vmax.f32 %v4412, 0.0
      %v4453 = vmax.f32 %v4413, 0.0
      %v4454 = vmax.f32 %v4414, 0.0
      %v4455 = vmax.f32 %v4415, 0.0
      %v4456 = vpack.c.bf16 %v4418, %v4416
      %v4457 = vpack.c.bf16 %v4419, %v4417
      %v4458 = vpack.c.bf16 %v4422, %v4420
      %v4459 = vpack.c.bf16 %v4423, %v4421
      %v4460 = vpack.c.bf16 %v4426, %v4424
      %v4461 = vpack.c.bf16 %v4427, %v4425
      %v4462 = vpack.c.bf16 %v4430, %v4428
      %v4463 = vpack.c.bf16 %v4431, %v4429
      %v4464 = vpack.c.bf16 %v4434, %v4432
      %v4465 = vpack.c.bf16 %v4435, %v4433
      %v4466 = vpack.c.bf16 %v4438, %v4436
      %v4467 = vpack.c.bf16 %v4439, %v4437
      %v4468 = vpack.c.bf16 %v4442, %v4440
      %v4469 = vpack.c.bf16 %v4443, %v4441
      %v4470 = vpack.c.bf16 %v4446, %v4444
      %v4471 = vpack.c.bf16 %v4447, %v4445
      %v4472 = vpack.c.bf16 %v4450, %v4448
      %v4473 = vpack.c.bf16 %v4451, %v4449
      %v4474 = vpack.c.bf16 %v4454, %v4452
      %v4475 = vpack.c.bf16 %v4455, %v4453
      %v4476 = vld [vmem:[%s11] sm:$0xff]
      %v4477 = vld [vmem:[%s11 + $0x8] sm:$0xff]
      %v4478 = vld [vmem:[%s11 + $0x10] sm:$0xff]
      %v4479 = vld [vmem:[%s11 + $0x18] sm:$0xff]
      %v4480 = vld [vmem:[%s11 + $0x20] sm:$0xff]
      %v4481 = vld [vmem:[%s11 + $0x28] sm:$0xff]
      %v4482 = vld [vmem:[%s11 + $0x30] sm:$0xff]
      %v4483 = vld [vmem:[%s11 + $0x38] sm:$0xff]
      %v4484 = vld [vmem:[%s11 + $0x40] sm:$0xff]
      %v4485 = vld [vmem:[%s11 + $0x48] sm:$0xff]
      %v4486 = vld [vmem:[%s11 + $0x50] sm:$0xff]
      %v4487 = vld [vmem:[%s11 + $0x58] sm:$0xff]
      %v4488 = vld [vmem:[%s11 + $0x60] sm:$0xff]
      %v4489 = vld [vmem:[%s11 + $0x68] sm:$0xff]
      %v4490 = vld [vmem:[%s11 + $0x70] sm:$0xff]
      %v4491 = vld [vmem:[%s11 + $0x78] sm:$0xff]
      %v4492 = vld [vmem:[%s11 + $0x80] sm:$0xff]
      %v4493 = vld [vmem:[%s11 + $0x88] sm:$0xff]
      %v4494 = vld [vmem:[%s11 + $0x90] sm:$0xff]
      %v4495 = vld [vmem:[%s11 + $0x98] sm:$0xff]
      %v4496 = vld [vmem:[%s11 + $0xa0] sm:$0xff]
      %v4497 = vld [vmem:[%s11 + $0xa8] sm:$0xff]
      %v4498 = vld [vmem:[%s11 + $0xb0] sm:$0xff]
      %v4499 = vld [vmem:[%s11 + $0xb8] sm:$0xff]
      %v4500 = vld [vmem:[%s11 + $0xc0] sm:$0xff]
      %v4501 = vld [vmem:[%s11 + $0xc8] sm:$0xff]
      %v4502 = vld [vmem:[%s11 + $0xd0] sm:$0xff]
      %v4503 = vld [vmem:[%s11 + $0xd8] sm:$0xff]
      %v4504 = vld [vmem:[%s11 + $0xe0] sm:$0xff]
      %v4505 = vld [vmem:[%s11 + $0xe8] sm:$0xff]
      %v4506 = vld [vmem:[%s11 + $0xf0] sm:$0xff]
      %v4507 = vld [vmem:[%s11 + $0xf8] sm:$0xff]
      %v4508 = vld [vmem:[%s12] sm:$0x3]
      %v4510 = vlaneseq
      %v4511 = vshrl.u32 %v4510, 7
      %v4512 = vsub.s32 0, %v4511
      %v4513 = vrot.slane %v4508, %v4512
      %v4514 = vlaneseq
      %v4515 = vshrl.u32 %v4514, 7
      %v4516 = vsub.s32 1, %v4515
      %v4517 = vrot.slane %v4508, %v4516
      %v4552 = vunpack.c.l.b16 %v4476
      %v4553 = vunpack.c.h.b16 %v4476
      %v4554 = vunpack.c.l.b16 %v4477
      %v4555 = vunpack.c.h.b16 %v4477
      %v4556 = vunpack.c.l.b16 %v4478
      %v4557 = vunpack.c.h.b16 %v4478
      %v4558 = vunpack.c.l.b16 %v4479
      %v4559 = vunpack.c.h.b16 %v4479
      %v4560 = vunpack.c.l.b16 %v4480
      %v4561 = vunpack.c.h.b16 %v4480
      %v4562 = vunpack.c.l.b16 %v4481
      %v4563 = vunpack.c.h.b16 %v4481
      %v4564 = vunpack.c.l.b16 %v4482
      %v4565 = vunpack.c.h.b16 %v4482
      %v4566 = vunpack.c.l.b16 %v4483
      %v4567 = vunpack.c.h.b16 %v4483
      %v4568 = vunpack.c.l.b16 %v4484
      %v4569 = vunpack.c.h.b16 %v4484
      %v4570 = vunpack.c.l.b16 %v4485
      %v4571 = vunpack.c.h.b16 %v4485
      %v4572 = vunpack.c.l.b16 %v4486
      %v4573 = vunpack.c.h.b16 %v4486
      %v4574 = vunpack.c.l.b16 %v4487
      %v4575 = vunpack.c.h.b16 %v4487
      %v4576 = vunpack.c.l.b16 %v4488
      %v4577 = vunpack.c.h.b16 %v4488
      %v4578 = vunpack.c.l.b16 %v4489
      %v4579 = vunpack.c.h.b16 %v4489
      %v4580 = vunpack.c.l.b16 %v4490
      %v4581 = vunpack.c.h.b16 %v4490
      %v4582 = vunpack.c.l.b16 %v4491
      %v4583 = vunpack.c.h.b16 %v4491
      %v4584 = vunpack.c.l.b16 %v4492
      %v4585 = vunpack.c.h.b16 %v4492
      %v4586 = vunpack.c.l.b16 %v4493
      %v4587 = vunpack.c.h.b16 %v4493
      %v4588 = vunpack.c.l.b16 %v4494
      %v4589 = vunpack.c.h.b16 %v4494
      %v4590 = vunpack.c.l.b16 %v4495
      %v4591 = vunpack.c.h.b16 %v4495
      %v4592 = vunpack.c.l.b16 %v4496
      %v4593 = vunpack.c.h.b16 %v4496
      %v4594 = vunpack.c.l.b16 %v4497
      %v4595 = vunpack.c.h.b16 %v4497
      %v4596 = vunpack.c.l.b16 %v4498
      %v4597 = vunpack.c.h.b16 %v4498
      %v4598 = vunpack.c.l.b16 %v4499
      %v4599 = vunpack.c.h.b16 %v4499
      %v4600 = vunpack.c.l.b16 %v4500
      %v4601 = vunpack.c.h.b16 %v4500
      %v4602 = vunpack.c.l.b16 %v4501
      %v4603 = vunpack.c.h.b16 %v4501
      %v4604 = vunpack.c.l.b16 %v4502
      %v4605 = vunpack.c.h.b16 %v4502
      %v4606 = vunpack.c.l.b16 %v4503
      %v4607 = vunpack.c.h.b16 %v4503
      %v4608 = vunpack.c.l.b16 %v4504
      %v4609 = vunpack.c.h.b16 %v4504
      %v4610 = vunpack.c.l.b16 %v4505
      %v4611 = vunpack.c.h.b16 %v4505
      %v4612 = vunpack.c.l.b16 %v4506
      %v4613 = vunpack.c.h.b16 %v4506
      %v4614 = vunpack.c.l.b16 %v4507
      %v4615 = vunpack.c.h.b16 %v4507
      %v4616 = vpack.c.b16 %v4554, %v4552
      %v4617 = vpack.c.b16 %v4555, %v4553
      %v4618 = vpack.c.b16 %v4558, %v4556
      %v4619 = vpack.c.b16 %v4559, %v4557
      %v4620 = vpack.c.b16 %v4562, %v4560
      %v4621 = vpack.c.b16 %v4563, %v4561
      %v4622 = vpack.c.b16 %v4566, %v4564
      %v4623 = vpack.c.b16 %v4567, %v4565
      %v4624 = vpack.c.b16 %v4570, %v4568
      %v4625 = vpack.c.b16 %v4571, %v4569
      %v4626 = vpack.c.b16 %v4574, %v4572
      %v4627 = vpack.c.b16 %v4575, %v4573
      %v4628 = vpack.c.b16 %v4578, %v4576
      %v4629 = vpack.c.b16 %v4579, %v4577
      %v4630 = vpack.c.b16 %v4582, %v4580
      %v4631 = vpack.c.b16 %v4583, %v4581
      %v4632 = vpack.c.b16 %v4586, %v4584
      %v4633 = vpack.c.b16 %v4587, %v4585
      %v4634 = vpack.c.b16 %v4590, %v4588
      %v4635 = vpack.c.b16 %v4591, %v4589
      %v4636 = vpack.c.b16 %v4594, %v4592
      %v4637 = vpack.c.b16 %v4595, %v4593
      %v4638 = vpack.c.b16 %v4598, %v4596
      %v4639 = vpack.c.b16 %v4599, %v4597
      %v4640 = vpack.c.b16 %v4602, %v4600
      %v4641 = vpack.c.b16 %v4603, %v4601
      %v4642 = vpack.c.b16 %v4606, %v4604
      %v4643 = vpack.c.b16 %v4607, %v4605
      %v4644 = vpack.c.b16 %v4610, %v4608
      %v4645 = vpack.c.b16 %v4611, %v4609
      %v4646 = vpack.c.b16 %v4614, %v4612
      %v4647 = vpack.c.b16 %v4615, %v4613
      %4680 = vmatprep.subr.bf16.mxu0 %v4631
      %4681 = vmatpush1.bf16.msra.mxu0 %v4630
      %4682 = vmatprep.subr.bf16.mxu0 %v4629
      %4683 = vmatpush1.bf16.msra.mxu0 %v4628
      %4684 = vmatprep.subr.bf16.mxu0 %v4627
      %4685 = vmatpush1.bf16.msra.mxu0 %v4626
      %4686 = vmatprep.subr.bf16.mxu0 %v4625
      %4687 = vmatpush1.bf16.msra.mxu0 %v4624
      %4688 = vmatprep.subr.bf16.mxu0 %v4623
      %4689 = vmatpush1.bf16.msra.mxu0 %v4622
      %4690 = vmatprep.subr.bf16.mxu0 %v4621
      %4691 = vmatpush1.bf16.msra.mxu0 %v4620
      %4692 = vmatprep.subr.bf16.mxu0 %v4619
      %4693 = vmatpush1.bf16.msra.mxu0 %v4618
      %4694 = vmatprep.subr.bf16.mxu0 %v4617
      %4695 = vmatpush1.bf16.msra.mxu0 %v4616
      %4696 = vmatprep.subr.bf16.mxu0 %v4647
      %4697 = vmatpush2.bf16.msra.mxu0 %v4646
      %4698 = vmatprep.subr.bf16.mxu0 %v4645
      %4699 = vmatpush2.bf16.msra.mxu0 %v4644
      %4700 = vmatprep.subr.bf16.mxu0 %v4643
      %4701 = vmatpush2.bf16.msra.mxu0 %v4642
      %4702 = vmatprep.subr.bf16.mxu0 %v4641
      %4703 = vmatpush2.bf16.msra.mxu0 %v4640
      %4704 = vmatprep.subr.bf16.mxu0 %v4639
      %4705 = vmatpush2.bf16.msra.mxu0 %v4638
      %4706 = vmatprep.subr.bf16.mxu0 %v4637
      %4707 = vmatpush2.bf16.msra.mxu0 %v4636
      %4708 = vmatprep.subr.bf16.mxu0 %v4635
      %4709 = vmatpush2.bf16.msra.mxu0 %v4634
      %4710 = vmatprep.subr.bf16.mxu0 %v4633
      %4711 = vmatpush2.bf16.msra.mxu0 %v4632
      %4712 = vmatprep.mubr.bf16.mxu0 %v4457
      %4713 = vmatmul.mubr.bf16.gmra.mxu0 %v4456
      %v4714 = vpop.f32.mrf.mxu0
      %v4715 = vadd.f32 %v4513, %v4714
      %v4716 = vpop.f32.mrf.mxu0
      %v4717 = vadd.f32 %v4517, %v4716
      %v4718 = vpop.f32.mrf.mxu0
      %v4719 = vadd.f32 %v4513, %v4718
      %v4720 = vpop.f32.mrf.mxu0
      %v4721 = vadd.f32 %v4517, %v4720
      %4722 = vmatprep.mubr.bf16.mxu0 %v4459
      %4723 = vmatmul.mubr.bf16.gmra.mxu0 %v4458
      %v4724 = vpop.f32.mrf.mxu0
      %v4725 = vadd.f32 %v4513, %v4724
      %v4726 = vpop.f32.mrf.mxu0
      %v4727 = vadd.f32 %v4517, %v4726
      %v4728 = vpop.f32.mrf.mxu0
      %v4729 = vadd.f32 %v4513, %v4728
      %v4730 = vpop.f32.mrf.mxu0
      %v4731 = vadd.f32 %v4517, %v4730
      %4732 = vmatprep.mubr.bf16.mxu0 %v4461
      %4733 = vmatmul.mubr.bf16.gmra.mxu0 %v4460
      %v4734 = vpop.f32.mrf.mxu0
      %v4735 = vadd.f32 %v4513, %v4734
      %v4736 = vpop.f32.mrf.mxu0
      %v4737 = vadd.f32 %v4517, %v4736
      %v4738 = vpop.f32.mrf.mxu0
      %v4739 = vadd.f32 %v4513, %v4738
      %v4740 = vpop.f32.mrf.mxu0
      %v4741 = vadd.f32 %v4517, %v4740
      %4742 = vmatprep.mubr.bf16.mxu0 %v4463
      %4743 = vmatmul.mubr.bf16.gmra.mxu0 %v4462
      %v4744 = vpop.f32.mrf.mxu0
      %v4745 = vadd.f32 %v4513, %v4744
      %v4746 = vpop.f32.mrf.mxu0
      %v4747 = vadd.f32 %v4517, %v4746
      %v4748 = vpop.f32.mrf.mxu0
      %v4749 = vadd.f32 %v4513, %v4748
      %v4750 = vpop.f32.mrf.mxu0
      %v4751 = vadd.f32 %v4517, %v4750
      %4752 = vmatprep.mubr.bf16.mxu0 %v4465
      %4753 = vmatmul.mubr.bf16.gmra.mxu0 %v4464
      %v4754 = vpop.f32.mrf.mxu0
      %v4755 = vadd.f32 %v4513, %v4754
      %v4756 = vpop.f32.mrf.mxu0
      %v4757 = vadd.f32 %v4517, %v4756
      %v4758 = vpop.f32.mrf.mxu0
      %v4759 = vadd.f32 %v4513, %v4758
      %v4760 = vpop.f32.mrf.mxu0
      %v4761 = vadd.f32 %v4517, %v4760
      %4762 = vmatprep.mubr.bf16.mxu0 %v4467
      %4763 = vmatmul.mubr.bf16.gmra.mxu0 %v4466
      %v4764 = vpop.f32.mrf.mxu0
      %v4765 = vadd.f32 %v4513, %v4764
      %v4766 = vpop.f32.mrf.mxu0
      %v4767 = vadd.f32 %v4517, %v4766
      %v4768 = vpop.f32.mrf.mxu0
      %v4769 = vadd.f32 %v4513, %v4768
      %v4770 = vpop.f32.mrf.mxu0
      %v4771 = vadd.f32 %v4517, %v4770
      %4772 = vmatprep.mubr.bf16.mxu0 %v4469
      %4773 = vmatmul.mubr.bf16.gmra.mxu0 %v4468
      %v4774 = vpop.f32.mrf.mxu0
      %v4775 = vadd.f32 %v4513, %v4774
      %v4776 = vpop.f32.mrf.mxu0
      %v4777 = vadd.f32 %v4517, %v4776
      %v4778 = vpop.f32.mrf.mxu0
      %v4779 = vadd.f32 %v4513, %v4778
      %v4780 = vpop.f32.mrf.mxu0
      %v4781 = vadd.f32 %v4517, %v4780
      %4782 = vmatprep.mubr.bf16.mxu0 %v4471
      %4783 = vmatmul.mubr.bf16.gmra.mxu0 %v4470
      %v4784 = vpop.f32.mrf.mxu0
      %v4785 = vadd.f32 %v4513, %v4784
      %v4786 = vpop.f32.mrf.mxu0
      %v4787 = vadd.f32 %v4517, %v4786
      %v4788 = vpop.f32.mrf.mxu0
      %v4789 = vadd.f32 %v4513, %v4788
      %v4790 = vpop.f32.mrf.mxu0
      %v4791 = vadd.f32 %v4517, %v4790
      %4792 = vmatprep.mubr.bf16.mxu0 %v4473
      %4793 = vmatmul.mubr.bf16.gmra.mxu0 %v4472
      %v4794 = vpop.f32.mrf.mxu0
      %v4795 = vadd.f32 %v4513, %v4794
      %v4796 = vpop.f32.mrf.mxu0
      %v4797 = vadd.f32 %v4517, %v4796
      %v4798 = vpop.f32.mrf.mxu0
      %v4799 = vadd.f32 %v4513, %v4798
      %v4800 = vpop.f32.mrf.mxu0
      %v4801 = vadd.f32 %v4517, %v4800
      %4802 = vmatprep.mubr.bf16.mxu0 %v4475
      %4803 = vmatmul.mubr.bf16.gmra.mxu0 %v4474
      %v4804 = vpop.f32.mrf.mxu0
      %v4805 = vadd.f32 %v4513, %v4804
      %v4806 = vpop.f32.mrf.mxu0
      %v4807 = vadd.f32 %v4517, %v4806
      %v4808 = vpop.f32.mrf.mxu0
      %v4809 = vadd.f32 %v4513, %v4808
      %v4810 = vpop.f32.mrf.mxu0
      %v4811 = vadd.f32 %v4517, %v4810
      %4812 = vdwg.mxu0
      %v4813 = vmax.f32 %v4715, 0.0
      %v4814 = vmax.f32 %v4717, 0.0
      %v4815 = vmax.f32 %v4719, 0.0
      %v4816 = vmax.f32 %v4721, 0.0
      %v4817 = vmax.f32 %v4725, 0.0
      %v4818 = vmax.f32 %v4727, 0.0
      %v4819 = vmax.f32 %v4729, 0.0
      %v4820 = vmax.f32 %v4731, 0.0
      %v4821 = vmax.f32 %v4735, 0.0
      %v4822 = vmax.f32 %v4737, 0.0
      %v4823 = vmax.f32 %v4739, 0.0
      %v4824 = vmax.f32 %v4741, 0.0
      %v4825 = vmax.f32 %v4745, 0.0
      %v4826 = vmax.f32 %v4747, 0.0
      %v4827 = vmax.f32 %v4749, 0.0
      %v4828 = vmax.f32 %v4751, 0.0
      %v4829 = vmax.f32 %v4755, 0.0
      %v4830 = vmax.f32 %v4757, 0.0
      %v4831 = vmax.f32 %v4759, 0.0
      %v4832 = vmax.f32 %v4761, 0.0
      %v4833 = vmax.f32 %v4765, 0.0
      %v4834 = vmax.f32 %v4767, 0.0
      %v4835 = vmax.f32 %v4769, 0.0
      %v4836 = vmax.f32 %v4771, 0.0
      %v4837 = vmax.f32 %v4775, 0.0
      %v4838 = vmax.f32 %v4777, 0.0
      %v4839 = vmax.f32 %v4779, 0.0
      %v4840 = vmax.f32 %v4781, 0.0
      %v4841 = vmax.f32 %v4785, 0.0
      %v4842 = vmax.f32 %v4787, 0.0
      %v4843 = vmax.f32 %v4789, 0.0
      %v4844 = vmax.f32 %v4791, 0.0
      %v4845 = vmax.f32 %v4795, 0.0
      %v4846 = vmax.f32 %v4797, 0.0
      %v4847 = vmax.f32 %v4799, 0.0
      %v4848 = vmax.f32 %v4801, 0.0
      %v4849 = vmax.f32 %v4805, 0.0
      %v4850 = vmax.f32 %v4807, 0.0
      %v4851 = vmax.f32 %v4809, 0.0
      %v4852 = vmax.f32 %v4811, 0.0
      %v4853 = vpack.c.bf16 %v4815, %v4813
      %v4854 = vpack.c.bf16 %v4816, %v4814
      %v4855 = vpack.c.bf16 %v4819, %v4817
      %v4856 = vpack.c.bf16 %v4820, %v4818
      %v4857 = vpack.c.bf16 %v4823, %v4821
      %v4858 = vpack.c.bf16 %v4824, %v4822
      %v4859 = vpack.c.bf16 %v4827, %v4825
      %v4860 = vpack.c.bf16 %v4828, %v4826
      %v4861 = vpack.c.bf16 %v4831, %v4829
      %v4862 = vpack.c.bf16 %v4832, %v4830
      %v4863 = vpack.c.bf16 %v4835, %v4833
      %v4864 = vpack.c.bf16 %v4836, %v4834
      %v4865 = vpack.c.bf16 %v4839, %v4837
      %v4866 = vpack.c.bf16 %v4840, %v4838
      %v4867 = vpack.c.bf16 %v4843, %v4841
      %v4868 = vpack.c.bf16 %v4844, %v4842
      %v4869 = vpack.c.bf16 %v4847, %v4845
      %v4870 = vpack.c.bf16 %v4848, %v4846
      %v4871 = vpack.c.bf16 %v4851, %v4849
      %v4872 = vpack.c.bf16 %v4852, %v4850
      %v4873 = vld [vmem:[%s13] sm:$0xff]
      %v4874 = vld [vmem:[%s13 + $0x8] sm:$0xff]
      %v4875 = vld [vmem:[%s13 + $0x10] sm:$0xff]
      %v4876 = vld [vmem:[%s13 + $0x18] sm:$0xff]
      %v4877 = vld [vmem:[%s13 + $0x20] sm:$0xff]
      %v4878 = vld [vmem:[%s13 + $0x28] sm:$0xff]
      %v4879 = vld [vmem:[%s13 + $0x30] sm:$0xff]
      %v4880 = vld [vmem:[%s13 + $0x38] sm:$0xff]
      %v4881 = vld [vmem:[%s13 + $0x40] sm:$0xff]
      %v4882 = vld [vmem:[%s13 + $0x48] sm:$0xff]
      %v4883 = vld [vmem:[%s13 + $0x50] sm:$0xff]
      %v4884 = vld [vmem:[%s13 + $0x58] sm:$0xff]
      %v4885 = vld [vmem:[%s13 + $0x60] sm:$0xff]
      %v4886 = vld [vmem:[%s13 + $0x68] sm:$0xff]
      %v4887 = vld [vmem:[%s13 + $0x70] sm:$0xff]
      %v4888 = vld [vmem:[%s13 + $0x78] sm:$0xff]
      %v4889 = vld [vmem:[%s13 + $0x80] sm:$0xff]
      %v4890 = vld [vmem:[%s13 + $0x88] sm:$0xff]
      %v4891 = vld [vmem:[%s13 + $0x90] sm:$0xff]
      %v4892 = vld [vmem:[%s13 + $0x98] sm:$0xff]
      %v4893 = vld [vmem:[%s13 + $0xa0] sm:$0xff]
      %v4894 = vld [vmem:[%s13 + $0xa8] sm:$0xff]
      %v4895 = vld [vmem:[%s13 + $0xb0] sm:$0xff]
      %v4896 = vld [vmem:[%s13 + $0xb8] sm:$0xff]
      %v4897 = vld [vmem:[%s13 + $0xc0] sm:$0xff]
      %v4898 = vld [vmem:[%s13 + $0xc8] sm:$0xff]
      %v4899 = vld [vmem:[%s13 + $0xd0] sm:$0xff]
      %v4900 = vld [vmem:[%s13 + $0xd8] sm:$0xff]
      %v4901 = vld [vmem:[%s13 + $0xe0] sm:$0xff]
      %v4902 = vld [vmem:[%s13 + $0xe8] sm:$0xff]
      %v4903 = vld [vmem:[%s13 + $0xf0] sm:$0xff]
      %v4904 = vld [vmem:[%s13 + $0xf8] sm:$0xff]
      %s4905 = scalar_lea.vmem %s13, 256
      %v4906 = vld [vmem:[%s4905] sm:$0xff]
      %v4907 = vld [vmem:[%s4905 + $0x8] sm:$0xff]
      %v4908 = vld [vmem:[%s4905 + $0x10] sm:$0xff]
      %v4909 = vld [vmem:[%s4905 + $0x18] sm:$0xff]
      %v4910 = vld [vmem:[%s4905 + $0x20] sm:$0xff]
      %v4911 = vld [vmem:[%s4905 + $0x28] sm:$0xff]
      %v4912 = vld [vmem:[%s4905 + $0x30] sm:$0xff]
      %v4913 = vld [vmem:[%s4905 + $0x38] sm:$0xff]
      %v4914 = vld [vmem:[%s4905 + $0x40] sm:$0xff]
      %v4915 = vld [vmem:[%s4905 + $0x48] sm:$0xff]
      %v4916 = vld [vmem:[%s4905 + $0x50] sm:$0xff]
      %v4917 = vld [vmem:[%s4905 + $0x58] sm:$0xff]
      %v4918 = vld [vmem:[%s4905 + $0x60] sm:$0xff]
      %v4919 = vld [vmem:[%s4905 + $0x68] sm:$0xff]
      %v4920 = vld [vmem:[%s4905 + $0x70] sm:$0xff]
      %v4921 = vld [vmem:[%s4905 + $0x78] sm:$0xff]
      %v4922 = vld [vmem:[%s4905 + $0x80] sm:$0xff]
      %v4923 = vld [vmem:[%s4905 + $0x88] sm:$0xff]
      %v4924 = vld [vmem:[%s4905 + $0x90] sm:$0xff]
      %v4925 = vld [vmem:[%s4905 + $0x98] sm:$0xff]
      %v4926 = vld [vmem:[%s4905 + $0xa0] sm:$0xff]
      %v4927 = vld [vmem:[%s4905 + $0xa8] sm:$0xff]
      %v4928 = vld [vmem:[%s4905 + $0xb0] sm:$0xff]
      %v4929 = vld [vmem:[%s4905 + $0xb8] sm:$0xff]
      %v4930 = vld [vmem:[%s4905 + $0xc0] sm:$0xff]
      %v4931 = vld [vmem:[%s4905 + $0xc8] sm:$0xff]
      %v4932 = vld [vmem:[%s4905 + $0xd0] sm:$0xff]
      %v4933 = vld [vmem:[%s4905 + $0xd8] sm:$0xff]
      %v4934 = vld [vmem:[%s4905 + $0xe0] sm:$0xff]
      %v4935 = vld [vmem:[%s4905 + $0xe8] sm:$0xff]
      %v4936 = vld [vmem:[%s4905 + $0xf0] sm:$0xff]
      %v4937 = vld [vmem:[%s4905 + $0xf8] sm:$0xff]
      %v4970 = vunpack.c.l.b16 %v4906
      %v4971 = vunpack.c.h.b16 %v4906
      %v4972 = vunpack.c.l.b16 %v4907
      %v4973 = vunpack.c.h.b16 %v4907
      %v4974 = vunpack.c.l.b16 %v4908
      %v4975 = vunpack.c.h.b16 %v4908
      %v4976 = vunpack.c.l.b16 %v4909
      %v4977 = vunpack.c.h.b16 %v4909
      %v4978 = vunpack.c.l.b16 %v4910
      %v4979 = vunpack.c.h.b16 %v4910
      %v4980 = vunpack.c.l.b16 %v4911
      %v4981 = vunpack.c.h.b16 %v4911
      %v4982 = vunpack.c.l.b16 %v4912
      %v4983 = vunpack.c.h.b16 %v4912
      %v4984 = vunpack.c.l.b16 %v4913
      %v4985 = vunpack.c.h.b16 %v4913
      %v4986 = vunpack.c.l.b16 %v4914
      %v4987 = vunpack.c.h.b16 %v4914
      %v4988 = vunpack.c.l.b16 %v4915
      %v4989 = vunpack.c.h.b16 %v4915
      %v4990 = vunpack.c.l.b16 %v4916
      %v4991 = vunpack.c.h.b16 %v4916
      %v4992 = vunpack.c.l.b16 %v4917
      %v4993 = vunpack.c.h.b16 %v4917
      %v4994 = vunpack.c.l.b16 %v4918
      %v4995 = vunpack.c.h.b16 %v4918
      %v4996 = vunpack.c.l.b16 %v4919
      %v4997 = vunpack.c.h.b16 %v4919
      %v4998 = vunpack.c.l.b16 %v4920
      %v4999 = vunpack.c.h.b16 %v4920
      %v5000 = vunpack.c.l.b16 %v4921
      %v5001 = vunpack.c.h.b16 %v4921
      %v5002 = vunpack.c.l.b16 %v4922
      %v5003 = vunpack.c.h.b16 %v4922
      %v5004 = vunpack.c.l.b16 %v4923
      %v5005 = vunpack.c.h.b16 %v4923
      %v5006 = vunpack.c.l.b16 %v4924
      %v5007 = vunpack.c.h.b16 %v4924
      %v5008 = vunpack.c.l.b16 %v4925
      %v5009 = vunpack.c.h.b16 %v4925
      %v5010 = vunpack.c.l.b16 %v4926
      %v5011 = vunpack.c.h.b16 %v4926
      %v5012 = vunpack.c.l.b16 %v4927
      %v5013 = vunpack.c.h.b16 %v4927
      %v5014 = vunpack.c.l.b16 %v4928
      %v5015 = vunpack.c.h.b16 %v4928
      %v5016 = vunpack.c.l.b16 %v4929
      %v5017 = vunpack.c.h.b16 %v4929
      %v5018 = vunpack.c.l.b16 %v4930
      %v5019 = vunpack.c.h.b16 %v4930
      %v5020 = vunpack.c.l.b16 %v4931
      %v5021 = vunpack.c.h.b16 %v4931
      %v5022 = vunpack.c.l.b16 %v4932
      %v5023 = vunpack.c.h.b16 %v4932
      %v5024 = vunpack.c.l.b16 %v4933
      %v5025 = vunpack.c.h.b16 %v4933
      %v5026 = vunpack.c.l.b16 %v4934
      %v5027 = vunpack.c.h.b16 %v4934
      %v5028 = vunpack.c.l.b16 %v4935
      %v5029 = vunpack.c.h.b16 %v4935
      %v5030 = vunpack.c.l.b16 %v4936
      %v5031 = vunpack.c.h.b16 %v4936
      %v5032 = vunpack.c.l.b16 %v4937
      %v5033 = vunpack.c.h.b16 %v4937
      %v5034 = vpack.c.b16 %v4972, %v4970
      %v5035 = vpack.c.b16 %v4973, %v4971
      %v5036 = vpack.c.b16 %v4976, %v4974
      %v5037 = vpack.c.b16 %v4977, %v4975
      %v5038 = vpack.c.b16 %v4980, %v4978
      %v5039 = vpack.c.b16 %v4981, %v4979
      %v5040 = vpack.c.b16 %v4984, %v4982
      %v5041 = vpack.c.b16 %v4985, %v4983
      %v5042 = vpack.c.b16 %v4988, %v4986
      %v5043 = vpack.c.b16 %v4989, %v4987
      %v5044 = vpack.c.b16 %v4992, %v4990
      %v5045 = vpack.c.b16 %v4993, %v4991
      %v5046 = vpack.c.b16 %v4996, %v4994
      %v5047 = vpack.c.b16 %v4997, %v4995
      %v5048 = vpack.c.b16 %v5000, %v4998
      %v5049 = vpack.c.b16 %v5001, %v4999
      %v5050 = vpack.c.b16 %v5004, %v5002
      %v5051 = vpack.c.b16 %v5005, %v5003
      %v5052 = vpack.c.b16 %v5008, %v5006
      %v5053 = vpack.c.b16 %v5009, %v5007
      %v5054 = vpack.c.b16 %v5012, %v5010
      %v5055 = vpack.c.b16 %v5013, %v5011
      %v5056 = vpack.c.b16 %v5016, %v5014
      %v5057 = vpack.c.b16 %v5017, %v5015
      %v5058 = vpack.c.b16 %v5020, %v5018
      %v5059 = vpack.c.b16 %v5021, %v5019
      %v5060 = vpack.c.b16 %v5024, %v5022
      %v5061 = vpack.c.b16 %v5025, %v5023
      %v5062 = vpack.c.b16 %v5028, %v5026
      %v5063 = vpack.c.b16 %v5029, %v5027
      %v5064 = vpack.c.b16 %v5032, %v5030
      %v5065 = vpack.c.b16 %v5033, %v5031
      %5098 = vmatprep.subr.bf16.mxu0 %v5049
      %5099 = vmatpush1.bf16.msra.mxu0 %v5048
      %5100 = vmatprep.subr.bf16.mxu0 %v5047
      %5101 = vmatpush1.bf16.msra.mxu0 %v5046
      %5102 = vmatprep.subr.bf16.mxu0 %v5045
      %5103 = vmatpush1.bf16.msra.mxu0 %v5044
      %5104 = vmatprep.subr.bf16.mxu0 %v5043
      %5105 = vmatpush1.bf16.msra.mxu0 %v5042
      %5106 = vmatprep.subr.bf16.mxu0 %v5041
      %5107 = vmatpush1.bf16.msra.mxu0 %v5040
      %5108 = vmatprep.subr.bf16.mxu0 %v5039
      %5109 = vmatpush1.bf16.msra.mxu0 %v5038
      %5110 = vmatprep.subr.bf16.mxu0 %v5037
      %5111 = vmatpush1.bf16.msra.mxu0 %v5036
      %5112 = vmatprep.subr.bf16.mxu0 %v5035
      %5113 = vmatpush1.bf16.msra.mxu0 %v5034
      %5114 = vmatprep.subr.bf16.mxu0 %v5065
      %5115 = vmatpush2.bf16.msra.mxu0 %v5064
      %5116 = vmatprep.subr.bf16.mxu0 %v5063
      %5117 = vmatpush2.bf16.msra.mxu0 %v5062
      %5118 = vmatprep.subr.bf16.mxu0 %v5061
      %5119 = vmatpush2.bf16.msra.mxu0 %v5060
      %5120 = vmatprep.subr.bf16.mxu0 %v5059
      %5121 = vmatpush2.bf16.msra.mxu0 %v5058
      %5122 = vmatprep.subr.bf16.mxu0 %v5057
      %5123 = vmatpush2.bf16.msra.mxu0 %v5056
      %5124 = vmatprep.subr.bf16.mxu0 %v5055
      %5125 = vmatpush2.bf16.msra.mxu0 %v5054
      %5126 = vmatprep.subr.bf16.mxu0 %v5053
      %5127 = vmatpush2.bf16.msra.mxu0 %v5052
      %5128 = vmatprep.subr.bf16.mxu0 %v5051
      %5129 = vmatpush2.bf16.msra.mxu0 %v5050
      %5130 = vmatprep.mubr.bf16.mxu0 %v4856
      %5131 = vmatmul.mubr.bf16.gmra.mxu0 %v4855
      %v5132 = vpop.f32.mrf.mxu0
      %v5133 = vadd.f32 0.0, %v5132
      %v5134 = vpop.f32.mrf.mxu0
      %v5135 = vadd.f32 0.0, %v5134
      %v5136 = vpop.f32.mrf.mxu0
      %v5137 = vadd.f32 0.0, %v5136
      %v5138 = vpop.f32.mrf.mxu0
      %v5139 = vadd.f32 0.0, %v5138
      %5140 = vmatprep.mubr.bf16.mxu0 %v4858
      %5141 = vmatmul.mubr.bf16.gmra.mxu0 %v4857
      %v5142 = vpop.f32.mrf.mxu0
      %v5143 = vadd.f32 0.0, %v5142
      %v5144 = vpop.f32.mrf.mxu0
      %v5145 = vadd.f32 0.0, %v5144
      %v5146 = vpop.f32.mrf.mxu0
      %v5147 = vadd.f32 0.0, %v5146
      %v5148 = vpop.f32.mrf.mxu0
      %v5149 = vadd.f32 0.0, %v5148
      %5150 = vmatprep.mubr.bf16.mxu0 %v4860
      %5151 = vmatmul.mubr.bf16.gmra.mxu0 %v4859
      %v5152 = vpop.f32.mrf.mxu0
      %v5153 = vadd.f32 0.0, %v5152
      %v5154 = vpop.f32.mrf.mxu0
      %v5155 = vadd.f32 0.0, %v5154
      %v5156 = vpop.f32.mrf.mxu0
      %v5157 = vadd.f32 0.0, %v5156
      %v5158 = vpop.f32.mrf.mxu0
      %v5159 = vadd.f32 0.0, %v5158
      %5160 = vmatprep.mubr.bf16.mxu0 %v4862
      %5161 = vmatmul.mubr.bf16.gmra.mxu0 %v4861
      %v5162 = vpop.f32.mrf.mxu0
      %v5163 = vadd.f32 0.0, %v5162
      %v5164 = vpop.f32.mrf.mxu0
      %v5165 = vadd.f32 0.0, %v5164
      %v5166 = vpop.f32.mrf.mxu0
      %v5167 = vadd.f32 0.0, %v5166
      %v5168 = vpop.f32.mrf.mxu0
      %v5169 = vadd.f32 0.0, %v5168
      %5170 = vmatprep.mubr.bf16.mxu0 %v4864
      %5171 = vmatmul.mubr.bf16.gmra.mxu0 %v4863
      %v5172 = vpop.f32.mrf.mxu0
      %v5173 = vadd.f32 0.0, %v5172
      %v5174 = vpop.f32.mrf.mxu0
      %v5175 = vadd.f32 0.0, %v5174
      %v5176 = vpop.f32.mrf.mxu0
      %v5177 = vadd.f32 0.0, %v5176
      %v5178 = vpop.f32.mrf.mxu0
      %v5179 = vadd.f32 0.0, %v5178
      %5180 = vmatprep.mubr.bf16.mxu0 %v4866
      %5181 = vmatmul.mubr.bf16.gmra.mxu0 %v4865
      %v5182 = vpop.f32.mrf.mxu0
      %v5183 = vadd.f32 0.0, %v5182
      %v5184 = vpop.f32.mrf.mxu0
      %v5185 = vadd.f32 0.0, %v5184
      %v5186 = vpop.f32.mrf.mxu0
      %v5187 = vadd.f32 0.0, %v5186
      %v5188 = vpop.f32.mrf.mxu0
      %v5189 = vadd.f32 0.0, %v5188
      %5190 = vmatprep.mubr.bf16.mxu0 %v4868
      %5191 = vmatmul.mubr.bf16.gmra.mxu0 %v4867
      %v5192 = vpop.f32.mrf.mxu0
      %v5193 = vadd.f32 0.0, %v5192
      %v5194 = vpop.f32.mrf.mxu0
      %v5195 = vadd.f32 0.0, %v5194
      %v5196 = vpop.f32.mrf.mxu0
      %v5197 = vadd.f32 0.0, %v5196
      %v5198 = vpop.f32.mrf.mxu0
      %v5199 = vadd.f32 0.0, %v5198
      %5200 = vmatprep.mubr.bf16.mxu0 %v4870
      %5201 = vmatmul.mubr.bf16.gmra.mxu0 %v4869
      %v5202 = vpop.f32.mrf.mxu0
      %v5203 = vadd.f32 0.0, %v5202
      %v5204 = vpop.f32.mrf.mxu0
      %v5205 = vadd.f32 0.0, %v5204
      %v5206 = vpop.f32.mrf.mxu0
      %v5207 = vadd.f32 0.0, %v5206
      %v5208 = vpop.f32.mrf.mxu0
      %v5209 = vadd.f32 0.0, %v5208
      %5210 = vdwg.mxu0
      %v5243 = vunpack.c.l.b16 %v4873
      %v5244 = vunpack.c.h.b16 %v4873
      %v5245 = vunpack.c.l.b16 %v4874
      %v5246 = vunpack.c.h.b16 %v4874
      %v5247 = vunpack.c.l.b16 %v4875
      %v5248 = vunpack.c.h.b16 %v4875
      %v5249 = vunpack.c.l.b16 %v4876
      %v5250 = vunpack.c.h.b16 %v4876
      %v5251 = vunpack.c.l.b16 %v4877
      %v5252 = vunpack.c.h.b16 %v4877
      %v5253 = vunpack.c.l.b16 %v4878
      %v5254 = vunpack.c.h.b16 %v4878
      %v5255 = vunpack.c.l.b16 %v4879
      %v5256 = vunpack.c.h.b16 %v4879
      %v5257 = vunpack.c.l.b16 %v4880
      %v5258 = vunpack.c.h.b16 %v4880
      %v5259 = vunpack.c.l.b16 %v4881
      %v5260 = vunpack.c.h.b16 %v4881
      %v5261 = vunpack.c.l.b16 %v4882
      %v5262 = vunpack.c.h.b16 %v4882
      %v5263 = vunpack.c.l.b16 %v4883
      %v5264 = vunpack.c.h.b16 %v4883
      %v5265 = vunpack.c.l.b16 %v4884
      %v5266 = vunpack.c.h.b16 %v4884
      %v5267 = vunpack.c.l.b16 %v4885
      %v5268 = vunpack.c.h.b16 %v4885
      %v5269 = vunpack.c.l.b16 %v4886
      %v5270 = vunpack.c.h.b16 %v4886
      %v5271 = vunpack.c.l.b16 %v4887
      %v5272 = vunpack.c.h.b16 %v4887
      %v5273 = vunpack.c.l.b16 %v4888
      %v5274 = vunpack.c.h.b16 %v4888
      %v5275 = vunpack.c.l.b16 %v4889
      %v5276 = vunpack.c.h.b16 %v4889
      %v5277 = vunpack.c.l.b16 %v4890
      %v5278 = vunpack.c.h.b16 %v4890
      %v5279 = vunpack.c.l.b16 %v4891
      %v5280 = vunpack.c.h.b16 %v4891
      %v5281 = vunpack.c.l.b16 %v4892
      %v5282 = vunpack.c.h.b16 %v4892
      %v5283 = vunpack.c.l.b16 %v4893
      %v5284 = vunpack.c.h.b16 %v4893
      %v5285 = vunpack.c.l.b16 %v4894
      %v5286 = vunpack.c.h.b16 %v4894
      %v5287 = vunpack.c.l.b16 %v4895
      %v5288 = vunpack.c.h.b16 %v4895
      %v5289 = vunpack.c.l.b16 %v4896
      %v5290 = vunpack.c.h.b16 %v4896
      %v5291 = vunpack.c.l.b16 %v4897
      %v5292 = vunpack.c.h.b16 %v4897
      %v5293 = vunpack.c.l.b16 %v4898
      %v5294 = vunpack.c.h.b16 %v4898
      %v5295 = vunpack.c.l.b16 %v4899
      %v5296 = vunpack.c.h.b16 %v4899
      %v5297 = vunpack.c.l.b16 %v4900
      %v5298 = vunpack.c.h.b16 %v4900
      %v5299 = vunpack.c.l.b16 %v4901
      %v5300 = vunpack.c.h.b16 %v4901
      %v5301 = vunpack.c.l.b16 %v4902
      %v5302 = vunpack.c.h.b16 %v4902
      %v5303 = vunpack.c.l.b16 %v4903
      %v5304 = vunpack.c.h.b16 %v4903
      %v5305 = vunpack.c.l.b16 %v4904
      %v5306 = vunpack.c.h.b16 %v4904
      %v5307 = vpack.c.b16 %v5245, %v5243
      %v5308 = vpack.c.b16 %v5246, %v5244
      %v5309 = vpack.c.b16 %v5249, %v5247
      %v5310 = vpack.c.b16 %v5250, %v5248
      %v5311 = vpack.c.b16 %v5253, %v5251
      %v5312 = vpack.c.b16 %v5254, %v5252
      %v5313 = vpack.c.b16 %v5257, %v5255
      %v5314 = vpack.c.b16 %v5258, %v5256
      %v5315 = vpack.c.b16 %v5261, %v5259
      %v5316 = vpack.c.b16 %v5262, %v5260
      %v5317 = vpack.c.b16 %v5265, %v5263
      %v5318 = vpack.c.b16 %v5266, %v5264
      %v5319 = vpack.c.b16 %v5269, %v5267
      %v5320 = vpack.c.b16 %v5270, %v5268
      %v5321 = vpack.c.b16 %v5273, %v5271
      %v5322 = vpack.c.b16 %v5274, %v5272
      %v5323 = vpack.c.b16 %v5277, %v5275
      %v5324 = vpack.c.b16 %v5278, %v5276
      %v5325 = vpack.c.b16 %v5281, %v5279
      %v5326 = vpack.c.b16 %v5282, %v5280
      %v5327 = vpack.c.b16 %v5285, %v5283
      %v5328 = vpack.c.b16 %v5286, %v5284
      %v5329 = vpack.c.b16 %v5289, %v5287
      %v5330 = vpack.c.b16 %v5290, %v5288
      %v5331 = vpack.c.b16 %v5293, %v5291
      %v5332 = vpack.c.b16 %v5294, %v5292
      %v5333 = vpack.c.b16 %v5297, %v5295
      %v5334 = vpack.c.b16 %v5298, %v5296
      %v5335 = vpack.c.b16 %v5301, %v5299
      %v5336 = vpack.c.b16 %v5302, %v5300
      %v5337 = vpack.c.b16 %v5305, %v5303
      %v5338 = vpack.c.b16 %v5306, %v5304
      %5371 = vmatprep.subr.bf16.mxu0 %v5322
      %5372 = vmatpush1.bf16.msra.mxu0 %v5321
      %5373 = vmatprep.subr.bf16.mxu0 %v5320
      %5374 = vmatpush1.bf16.msra.mxu0 %v5319
      %5375 = vmatprep.subr.bf16.mxu0 %v5318
      %5376 = vmatpush1.bf16.msra.mxu0 %v5317
      %5377 = vmatprep.subr.bf16.mxu0 %v5316
      %5378 = vmatpush1.bf16.msra.mxu0 %v5315
      %5379 = vmatprep.subr.bf16.mxu0 %v5314
      %5380 = vmatpush1.bf16.msra.mxu0 %v5313
      %5381 = vmatprep.subr.bf16.mxu0 %v5312
      %5382 = vmatpush1.bf16.msra.mxu0 %v5311
      %5383 = vmatprep.subr.bf16.mxu0 %v5310
      %5384 = vmatpush1.bf16.msra.mxu0 %v5309
      %5385 = vmatprep.subr.bf16.mxu0 %v5308
      %5386 = vmatpush1.bf16.msra.mxu0 %v5307
      %5387 = vmatprep.subr.bf16.mxu0 %v5338
      %5388 = vmatpush2.bf16.msra.mxu0 %v5337
      %5389 = vmatprep.subr.bf16.mxu0 %v5336
      %5390 = vmatpush2.bf16.msra.mxu0 %v5335
      %5391 = vmatprep.subr.bf16.mxu0 %v5334
      %5392 = vmatpush2.bf16.msra.mxu0 %v5333
      %5393 = vmatprep.subr.bf16.mxu0 %v5332
      %5394 = vmatpush2.bf16.msra.mxu0 %v5331
      %5395 = vmatprep.subr.bf16.mxu0 %v5330
      %5396 = vmatpush2.bf16.msra.mxu0 %v5329
      %5397 = vmatprep.subr.bf16.mxu0 %v5328
      %5398 = vmatpush2.bf16.msra.mxu0 %v5327
      %5399 = vmatprep.subr.bf16.mxu0 %v5326
      %5400 = vmatpush2.bf16.msra.mxu0 %v5325
      %5401 = vmatprep.subr.bf16.mxu0 %v5324
      %5402 = vmatpush2.bf16.msra.mxu0 %v5323
      %5403 = vmatprep.mubr.bf16.mxu0 %v4854
      %5404 = vmatmul.mubr.bf16.gmra.mxu0 %v4853
      %v5405 = vpop.f32.mrf.mxu0
      %v5406 = vadd.f32 %v5133, %v5405
      %v5407 = vpop.f32.mrf.mxu0
      %v5408 = vadd.f32 %v5135, %v5407
      %v5409 = vpop.f32.mrf.mxu0
      %v5410 = vadd.f32 %v5137, %v5409
      %v5411 = vpop.f32.mrf.mxu0
      %v5412 = vadd.f32 %v5139, %v5411
      %5413 = vmatprep.mubr.bf16.mxu0 %v4856
      %5414 = vmatmul.mubr.bf16.gmra.mxu0 %v4855
      %v5415 = vpop.f32.mrf.mxu0
      %v5416 = vadd.f32 %v5143, %v5415
      %v5417 = vpop.f32.mrf.mxu0
      %v5418 = vadd.f32 %v5145, %v5417
      %v5419 = vpop.f32.mrf.mxu0
      %v5420 = vadd.f32 %v5147, %v5419
      %v5421 = vpop.f32.mrf.mxu0
      %v5422 = vadd.f32 %v5149, %v5421
      %5423 = vmatprep.mubr.bf16.mxu0 %v4858
      %5424 = vmatmul.mubr.bf16.gmra.mxu0 %v4857
      %v5425 = vpop.f32.mrf.mxu0
      %v5426 = vadd.f32 %v5153, %v5425
      %v5427 = vpop.f32.mrf.mxu0
      %v5428 = vadd.f32 %v5155, %v5427
      %v5429 = vpop.f32.mrf.mxu0
      %v5430 = vadd.f32 %v5157, %v5429
      %v5431 = vpop.f32.mrf.mxu0
      %v5432 = vadd.f32 %v5159, %v5431
      %5433 = vmatprep.mubr.bf16.mxu0 %v4860
      %5434 = vmatmul.mubr.bf16.gmra.mxu0 %v4859
      %v5435 = vpop.f32.mrf.mxu0
      %v5436 = vadd.f32 %v5163, %v5435
      %v5437 = vpop.f32.mrf.mxu0
      %v5438 = vadd.f32 %v5165, %v5437
      %v5439 = vpop.f32.mrf.mxu0
      %v5440 = vadd.f32 %v5167, %v5439
      %v5441 = vpop.f32.mrf.mxu0
      %v5442 = vadd.f32 %v5169, %v5441
      %5443 = vmatprep.mubr.bf16.mxu0 %v4862
      %5444 = vmatmul.mubr.bf16.gmra.mxu0 %v4861
      %v5445 = vpop.f32.mrf.mxu0
      %v5446 = vadd.f32 %v5173, %v5445
      %v5447 = vpop.f32.mrf.mxu0
      %v5448 = vadd.f32 %v5175, %v5447
      %v5449 = vpop.f32.mrf.mxu0
      %v5450 = vadd.f32 %v5177, %v5449
      %v5451 = vpop.f32.mrf.mxu0
      %v5452 = vadd.f32 %v5179, %v5451
      %5453 = vmatprep.mubr.bf16.mxu0 %v4864
      %5454 = vmatmul.mubr.bf16.gmra.mxu0 %v4863
      %v5455 = vpop.f32.mrf.mxu0
      %v5456 = vadd.f32 %v5183, %v5455
      %v5457 = vpop.f32.mrf.mxu0
      %v5458 = vadd.f32 %v5185, %v5457
      %v5459 = vpop.f32.mrf.mxu0
      %v5460 = vadd.f32 %v5187, %v5459
      %v5461 = vpop.f32.mrf.mxu0
      %v5462 = vadd.f32 %v5189, %v5461
      %5463 = vmatprep.mubr.bf16.mxu0 %v4866
      %5464 = vmatmul.mubr.bf16.gmra.mxu0 %v4865
      %v5465 = vpop.f32.mrf.mxu0
      %v5466 = vadd.f32 %v5193, %v5465
      %v5467 = vpop.f32.mrf.mxu0
      %v5468 = vadd.f32 %v5195, %v5467
      %v5469 = vpop.f32.mrf.mxu0
      %v5470 = vadd.f32 %v5197, %v5469
      %v5471 = vpop.f32.mrf.mxu0
      %v5472 = vadd.f32 %v5199, %v5471
      %5473 = vmatprep.mubr.bf16.mxu0 %v4868
      %5474 = vmatmul.mubr.bf16.gmra.mxu0 %v4867
      %v5475 = vpop.f32.mrf.mxu0
      %v5476 = vadd.f32 %v5203, %v5475
      %v5477 = vpop.f32.mrf.mxu0
      %v5478 = vadd.f32 %v5205, %v5477
      %v5479 = vpop.f32.mrf.mxu0
      %v5480 = vadd.f32 %v5207, %v5479
      %v5481 = vpop.f32.mrf.mxu0
      %v5482 = vadd.f32 %v5209, %v5481
      %5483 = vdwg.mxu0
      %s5484 = scalar_lea.vmem %s13, 512
      %v5485 = vld [vmem:[%s5484] sm:$0xff]
      %v5486 = vld [vmem:[%s5484 + $0x8] sm:$0xff]
      %v5487 = vld [vmem:[%s5484 + $0x10] sm:$0xff]
      %v5488 = vld [vmem:[%s5484 + $0x18] sm:$0xff]
      %v5489 = vld [vmem:[%s5484 + $0x20] sm:$0xff]
      %v5490 = vld [vmem:[%s5484 + $0x28] sm:$0xff]
      %v5491 = vld [vmem:[%s5484 + $0x30] sm:$0xff]
      %v5492 = vld [vmem:[%s5484 + $0x38] sm:$0xff]
      %v5493 = vld [vmem:[%s5484 + $0x40] sm:$0xff]
      %v5494 = vld [vmem:[%s5484 + $0x48] sm:$0xff]
      %v5495 = vld [vmem:[%s5484 + $0x50] sm:$0xff]
      %v5496 = vld [vmem:[%s5484 + $0x58] sm:$0xff]
      %v5497 = vld [vmem:[%s5484 + $0x60] sm:$0xff]
      %v5498 = vld [vmem:[%s5484 + $0x68] sm:$0xff]
      %v5499 = vld [vmem:[%s5484 + $0x70] sm:$0xff]
      %v5500 = vld [vmem:[%s5484 + $0x78] sm:$0xff]
      %v5501 = vld [vmem:[%s5484 + $0x80] sm:$0xff]
      %v5502 = vld [vmem:[%s5484 + $0x88] sm:$0xff]
      %v5503 = vld [vmem:[%s5484 + $0x90] sm:$0xff]
      %v5504 = vld [vmem:[%s5484 + $0x98] sm:$0xff]
      %v5505 = vld [vmem:[%s5484 + $0xa0] sm:$0xff]
      %v5506 = vld [vmem:[%s5484 + $0xa8] sm:$0xff]
      %v5507 = vld [vmem:[%s5484 + $0xb0] sm:$0xff]
      %v5508 = vld [vmem:[%s5484 + $0xb8] sm:$0xff]
      %v5509 = vld [vmem:[%s5484 + $0xc0] sm:$0xff]
      %v5510 = vld [vmem:[%s5484 + $0xc8] sm:$0xff]
      %v5511 = vld [vmem:[%s5484 + $0xd0] sm:$0xff]
      %v5512 = vld [vmem:[%s5484 + $0xd8] sm:$0xff]
      %v5513 = vld [vmem:[%s5484 + $0xe0] sm:$0xff]
      %v5514 = vld [vmem:[%s5484 + $0xe8] sm:$0xff]
      %v5515 = vld [vmem:[%s5484 + $0xf0] sm:$0xff]
      %v5516 = vld [vmem:[%s5484 + $0xf8] sm:$0xff]
      %v5549 = vunpack.c.l.b16 %v5485
      %v5550 = vunpack.c.h.b16 %v5485
      %v5551 = vunpack.c.l.b16 %v5486
      %v5552 = vunpack.c.h.b16 %v5486
      %v5553 = vunpack.c.l.b16 %v5487
      %v5554 = vunpack.c.h.b16 %v5487
      %v5555 = vunpack.c.l.b16 %v5488
      %v5556 = vunpack.c.h.b16 %v5488
      %v5557 = vunpack.c.l.b16 %v5489
      %v5558 = vunpack.c.h.b16 %v5489
      %v5559 = vunpack.c.l.b16 %v5490
      %v5560 = vunpack.c.h.b16 %v5490
      %v5561 = vunpack.c.l.b16 %v5491
      %v5562 = vunpack.c.h.b16 %v5491
      %v5563 = vunpack.c.l.b16 %v5492
      %v5564 = vunpack.c.h.b16 %v5492
      %v5565 = vunpack.c.l.b16 %v5493
      %v5566 = vunpack.c.h.b16 %v5493
      %v5567 = vunpack.c.l.b16 %v5494
      %v5568 = vunpack.c.h.b16 %v5494
      %v5569 = vunpack.c.l.b16 %v5495
      %v5570 = vunpack.c.h.b16 %v5495
      %v5571 = vunpack.c.l.b16 %v5496
      %v5572 = vunpack.c.h.b16 %v5496
      %v5573 = vunpack.c.l.b16 %v5497
      %v5574 = vunpack.c.h.b16 %v5497
      %v5575 = vunpack.c.l.b16 %v5498
      %v5576 = vunpack.c.h.b16 %v5498
      %v5577 = vunpack.c.l.b16 %v5499
      %v5578 = vunpack.c.h.b16 %v5499
      %v5579 = vunpack.c.l.b16 %v5500
      %v5580 = vunpack.c.h.b16 %v5500
      %v5581 = vunpack.c.l.b16 %v5501
      %v5582 = vunpack.c.h.b16 %v5501
      %v5583 = vunpack.c.l.b16 %v5502
      %v5584 = vunpack.c.h.b16 %v5502
      %v5585 = vunpack.c.l.b16 %v5503
      %v5586 = vunpack.c.h.b16 %v5503
      %v5587 = vunpack.c.l.b16 %v5504
      %v5588 = vunpack.c.h.b16 %v5504
      %v5589 = vunpack.c.l.b16 %v5505
      %v5590 = vunpack.c.h.b16 %v5505
      %v5591 = vunpack.c.l.b16 %v5506
      %v5592 = vunpack.c.h.b16 %v5506
      %v5593 = vunpack.c.l.b16 %v5507
      %v5594 = vunpack.c.h.b16 %v5507
      %v5595 = vunpack.c.l.b16 %v5508
      %v5596 = vunpack.c.h.b16 %v5508
      %v5597 = vunpack.c.l.b16 %v5509
      %v5598 = vunpack.c.h.b16 %v5509
      %v5599 = vunpack.c.l.b16 %v5510
      %v5600 = vunpack.c.h.b16 %v5510
      %v5601 = vunpack.c.l.b16 %v5511
      %v5602 = vunpack.c.h.b16 %v5511
      %v5603 = vunpack.c.l.b16 %v5512
      %v5604 = vunpack.c.h.b16 %v5512
      %v5605 = vunpack.c.l.b16 %v5513
      %v5606 = vunpack.c.h.b16 %v5513
      %v5607 = vunpack.c.l.b16 %v5514
      %v5608 = vunpack.c.h.b16 %v5514
      %v5609 = vunpack.c.l.b16 %v5515
      %v5610 = vunpack.c.h.b16 %v5515
      %v5611 = vunpack.c.l.b16 %v5516
      %v5612 = vunpack.c.h.b16 %v5516
      %v5613 = vpack.c.b16 %v5551, %v5549
      %v5614 = vpack.c.b16 %v5552, %v5550
      %v5615 = vpack.c.b16 %v5555, %v5553
      %v5616 = vpack.c.b16 %v5556, %v5554
      %v5617 = vpack.c.b16 %v5559, %v5557
      %v5618 = vpack.c.b16 %v5560, %v5558
      %v5619 = vpack.c.b16 %v5563, %v5561
      %v5620 = vpack.c.b16 %v5564, %v5562
      %v5621 = vpack.c.b16 %v5567, %v5565
      %v5622 = vpack.c.b16 %v5568, %v5566
      %v5623 = vpack.c.b16 %v5571, %v5569
      %v5624 = vpack.c.b16 %v5572, %v5570
      %v5625 = vpack.c.b16 %v5575, %v5573
      %v5626 = vpack.c.b16 %v5576, %v5574
      %v5627 = vpack.c.b16 %v5579, %v5577
      %v5628 = vpack.c.b16 %v5580, %v5578
      %v5629 = vpack.c.b16 %v5583, %v5581
      %v5630 = vpack.c.b16 %v5584, %v5582
      %v5631 = vpack.c.b16 %v5587, %v5585
      %v5632 = vpack.c.b16 %v5588, %v5586
      %v5633 = vpack.c.b16 %v5591, %v5589
      %v5634 = vpack.c.b16 %v5592, %v5590
      %v5635 = vpack.c.b16 %v5595, %v5593
      %v5636 = vpack.c.b16 %v5596, %v5594
      %v5637 = vpack.c.b16 %v5599, %v5597
      %v5638 = vpack.c.b16 %v5600, %v5598
      %v5639 = vpack.c.b16 %v5603, %v5601
      %v5640 = vpack.c.b16 %v5604, %v5602
      %v5641 = vpack.c.b16 %v5607, %v5605
      %v5642 = vpack.c.b16 %v5608, %v5606
      %v5643 = vpack.c.b16 %v5611, %v5609
      %v5644 = vpack.c.b16 %v5612, %v5610
      %5677 = vmatprep.subr.bf16.mxu0 %v5628
      %5678 = vmatpush1.bf16.msra.mxu0 %v5627
      %5679 = vmatprep.subr.bf16.mxu0 %v5626
      %5680 = vmatpush1.bf16.msra.mxu0 %v5625
      %5681 = vmatprep.subr.bf16.mxu0 %v5624
      %5682 = vmatpush1.bf16.msra.mxu0 %v5623
      %5683 = vmatprep.subr.bf16.mxu0 %v5622
      %5684 = vmatpush1.bf16.msra.mxu0 %v5621
      %5685 = vmatprep.subr.bf16.mxu0 %v5620
      %5686 = vmatpush1.bf16.msra.mxu0 %v5619
      %5687 = vmatprep.subr.bf16.mxu0 %v5618
      %5688 = vmatpush1.bf16.msra.mxu0 %v5617
      %5689 = vmatprep.subr.bf16.mxu0 %v5616
      %5690 = vmatpush1.bf16.msra.mxu0 %v5615
      %5691 = vmatprep.subr.bf16.mxu0 %v5614
      %5692 = vmatpush1.bf16.msra.mxu0 %v5613
      %5693 = vmatprep.subr.bf16.mxu0 %v5644
      %5694 = vmatpush2.bf16.msra.mxu0 %v5643
      %5695 = vmatprep.subr.bf16.mxu0 %v5642
      %5696 = vmatpush2.bf16.msra.mxu0 %v5641
      %5697 = vmatprep.subr.bf16.mxu0 %v5640
      %5698 = vmatpush2.bf16.msra.mxu0 %v5639
      %5699 = vmatprep.subr.bf16.mxu0 %v5638
      %5700 = vmatpush2.bf16.msra.mxu0 %v5637
      %5701 = vmatprep.subr.bf16.mxu0 %v5636
      %5702 = vmatpush2.bf16.msra.mxu0 %v5635
      %5703 = vmatprep.subr.bf16.mxu0 %v5634
      %5704 = vmatpush2.bf16.msra.mxu0 %v5633
      %5705 = vmatprep.subr.bf16.mxu0 %v5632
      %5706 = vmatpush2.bf16.msra.mxu0 %v5631
      %5707 = vmatprep.subr.bf16.mxu0 %v5630
      %5708 = vmatpush2.bf16.msra.mxu0 %v5629
      %5709 = vmatprep.mubr.bf16.mxu0 %v4858
      %5710 = vmatmul.mubr.bf16.gmra.mxu0 %v4857
      %v5711 = vpop.f32.mrf.mxu0
      %v5712 = vadd.f32 0.0, %v5711
      %v5713 = vpop.f32.mrf.mxu0
      %v5714 = vadd.f32 0.0, %v5713
      %v5715 = vpop.f32.mrf.mxu0
      %v5716 = vadd.f32 0.0, %v5715
      %v5717 = vpop.f32.mrf.mxu0
      %v5718 = vadd.f32 0.0, %v5717
      %5719 = vmatprep.mubr.bf16.mxu0 %v4860
      %5720 = vmatmul.mubr.bf16.gmra.mxu0 %v4859
      %v5721 = vpop.f32.mrf.mxu0
      %v5722 = vadd.f32 0.0, %v5721
      %v5723 = vpop.f32.mrf.mxu0
      %v5724 = vadd.f32 0.0, %v5723
      %v5725 = vpop.f32.mrf.mxu0
      %v5726 = vadd.f32 0.0, %v5725
      %v5727 = vpop.f32.mrf.mxu0
      %v5728 = vadd.f32 0.0, %v5727
      %5729 = vmatprep.mubr.bf16.mxu0 %v4862
      %5730 = vmatmul.mubr.bf16.gmra.mxu0 %v4861
      %v5731 = vpop.f32.mrf.mxu0
      %v5732 = vadd.f32 0.0, %v5731
      %v5733 = vpop.f32.mrf.mxu0
      %v5734 = vadd.f32 0.0, %v5733
      %v5735 = vpop.f32.mrf.mxu0
      %v5736 = vadd.f32 0.0, %v5735
      %v5737 = vpop.f32.mrf.mxu0
      %v5738 = vadd.f32 0.0, %v5737
      %5739 = vmatprep.mubr.bf16.mxu0 %v4864
      %5740 = vmatmul.mubr.bf16.gmra.mxu0 %v4863
      %v5741 = vpop.f32.mrf.mxu0
      %v5742 = vadd.f32 0.0, %v5741
      %v5743 = vpop.f32.mrf.mxu0
      %v5744 = vadd.f32 0.0, %v5743
      %v5745 = vpop.f32.mrf.mxu0
      %v5746 = vadd.f32 0.0, %v5745
      %v5747 = vpop.f32.mrf.mxu0
      %v5748 = vadd.f32 0.0, %v5747
      %5749 = vmatprep.mubr.bf16.mxu0 %v4866
      %5750 = vmatmul.mubr.bf16.gmra.mxu0 %v4865
      %v5751 = vpop.f32.mrf.mxu0
      %v5752 = vadd.f32 0.0, %v5751
      %v5753 = vpop.f32.mrf.mxu0
      %v5754 = vadd.f32 0.0, %v5753
      %v5755 = vpop.f32.mrf.mxu0
      %v5756 = vadd.f32 0.0, %v5755
      %v5757 = vpop.f32.mrf.mxu0
      %v5758 = vadd.f32 0.0, %v5757
      %5759 = vmatprep.mubr.bf16.mxu0 %v4868
      %5760 = vmatmul.mubr.bf16.gmra.mxu0 %v4867
      %v5761 = vpop.f32.mrf.mxu0
      %v5762 = vadd.f32 0.0, %v5761
      %v5763 = vpop.f32.mrf.mxu0
      %v5764 = vadd.f32 0.0, %v5763
      %v5765 = vpop.f32.mrf.mxu0
      %v5766 = vadd.f32 0.0, %v5765
      %v5767 = vpop.f32.mrf.mxu0
      %v5768 = vadd.f32 0.0, %v5767
      %5769 = vmatprep.mubr.bf16.mxu0 %v4870
      %5770 = vmatmul.mubr.bf16.gmra.mxu0 %v4869
      %v5771 = vpop.f32.mrf.mxu0
      %v5772 = vadd.f32 0.0, %v5771
      %v5773 = vpop.f32.mrf.mxu0
      %v5774 = vadd.f32 0.0, %v5773
      %v5775 = vpop.f32.mrf.mxu0
      %v5776 = vadd.f32 0.0, %v5775
      %v5777 = vpop.f32.mrf.mxu0
      %v5778 = vadd.f32 0.0, %v5777
      %5779 = vmatprep.mubr.bf16.mxu0 %v4872
      %5780 = vmatmul.mubr.bf16.gmra.mxu0 %v4871
      %v5781 = vpop.f32.mrf.mxu0
      %v5782 = vadd.f32 0.0, %v5781
      %v5783 = vpop.f32.mrf.mxu0
      %v5784 = vadd.f32 0.0, %v5783
      %v5785 = vpop.f32.mrf.mxu0
      %v5786 = vadd.f32 0.0, %v5785
      %v5787 = vpop.f32.mrf.mxu0
      %v5788 = vadd.f32 0.0, %v5787
      %5789 = vdwg.mxu0
      %v5790 = vadd.f32 %v5406, %v5712
      %v5791 = vadd.f32 %v5408, %v5714
      %v5792 = vadd.f32 %v5410, %v5716
      %v5793 = vadd.f32 %v5412, %v5718
      %v5794 = vadd.f32 %v5416, %v5722
      %v5795 = vadd.f32 %v5418, %v5724
      %v5796 = vadd.f32 %v5420, %v5726
      %v5797 = vadd.f32 %v5422, %v5728
      %v5798 = vadd.f32 %v5426, %v5732
      %v5799 = vadd.f32 %v5428, %v5734
      %v5800 = vadd.f32 %v5430, %v5736
      %v5801 = vadd.f32 %v5432, %v5738
      %v5802 = vadd.f32 %v5436, %v5742
      %v5803 = vadd.f32 %v5438, %v5744
      %v5804 = vadd.f32 %v5440, %v5746
      %v5805 = vadd.f32 %v5442, %v5748
      %v5806 = vadd.f32 %v5446, %v5752
      %v5807 = vadd.f32 %v5448, %v5754
      %v5808 = vadd.f32 %v5450, %v5756
      %v5809 = vadd.f32 %v5452, %v5758
      %v5810 = vadd.f32 %v5456, %v5762
      %v5811 = vadd.f32 %v5458, %v5764
      %v5812 = vadd.f32 %v5460, %v5766
      %v5813 = vadd.f32 %v5462, %v5768
      %v5814 = vadd.f32 %v5466, %v5772
      %v5815 = vadd.f32 %v5468, %v5774
      %v5816 = vadd.f32 %v5470, %v5776
      %v5817 = vadd.f32 %v5472, %v5778
      %v5818 = vadd.f32 %v5476, %v5782
      %v5819 = vadd.f32 %v5478, %v5784
      %v5820 = vadd.f32 %v5480, %v5786
      %v5821 = vadd.f32 %v5482, %v5788
      %v5822 = vld [vmem:[%s14] sm:$0x3]
      %v5824 = vlaneseq
      %v5825 = vshrl.u32 %v5824, 7
      %v5826 = vsub.s32 0, %v5825
      %v5827 = vrot.slane %v5822, %v5826
      %v5828 = vlaneseq
      %v5829 = vshrl.u32 %v5828, 7
      %v5830 = vsub.s32 1, %v5829
      %v5831 = vrot.slane %v5822, %v5830
      %v5834 = vadd.f32 %v5790, %v5827
      %v5835 = vadd.f32 %v5791, %v5831
      %v5836 = vadd.f32 %v5792, %v5827
      %v5837 = vadd.f32 %v5793, %v5831
      %v5838 = vadd.f32 %v5794, %v5827
      %v5839 = vadd.f32 %v5795, %v5831
      %v5840 = vadd.f32 %v5796, %v5827
      %v5841 = vadd.f32 %v5797, %v5831
      %v5842 = vadd.f32 %v5798, %v5827
      %v5843 = vadd.f32 %v5799, %v5831
      %v5844 = vadd.f32 %v5800, %v5827
      %v5845 = vadd.f32 %v5801, %v5831
      %v5846 = vadd.f32 %v5802, %v5827
      %v5847 = vadd.f32 %v5803, %v5831
      %v5848 = vadd.f32 %v5804, %v5827
      %v5849 = vadd.f32 %v5805, %v5831
      %v5850 = vadd.f32 %v5806, %v5827
      %v5851 = vadd.f32 %v5807, %v5831
      %v5852 = vadd.f32 %v5808, %v5827
      %v5853 = vadd.f32 %v5809, %v5831
      %v5854 = vadd.f32 %v5810, %v5827
      %v5855 = vadd.f32 %v5811, %v5831
      %v5856 = vadd.f32 %v5812, %v5827
      %v5857 = vadd.f32 %v5813, %v5831
      %v5858 = vadd.f32 %v5814, %v5827
      %v5859 = vadd.f32 %v5815, %v5831
      %v5860 = vadd.f32 %v5816, %v5827
      %v5861 = vadd.f32 %v5817, %v5831
      %v5862 = vadd.f32 %v5818, %v5827
      %v5863 = vadd.f32 %v5819, %v5831
      %v5864 = vadd.f32 %v5820, %v5827
      %v5865 = vadd.f32 %v5821, %v5831
      %v5866 = vmax.f32 %v5834, 0.0
      %v5867 = vmax.f32 %v5835, 0.0
      %v5868 = vmax.f32 %v5836, 0.0
      %v5869 = vmax.f32 %v5837, 0.0
      %v5870 = vmax.f32 %v5838, 0.0
      %v5871 = vmax.f32 %v5839, 0.0
      %v5872 = vmax.f32 %v5840, 0.0
      %v5873 = vmax.f32 %v5841, 0.0
      %v5874 = vmax.f32 %v5842, 0.0
      %v5875 = vmax.f32 %v5843, 0.0
      %v5876 = vmax.f32 %v5844, 0.0
      %v5877 = vmax.f32 %v5845, 0.0
      %v5878 = vmax.f32 %v5846, 0.0
      %v5879 = vmax.f32 %v5847, 0.0
      %v5880 = vmax.f32 %v5848, 0.0
      %v5881 = vmax.f32 %v5849, 0.0
      %v5882 = vmax.f32 %v5850, 0.0
      %v5883 = vmax.f32 %v5851, 0.0
      %v5884 = vmax.f32 %v5852, 0.0
      %v5885 = vmax.f32 %v5853, 0.0
      %v5886 = vmax.f32 %v5854, 0.0
      %v5887 = vmax.f32 %v5855, 0.0
      %v5888 = vmax.f32 %v5856, 0.0
      %v5889 = vmax.f32 %v5857, 0.0
      %v5890 = vmax.f32 %v5858, 0.0
      %v5891 = vmax.f32 %v5859, 0.0
      %v5892 = vmax.f32 %v5860, 0.0
      %v5893 = vmax.f32 %v5861, 0.0
      %v5894 = vmax.f32 %v5862, 0.0
      %v5895 = vmax.f32 %v5863, 0.0
      %v5896 = vmax.f32 %v5864, 0.0
      %v5897 = vmax.f32 %v5865, 0.0
      %v5898 = vpack.c.bf16 %v5868, %v5866
      %v5899 = vpack.c.bf16 %v5869, %v5867
      %v5900 = vpack.c.bf16 %v5872, %v5870
      %v5901 = vpack.c.bf16 %v5873, %v5871
      %v5902 = vpack.c.bf16 %v5876, %v5874
      %v5903 = vpack.c.bf16 %v5877, %v5875
      %v5904 = vpack.c.bf16 %v5880, %v5878
      %v5905 = vpack.c.bf16 %v5881, %v5879
      %v5906 = vpack.c.bf16 %v5884, %v5882
      %v5907 = vpack.c.bf16 %v5885, %v5883
      %v5908 = vpack.c.bf16 %v5888, %v5886
      %v5909 = vpack.c.bf16 %v5889, %v5887
      %v5910 = vpack.c.bf16 %v5892, %v5890
      %v5911 = vpack.c.bf16 %v5893, %v5891
      %v5912 = vpack.c.bf16 %v5896, %v5894
      %v5913 = vpack.c.bf16 %v5897, %v5895
      %v5914 = vunpack.c.l.bf16 %v5898
      %v5915 = vunpack.c.l.bf16 %v5899
      %v5916 = vunpack.c.h.bf16 %v5898
      %v5917 = vunpack.c.h.bf16 %v5899
      %v5918 = vunpack.c.l.bf16 %v5900
      %v5919 = vunpack.c.l.bf16 %v5901
      %v5920 = vunpack.c.h.bf16 %v5900
      %v5921 = vunpack.c.h.bf16 %v5901
      %v5922 = vunpack.c.l.bf16 %v5902
      %v5923 = vunpack.c.l.bf16 %v5903
      %v5924 = vunpack.c.h.bf16 %v5902
      %v5925 = vunpack.c.h.bf16 %v5903
      %v5926 = vunpack.c.l.bf16 %v5904
      %v5927 = vunpack.c.l.bf16 %v5905
      %v5928 = vunpack.c.h.bf16 %v5904
      %v5929 = vunpack.c.h.bf16 %v5905
      %v5930 = vunpack.c.l.bf16 %v5906
      %v5931 = vunpack.c.l.bf16 %v5907
      %v5932 = vunpack.c.h.bf16 %v5906
      %v5933 = vunpack.c.h.bf16 %v5907
      %v5934 = vunpack.c.l.bf16 %v5908
      %v5935 = vunpack.c.l.bf16 %v5909
      %v5936 = vunpack.c.h.bf16 %v5908
      %v5937 = vunpack.c.h.bf16 %v5909
      %v5938 = vunpack.c.l.bf16 %v5910
      %v5939 = vunpack.c.l.bf16 %v5911
      %v5940 = vunpack.c.h.bf16 %v5910
      %v5941 = vunpack.c.h.bf16 %v5911
      %v5942 = vunpack.c.l.bf16 %v5912
      %v5943 = vunpack.c.l.bf16 %v5913
      %v5944 = vunpack.c.h.bf16 %v5912
      %v5945 = vunpack.c.h.bf16 %v5913
      %v5946 = vadd.f32 %v5914, %v5915
      %5947 = vadd.xlane.f32.xlu0 %v5946
      %v5948 = vpop.xlane.xlu0 %5947
      %v5949 = vadd.f32 %v5916, %v5917
      %5950 = vadd.xlane.f32.xlu0 %v5949
      %v5951 = vpop.xlane.xlu0 %5950
      %v5952 = vadd.f32 %v5918, %v5919
      %5953 = vadd.xlane.f32.xlu0 %v5952
      %v5954 = vpop.xlane.xlu0 %5953
      %v5955 = vadd.f32 %v5920, %v5921
      %5956 = vadd.xlane.f32.xlu0 %v5955
      %v5957 = vpop.xlane.xlu0 %5956
      %v5958 = vadd.f32 %v5922, %v5923
      %5959 = vadd.xlane.f32.xlu0 %v5958
      %v5960 = vpop.xlane.xlu0 %5959
      %v5961 = vadd.f32 %v5924, %v5925
      %5962 = vadd.xlane.f32.xlu0 %v5961
      %v5963 = vpop.xlane.xlu0 %5962
      %v5964 = vadd.f32 %v5926, %v5927
      %5965 = vadd.xlane.f32.xlu0 %v5964
      %v5966 = vpop.xlane.xlu0 %5965
      %v5967 = vadd.f32 %v5928, %v5929
      %5968 = vadd.xlane.f32.xlu0 %v5967
      %v5969 = vpop.xlane.xlu0 %5968
      %v5970 = vadd.f32 %v5930, %v5931
      %5971 = vadd.xlane.f32.xlu0 %v5970
      %v5972 = vpop.xlane.xlu0 %5971
      %v5973 = vadd.f32 %v5932, %v5933
      %5974 = vadd.xlane.f32.xlu0 %v5973
      %v5975 = vpop.xlane.xlu0 %5974
      %v5976 = vadd.f32 %v5934, %v5935
      %5977 = vadd.xlane.f32.xlu0 %v5976
      %v5978 = vpop.xlane.xlu0 %5977
      %v5979 = vadd.f32 %v5936, %v5937
      %5980 = vadd.xlane.f32.xlu0 %v5979
      %v5981 = vpop.xlane.xlu0 %5980
      %v5982 = vadd.f32 %v5938, %v5939
      %5983 = vadd.xlane.f32.xlu0 %v5982
      %v5984 = vpop.xlane.xlu0 %5983
      %v5985 = vadd.f32 %v5940, %v5941
      %5986 = vadd.xlane.f32.xlu0 %v5985
      %v5987 = vpop.xlane.xlu0 %5986
      %v5988 = vadd.f32 %v5942, %v5943
      %5989 = vadd.xlane.f32.xlu0 %v5988
      %v5990 = vpop.xlane.xlu0 %5989
      %v5991 = vadd.f32 %v5944, %v5945
      %5992 = vadd.xlane.f32.xlu0 %v5991
      %v5993 = vpop.xlane.xlu0 %5992
      %v5994 = vmul.f32 %v5948, %v2890
      %v5995 = vmul.f32 %v5951, %v2890
      %v5996 = vmul.f32 %v5954, %v2890
      %v5997 = vmul.f32 %v5957, %v2890
      %v5998 = vmul.f32 %v5960, %v2890
      %v5999 = vmul.f32 %v5963, %v2890
      %v6000 = vmul.f32 %v5966, %v2890
      %v6001 = vmul.f32 %v5969, %v2890
      %v6002 = vmul.f32 %v5972, %v2890
      %v6003 = vmul.f32 %v5975, %v2890
      %v6004 = vmul.f32 %v5978, %v2890
      %v6005 = vmul.f32 %v5981, %v2890
      %v6006 = vmul.f32 %v5984, %v2890
      %v6007 = vmul.f32 %v5987, %v2890
      %v6008 = vmul.f32 %v5990, %v2890
      %v6009 = vmul.f32 %v5993, %v2890
      %v6010 = vsub.f32 %v5914, %v5994
      %v6011 = vsub.f32 %v5915, %v5994
      %v6012 = vsub.f32 %v5916, %v5995
      %v6013 = vsub.f32 %v5917, %v5995
      %v6014 = vsub.f32 %v5918, %v5996
      %v6015 = vsub.f32 %v5919, %v5996
      %v6016 = vsub.f32 %v5920, %v5997
      %v6017 = vsub.f32 %v5921, %v5997
      %v6018 = vsub.f32 %v5922, %v5998
      %v6019 = vsub.f32 %v5923, %v5998
      %v6020 = vsub.f32 %v5924, %v5999
      %v6021 = vsub.f32 %v5925, %v5999
      %v6022 = vsub.f32 %v5926, %v6000
      %v6023 = vsub.f32 %v5927, %v6000
      %v6024 = vsub.f32 %v5928, %v6001
      %v6025 = vsub.f32 %v5929, %v6001
      %v6026 = vsub.f32 %v5930, %v6002
      %v6027 = vsub.f32 %v5931, %v6002
      %v6028 = vsub.f32 %v5932, %v6003
      %v6029 = vsub.f32 %v5933, %v6003
      %v6030 = vsub.f32 %v5934, %v6004
      %v6031 = vsub.f32 %v5935, %v6004
      %v6032 = vsub.f32 %v5936, %v6005
      %v6033 = vsub.f32 %v5937, %v6005
      %v6034 = vsub.f32 %v5938, %v6006
      %v6035 = vsub.f32 %v5939, %v6006
      %v6036 = vsub.f32 %v5940, %v6007
      %v6037 = vsub.f32 %v5941, %v6007
      %v6038 = vsub.f32 %v5942, %v6008
      %v6039 = vsub.f32 %v5943, %v6008
      %v6040 = vsub.f32 %v5944, %v6009
      %v6041 = vsub.f32 %v5945, %v6009
      %v6042 = vmul.f32 %v6010, %v6010
      %v6043 = vmul.f32 %v6011, %v6011
      %v6044 = vmul.f32 %v6012, %v6012
      %v6045 = vmul.f32 %v6013, %v6013
      %v6046 = vmul.f32 %v6014, %v6014
      %v6047 = vmul.f32 %v6015, %v6015
      %v6048 = vmul.f32 %v6016, %v6016
      %v6049 = vmul.f32 %v6017, %v6017
      %v6050 = vmul.f32 %v6018, %v6018
      %v6051 = vmul.f32 %v6019, %v6019
      %v6052 = vmul.f32 %v6020, %v6020
      %v6053 = vmul.f32 %v6021, %v6021
      %v6054 = vmul.f32 %v6022, %v6022
      %v6055 = vmul.f32 %v6023, %v6023
      %v6056 = vmul.f32 %v6024, %v6024
      %v6057 = vmul.f32 %v6025, %v6025
      %v6058 = vmul.f32 %v6026, %v6026
      %v6059 = vmul.f32 %v6027, %v6027
      %v6060 = vmul.f32 %v6028, %v6028
      %v6061 = vmul.f32 %v6029, %v6029
      %v6062 = vmul.f32 %v6030, %v6030
      %v6063 = vmul.f32 %v6031, %v6031
      %v6064 = vmul.f32 %v6032, %v6032
      %v6065 = vmul.f32 %v6033, %v6033
      %v6066 = vmul.f32 %v6034, %v6034
      %v6067 = vmul.f32 %v6035, %v6035
      %v6068 = vmul.f32 %v6036, %v6036
      %v6069 = vmul.f32 %v6037, %v6037
      %v6070 = vmul.f32 %v6038, %v6038
      %v6071 = vmul.f32 %v6039, %v6039
      %v6072 = vmul.f32 %v6040, %v6040
      %v6073 = vmul.f32 %v6041, %v6041
      %v6074 = vadd.f32 %v6042, %v6043
      %6075 = vadd.xlane.f32.xlu0 %v6074
      %v6076 = vpop.xlane.xlu0 %6075
      %v6077 = vadd.f32 %v6044, %v6045
      %6078 = vadd.xlane.f32.xlu0 %v6077
      %v6079 = vpop.xlane.xlu0 %6078
      %v6080 = vadd.f32 %v6046, %v6047
      %6081 = vadd.xlane.f32.xlu0 %v6080
      %v6082 = vpop.xlane.xlu0 %6081
      %v6083 = vadd.f32 %v6048, %v6049
      %6084 = vadd.xlane.f32.xlu0 %v6083
      %v6085 = vpop.xlane.xlu0 %6084
      %v6086 = vadd.f32 %v6050, %v6051
      %6087 = vadd.xlane.f32.xlu0 %v6086
      %v6088 = vpop.xlane.xlu0 %6087
      %v6089 = vadd.f32 %v6052, %v6053
      %6090 = vadd.xlane.f32.xlu0 %v6089
      %v6091 = vpop.xlane.xlu0 %6090
      %v6092 = vadd.f32 %v6054, %v6055
      %6093 = vadd.xlane.f32.xlu0 %v6092
      %v6094 = vpop.xlane.xlu0 %6093
      %v6095 = vadd.f32 %v6056, %v6057
      %6096 = vadd.xlane.f32.xlu0 %v6095
      %v6097 = vpop.xlane.xlu0 %6096
      %v6098 = vadd.f32 %v6058, %v6059
      %6099 = vadd.xlane.f32.xlu0 %v6098
      %v6100 = vpop.xlane.xlu0 %6099
      %v6101 = vadd.f32 %v6060, %v6061
      %6102 = vadd.xlane.f32.xlu0 %v6101
      %v6103 = vpop.xlane.xlu0 %6102
      %v6104 = vadd.f32 %v6062, %v6063
      %6105 = vadd.xlane.f32.xlu0 %v6104
      %v6106 = vpop.xlane.xlu0 %6105
      %v6107 = vadd.f32 %v6064, %v6065
      %6108 = vadd.xlane.f32.xlu0 %v6107
      %v6109 = vpop.xlane.xlu0 %6108
      %v6110 = vadd.f32 %v6066, %v6067
      %6111 = vadd.xlane.f32.xlu0 %v6110
      %v6112 = vpop.xlane.xlu0 %6111
      %v6113 = vadd.f32 %v6068, %v6069
      %6114 = vadd.xlane.f32.xlu0 %v6113
      %v6115 = vpop.xlane.xlu0 %6114
      %v6116 = vadd.f32 %v6070, %v6071
      %6117 = vadd.xlane.f32.xlu0 %v6116
      %v6118 = vpop.xlane.xlu0 %6117
      %v6119 = vadd.f32 %v6072, %v6073
      %6120 = vadd.xlane.f32.xlu0 %v6119
      %v6121 = vpop.xlane.xlu0 %6120
      %v6122 = vmul.f32 %v6076, %v2890
      %v6123 = vmul.f32 %v6079, %v2890
      %v6124 = vmul.f32 %v6082, %v2890
      %v6125 = vmul.f32 %v6085, %v2890
      %v6126 = vmul.f32 %v6088, %v2890
      %v6127 = vmul.f32 %v6091, %v2890
      %v6128 = vmul.f32 %v6094, %v2890
      %v6129 = vmul.f32 %v6097, %v2890
      %v6130 = vmul.f32 %v6100, %v2890
      %v6131 = vmul.f32 %v6103, %v2890
      %v6132 = vmul.f32 %v6106, %v2890
      %v6133 = vmul.f32 %v6109, %v2890
      %v6134 = vmul.f32 %v6112, %v2890
      %v6135 = vmul.f32 %v6115, %v2890
      %v6136 = vmul.f32 %v6118, %v2890
      %v6137 = vmul.f32 %v6121, %v2890
      %v6138 = vadd.f32 %v6122, 1e-05
      %v6139 = vadd.f32 %v6123, 1e-05
      %v6140 = vadd.f32 %v6124, 1e-05
      %v6141 = vadd.f32 %v6125, 1e-05
      %v6142 = vadd.f32 %v6126, 1e-05
      %v6143 = vadd.f32 %v6127, 1e-05
      %v6144 = vadd.f32 %v6128, 1e-05
      %v6145 = vadd.f32 %v6129, 1e-05
      %v6146 = vadd.f32 %v6130, 1e-05
      %v6147 = vadd.f32 %v6131, 1e-05
      %v6148 = vadd.f32 %v6132, 1e-05
      %v6149 = vadd.f32 %v6133, 1e-05
      %v6150 = vadd.f32 %v6134, 1e-05
      %v6151 = vadd.f32 %v6135, 1e-05
      %v6152 = vadd.f32 %v6136, 1e-05
      %v6153 = vadd.f32 %v6137, 1e-05
      %v6154 = vrsqrt.pop %v6138
      %v6155 = vrsqrt.pop %v6139
      %v6156 = vrsqrt.pop %v6140
      %v6157 = vrsqrt.pop %v6141
      %v6158 = vrsqrt.pop %v6142
      %v6159 = vrsqrt.pop %v6143
      %v6160 = vrsqrt.pop %v6144
      %v6161 = vrsqrt.pop %v6145
      %v6162 = vrsqrt.pop %v6146
      %v6163 = vrsqrt.pop %v6147
      %v6164 = vrsqrt.pop %v6148
      %v6165 = vrsqrt.pop %v6149
      %v6166 = vrsqrt.pop %v6150
      %v6167 = vrsqrt.pop %v6151
      %v6168 = vrsqrt.pop %v6152
      %v6169 = vrsqrt.pop %v6153
      %v6170 = vmul.f32 %v6010, %v6154
      %v6171 = vmul.f32 %v6011, %v6154
      %v6172 = vmul.f32 %v6012, %v6155
      %v6173 = vmul.f32 %v6013, %v6155
      %v6174 = vmul.f32 %v6014, %v6156
      %v6175 = vmul.f32 %v6015, %v6156
      %v6176 = vmul.f32 %v6016, %v6157
      %v6177 = vmul.f32 %v6017, %v6157
      %v6178 = vmul.f32 %v6018, %v6158
      %v6179 = vmul.f32 %v6019, %v6158
      %v6180 = vmul.f32 %v6020, %v6159
      %v6181 = vmul.f32 %v6021, %v6159
      %v6182 = vmul.f32 %v6022, %v6160
      %v6183 = vmul.f32 %v6023, %v6160
      %v6184 = vmul.f32 %v6024, %v6161
      %v6185 = vmul.f32 %v6025, %v6161
      %v6186 = vmul.f32 %v6026, %v6162
      %v6187 = vmul.f32 %v6027, %v6162
      %v6188 = vmul.f32 %v6028, %v6163
      %v6189 = vmul.f32 %v6029, %v6163
      %v6190 = vmul.f32 %v6030, %v6164
      %v6191 = vmul.f32 %v6031, %v6164
      %v6192 = vmul.f32 %v6032, %v6165
      %v6193 = vmul.f32 %v6033, %v6165
      %v6194 = vmul.f32 %v6034, %v6166
      %v6195 = vmul.f32 %v6035, %v6166
      %v6196 = vmul.f32 %v6036, %v6167
      %v6197 = vmul.f32 %v6037, %v6167
      %v6198 = vmul.f32 %v6038, %v6168
      %v6199 = vmul.f32 %v6039, %v6168
      %v6200 = vmul.f32 %v6040, %v6169
      %v6201 = vmul.f32 %v6041, %v6169
      %v6202 = vld [vmem:[%s15] sm:$0x3]
      %v6204 = vlaneseq
      %v6205 = vshrl.u32 %v6204, 7
      %v6206 = vsub.s32 0, %v6205
      %v6207 = vrot.slane %v6202, %v6206
      %v6208 = vlaneseq
      %v6209 = vshrl.u32 %v6208, 7
      %v6210 = vsub.s32 1, %v6209
      %v6211 = vrot.slane %v6202, %v6210
      %v6214 = vmul.f32 %v6170, %v6207
      %v6215 = vmul.f32 %v6171, %v6211
      %v6216 = vmul.f32 %v6172, %v6207
      %v6217 = vmul.f32 %v6173, %v6211
      %v6218 = vmul.f32 %v6174, %v6207
      %v6219 = vmul.f32 %v6175, %v6211
      %v6220 = vmul.f32 %v6176, %v6207
      %v6221 = vmul.f32 %v6177, %v6211
      %v6222 = vmul.f32 %v6178, %v6207
      %v6223 = vmul.f32 %v6179, %v6211
      %v6224 = vmul.f32 %v6180, %v6207
      %v6225 = vmul.f32 %v6181, %v6211
      %v6226 = vmul.f32 %v6182, %v6207
      %v6227 = vmul.f32 %v6183, %v6211
      %v6228 = vmul.f32 %v6184, %v6207
      %v6229 = vmul.f32 %v6185, %v6211
      %v6230 = vmul.f32 %v6186, %v6207
      %v6231 = vmul.f32 %v6187, %v6211
      %v6232 = vmul.f32 %v6188, %v6207
      %v6233 = vmul.f32 %v6189, %v6211
      %v6234 = vmul.f32 %v6190, %v6207
      %v6235 = vmul.f32 %v6191, %v6211
      %v6236 = vmul.f32 %v6192, %v6207
      %v6237 = vmul.f32 %v6193, %v6211
      %v6238 = vmul.f32 %v6194, %v6207
      %v6239 = vmul.f32 %v6195, %v6211
      %v6240 = vmul.f32 %v6196, %v6207
      %v6241 = vmul.f32 %v6197, %v6211
      %v6242 = vmul.f32 %v6198, %v6207
      %v6243 = vmul.f32 %v6199, %v6211
      %v6244 = vmul.f32 %v6200, %v6207
      %v6245 = vmul.f32 %v6201, %v6211
      %v6246 = vld [vmem:[%s16] sm:$0x3]
      %v6248 = vlaneseq
      %v6249 = vshrl.u32 %v6248, 7
      %v6250 = vsub.s32 0, %v6249
      %v6251 = vrot.slane %v6246, %v6250
      %v6252 = vlaneseq
      %v6253 = vshrl.u32 %v6252, 7
      %v6254 = vsub.s32 1, %v6253
      %v6255 = vrot.slane %v6246, %v6254
      %v6258 = vadd.f32 %v6214, %v6251
      %v6259 = vadd.f32 %v6215, %v6255
      %v6260 = vadd.f32 %v6216, %v6251
      %v6261 = vadd.f32 %v6217, %v6255
      %v6262 = vadd.f32 %v6218, %v6251
      %v6263 = vadd.f32 %v6219, %v6255
      %v6264 = vadd.f32 %v6220, %v6251
      %v6265 = vadd.f32 %v6221, %v6255
      %v6266 = vadd.f32 %v6222, %v6251
      %v6267 = vadd.f32 %v6223, %v6255
      %v6268 = vadd.f32 %v6224, %v6251
      %v6269 = vadd.f32 %v6225, %v6255
      %v6270 = vadd.f32 %v6226, %v6251
      %v6271 = vadd.f32 %v6227, %v6255
      %v6272 = vadd.f32 %v6228, %v6251
      %v6273 = vadd.f32 %v6229, %v6255
      %v6274 = vadd.f32 %v6230, %v6251
      %v6275 = vadd.f32 %v6231, %v6255
      %v6276 = vadd.f32 %v6232, %v6251
      %v6277 = vadd.f32 %v6233, %v6255
      %v6278 = vadd.f32 %v6234, %v6251
      %v6279 = vadd.f32 %v6235, %v6255
      %v6280 = vadd.f32 %v6236, %v6251
      %v6281 = vadd.f32 %v6237, %v6255
      %v6282 = vadd.f32 %v6238, %v6251
      %v6283 = vadd.f32 %v6239, %v6255
      %v6284 = vadd.f32 %v6240, %v6251
      %v6285 = vadd.f32 %v6241, %v6255
      %v6286 = vadd.f32 %v6242, %v6251
      %v6287 = vadd.f32 %v6243, %v6255
      %v6288 = vadd.f32 %v6244, %v6251
      %v6289 = vadd.f32 %v6245, %v6255
      %v6290 = vpack.c.bf16 %v6260, %v6258
      %v6291 = vpack.c.bf16 %v6261, %v6259
      %v6292 = vpack.c.bf16 %v6264, %v6262
      %v6293 = vpack.c.bf16 %v6265, %v6263
      %v6294 = vpack.c.bf16 %v6268, %v6266
      %v6295 = vpack.c.bf16 %v6269, %v6267
      %v6296 = vpack.c.bf16 %v6272, %v6270
      %v6297 = vpack.c.bf16 %v6273, %v6271
      %v6298 = vpack.c.bf16 %v6276, %v6274
      %v6299 = vpack.c.bf16 %v6277, %v6275
      %v6300 = vpack.c.bf16 %v6280, %v6278
      %v6301 = vpack.c.bf16 %v6281, %v6279
      %v6302 = vpack.c.bf16 %v6284, %v6282
      %v6303 = vpack.c.bf16 %v6285, %v6283
      %v6304 = vpack.c.bf16 %v6288, %v6286
      %v6305 = vpack.c.bf16 %v6289, %v6287
      %v6306 = vld [vmem:[%s17] sm:$0xff]
      %v6307 = vld [vmem:[%s17 + $0x8] sm:$0xff]
      %v6308 = vld [vmem:[%s17 + $0x10] sm:$0xff]
      %v6309 = vld [vmem:[%s17 + $0x18] sm:$0xff]
      %v6310 = vld [vmem:[%s17 + $0x20] sm:$0xff]
      %v6311 = vld [vmem:[%s17 + $0x28] sm:$0xff]
      %v6312 = vld [vmem:[%s17 + $0x30] sm:$0xff]
      %v6313 = vld [vmem:[%s17 + $0x38] sm:$0xff]
      %v6314 = vld [vmem:[%s17 + $0x40] sm:$0xff]
      %v6315 = vld [vmem:[%s17 + $0x48] sm:$0xff]
      %v6316 = vld [vmem:[%s17 + $0x50] sm:$0xff]
      %v6317 = vld [vmem:[%s17 + $0x58] sm:$0xff]
      %v6318 = vld [vmem:[%s17 + $0x60] sm:$0xff]
      %v6319 = vld [vmem:[%s17 + $0x68] sm:$0xff]
      %v6320 = vld [vmem:[%s17 + $0x70] sm:$0xff]
      %v6321 = vld [vmem:[%s17 + $0x78] sm:$0xff]
      %v6322 = vld [vmem:[%s17 + $0x80] sm:$0xff]
      %v6323 = vld [vmem:[%s17 + $0x88] sm:$0xff]
      %v6324 = vld [vmem:[%s17 + $0x90] sm:$0xff]
      %v6325 = vld [vmem:[%s17 + $0x98] sm:$0xff]
      %v6326 = vld [vmem:[%s17 + $0xa0] sm:$0xff]
      %v6327 = vld [vmem:[%s17 + $0xa8] sm:$0xff]
      %v6328 = vld [vmem:[%s17 + $0xb0] sm:$0xff]
      %v6329 = vld [vmem:[%s17 + $0xb8] sm:$0xff]
      %v6330 = vld [vmem:[%s17 + $0xc0] sm:$0xff]
      %v6331 = vld [vmem:[%s17 + $0xc8] sm:$0xff]
      %v6332 = vld [vmem:[%s17 + $0xd0] sm:$0xff]
      %v6333 = vld [vmem:[%s17 + $0xd8] sm:$0xff]
      %v6334 = vld [vmem:[%s17 + $0xe0] sm:$0xff]
      %v6335 = vld [vmem:[%s17 + $0xe8] sm:$0xff]
      %v6336 = vld [vmem:[%s17 + $0xf0] sm:$0xff]
      %v6337 = vld [vmem:[%s17 + $0xf8] sm:$0xff]
      %s6338 = scalar_lea.vmem %s17, 256
      %v6339 = vld [vmem:[%s6338] sm:$0xff]
      %v6340 = vld [vmem:[%s6338 + $0x8] sm:$0xff]
      %v6341 = vld [vmem:[%s6338 + $0x10] sm:$0xff]
      %v6342 = vld [vmem:[%s6338 + $0x18] sm:$0xff]
      %v6343 = vld [vmem:[%s6338 + $0x20] sm:$0xff]
      %v6344 = vld [vmem:[%s6338 + $0x28] sm:$0xff]
      %v6345 = vld [vmem:[%s6338 + $0x30] sm:$0xff]
      %v6346 = vld [vmem:[%s6338 + $0x38] sm:$0xff]
      %v6347 = vld [vmem:[%s6338 + $0x40] sm:$0xff]
      %v6348 = vld [vmem:[%s6338 + $0x48] sm:$0xff]
      %v6349 = vld [vmem:[%s6338 + $0x50] sm:$0xff]
      %v6350 = vld [vmem:[%s6338 + $0x58] sm:$0xff]
      %v6351 = vld [vmem:[%s6338 + $0x60] sm:$0xff]
      %v6352 = vld [vmem:[%s6338 + $0x68] sm:$0xff]
      %v6353 = vld [vmem:[%s6338 + $0x70] sm:$0xff]
      %v6354 = vld [vmem:[%s6338 + $0x78] sm:$0xff]
      %v6355 = vld [vmem:[%s6338 + $0x80] sm:$0xff]
      %v6356 = vld [vmem:[%s6338 + $0x88] sm:$0xff]
      %v6357 = vld [vmem:[%s6338 + $0x90] sm:$0xff]
      %v6358 = vld [vmem:[%s6338 + $0x98] sm:$0xff]
      %v6359 = vld [vmem:[%s6338 + $0xa0] sm:$0xff]
      %v6360 = vld [vmem:[%s6338 + $0xa8] sm:$0xff]
      %v6361 = vld [vmem:[%s6338 + $0xb0] sm:$0xff]
      %v6362 = vld [vmem:[%s6338 + $0xb8] sm:$0xff]
      %v6363 = vld [vmem:[%s6338 + $0xc0] sm:$0xff]
      %v6364 = vld [vmem:[%s6338 + $0xc8] sm:$0xff]
      %v6365 = vld [vmem:[%s6338 + $0xd0] sm:$0xff]
      %v6366 = vld [vmem:[%s6338 + $0xd8] sm:$0xff]
      %v6367 = vld [vmem:[%s6338 + $0xe0] sm:$0xff]
      %v6368 = vld [vmem:[%s6338 + $0xe8] sm:$0xff]
      %v6369 = vld [vmem:[%s6338 + $0xf0] sm:$0xff]
      %v6370 = vld [vmem:[%s6338 + $0xf8] sm:$0xff]
      %v6403 = vunpack.c.l.b16 %v6339
      %v6404 = vunpack.c.h.b16 %v6339
      %v6405 = vunpack.c.l.b16 %v6340
      %v6406 = vunpack.c.h.b16 %v6340
      %v6407 = vunpack.c.l.b16 %v6341
      %v6408 = vunpack.c.h.b16 %v6341
      %v6409 = vunpack.c.l.b16 %v6342
      %v6410 = vunpack.c.h.b16 %v6342
      %v6411 = vunpack.c.l.b16 %v6343
      %v6412 = vunpack.c.h.b16 %v6343
      %v6413 = vunpack.c.l.b16 %v6344
      %v6414 = vunpack.c.h.b16 %v6344
      %v6415 = vunpack.c.l.b16 %v6345
      %v6416 = vunpack.c.h.b16 %v6345
      %v6417 = vunpack.c.l.b16 %v6346
      %v6418 = vunpack.c.h.b16 %v6346
      %v6419 = vunpack.c.l.b16 %v6347
      %v6420 = vunpack.c.h.b16 %v6347
      %v6421 = vunpack.c.l.b16 %v6348
      %v6422 = vunpack.c.h.b16 %v6348
      %v6423 = vunpack.c.l.b16 %v6349
      %v6424 = vunpack.c.h.b16 %v6349
      %v6425 = vunpack.c.l.b16 %v6350
      %v6426 = vunpack.c.h.b16 %v6350
      %v6427 = vunpack.c.l.b16 %v6351
      %v6428 = vunpack.c.h.b16 %v6351
      %v6429 = vunpack.c.l.b16 %v6352
      %v6430 = vunpack.c.h.b16 %v6352
      %v6431 = vunpack.c.l.b16 %v6353
      %v6432 = vunpack.c.h.b16 %v6353
      %v6433 = vunpack.c.l.b16 %v6354
      %v6434 = vunpack.c.h.b16 %v6354
      %v6435 = vunpack.c.l.b16 %v6355
      %v6436 = vunpack.c.h.b16 %v6355
      %v6437 = vunpack.c.l.b16 %v6356
      %v6438 = vunpack.c.h.b16 %v6356
      %v6439 = vunpack.c.l.b16 %v6357
      %v6440 = vunpack.c.h.b16 %v6357
      %v6441 = vunpack.c.l.b16 %v6358
      %v6442 = vunpack.c.h.b16 %v6358
      %v6443 = vunpack.c.l.b16 %v6359
      %v6444 = vunpack.c.h.b16 %v6359
      %v6445 = vunpack.c.l.b16 %v6360
      %v6446 = vunpack.c.h.b16 %v6360
      %v6447 = vunpack.c.l.b16 %v6361
      %v6448 = vunpack.c.h.b16 %v6361
      %v6449 = vunpack.c.l.b16 %v6362
      %v6450 = vunpack.c.h.b16 %v6362
      %v6451 = vunpack.c.l.b16 %v6363
      %v6452 = vunpack.c.h.b16 %v6363
      %v6453 = vunpack.c.l.b16 %v6364
      %v6454 = vunpack.c.h.b16 %v6364
      %v6455 = vunpack.c.l.b16 %v6365
      %v6456 = vunpack.c.h.b16 %v6365
      %v6457 = vunpack.c.l.b16 %v6366
      %v6458 = vunpack.c.h.b16 %v6366
      %v6459 = vunpack.c.l.b16 %v6367
      %v6460 = vunpack.c.h.b16 %v6367
      %v6461 = vunpack.c.l.b16 %v6368
      %v6462 = vunpack.c.h.b16 %v6368
      %v6463 = vunpack.c.l.b16 %v6369
      %v6464 = vunpack.c.h.b16 %v6369
      %v6465 = vunpack.c.l.b16 %v6370
      %v6466 = vunpack.c.h.b16 %v6370
      %v6467 = vpack.c.b16 %v6405, %v6403
      %v6468 = vpack.c.b16 %v6406, %v6404
      %v6469 = vpack.c.b16 %v6409, %v6407
      %v6470 = vpack.c.b16 %v6410, %v6408
      %v6471 = vpack.c.b16 %v6413, %v6411
      %v6472 = vpack.c.b16 %v6414, %v6412
      %v6473 = vpack.c.b16 %v6417, %v6415
      %v6474 = vpack.c.b16 %v6418, %v6416
      %v6475 = vpack.c.b16 %v6421, %v6419
      %v6476 = vpack.c.b16 %v6422, %v6420
      %v6477 = vpack.c.b16 %v6425, %v6423
      %v6478 = vpack.c.b16 %v6426, %v6424
      %v6479 = vpack.c.b16 %v6429, %v6427
      %v6480 = vpack.c.b16 %v6430, %v6428
      %v6481 = vpack.c.b16 %v6433, %v6431
      %v6482 = vpack.c.b16 %v6434, %v6432
      %v6483 = vpack.c.b16 %v6437, %v6435
      %v6484 = vpack.c.b16 %v6438, %v6436
      %v6485 = vpack.c.b16 %v6441, %v6439
      %v6486 = vpack.c.b16 %v6442, %v6440
      %v6487 = vpack.c.b16 %v6445, %v6443
      %v6488 = vpack.c.b16 %v6446, %v6444
      %v6489 = vpack.c.b16 %v6449, %v6447
      %v6490 = vpack.c.b16 %v6450, %v6448
      %v6491 = vpack.c.b16 %v6453, %v6451
      %v6492 = vpack.c.b16 %v6454, %v6452
      %v6493 = vpack.c.b16 %v6457, %v6455
      %v6494 = vpack.c.b16 %v6458, %v6456
      %v6495 = vpack.c.b16 %v6461, %v6459
      %v6496 = vpack.c.b16 %v6462, %v6460
      %v6497 = vpack.c.b16 %v6465, %v6463
      %v6498 = vpack.c.b16 %v6466, %v6464
      %6531 = vmatprep.subr.bf16.mxu0 %v6482
      %6532 = vmatpush1.bf16.msra.mxu0 %v6481
      %6533 = vmatprep.subr.bf16.mxu0 %v6480
      %6534 = vmatpush1.bf16.msra.mxu0 %v6479
      %6535 = vmatprep.subr.bf16.mxu0 %v6478
      %6536 = vmatpush1.bf16.msra.mxu0 %v6477
      %6537 = vmatprep.subr.bf16.mxu0 %v6476
      %6538 = vmatpush1.bf16.msra.mxu0 %v6475
      %6539 = vmatprep.subr.bf16.mxu0 %v6474
      %6540 = vmatpush1.bf16.msra.mxu0 %v6473
      %6541 = vmatprep.subr.bf16.mxu0 %v6472
      %6542 = vmatpush1.bf16.msra.mxu0 %v6471
      %6543 = vmatprep.subr.bf16.mxu0 %v6470
      %6544 = vmatpush1.bf16.msra.mxu0 %v6469
      %6545 = vmatprep.subr.bf16.mxu0 %v6468
      %6546 = vmatpush1.bf16.msra.mxu0 %v6467
      %6547 = vmatprep.subr.bf16.mxu0 %v6498
      %6548 = vmatpush2.bf16.msra.mxu0 %v6497
      %6549 = vmatprep.subr.bf16.mxu0 %v6496
      %6550 = vmatpush2.bf16.msra.mxu0 %v6495
      %6551 = vmatprep.subr.bf16.mxu0 %v6494
      %6552 = vmatpush2.bf16.msra.mxu0 %v6493
      %6553 = vmatprep.subr.bf16.mxu0 %v6492
      %6554 = vmatpush2.bf16.msra.mxu0 %v6491
      %6555 = vmatprep.subr.bf16.mxu0 %v6490
      %6556 = vmatpush2.bf16.msra.mxu0 %v6489
      %6557 = vmatprep.subr.bf16.mxu0 %v6488
      %6558 = vmatpush2.bf16.msra.mxu0 %v6487
      %6559 = vmatprep.subr.bf16.mxu0 %v6486
      %6560 = vmatpush2.bf16.msra.mxu0 %v6485
      %6561 = vmatprep.subr.bf16.mxu0 %v6484
      %6562 = vmatpush2.bf16.msra.mxu0 %v6483
      %6563 = vmatprep.mubr.bf16.mxu0 %v6293
      %6564 = vmatmul.mubr.bf16.gmra.mxu0 %v6292
      %v6565 = vpop.f32.mrf.mxu0
      %v6566 = vadd.f32 0.0, %v6565
      %v6567 = vpop.f32.mrf.mxu0
      %v6568 = vadd.f32 0.0, %v6567
      %v6569 = vpop.f32.mrf.mxu0
      %v6570 = vadd.f32 0.0, %v6569
      %v6571 = vpop.f32.mrf.mxu0
      %v6572 = vadd.f32 0.0, %v6571
      %6573 = vdwg.mxu0
      %v6606 = vunpack.c.l.b16 %v6306
      %v6607 = vunpack.c.h.b16 %v6306
      %v6608 = vunpack.c.l.b16 %v6307
      %v6609 = vunpack.c.h.b16 %v6307
      %v6610 = vunpack.c.l.b16 %v6308
      %v6611 = vunpack.c.h.b16 %v6308
      %v6612 = vunpack.c.l.b16 %v6309
      %v6613 = vunpack.c.h.b16 %v6309
      %v6614 = vunpack.c.l.b16 %v6310
      %v6615 = vunpack.c.h.b16 %v6310
      %v6616 = vunpack.c.l.b16 %v6311
      %v6617 = vunpack.c.h.b16 %v6311
      %v6618 = vunpack.c.l.b16 %v6312
      %v6619 = vunpack.c.h.b16 %v6312
      %v6620 = vunpack.c.l.b16 %v6313
      %v6621 = vunpack.c.h.b16 %v6313
      %v6622 = vunpack.c.l.b16 %v6314
      %v6623 = vunpack.c.h.b16 %v6314
      %v6624 = vunpack.c.l.b16 %v6315
      %v6625 = vunpack.c.h.b16 %v6315
      %v6626 = vunpack.c.l.b16 %v6316
      %v6627 = vunpack.c.h.b16 %v6316
      %v6628 = vunpack.c.l.b16 %v6317
      %v6629 = vunpack.c.h.b16 %v6317
      %v6630 = vunpack.c.l.b16 %v6318
      %v6631 = vunpack.c.h.b16 %v6318
      %v6632 = vunpack.c.l.b16 %v6319
      %v6633 = vunpack.c.h.b16 %v6319
      %v6634 = vunpack.c.l.b16 %v6320
      %v6635 = vunpack.c.h.b16 %v6320
      %v6636 = vunpack.c.l.b16 %v6321
      %v6637 = vunpack.c.h.b16 %v6321
      %v6638 = vunpack.c.l.b16 %v6322
      %v6639 = vunpack.c.h.b16 %v6322
      %v6640 = vunpack.c.l.b16 %v6323
      %v6641 = vunpack.c.h.b16 %v6323
      %v6642 = vunpack.c.l.b16 %v6324
      %v6643 = vunpack.c.h.b16 %v6324
      %v6644 = vunpack.c.l.b16 %v6325
      %v6645 = vunpack.c.h.b16 %v6325
      %v6646 = vunpack.c.l.b16 %v6326
      %v6647 = vunpack.c.h.b16 %v6326
      %v6648 = vunpack.c.l.b16 %v6327
      %v6649 = vunpack.c.h.b16 %v6327
      %v6650 = vunpack.c.l.b16 %v6328
      %v6651 = vunpack.c.h.b16 %v6328
      %v6652 = vunpack.c.l.b16 %v6329
      %v6653 = vunpack.c.h.b16 %v6329
      %v6654 = vunpack.c.l.b16 %v6330
      %v6655 = vunpack.c.h.b16 %v6330
      %v6656 = vunpack.c.l.b16 %v6331
      %v6657 = vunpack.c.h.b16 %v6331
      %v6658 = vunpack.c.l.b16 %v6332
      %v6659 = vunpack.c.h.b16 %v6332
      %v6660 = vunpack.c.l.b16 %v6333
      %v6661 = vunpack.c.h.b16 %v6333
      %v6662 = vunpack.c.l.b16 %v6334
      %v6663 = vunpack.c.h.b16 %v6334
      %v6664 = vunpack.c.l.b16 %v6335
      %v6665 = vunpack.c.h.b16 %v6335
      %v6666 = vunpack.c.l.b16 %v6336
      %v6667 = vunpack.c.h.b16 %v6336
      %v6668 = vunpack.c.l.b16 %v6337
      %v6669 = vunpack.c.h.b16 %v6337
      %v6670 = vpack.c.b16 %v6608, %v6606
      %v6671 = vpack.c.b16 %v6609, %v6607
      %v6672 = vpack.c.b16 %v6612, %v6610
      %v6673 = vpack.c.b16 %v6613, %v6611
      %v6674 = vpack.c.b16 %v6616, %v6614
      %v6675 = vpack.c.b16 %v6617, %v6615
      %v6676 = vpack.c.b16 %v6620, %v6618
      %v6677 = vpack.c.b16 %v6621, %v6619
      %v6678 = vpack.c.b16 %v6624, %v6622
      %v6679 = vpack.c.b16 %v6625, %v6623
      %v6680 = vpack.c.b16 %v6628, %v6626
      %v6681 = vpack.c.b16 %v6629, %v6627
      %v6682 = vpack.c.b16 %v6632, %v6630
      %v6683 = vpack.c.b16 %v6633, %v6631
      %v6684 = vpack.c.b16 %v6636, %v6634
      %v6685 = vpack.c.b16 %v6637, %v6635
      %v6686 = vpack.c.b16 %v6640, %v6638
      %v6687 = vpack.c.b16 %v6641, %v6639
      %v6688 = vpack.c.b16 %v6644, %v6642
      %v6689 = vpack.c.b16 %v6645, %v6643
      %v6690 = vpack.c.b16 %v6648, %v6646
      %v6691 = vpack.c.b16 %v6649, %v6647
      %v6692 = vpack.c.b16 %v6652, %v6650
      %v6693 = vpack.c.b16 %v6653, %v6651
      %v6694 = vpack.c.b16 %v6656, %v6654
      %v6695 = vpack.c.b16 %v6657, %v6655
      %v6696 = vpack.c.b16 %v6660, %v6658
      %v6697 = vpack.c.b16 %v6661, %v6659
      %v6698 = vpack.c.b16 %v6664, %v6662
      %v6699 = vpack.c.b16 %v6665, %v6663
      %v6700 = vpack.c.b16 %v6668, %v6666
      %v6701 = vpack.c.b16 %v6669, %v6667
      %6734 = vmatprep.subr.bf16.mxu0 %v6685
      %6735 = vmatpush1.bf16.msra.mxu0 %v6684
      %6736 = vmatprep.subr.bf16.mxu0 %v6683
      %6737 = vmatpush1.bf16.msra.mxu0 %v6682
      %6738 = vmatprep.subr.bf16.mxu0 %v6681
      %6739 = vmatpush1.bf16.msra.mxu0 %v6680
      %6740 = vmatprep.subr.bf16.mxu0 %v6679
      %6741 = vmatpush1.bf16.msra.mxu0 %v6678
      %6742 = vmatprep.subr.bf16.mxu0 %v6677
      %6743 = vmatpush1.bf16.msra.mxu0 %v6676
      %6744 = vmatprep.subr.bf16.mxu0 %v6675
      %6745 = vmatpush1.bf16.msra.mxu0 %v6674
      %6746 = vmatprep.subr.bf16.mxu0 %v6673
      %6747 = vmatpush1.bf16.msra.mxu0 %v6672
      %6748 = vmatprep.subr.bf16.mxu0 %v6671
      %6749 = vmatpush1.bf16.msra.mxu0 %v6670
      %6750 = vmatprep.subr.bf16.mxu0 %v6701
      %6751 = vmatpush2.bf16.msra.mxu0 %v6700
      %6752 = vmatprep.subr.bf16.mxu0 %v6699
      %6753 = vmatpush2.bf16.msra.mxu0 %v6698
      %6754 = vmatprep.subr.bf16.mxu0 %v6697
      %6755 = vmatpush2.bf16.msra.mxu0 %v6696
      %6756 = vmatprep.subr.bf16.mxu0 %v6695
      %6757 = vmatpush2.bf16.msra.mxu0 %v6694
      %6758 = vmatprep.subr.bf16.mxu0 %v6693
      %6759 = vmatpush2.bf16.msra.mxu0 %v6692
      %6760 = vmatprep.subr.bf16.mxu0 %v6691
      %6761 = vmatpush2.bf16.msra.mxu0 %v6690
      %6762 = vmatprep.subr.bf16.mxu0 %v6689
      %6763 = vmatpush2.bf16.msra.mxu0 %v6688
      %6764 = vmatprep.subr.bf16.mxu0 %v6687
      %6765 = vmatpush2.bf16.msra.mxu0 %v6686
      %6766 = vmatprep.mubr.bf16.mxu0 %v6291
      %6767 = vmatmul.mubr.bf16.gmra.mxu0 %v6290
      %v6768 = vpop.f32.mrf.mxu0
      %v6769 = vadd.f32 %v6566, %v6768
      %v6770 = vpop.f32.mrf.mxu0
      %v6771 = vadd.f32 %v6568, %v6770
      %v6772 = vpop.f32.mrf.mxu0
      %v6773 = vadd.f32 %v6570, %v6772
      %v6774 = vpop.f32.mrf.mxu0
      %v6775 = vadd.f32 %v6572, %v6774
      %6776 = vdwg.mxu0
      %s6777 = scalar_lea.vmem %s17, 512
      %v6778 = vld [vmem:[%s6777] sm:$0xff]
      %v6779 = vld [vmem:[%s6777 + $0x8] sm:$0xff]
      %v6780 = vld [vmem:[%s6777 + $0x10] sm:$0xff]
      %v6781 = vld [vmem:[%s6777 + $0x18] sm:$0xff]
      %v6782 = vld [vmem:[%s6777 + $0x20] sm:$0xff]
      %v6783 = vld [vmem:[%s6777 + $0x28] sm:$0xff]
      %v6784 = vld [vmem:[%s6777 + $0x30] sm:$0xff]
      %v6785 = vld [vmem:[%s6777 + $0x38] sm:$0xff]
      %v6786 = vld [vmem:[%s6777 + $0x40] sm:$0xff]
      %v6787 = vld [vmem:[%s6777 + $0x48] sm:$0xff]
      %v6788 = vld [vmem:[%s6777 + $0x50] sm:$0xff]
      %v6789 = vld [vmem:[%s6777 + $0x58] sm:$0xff]
      %v6790 = vld [vmem:[%s6777 + $0x60] sm:$0xff]
      %v6791 = vld [vmem:[%s6777 + $0x68] sm:$0xff]
      %v6792 = vld [vmem:[%s6777 + $0x70] sm:$0xff]
      %v6793 = vld [vmem:[%s6777 + $0x78] sm:$0xff]
      %v6794 = vld [vmem:[%s6777 + $0x80] sm:$0xff]
      %v6795 = vld [vmem:[%s6777 + $0x88] sm:$0xff]
      %v6796 = vld [vmem:[%s6777 + $0x90] sm:$0xff]
      %v6797 = vld [vmem:[%s6777 + $0x98] sm:$0xff]
      %v6798 = vld [vmem:[%s6777 + $0xa0] sm:$0xff]
      %v6799 = vld [vmem:[%s6777 + $0xa8] sm:$0xff]
      %v6800 = vld [vmem:[%s6777 + $0xb0] sm:$0xff]
      %v6801 = vld [vmem:[%s6777 + $0xb8] sm:$0xff]
      %v6802 = vld [vmem:[%s6777 + $0xc0] sm:$0xff]
      %v6803 = vld [vmem:[%s6777 + $0xc8] sm:$0xff]
      %v6804 = vld [vmem:[%s6777 + $0xd0] sm:$0xff]
      %v6805 = vld [vmem:[%s6777 + $0xd8] sm:$0xff]
      %v6806 = vld [vmem:[%s6777 + $0xe0] sm:$0xff]
      %v6807 = vld [vmem:[%s6777 + $0xe8] sm:$0xff]
      %v6808 = vld [vmem:[%s6777 + $0xf0] sm:$0xff]
      %v6809 = vld [vmem:[%s6777 + $0xf8] sm:$0xff]
      %v6842 = vunpack.c.l.b16 %v6778
      %v6843 = vunpack.c.h.b16 %v6778
      %v6844 = vunpack.c.l.b16 %v6779
      %v6845 = vunpack.c.h.b16 %v6779
      %v6846 = vunpack.c.l.b16 %v6780
      %v6847 = vunpack.c.h.b16 %v6780
      %v6848 = vunpack.c.l.b16 %v6781
      %v6849 = vunpack.c.h.b16 %v6781
      %v6850 = vunpack.c.l.b16 %v6782
      %v6851 = vunpack.c.h.b16 %v6782
      %v6852 = vunpack.c.l.b16 %v6783
      %v6853 = vunpack.c.h.b16 %v6783
      %v6854 = vunpack.c.l.b16 %v6784
      %v6855 = vunpack.c.h.b16 %v6784
      %v6856 = vunpack.c.l.b16 %v6785
      %v6857 = vunpack.c.h.b16 %v6785
      %v6858 = vunpack.c.l.b16 %v6786
      %v6859 = vunpack.c.h.b16 %v6786
      %v6860 = vunpack.c.l.b16 %v6787
      %v6861 = vunpack.c.h.b16 %v6787
      %v6862 = vunpack.c.l.b16 %v6788
      %v6863 = vunpack.c.h.b16 %v6788
      %v6864 = vunpack.c.l.b16 %v6789
      %v6865 = vunpack.c.h.b16 %v6789
      %v6866 = vunpack.c.l.b16 %v6790
      %v6867 = vunpack.c.h.b16 %v6790
      %v6868 = vunpack.c.l.b16 %v6791
      %v6869 = vunpack.c.h.b16 %v6791
      %v6870 = vunpack.c.l.b16 %v6792
      %v6871 = vunpack.c.h.b16 %v6792
      %v6872 = vunpack.c.l.b16 %v6793
      %v6873 = vunpack.c.h.b16 %v6793
      %v6874 = vunpack.c.l.b16 %v6794
      %v6875 = vunpack.c.h.b16 %v6794
      %v6876 = vunpack.c.l.b16 %v6795
      %v6877 = vunpack.c.h.b16 %v6795
      %v6878 = vunpack.c.l.b16 %v6796
      %v6879 = vunpack.c.h.b16 %v6796
      %v6880 = vunpack.c.l.b16 %v6797
      %v6881 = vunpack.c.h.b16 %v6797
      %v6882 = vunpack.c.l.b16 %v6798
      %v6883 = vunpack.c.h.b16 %v6798
      %v6884 = vunpack.c.l.b16 %v6799
      %v6885 = vunpack.c.h.b16 %v6799
      %v6886 = vunpack.c.l.b16 %v6800
      %v6887 = vunpack.c.h.b16 %v6800
      %v6888 = vunpack.c.l.b16 %v6801
      %v6889 = vunpack.c.h.b16 %v6801
      %v6890 = vunpack.c.l.b16 %v6802
      %v6891 = vunpack.c.h.b16 %v6802
      %v6892 = vunpack.c.l.b16 %v6803
      %v6893 = vunpack.c.h.b16 %v6803
      %v6894 = vunpack.c.l.b16 %v6804
      %v6895 = vunpack.c.h.b16 %v6804
      %v6896 = vunpack.c.l.b16 %v6805
      %v6897 = vunpack.c.h.b16 %v6805
      %v6898 = vunpack.c.l.b16 %v6806
      %v6899 = vunpack.c.h.b16 %v6806
      %v6900 = vunpack.c.l.b16 %v6807
      %v6901 = vunpack.c.h.b16 %v6807
      %v6902 = vunpack.c.l.b16 %v6808
      %v6903 = vunpack.c.h.b16 %v6808
      %v6904 = vunpack.c.l.b16 %v6809
      %v6905 = vunpack.c.h.b16 %v6809
      %v6906 = vpack.c.b16 %v6844, %v6842
      %v6907 = vpack.c.b16 %v6845, %v6843
      %v6908 = vpack.c.b16 %v6848, %v6846
      %v6909 = vpack.c.b16 %v6849, %v6847
      %v6910 = vpack.c.b16 %v6852, %v6850
      %v6911 = vpack.c.b16 %v6853, %v6851
      %v6912 = vpack.c.b16 %v6856, %v6854
      %v6913 = vpack.c.b16 %v6857, %v6855
      %v6914 = vpack.c.b16 %v6860, %v6858
      %v6915 = vpack.c.b16 %v6861, %v6859
      %v6916 = vpack.c.b16 %v6864, %v6862
      %v6917 = vpack.c.b16 %v6865, %v6863
      %v6918 = vpack.c.b16 %v6868, %v6866
      %v6919 = vpack.c.b16 %v6869, %v6867
      %v6920 = vpack.c.b16 %v6872, %v6870
      %v6921 = vpack.c.b16 %v6873, %v6871
      %v6922 = vpack.c.b16 %v6876, %v6874
      %v6923 = vpack.c.b16 %v6877, %v6875
      %v6924 = vpack.c.b16 %v6880, %v6878
      %v6925 = vpack.c.b16 %v6881, %v6879
      %v6926 = vpack.c.b16 %v6884, %v6882
      %v6927 = vpack.c.b16 %v6885, %v6883
      %v6928 = vpack.c.b16 %v6888, %v6886
      %v6929 = vpack.c.b16 %v6889, %v6887
      %v6930 = vpack.c.b16 %v6892, %v6890
      %v6931 = vpack.c.b16 %v6893, %v6891
      %v6932 = vpack.c.b16 %v6896, %v6894
      %v6933 = vpack.c.b16 %v6897, %v6895
      %v6934 = vpack.c.b16 %v6900, %v6898
      %v6935 = vpack.c.b16 %v6901, %v6899
      %v6936 = vpack.c.b16 %v6904, %v6902
      %v6937 = vpack.c.b16 %v6905, %v6903
      %6970 = vmatprep.subr.bf16.mxu0 %v6921
      %6971 = vmatpush1.bf16.msra.mxu0 %v6920
      %6972 = vmatprep.subr.bf16.mxu0 %v6919
      %6973 = vmatpush1.bf16.msra.mxu0 %v6918
      %6974 = vmatprep.subr.bf16.mxu0 %v6917
      %6975 = vmatpush1.bf16.msra.mxu0 %v6916
      %6976 = vmatprep.subr.bf16.mxu0 %v6915
      %6977 = vmatpush1.bf16.msra.mxu0 %v6914
      %6978 = vmatprep.subr.bf16.mxu0 %v6913
      %6979 = vmatpush1.bf16.msra.mxu0 %v6912
      %6980 = vmatprep.subr.bf16.mxu0 %v6911
      %6981 = vmatpush1.bf16.msra.mxu0 %v6910
      %6982 = vmatprep.subr.bf16.mxu0 %v6909
      %6983 = vmatpush1.bf16.msra.mxu0 %v6908
      %6984 = vmatprep.subr.bf16.mxu0 %v6907
      %6985 = vmatpush1.bf16.msra.mxu0 %v6906
      %6986 = vmatprep.subr.bf16.mxu0 %v6937
      %6987 = vmatpush2.bf16.msra.mxu0 %v6936
      %6988 = vmatprep.subr.bf16.mxu0 %v6935
      %6989 = vmatpush2.bf16.msra.mxu0 %v6934
      %6990 = vmatprep.subr.bf16.mxu0 %v6933
      %6991 = vmatpush2.bf16.msra.mxu0 %v6932
      %6992 = vmatprep.subr.bf16.mxu0 %v6931
      %6993 = vmatpush2.bf16.msra.mxu0 %v6930
      %6994 = vmatprep.subr.bf16.mxu0 %v6929
      %6995 = vmatpush2.bf16.msra.mxu0 %v6928
      %6996 = vmatprep.subr.bf16.mxu0 %v6927
      %6997 = vmatpush2.bf16.msra.mxu0 %v6926
      %6998 = vmatprep.subr.bf16.mxu0 %v6925
      %6999 = vmatpush2.bf16.msra.mxu0 %v6924
      %7000 = vmatprep.subr.bf16.mxu0 %v6923
      %7001 = vmatpush2.bf16.msra.mxu0 %v6922
      %7002 = vmatprep.mubr.bf16.mxu0 %v6295
      %7003 = vmatmul.mubr.bf16.gmra.mxu0 %v6294
      %v7004 = vpop.f32.mrf.mxu0
      %v7005 = vadd.f32 0.0, %v7004
      %v7006 = vpop.f32.mrf.mxu0
      %v7007 = vadd.f32 0.0, %v7006
      %v7008 = vpop.f32.mrf.mxu0
      %v7009 = vadd.f32 0.0, %v7008
      %v7010 = vpop.f32.mrf.mxu0
      %v7011 = vadd.f32 0.0, %v7010
      %7012 = vdwg.mxu0
      %v7013 = vadd.f32 %v6769, %v7005
      %v7014 = vadd.f32 %v6771, %v7007
      %v7015 = vadd.f32 %v6773, %v7009
      %v7016 = vadd.f32 %v6775, %v7011
      %s7017 = scalar_lea.vmem %s17, 768
      %v7018 = vld [vmem:[%s7017] sm:$0xff]
      %v7019 = vld [vmem:[%s7017 + $0x8] sm:$0xff]
      %v7020 = vld [vmem:[%s7017 + $0x10] sm:$0xff]
      %v7021 = vld [vmem:[%s7017 + $0x18] sm:$0xff]
      %v7022 = vld [vmem:[%s7017 + $0x20] sm:$0xff]
      %v7023 = vld [vmem:[%s7017 + $0x28] sm:$0xff]
      %v7024 = vld [vmem:[%s7017 + $0x30] sm:$0xff]
      %v7025 = vld [vmem:[%s7017 + $0x38] sm:$0xff]
      %v7026 = vld [vmem:[%s7017 + $0x40] sm:$0xff]
      %v7027 = vld [vmem:[%s7017 + $0x48] sm:$0xff]
      %v7028 = vld [vmem:[%s7017 + $0x50] sm:$0xff]
      %v7029 = vld [vmem:[%s7017 + $0x58] sm:$0xff]
      %v7030 = vld [vmem:[%s7017 + $0x60] sm:$0xff]
      %v7031 = vld [vmem:[%s7017 + $0x68] sm:$0xff]
      %v7032 = vld [vmem:[%s7017 + $0x70] sm:$0xff]
      %v7033 = vld [vmem:[%s7017 + $0x78] sm:$0xff]
      %v7034 = vld [vmem:[%s7017 + $0x80] sm:$0xff]
      %v7035 = vld [vmem:[%s7017 + $0x88] sm:$0xff]
      %v7036 = vld [vmem:[%s7017 + $0x90] sm:$0xff]
      %v7037 = vld [vmem:[%s7017 + $0x98] sm:$0xff]
      %v7038 = vld [vmem:[%s7017 + $0xa0] sm:$0xff]
      %v7039 = vld [vmem:[%s7017 + $0xa8] sm:$0xff]
      %v7040 = vld [vmem:[%s7017 + $0xb0] sm:$0xff]
      %v7041 = vld [vmem:[%s7017 + $0xb8] sm:$0xff]
      %v7042 = vld [vmem:[%s7017 + $0xc0] sm:$0xff]
      %v7043 = vld [vmem:[%s7017 + $0xc8] sm:$0xff]
      %v7044 = vld [vmem:[%s7017 + $0xd0] sm:$0xff]
      %v7045 = vld [vmem:[%s7017 + $0xd8] sm:$0xff]
      %v7046 = vld [vmem:[%s7017 + $0xe0] sm:$0xff]
      %v7047 = vld [vmem:[%s7017 + $0xe8] sm:$0xff]
      %v7048 = vld [vmem:[%s7017 + $0xf0] sm:$0xff]
      %v7049 = vld [vmem:[%s7017 + $0xf8] sm:$0xff]
      %v7082 = vunpack.c.l.b16 %v7018
      %v7083 = vunpack.c.h.b16 %v7018
      %v7084 = vunpack.c.l.b16 %v7019
      %v7085 = vunpack.c.h.b16 %v7019
      %v7086 = vunpack.c.l.b16 %v7020
      %v7087 = vunpack.c.h.b16 %v7020
      %v7088 = vunpack.c.l.b16 %v7021
      %v7089 = vunpack.c.h.b16 %v7021
      %v7090 = vunpack.c.l.b16 %v7022
      %v7091 = vunpack.c.h.b16 %v7022
      %v7092 = vunpack.c.l.b16 %v7023
      %v7093 = vunpack.c.h.b16 %v7023
      %v7094 = vunpack.c.l.b16 %v7024
      %v7095 = vunpack.c.h.b16 %v7024
      %v7096 = vunpack.c.l.b16 %v7025
      %v7097 = vunpack.c.h.b16 %v7025
      %v7098 = vunpack.c.l.b16 %v7026
      %v7099 = vunpack.c.h.b16 %v7026
      %v7100 = vunpack.c.l.b16 %v7027
      %v7101 = vunpack.c.h.b16 %v7027
      %v7102 = vunpack.c.l.b16 %v7028
      %v7103 = vunpack.c.h.b16 %v7028
      %v7104 = vunpack.c.l.b16 %v7029
      %v7105 = vunpack.c.h.b16 %v7029
      %v7106 = vunpack.c.l.b16 %v7030
      %v7107 = vunpack.c.h.b16 %v7030
      %v7108 = vunpack.c.l.b16 %v7031
      %v7109 = vunpack.c.h.b16 %v7031
      %v7110 = vunpack.c.l.b16 %v7032
      %v7111 = vunpack.c.h.b16 %v7032
      %v7112 = vunpack.c.l.b16 %v7033
      %v7113 = vunpack.c.h.b16 %v7033
      %v7114 = vunpack.c.l.b16 %v7034
      %v7115 = vunpack.c.h.b16 %v7034
      %v7116 = vunpack.c.l.b16 %v7035
      %v7117 = vunpack.c.h.b16 %v7035
      %v7118 = vunpack.c.l.b16 %v7036
      %v7119 = vunpack.c.h.b16 %v7036
      %v7120 = vunpack.c.l.b16 %v7037
      %v7121 = vunpack.c.h.b16 %v7037
      %v7122 = vunpack.c.l.b16 %v7038
      %v7123 = vunpack.c.h.b16 %v7038
      %v7124 = vunpack.c.l.b16 %v7039
      %v7125 = vunpack.c.h.b16 %v7039
      %v7126 = vunpack.c.l.b16 %v7040
      %v7127 = vunpack.c.h.b16 %v7040
      %v7128 = vunpack.c.l.b16 %v7041
      %v7129 = vunpack.c.h.b16 %v7041
      %v7130 = vunpack.c.l.b16 %v7042
      %v7131 = vunpack.c.h.b16 %v7042
      %v7132 = vunpack.c.l.b16 %v7043
      %v7133 = vunpack.c.h.b16 %v7043
      %v7134 = vunpack.c.l.b16 %v7044
      %v7135 = vunpack.c.h.b16 %v7044
      %v7136 = vunpack.c.l.b16 %v7045
      %v7137 = vunpack.c.h.b16 %v7045
      %v7138 = vunpack.c.l.b16 %v7046
      %v7139 = vunpack.c.h.b16 %v7046
      %v7140 = vunpack.c.l.b16 %v7047
      %v7141 = vunpack.c.h.b16 %v7047
      %v7142 = vunpack.c.l.b16 %v7048
      %v7143 = vunpack.c.h.b16 %v7048
      %v7144 = vunpack.c.l.b16 %v7049
      %v7145 = vunpack.c.h.b16 %v7049
      %v7146 = vpack.c.b16 %v7084, %v7082
      %v7147 = vpack.c.b16 %v7085, %v7083
      %v7148 = vpack.c.b16 %v7088, %v7086
      %v7149 = vpack.c.b16 %v7089, %v7087
      %v7150 = vpack.c.b16 %v7092, %v7090
      %v7151 = vpack.c.b16 %v7093, %v7091
      %v7152 = vpack.c.b16 %v7096, %v7094
      %v7153 = vpack.c.b16 %v7097, %v7095
      %v7154 = vpack.c.b16 %v7100, %v7098
      %v7155 = vpack.c.b16 %v7101, %v7099
      %v7156 = vpack.c.b16 %v7104, %v7102
      %v7157 = vpack.c.b16 %v7105, %v7103
      %v7158 = vpack.c.b16 %v7108, %v7106
      %v7159 = vpack.c.b16 %v7109, %v7107
      %v7160 = vpack.c.b16 %v7112, %v7110
      %v7161 = vpack.c.b16 %v7113, %v7111
      %v7162 = vpack.c.b16 %v7116, %v7114
      %v7163 = vpack.c.b16 %v7117, %v7115
      %v7164 = vpack.c.b16 %v7120, %v7118
      %v7165 = vpack.c.b16 %v7121, %v7119
      %v7166 = vpack.c.b16 %v7124, %v7122
      %v7167 = vpack.c.b16 %v7125, %v7123
      %v7168 = vpack.c.b16 %v7128, %v7126
      %v7169 = vpack.c.b16 %v7129, %v7127
      %v7170 = vpack.c.b16 %v7132, %v7130
      %v7171 = vpack.c.b16 %v7133, %v7131
      %v7172 = vpack.c.b16 %v7136, %v7134
      %v7173 = vpack.c.b16 %v7137, %v7135
      %v7174 = vpack.c.b16 %v7140, %v7138
      %v7175 = vpack.c.b16 %v7141, %v7139
      %v7176 = vpack.c.b16 %v7144, %v7142
      %v7177 = vpack.c.b16 %v7145, %v7143
      %7210 = vmatprep.subr.bf16.mxu0 %v7161
      %7211 = vmatpush1.bf16.msra.mxu0 %v7160
      %7212 = vmatprep.subr.bf16.mxu0 %v7159
      %7213 = vmatpush1.bf16.msra.mxu0 %v7158
      %7214 = vmatprep.subr.bf16.mxu0 %v7157
      %7215 = vmatpush1.bf16.msra.mxu0 %v7156
      %7216 = vmatprep.subr.bf16.mxu0 %v7155
      %7217 = vmatpush1.bf16.msra.mxu0 %v7154
      %7218 = vmatprep.subr.bf16.mxu0 %v7153
      %7219 = vmatpush1.bf16.msra.mxu0 %v7152
      %7220 = vmatprep.subr.bf16.mxu0 %v7151
      %7221 = vmatpush1.bf16.msra.mxu0 %v7150
      %7222 = vmatprep.subr.bf16.mxu0 %v7149
      %7223 = vmatpush1.bf16.msra.mxu0 %v7148
      %7224 = vmatprep.subr.bf16.mxu0 %v7147
      %7225 = vmatpush1.bf16.msra.mxu0 %v7146
      %7226 = vmatprep.subr.bf16.mxu0 %v7177
      %7227 = vmatpush2.bf16.msra.mxu0 %v7176
      %7228 = vmatprep.subr.bf16.mxu0 %v7175
      %7229 = vmatpush2.bf16.msra.mxu0 %v7174
      %7230 = vmatprep.subr.bf16.mxu0 %v7173
      %7231 = vmatpush2.bf16.msra.mxu0 %v7172
      %7232 = vmatprep.subr.bf16.mxu0 %v7171
      %7233 = vmatpush2.bf16.msra.mxu0 %v7170
      %7234 = vmatprep.subr.bf16.mxu0 %v7169
      %7235 = vmatpush2.bf16.msra.mxu0 %v7168
      %7236 = vmatprep.subr.bf16.mxu0 %v7167
      %7237 = vmatpush2.bf16.msra.mxu0 %v7166
      %7238 = vmatprep.subr.bf16.mxu0 %v7165
      %7239 = vmatpush2.bf16.msra.mxu0 %v7164
      %7240 = vmatprep.subr.bf16.mxu0 %v7163
      %7241 = vmatpush2.bf16.msra.mxu0 %v7162
      %7242 = vmatprep.mubr.bf16.mxu0 %v6297
      %7243 = vmatmul.mubr.bf16.gmra.mxu0 %v6296
      %v7244 = vpop.f32.mrf.mxu0
      %v7245 = vadd.f32 0.0, %v7244
      %v7246 = vpop.f32.mrf.mxu0
      %v7247 = vadd.f32 0.0, %v7246
      %v7248 = vpop.f32.mrf.mxu0
      %v7249 = vadd.f32 0.0, %v7248
      %v7250 = vpop.f32.mrf.mxu0
      %v7251 = vadd.f32 0.0, %v7250
      %7252 = vdwg.mxu0
      %v7253 = vadd.f32 %v7013, %v7245
      %v7254 = vadd.f32 %v7014, %v7247
      %v7255 = vadd.f32 %v7015, %v7249
      %v7256 = vadd.f32 %v7016, %v7251
      %s7257 = scalar_lea.vmem %s17, 1024
      %v7258 = vld [vmem:[%s7257] sm:$0xff]
      %v7259 = vld [vmem:[%s7257 + $0x8] sm:$0xff]
      %v7260 = vld [vmem:[%s7257 + $0x10] sm:$0xff]
      %v7261 = vld [vmem:[%s7257 + $0x18] sm:$0xff]
      %v7262 = vld [vmem:[%s7257 + $0x20] sm:$0xff]
      %v7263 = vld [vmem:[%s7257 + $0x28] sm:$0xff]
      %v7264 = vld [vmem:[%s7257 + $0x30] sm:$0xff]
      %v7265 = vld [vmem:[%s7257 + $0x38] sm:$0xff]
      %v7266 = vld [vmem:[%s7257 + $0x40] sm:$0xff]
      %v7267 = vld [vmem:[%s7257 + $0x48] sm:$0xff]
      %v7268 = vld [vmem:[%s7257 + $0x50] sm:$0xff]
      %v7269 = vld [vmem:[%s7257 + $0x58] sm:$0xff]
      %v7270 = vld [vmem:[%s7257 + $0x60] sm:$0xff]
      %v7271 = vld [vmem:[%s7257 + $0x68] sm:$0xff]
      %v7272 = vld [vmem:[%s7257 + $0x70] sm:$0xff]
      %v7273 = vld [vmem:[%s7257 + $0x78] sm:$0xff]
      %v7274 = vld [vmem:[%s7257 + $0x80] sm:$0xff]
      %v7275 = vld [vmem:[%s7257 + $0x88] sm:$0xff]
      %v7276 = vld [vmem:[%s7257 + $0x90] sm:$0xff]
      %v7277 = vld [vmem:[%s7257 + $0x98] sm:$0xff]
      %v7278 = vld [vmem:[%s7257 + $0xa0] sm:$0xff]
      %v7279 = vld [vmem:[%s7257 + $0xa8] sm:$0xff]
      %v7280 = vld [vmem:[%s7257 + $0xb0] sm:$0xff]
      %v7281 = vld [vmem:[%s7257 + $0xb8] sm:$0xff]
      %v7282 = vld [vmem:[%s7257 + $0xc0] sm:$0xff]
      %v7283 = vld [vmem:[%s7257 + $0xc8] sm:$0xff]
      %v7284 = vld [vmem:[%s7257 + $0xd0] sm:$0xff]
      %v7285 = vld [vmem:[%s7257 + $0xd8] sm:$0xff]
      %v7286 = vld [vmem:[%s7257 + $0xe0] sm:$0xff]
      %v7287 = vld [vmem:[%s7257 + $0xe8] sm:$0xff]
      %v7288 = vld [vmem:[%s7257 + $0xf0] sm:$0xff]
      %v7289 = vld [vmem:[%s7257 + $0xf8] sm:$0xff]
      %v7322 = vunpack.c.l.b16 %v7258
      %v7323 = vunpack.c.h.b16 %v7258
      %v7324 = vunpack.c.l.b16 %v7259
      %v7325 = vunpack.c.h.b16 %v7259
      %v7326 = vunpack.c.l.b16 %v7260
      %v7327 = vunpack.c.h.b16 %v7260
      %v7328 = vunpack.c.l.b16 %v7261
      %v7329 = vunpack.c.h.b16 %v7261
      %v7330 = vunpack.c.l.b16 %v7262
      %v7331 = vunpack.c.h.b16 %v7262
      %v7332 = vunpack.c.l.b16 %v7263
      %v7333 = vunpack.c.h.b16 %v7263
      %v7334 = vunpack.c.l.b16 %v7264
      %v7335 = vunpack.c.h.b16 %v7264
      %v7336 = vunpack.c.l.b16 %v7265
      %v7337 = vunpack.c.h.b16 %v7265
      %v7338 = vunpack.c.l.b16 %v7266
      %v7339 = vunpack.c.h.b16 %v7266
      %v7340 = vunpack.c.l.b16 %v7267
      %v7341 = vunpack.c.h.b16 %v7267
      %v7342 = vunpack.c.l.b16 %v7268
      %v7343 = vunpack.c.h.b16 %v7268
      %v7344 = vunpack.c.l.b16 %v7269
      %v7345 = vunpack.c.h.b16 %v7269
      %v7346 = vunpack.c.l.b16 %v7270
      %v7347 = vunpack.c.h.b16 %v7270
      %v7348 = vunpack.c.l.b16 %v7271
      %v7349 = vunpack.c.h.b16 %v7271
      %v7350 = vunpack.c.l.b16 %v7272
      %v7351 = vunpack.c.h.b16 %v7272
      %v7352 = vunpack.c.l.b16 %v7273
      %v7353 = vunpack.c.h.b16 %v7273
      %v7354 = vunpack.c.l.b16 %v7274
      %v7355 = vunpack.c.h.b16 %v7274
      %v7356 = vunpack.c.l.b16 %v7275
      %v7357 = vunpack.c.h.b16 %v7275
      %v7358 = vunpack.c.l.b16 %v7276
      %v7359 = vunpack.c.h.b16 %v7276
      %v7360 = vunpack.c.l.b16 %v7277
      %v7361 = vunpack.c.h.b16 %v7277
      %v7362 = vunpack.c.l.b16 %v7278
      %v7363 = vunpack.c.h.b16 %v7278
      %v7364 = vunpack.c.l.b16 %v7279
      %v7365 = vunpack.c.h.b16 %v7279
      %v7366 = vunpack.c.l.b16 %v7280
      %v7367 = vunpack.c.h.b16 %v7280
      %v7368 = vunpack.c.l.b16 %v7281
      %v7369 = vunpack.c.h.b16 %v7281
      %v7370 = vunpack.c.l.b16 %v7282
      %v7371 = vunpack.c.h.b16 %v7282
      %v7372 = vunpack.c.l.b16 %v7283
      %v7373 = vunpack.c.h.b16 %v7283
      %v7374 = vunpack.c.l.b16 %v7284
      %v7375 = vunpack.c.h.b16 %v7284
      %v7376 = vunpack.c.l.b16 %v7285
      %v7377 = vunpack.c.h.b16 %v7285
      %v7378 = vunpack.c.l.b16 %v7286
      %v7379 = vunpack.c.h.b16 %v7286
      %v7380 = vunpack.c.l.b16 %v7287
      %v7381 = vunpack.c.h.b16 %v7287
      %v7382 = vunpack.c.l.b16 %v7288
      %v7383 = vunpack.c.h.b16 %v7288
      %v7384 = vunpack.c.l.b16 %v7289
      %v7385 = vunpack.c.h.b16 %v7289
      %v7386 = vpack.c.b16 %v7324, %v7322
      %v7387 = vpack.c.b16 %v7325, %v7323
      %v7388 = vpack.c.b16 %v7328, %v7326
      %v7389 = vpack.c.b16 %v7329, %v7327
      %v7390 = vpack.c.b16 %v7332, %v7330
      %v7391 = vpack.c.b16 %v7333, %v7331
      %v7392 = vpack.c.b16 %v7336, %v7334
      %v7393 = vpack.c.b16 %v7337, %v7335
      %v7394 = vpack.c.b16 %v7340, %v7338
      %v7395 = vpack.c.b16 %v7341, %v7339
      %v7396 = vpack.c.b16 %v7344, %v7342
      %v7397 = vpack.c.b16 %v7345, %v7343
      %v7398 = vpack.c.b16 %v7348, %v7346
      %v7399 = vpack.c.b16 %v7349, %v7347
      %v7400 = vpack.c.b16 %v7352, %v7350
      %v7401 = vpack.c.b16 %v7353, %v7351
      %v7402 = vpack.c.b16 %v7356, %v7354
      %v7403 = vpack.c.b16 %v7357, %v7355
      %v7404 = vpack.c.b16 %v7360, %v7358
      %v7405 = vpack.c.b16 %v7361, %v7359
      %v7406 = vpack.c.b16 %v7364, %v7362
      %v7407 = vpack.c.b16 %v7365, %v7363
      %v7408 = vpack.c.b16 %v7368, %v7366
      %v7409 = vpack.c.b16 %v7369, %v7367
      %v7410 = vpack.c.b16 %v7372, %v7370
      %v7411 = vpack.c.b16 %v7373, %v7371
      %v7412 = vpack.c.b16 %v7376, %v7374
      %v7413 = vpack.c.b16 %v7377, %v7375
      %v7414 = vpack.c.b16 %v7380, %v7378
      %v7415 = vpack.c.b16 %v7381, %v7379
      %v7416 = vpack.c.b16 %v7384, %v7382
      %v7417 = vpack.c.b16 %v7385, %v7383
      %7450 = vmatprep.subr.bf16.mxu0 %v7401
      %7451 = vmatpush1.bf16.msra.mxu0 %v7400
      %7452 = vmatprep.subr.bf16.mxu0 %v7399
      %7453 = vmatpush1.bf16.msra.mxu0 %v7398
      %7454 = vmatprep.subr.bf16.mxu0 %v7397
      %7455 = vmatpush1.bf16.msra.mxu0 %v7396
      %7456 = vmatprep.subr.bf16.mxu0 %v7395
      %7457 = vmatpush1.bf16.msra.mxu0 %v7394
      %7458 = vmatprep.subr.bf16.mxu0 %v7393
      %7459 = vmatpush1.bf16.msra.mxu0 %v7392
      %7460 = vmatprep.subr.bf16.mxu0 %v7391
      %7461 = vmatpush1.bf16.msra.mxu0 %v7390
      %7462 = vmatprep.subr.bf16.mxu0 %v7389
      %7463 = vmatpush1.bf16.msra.mxu0 %v7388
      %7464 = vmatprep.subr.bf16.mxu0 %v7387
      %7465 = vmatpush1.bf16.msra.mxu0 %v7386
      %7466 = vmatprep.subr.bf16.mxu0 %v7417
      %7467 = vmatpush2.bf16.msra.mxu0 %v7416
      %7468 = vmatprep.subr.bf16.mxu0 %v7415
      %7469 = vmatpush2.bf16.msra.mxu0 %v7414
      %7470 = vmatprep.subr.bf16.mxu0 %v7413
      %7471 = vmatpush2.bf16.msra.mxu0 %v7412
      %7472 = vmatprep.subr.bf16.mxu0 %v7411
      %7473 = vmatpush2.bf16.msra.mxu0 %v7410
      %7474 = vmatprep.subr.bf16.mxu0 %v7409
      %7475 = vmatpush2.bf16.msra.mxu0 %v7408
      %7476 = vmatprep.subr.bf16.mxu0 %v7407
      %7477 = vmatpush2.bf16.msra.mxu0 %v7406
      %7478 = vmatprep.subr.bf16.mxu0 %v7405
      %7479 = vmatpush2.bf16.msra.mxu0 %v7404
      %7480 = vmatprep.subr.bf16.mxu0 %v7403
      %7481 = vmatpush2.bf16.msra.mxu0 %v7402
      %7482 = vmatprep.mubr.bf16.mxu0 %v6299
      %7483 = vmatmul.mubr.bf16.gmra.mxu0 %v6298
      %v7484 = vpop.f32.mrf.mxu0
      %v7485 = vadd.f32 0.0, %v7484
      %v7486 = vpop.f32.mrf.mxu0
      %v7487 = vadd.f32 0.0, %v7486
      %v7488 = vpop.f32.mrf.mxu0
      %v7489 = vadd.f32 0.0, %v7488
      %v7490 = vpop.f32.mrf.mxu0
      %v7491 = vadd.f32 0.0, %v7490
      %7492 = vdwg.mxu0
      %v7493 = vadd.f32 %v7253, %v7485
      %v7494 = vadd.f32 %v7254, %v7487
      %v7495 = vadd.f32 %v7255, %v7489
      %v7496 = vadd.f32 %v7256, %v7491
      %s7497 = scalar_lea.vmem %s17, 1280
      %v7498 = vld [vmem:[%s7497] sm:$0xff]
      %v7499 = vld [vmem:[%s7497 + $0x8] sm:$0xff]
      %v7500 = vld [vmem:[%s7497 + $0x10] sm:$0xff]
      %v7501 = vld [vmem:[%s7497 + $0x18] sm:$0xff]
      %v7502 = vld [vmem:[%s7497 + $0x20] sm:$0xff]
      %v7503 = vld [vmem:[%s7497 + $0x28] sm:$0xff]
      %v7504 = vld [vmem:[%s7497 + $0x30] sm:$0xff]
      %v7505 = vld [vmem:[%s7497 + $0x38] sm:$0xff]
      %v7506 = vld [vmem:[%s7497 + $0x40] sm:$0xff]
      %v7507 = vld [vmem:[%s7497 + $0x48] sm:$0xff]
      %v7508 = vld [vmem:[%s7497 + $0x50] sm:$0xff]
      %v7509 = vld [vmem:[%s7497 + $0x58] sm:$0xff]
      %v7510 = vld [vmem:[%s7497 + $0x60] sm:$0xff]
      %v7511 = vld [vmem:[%s7497 + $0x68] sm:$0xff]
      %v7512 = vld [vmem:[%s7497 + $0x70] sm:$0xff]
      %v7513 = vld [vmem:[%s7497 + $0x78] sm:$0xff]
      %v7514 = vld [vmem:[%s7497 + $0x80] sm:$0xff]
      %v7515 = vld [vmem:[%s7497 + $0x88] sm:$0xff]
      %v7516 = vld [vmem:[%s7497 + $0x90] sm:$0xff]
      %v7517 = vld [vmem:[%s7497 + $0x98] sm:$0xff]
      %v7518 = vld [vmem:[%s7497 + $0xa0] sm:$0xff]
      %v7519 = vld [vmem:[%s7497 + $0xa8] sm:$0xff]
      %v7520 = vld [vmem:[%s7497 + $0xb0] sm:$0xff]
      %v7521 = vld [vmem:[%s7497 + $0xb8] sm:$0xff]
      %v7522 = vld [vmem:[%s7497 + $0xc0] sm:$0xff]
      %v7523 = vld [vmem:[%s7497 + $0xc8] sm:$0xff]
      %v7524 = vld [vmem:[%s7497 + $0xd0] sm:$0xff]
      %v7525 = vld [vmem:[%s7497 + $0xd8] sm:$0xff]
      %v7526 = vld [vmem:[%s7497 + $0xe0] sm:$0xff]
      %v7527 = vld [vmem:[%s7497 + $0xe8] sm:$0xff]
      %v7528 = vld [vmem:[%s7497 + $0xf0] sm:$0xff]
      %v7529 = vld [vmem:[%s7497 + $0xf8] sm:$0xff]
      %v7562 = vunpack.c.l.b16 %v7498
      %v7563 = vunpack.c.h.b16 %v7498
      %v7564 = vunpack.c.l.b16 %v7499
      %v7565 = vunpack.c.h.b16 %v7499
      %v7566 = vunpack.c.l.b16 %v7500
      %v7567 = vunpack.c.h.b16 %v7500
      %v7568 = vunpack.c.l.b16 %v7501
      %v7569 = vunpack.c.h.b16 %v7501
      %v7570 = vunpack.c.l.b16 %v7502
      %v7571 = vunpack.c.h.b16 %v7502
      %v7572 = vunpack.c.l.b16 %v7503
      %v7573 = vunpack.c.h.b16 %v7503
      %v7574 = vunpack.c.l.b16 %v7504
      %v7575 = vunpack.c.h.b16 %v7504
      %v7576 = vunpack.c.l.b16 %v7505
      %v7577 = vunpack.c.h.b16 %v7505
      %v7578 = vunpack.c.l.b16 %v7506
      %v7579 = vunpack.c.h.b16 %v7506
      %v7580 = vunpack.c.l.b16 %v7507
      %v7581 = vunpack.c.h.b16 %v7507
      %v7582 = vunpack.c.l.b16 %v7508
      %v7583 = vunpack.c.h.b16 %v7508
      %v7584 = vunpack.c.l.b16 %v7509
      %v7585 = vunpack.c.h.b16 %v7509
      %v7586 = vunpack.c.l.b16 %v7510
      %v7587 = vunpack.c.h.b16 %v7510
      %v7588 = vunpack.c.l.b16 %v7511
      %v7589 = vunpack.c.h.b16 %v7511
      %v7590 = vunpack.c.l.b16 %v7512
      %v7591 = vunpack.c.h.b16 %v7512
      %v7592 = vunpack.c.l.b16 %v7513
      %v7593 = vunpack.c.h.b16 %v7513
      %v7594 = vunpack.c.l.b16 %v7514
      %v7595 = vunpack.c.h.b16 %v7514
      %v7596 = vunpack.c.l.b16 %v7515
      %v7597 = vunpack.c.h.b16 %v7515
      %v7598 = vunpack.c.l.b16 %v7516
      %v7599 = vunpack.c.h.b16 %v7516
      %v7600 = vunpack.c.l.b16 %v7517
      %v7601 = vunpack.c.h.b16 %v7517
      %v7602 = vunpack.c.l.b16 %v7518
      %v7603 = vunpack.c.h.b16 %v7518
      %v7604 = vunpack.c.l.b16 %v7519
      %v7605 = vunpack.c.h.b16 %v7519
      %v7606 = vunpack.c.l.b16 %v7520
      %v7607 = vunpack.c.h.b16 %v7520
      %v7608 = vunpack.c.l.b16 %v7521
      %v7609 = vunpack.c.h.b16 %v7521
      %v7610 = vunpack.c.l.b16 %v7522
      %v7611 = vunpack.c.h.b16 %v7522
      %v7612 = vunpack.c.l.b16 %v7523
      %v7613 = vunpack.c.h.b16 %v7523
      %v7614 = vunpack.c.l.b16 %v7524
      %v7615 = vunpack.c.h.b16 %v7524
      %v7616 = vunpack.c.l.b16 %v7525
      %v7617 = vunpack.c.h.b16 %v7525
      %v7618 = vunpack.c.l.b16 %v7526
      %v7619 = vunpack.c.h.b16 %v7526
      %v7620 = vunpack.c.l.b16 %v7527
      %v7621 = vunpack.c.h.b16 %v7527
      %v7622 = vunpack.c.l.b16 %v7528
      %v7623 = vunpack.c.h.b16 %v7528
      %v7624 = vunpack.c.l.b16 %v7529
      %v7625 = vunpack.c.h.b16 %v7529
      %v7626 = vpack.c.b16 %v7564, %v7562
      %v7627 = vpack.c.b16 %v7565, %v7563
      %v7628 = vpack.c.b16 %v7568, %v7566
      %v7629 = vpack.c.b16 %v7569, %v7567
      %v7630 = vpack.c.b16 %v7572, %v7570
      %v7631 = vpack.c.b16 %v7573, %v7571
      %v7632 = vpack.c.b16 %v7576, %v7574
      %v7633 = vpack.c.b16 %v7577, %v7575
      %v7634 = vpack.c.b16 %v7580, %v7578
      %v7635 = vpack.c.b16 %v7581, %v7579
      %v7636 = vpack.c.b16 %v7584, %v7582
      %v7637 = vpack.c.b16 %v7585, %v7583
      %v7638 = vpack.c.b16 %v7588, %v7586
      %v7639 = vpack.c.b16 %v7589, %v7587
      %v7640 = vpack.c.b16 %v7592, %v7590
      %v7641 = vpack.c.b16 %v7593, %v7591
      %v7642 = vpack.c.b16 %v7596, %v7594
      %v7643 = vpack.c.b16 %v7597, %v7595
      %v7644 = vpack.c.b16 %v7600, %v7598
      %v7645 = vpack.c.b16 %v7601, %v7599
      %v7646 = vpack.c.b16 %v7604, %v7602
      %v7647 = vpack.c.b16 %v7605, %v7603
      %v7648 = vpack.c.b16 %v7608, %v7606
      %v7649 = vpack.c.b16 %v7609, %v7607
      %v7650 = vpack.c.b16 %v7612, %v7610
      %v7651 = vpack.c.b16 %v7613, %v7611
      %v7652 = vpack.c.b16 %v7616, %v7614
      %v7653 = vpack.c.b16 %v7617, %v7615
      %v7654 = vpack.c.b16 %v7620, %v7618
      %v7655 = vpack.c.b16 %v7621, %v7619
      %v7656 = vpack.c.b16 %v7624, %v7622
      %v7657 = vpack.c.b16 %v7625, %v7623
      %7690 = vmatprep.subr.bf16.mxu0 %v7641
      %7691 = vmatpush1.bf16.msra.mxu0 %v7640
      %7692 = vmatprep.subr.bf16.mxu0 %v7639
      %7693 = vmatpush1.bf16.msra.mxu0 %v7638
      %7694 = vmatprep.subr.bf16.mxu0 %v7637
      %7695 = vmatpush1.bf16.msra.mxu0 %v7636
      %7696 = vmatprep.subr.bf16.mxu0 %v7635
      %7697 = vmatpush1.bf16.msra.mxu0 %v7634
      %7698 = vmatprep.subr.bf16.mxu0 %v7633
      %7699 = vmatpush1.bf16.msra.mxu0 %v7632
      %7700 = vmatprep.subr.bf16.mxu0 %v7631
      %7701 = vmatpush1.bf16.msra.mxu0 %v7630
      %7702 = vmatprep.subr.bf16.mxu0 %v7629
      %7703 = vmatpush1.bf16.msra.mxu0 %v7628
      %7704 = vmatprep.subr.bf16.mxu0 %v7627
      %7705 = vmatpush1.bf16.msra.mxu0 %v7626
      %7706 = vmatprep.subr.bf16.mxu0 %v7657
      %7707 = vmatpush2.bf16.msra.mxu0 %v7656
      %7708 = vmatprep.subr.bf16.mxu0 %v7655
      %7709 = vmatpush2.bf16.msra.mxu0 %v7654
      %7710 = vmatprep.subr.bf16.mxu0 %v7653
      %7711 = vmatpush2.bf16.msra.mxu0 %v7652
      %7712 = vmatprep.subr.bf16.mxu0 %v7651
      %7713 = vmatpush2.bf16.msra.mxu0 %v7650
      %7714 = vmatprep.subr.bf16.mxu0 %v7649
      %7715 = vmatpush2.bf16.msra.mxu0 %v7648
      %7716 = vmatprep.subr.bf16.mxu0 %v7647
      %7717 = vmatpush2.bf16.msra.mxu0 %v7646
      %7718 = vmatprep.subr.bf16.mxu0 %v7645
      %7719 = vmatpush2.bf16.msra.mxu0 %v7644
      %7720 = vmatprep.subr.bf16.mxu0 %v7643
      %7721 = vmatpush2.bf16.msra.mxu0 %v7642
      %7722 = vmatprep.mubr.bf16.mxu0 %v6301
      %7723 = vmatmul.mubr.bf16.gmra.mxu0 %v6300
      %v7724 = vpop.f32.mrf.mxu0
      %v7725 = vadd.f32 0.0, %v7724
      %v7726 = vpop.f32.mrf.mxu0
      %v7727 = vadd.f32 0.0, %v7726
      %v7728 = vpop.f32.mrf.mxu0
      %v7729 = vadd.f32 0.0, %v7728
      %v7730 = vpop.f32.mrf.mxu0
      %v7731 = vadd.f32 0.0, %v7730
      %7732 = vdwg.mxu0
      %v7733 = vadd.f32 %v7493, %v7725
      %v7734 = vadd.f32 %v7494, %v7727
      %v7735 = vadd.f32 %v7495, %v7729
      %v7736 = vadd.f32 %v7496, %v7731
      %s7737 = scalar_lea.vmem %s17, 1536
      %v7738 = vld [vmem:[%s7737] sm:$0xff]
      %v7739 = vld [vmem:[%s7737 + $0x8] sm:$0xff]
      %v7740 = vld [vmem:[%s7737 + $0x10] sm:$0xff]
      %v7741 = vld [vmem:[%s7737 + $0x18] sm:$0xff]
      %v7742 = vld [vmem:[%s7737 + $0x20] sm:$0xff]
      %v7743 = vld [vmem:[%s7737 + $0x28] sm:$0xff]
      %v7744 = vld [vmem:[%s7737 + $0x30] sm:$0xff]
      %v7745 = vld [vmem:[%s7737 + $0x38] sm:$0xff]
      %v7746 = vld [vmem:[%s7737 + $0x40] sm:$0xff]
      %v7747 = vld [vmem:[%s7737 + $0x48] sm:$0xff]
      %v7748 = vld [vmem:[%s7737 + $0x50] sm:$0xff]
      %v7749 = vld [vmem:[%s7737 + $0x58] sm:$0xff]
      %v7750 = vld [vmem:[%s7737 + $0x60] sm:$0xff]
      %v7751 = vld [vmem:[%s7737 + $0x68] sm:$0xff]
      %v7752 = vld [vmem:[%s7737 + $0x70] sm:$0xff]
      %v7753 = vld [vmem:[%s7737 + $0x78] sm:$0xff]
      %v7754 = vld [vmem:[%s7737 + $0x80] sm:$0xff]
      %v7755 = vld [vmem:[%s7737 + $0x88] sm:$0xff]
      %v7756 = vld [vmem:[%s7737 + $0x90] sm:$0xff]
      %v7757 = vld [vmem:[%s7737 + $0x98] sm:$0xff]
      %v7758 = vld [vmem:[%s7737 + $0xa0] sm:$0xff]
      %v7759 = vld [vmem:[%s7737 + $0xa8] sm:$0xff]
      %v7760 = vld [vmem:[%s7737 + $0xb0] sm:$0xff]
      %v7761 = vld [vmem:[%s7737 + $0xb8] sm:$0xff]
      %v7762 = vld [vmem:[%s7737 + $0xc0] sm:$0xff]
      %v7763 = vld [vmem:[%s7737 + $0xc8] sm:$0xff]
      %v7764 = vld [vmem:[%s7737 + $0xd0] sm:$0xff]
      %v7765 = vld [vmem:[%s7737 + $0xd8] sm:$0xff]
      %v7766 = vld [vmem:[%s7737 + $0xe0] sm:$0xff]
      %v7767 = vld [vmem:[%s7737 + $0xe8] sm:$0xff]
      %v7768 = vld [vmem:[%s7737 + $0xf0] sm:$0xff]
      %v7769 = vld [vmem:[%s7737 + $0xf8] sm:$0xff]
      %v7802 = vunpack.c.l.b16 %v7738
      %v7803 = vunpack.c.h.b16 %v7738
      %v7804 = vunpack.c.l.b16 %v7739
      %v7805 = vunpack.c.h.b16 %v7739
      %v7806 = vunpack.c.l.b16 %v7740
      %v7807 = vunpack.c.h.b16 %v7740
      %v7808 = vunpack.c.l.b16 %v7741
      %v7809 = vunpack.c.h.b16 %v7741
      %v7810 = vunpack.c.l.b16 %v7742
      %v7811 = vunpack.c.h.b16 %v7742
      %v7812 = vunpack.c.l.b16 %v7743
      %v7813 = vunpack.c.h.b16 %v7743
      %v7814 = vunpack.c.l.b16 %v7744
      %v7815 = vunpack.c.h.b16 %v7744
      %v7816 = vunpack.c.l.b16 %v7745
      %v7817 = vunpack.c.h.b16 %v7745
      %v7818 = vunpack.c.l.b16 %v7746
      %v7819 = vunpack.c.h.b16 %v7746
      %v7820 = vunpack.c.l.b16 %v7747
      %v7821 = vunpack.c.h.b16 %v7747
      %v7822 = vunpack.c.l.b16 %v7748
      %v7823 = vunpack.c.h.b16 %v7748
      %v7824 = vunpack.c.l.b16 %v7749
      %v7825 = vunpack.c.h.b16 %v7749
      %v7826 = vunpack.c.l.b16 %v7750
      %v7827 = vunpack.c.h.b16 %v7750
      %v7828 = vunpack.c.l.b16 %v7751
      %v7829 = vunpack.c.h.b16 %v7751
      %v7830 = vunpack.c.l.b16 %v7752
      %v7831 = vunpack.c.h.b16 %v7752
      %v7832 = vunpack.c.l.b16 %v7753
      %v7833 = vunpack.c.h.b16 %v7753
      %v7834 = vunpack.c.l.b16 %v7754
      %v7835 = vunpack.c.h.b16 %v7754
      %v7836 = vunpack.c.l.b16 %v7755
      %v7837 = vunpack.c.h.b16 %v7755
      %v7838 = vunpack.c.l.b16 %v7756
      %v7839 = vunpack.c.h.b16 %v7756
      %v7840 = vunpack.c.l.b16 %v7757
      %v7841 = vunpack.c.h.b16 %v7757
      %v7842 = vunpack.c.l.b16 %v7758
      %v7843 = vunpack.c.h.b16 %v7758
      %v7844 = vunpack.c.l.b16 %v7759
      %v7845 = vunpack.c.h.b16 %v7759
      %v7846 = vunpack.c.l.b16 %v7760
      %v7847 = vunpack.c.h.b16 %v7760
      %v7848 = vunpack.c.l.b16 %v7761
      %v7849 = vunpack.c.h.b16 %v7761
      %v7850 = vunpack.c.l.b16 %v7762
      %v7851 = vunpack.c.h.b16 %v7762
      %v7852 = vunpack.c.l.b16 %v7763
      %v7853 = vunpack.c.h.b16 %v7763
      %v7854 = vunpack.c.l.b16 %v7764
      %v7855 = vunpack.c.h.b16 %v7764
      %v7856 = vunpack.c.l.b16 %v7765
      %v7857 = vunpack.c.h.b16 %v7765
      %v7858 = vunpack.c.l.b16 %v7766
      %v7859 = vunpack.c.h.b16 %v7766
      %v7860 = vunpack.c.l.b16 %v7767
      %v7861 = vunpack.c.h.b16 %v7767
      %v7862 = vunpack.c.l.b16 %v7768
      %v7863 = vunpack.c.h.b16 %v7768
      %v7864 = vunpack.c.l.b16 %v7769
      %v7865 = vunpack.c.h.b16 %v7769
      %v7866 = vpack.c.b16 %v7804, %v7802
      %v7867 = vpack.c.b16 %v7805, %v7803
      %v7868 = vpack.c.b16 %v7808, %v7806
      %v7869 = vpack.c.b16 %v7809, %v7807
      %v7870 = vpack.c.b16 %v7812, %v7810
      %v7871 = vpack.c.b16 %v7813, %v7811
      %v7872 = vpack.c.b16 %v7816, %v7814
      %v7873 = vpack.c.b16 %v7817, %v7815
      %v7874 = vpack.c.b16 %v7820, %v7818
      %v7875 = vpack.c.b16 %v7821, %v7819
      %v7876 = vpack.c.b16 %v7824, %v7822
      %v7877 = vpack.c.b16 %v7825, %v7823
      %v7878 = vpack.c.b16 %v7828, %v7826
      %v7879 = vpack.c.b16 %v7829, %v7827
      %v7880 = vpack.c.b16 %v7832, %v7830
      %v7881 = vpack.c.b16 %v7833, %v7831
      %v7882 = vpack.c.b16 %v7836, %v7834
      %v7883 = vpack.c.b16 %v7837, %v7835
      %v7884 = vpack.c.b16 %v7840, %v7838
      %v7885 = vpack.c.b16 %v7841, %v7839
      %v7886 = vpack.c.b16 %v7844, %v7842
      %v7887 = vpack.c.b16 %v7845, %v7843
      %v7888 = vpack.c.b16 %v7848, %v7846
      %v7889 = vpack.c.b16 %v7849, %v7847
      %v7890 = vpack.c.b16 %v7852, %v7850
      %v7891 = vpack.c.b16 %v7853, %v7851
      %v7892 = vpack.c.b16 %v7856, %v7854
      %v7893 = vpack.c.b16 %v7857, %v7855
      %v7894 = vpack.c.b16 %v7860, %v7858
      %v7895 = vpack.c.b16 %v7861, %v7859
      %v7896 = vpack.c.b16 %v7864, %v7862
      %v7897 = vpack.c.b16 %v7865, %v7863
      %7930 = vmatprep.subr.bf16.mxu0 %v7881
      %7931 = vmatpush1.bf16.msra.mxu0 %v7880
      %7932 = vmatprep.subr.bf16.mxu0 %v7879
      %7933 = vmatpush1.bf16.msra.mxu0 %v7878
      %7934 = vmatprep.subr.bf16.mxu0 %v7877
      %7935 = vmatpush1.bf16.msra.mxu0 %v7876
      %7936 = vmatprep.subr.bf16.mxu0 %v7875
      %7937 = vmatpush1.bf16.msra.mxu0 %v7874
      %7938 = vmatprep.subr.bf16.mxu0 %v7873
      %7939 = vmatpush1.bf16.msra.mxu0 %v7872
      %7940 = vmatprep.subr.bf16.mxu0 %v7871
      %7941 = vmatpush1.bf16.msra.mxu0 %v7870
      %7942 = vmatprep.subr.bf16.mxu0 %v7869
      %7943 = vmatpush1.bf16.msra.mxu0 %v7868
      %7944 = vmatprep.subr.bf16.mxu0 %v7867
      %7945 = vmatpush1.bf16.msra.mxu0 %v7866
      %7946 = vmatprep.subr.bf16.mxu0 %v7897
      %7947 = vmatpush2.bf16.msra.mxu0 %v7896
      %7948 = vmatprep.subr.bf16.mxu0 %v7895
      %7949 = vmatpush2.bf16.msra.mxu0 %v7894
      %7950 = vmatprep.subr.bf16.mxu0 %v7893
      %7951 = vmatpush2.bf16.msra.mxu0 %v7892
      %7952 = vmatprep.subr.bf16.mxu0 %v7891
      %7953 = vmatpush2.bf16.msra.mxu0 %v7890
      %7954 = vmatprep.subr.bf16.mxu0 %v7889
      %7955 = vmatpush2.bf16.msra.mxu0 %v7888
      %7956 = vmatprep.subr.bf16.mxu0 %v7887
      %7957 = vmatpush2.bf16.msra.mxu0 %v7886
      %7958 = vmatprep.subr.bf16.mxu0 %v7885
      %7959 = vmatpush2.bf16.msra.mxu0 %v7884
      %7960 = vmatprep.subr.bf16.mxu0 %v7883
      %7961 = vmatpush2.bf16.msra.mxu0 %v7882
      %7962 = vmatprep.mubr.bf16.mxu0 %v6303
      %7963 = vmatmul.mubr.bf16.gmra.mxu0 %v6302
      %v7964 = vpop.f32.mrf.mxu0
      %v7965 = vadd.f32 0.0, %v7964
      %v7966 = vpop.f32.mrf.mxu0
      %v7967 = vadd.f32 0.0, %v7966
      %v7968 = vpop.f32.mrf.mxu0
      %v7969 = vadd.f32 0.0, %v7968
      %v7970 = vpop.f32.mrf.mxu0
      %v7971 = vadd.f32 0.0, %v7970
      %7972 = vdwg.mxu0
      %v7973 = vadd.f32 %v7733, %v7965
      %v7974 = vadd.f32 %v7734, %v7967
      %v7975 = vadd.f32 %v7735, %v7969
      %v7976 = vadd.f32 %v7736, %v7971
      %s7977 = scalar_lea.vmem %s17, 1792
      %v7978 = vld [vmem:[%s7977] sm:$0xff]
      %v7979 = vld [vmem:[%s7977 + $0x8] sm:$0xff]
      %v7980 = vld [vmem:[%s7977 + $0x10] sm:$0xff]
      %v7981 = vld [vmem:[%s7977 + $0x18] sm:$0xff]
      %v7982 = vld [vmem:[%s7977 + $0x20] sm:$0xff]
      %v7983 = vld [vmem:[%s7977 + $0x28] sm:$0xff]
      %v7984 = vld [vmem:[%s7977 + $0x30] sm:$0xff]
      %v7985 = vld [vmem:[%s7977 + $0x38] sm:$0xff]
      %v7986 = vld [vmem:[%s7977 + $0x40] sm:$0xff]
      %v7987 = vld [vmem:[%s7977 + $0x48] sm:$0xff]
      %v7988 = vld [vmem:[%s7977 + $0x50] sm:$0xff]
      %v7989 = vld [vmem:[%s7977 + $0x58] sm:$0xff]
      %v7990 = vld [vmem:[%s7977 + $0x60] sm:$0xff]
      %v7991 = vld [vmem:[%s7977 + $0x68] sm:$0xff]
      %v7992 = vld [vmem:[%s7977 + $0x70] sm:$0xff]
      %v7993 = vld [vmem:[%s7977 + $0x78] sm:$0xff]
      %v7994 = vld [vmem:[%s7977 + $0x80] sm:$0xff]
      %v7995 = vld [vmem:[%s7977 + $0x88] sm:$0xff]
      %v7996 = vld [vmem:[%s7977 + $0x90] sm:$0xff]
      %v7997 = vld [vmem:[%s7977 + $0x98] sm:$0xff]
      %v7998 = vld [vmem:[%s7977 + $0xa0] sm:$0xff]
      %v7999 = vld [vmem:[%s7977 + $0xa8] sm:$0xff]
      %v8000 = vld [vmem:[%s7977 + $0xb0] sm:$0xff]
      %v8001 = vld [vmem:[%s7977 + $0xb8] sm:$0xff]
      %v8002 = vld [vmem:[%s7977 + $0xc0] sm:$0xff]
      %v8003 = vld [vmem:[%s7977 + $0xc8] sm:$0xff]
      %v8004 = vld [vmem:[%s7977 + $0xd0] sm:$0xff]
      %v8005 = vld [vmem:[%s7977 + $0xd8] sm:$0xff]
      %v8006 = vld [vmem:[%s7977 + $0xe0] sm:$0xff]
      %v8007 = vld [vmem:[%s7977 + $0xe8] sm:$0xff]
      %v8008 = vld [vmem:[%s7977 + $0xf0] sm:$0xff]
      %v8009 = vld [vmem:[%s7977 + $0xf8] sm:$0xff]
      %v8042 = vunpack.c.l.b16 %v7978
      %v8043 = vunpack.c.h.b16 %v7978
      %v8044 = vunpack.c.l.b16 %v7979
      %v8045 = vunpack.c.h.b16 %v7979
      %v8046 = vunpack.c.l.b16 %v7980
      %v8047 = vunpack.c.h.b16 %v7980
      %v8048 = vunpack.c.l.b16 %v7981
      %v8049 = vunpack.c.h.b16 %v7981
      %v8050 = vunpack.c.l.b16 %v7982
      %v8051 = vunpack.c.h.b16 %v7982
      %v8052 = vunpack.c.l.b16 %v7983
      %v8053 = vunpack.c.h.b16 %v7983
      %v8054 = vunpack.c.l.b16 %v7984
      %v8055 = vunpack.c.h.b16 %v7984
      %v8056 = vunpack.c.l.b16 %v7985
      %v8057 = vunpack.c.h.b16 %v7985
      %v8058 = vunpack.c.l.b16 %v7986
      %v8059 = vunpack.c.h.b16 %v7986
      %v8060 = vunpack.c.l.b16 %v7987
      %v8061 = vunpack.c.h.b16 %v7987
      %v8062 = vunpack.c.l.b16 %v7988
      %v8063 = vunpack.c.h.b16 %v7988
      %v8064 = vunpack.c.l.b16 %v7989
      %v8065 = vunpack.c.h.b16 %v7989
      %v8066 = vunpack.c.l.b16 %v7990
      %v8067 = vunpack.c.h.b16 %v7990
      %v8068 = vunpack.c.l.b16 %v7991
      %v8069 = vunpack.c.h.b16 %v7991
      %v8070 = vunpack.c.l.b16 %v7992
      %v8071 = vunpack.c.h.b16 %v7992
      %v8072 = vunpack.c.l.b16 %v7993
      %v8073 = vunpack.c.h.b16 %v7993
      %v8074 = vunpack.c.l.b16 %v7994
      %v8075 = vunpack.c.h.b16 %v7994
      %v8076 = vunpack.c.l.b16 %v7995
      %v8077 = vunpack.c.h.b16 %v7995
      %v8078 = vunpack.c.l.b16 %v7996
      %v8079 = vunpack.c.h.b16 %v7996
      %v8080 = vunpack.c.l.b16 %v7997
      %v8081 = vunpack.c.h.b16 %v7997
      %v8082 = vunpack.c.l.b16 %v7998
      %v8083 = vunpack.c.h.b16 %v7998
      %v8084 = vunpack.c.l.b16 %v7999
      %v8085 = vunpack.c.h.b16 %v7999
      %v8086 = vunpack.c.l.b16 %v8000
      %v8087 = vunpack.c.h.b16 %v8000
      %v8088 = vunpack.c.l.b16 %v8001
      %v8089 = vunpack.c.h.b16 %v8001
      %v8090 = vunpack.c.l.b16 %v8002
      %v8091 = vunpack.c.h.b16 %v8002
      %v8092 = vunpack.c.l.b16 %v8003
      %v8093 = vunpack.c.h.b16 %v8003
      %v8094 = vunpack.c.l.b16 %v8004
      %v8095 = vunpack.c.h.b16 %v8004
      %v8096 = vunpack.c.l.b16 %v8005
      %v8097 = vunpack.c.h.b16 %v8005
      %v8098 = vunpack.c.l.b16 %v8006
      %v8099 = vunpack.c.h.b16 %v8006
      %v8100 = vunpack.c.l.b16 %v8007
      %v8101 = vunpack.c.h.b16 %v8007
      %v8102 = vunpack.c.l.b16 %v8008
      %v8103 = vunpack.c.h.b16 %v8008
      %v8104 = vunpack.c.l.b16 %v8009
      %v8105 = vunpack.c.h.b16 %v8009
      %v8106 = vpack.c.b16 %v8044, %v8042
      %v8107 = vpack.c.b16 %v8045, %v8043
      %v8108 = vpack.c.b16 %v8048, %v8046
      %v8109 = vpack.c.b16 %v8049, %v8047
      %v8110 = vpack.c.b16 %v8052, %v8050
      %v8111 = vpack.c.b16 %v8053, %v8051
      %v8112 = vpack.c.b16 %v8056, %v8054
      %v8113 = vpack.c.b16 %v8057, %v8055
      %v8114 = vpack.c.b16 %v8060, %v8058
      %v8115 = vpack.c.b16 %v8061, %v8059
      %v8116 = vpack.c.b16 %v8064, %v8062
      %v8117 = vpack.c.b16 %v8065, %v8063
      %v8118 = vpack.c.b16 %v8068, %v8066
      %v8119 = vpack.c.b16 %v8069, %v8067
      %v8120 = vpack.c.b16 %v8072, %v8070
      %v8121 = vpack.c.b16 %v8073, %v8071
      %v8122 = vpack.c.b16 %v8076, %v8074
      %v8123 = vpack.c.b16 %v8077, %v8075
      %v8124 = vpack.c.b16 %v8080, %v8078
      %v8125 = vpack.c.b16 %v8081, %v8079
      %v8126 = vpack.c.b16 %v8084, %v8082
      %v8127 = vpack.c.b16 %v8085, %v8083
      %v8128 = vpack.c.b16 %v8088, %v8086
      %v8129 = vpack.c.b16 %v8089, %v8087
      %v8130 = vpack.c.b16 %v8092, %v8090
      %v8131 = vpack.c.b16 %v8093, %v8091
      %v8132 = vpack.c.b16 %v8096, %v8094
      %v8133 = vpack.c.b16 %v8097, %v8095
      %v8134 = vpack.c.b16 %v8100, %v8098
      %v8135 = vpack.c.b16 %v8101, %v8099
      %v8136 = vpack.c.b16 %v8104, %v8102
      %v8137 = vpack.c.b16 %v8105, %v8103
      %8170 = vmatprep.subr.bf16.mxu0 %v8121
      %8171 = vmatpush1.bf16.msra.mxu0 %v8120
      %8172 = vmatprep.subr.bf16.mxu0 %v8119
      %8173 = vmatpush1.bf16.msra.mxu0 %v8118
      %8174 = vmatprep.subr.bf16.mxu0 %v8117
      %8175 = vmatpush1.bf16.msra.mxu0 %v8116
      %8176 = vmatprep.subr.bf16.mxu0 %v8115
      %8177 = vmatpush1.bf16.msra.mxu0 %v8114
      %8178 = vmatprep.subr.bf16.mxu0 %v8113
      %8179 = vmatpush1.bf16.msra.mxu0 %v8112
      %8180 = vmatprep.subr.bf16.mxu0 %v8111
      %8181 = vmatpush1.bf16.msra.mxu0 %v8110
      %8182 = vmatprep.subr.bf16.mxu0 %v8109
      %8183 = vmatpush1.bf16.msra.mxu0 %v8108
      %8184 = vmatprep.subr.bf16.mxu0 %v8107
      %8185 = vmatpush1.bf16.msra.mxu0 %v8106
      %8186 = vmatprep.subr.bf16.mxu0 %v8137
      %8187 = vmatpush2.bf16.msra.mxu0 %v8136
      %8188 = vmatprep.subr.bf16.mxu0 %v8135
      %8189 = vmatpush2.bf16.msra.mxu0 %v8134
      %8190 = vmatprep.subr.bf16.mxu0 %v8133
      %8191 = vmatpush2.bf16.msra.mxu0 %v8132
      %8192 = vmatprep.subr.bf16.mxu0 %v8131
      %8193 = vmatpush2.bf16.msra.mxu0 %v8130
      %8194 = vmatprep.subr.bf16.mxu0 %v8129
      %8195 = vmatpush2.bf16.msra.mxu0 %v8128
      %8196 = vmatprep.subr.bf16.mxu0 %v8127
      %8197 = vmatpush2.bf16.msra.mxu0 %v8126
      %8198 = vmatprep.subr.bf16.mxu0 %v8125
      %8199 = vmatpush2.bf16.msra.mxu0 %v8124
      %8200 = vmatprep.subr.bf16.mxu0 %v8123
      %8201 = vmatpush2.bf16.msra.mxu0 %v8122
      %8202 = vmatprep.mubr.bf16.mxu0 %v6305
      %8203 = vmatmul.mubr.bf16.gmra.mxu0 %v6304
      %v8204 = vpop.f32.mrf.mxu0
      %v8205 = vadd.f32 0.0, %v8204
      %v8206 = vpop.f32.mrf.mxu0
      %v8207 = vadd.f32 0.0, %v8206
      %v8208 = vpop.f32.mrf.mxu0
      %v8209 = vadd.f32 0.0, %v8208
      %v8210 = vpop.f32.mrf.mxu0
      %v8211 = vadd.f32 0.0, %v8210
      %8212 = vdwg.mxu0
      %v8213 = vadd.f32 %v7973, %v8205
      %v8214 = vadd.f32 %v7974, %v8207
      %v8215 = vadd.f32 %v7975, %v8209
      %v8216 = vadd.f32 %v7976, %v8211
      %v8217 = vld [vmem:[%s18] sm:$0x3]
      %v8219 = vlaneseq
      %v8220 = vshrl.u32 %v8219, 7
      %v8221 = vsub.s32 0, %v8220
      %v8222 = vrot.slane %v8217, %v8221
      %v8223 = vlaneseq
      %v8224 = vshrl.u32 %v8223, 7
      %v8225 = vsub.s32 1, %v8224
      %v8226 = vrot.slane %v8217, %v8225
      %v8229 = vadd.f32 %v8213, %v8222
      %v8230 = vadd.f32 %v8214, %v8226
      %v8231 = vadd.f32 %v8215, %v8222
      %v8232 = vadd.f32 %v8216, %v8226
      %v8233 = vadd.f32 %v8229, %v8230
      %8234 = vadd.xlane.f32.xlu0 %v8233
      %v8235 = vpop.xlane.xlu0 %8234
      %v8236 = vadd.f32 %v8231, %v8232
      %8237 = vadd.xlane.f32.xlu0 %v8236
      %v8238 = vpop.xlane.xlu0 %8237
      %v8239 = vmul.f32 %v8235, %v2890
      %v8240 = vmul.f32 %v8238, %v2890
      %v8241 = vsub.f32 %v8229, %v8239
      %v8242 = vsub.f32 %v8230, %v8239
      %v8243 = vsub.f32 %v8231, %v8240
      %v8244 = vsub.f32 %v8232, %v8240
      %v8245 = vmul.f32 %v8241, %v8241
      %v8246 = vmul.f32 %v8242, %v8242
      %v8247 = vmul.f32 %v8243, %v8243
      %v8248 = vmul.f32 %v8244, %v8244
      %v8249 = vadd.f32 %v8245, %v8246
      %8250 = vadd.xlane.f32.xlu0 %v8249
      %v8251 = vpop.xlane.xlu0 %8250
      %v8252 = vadd.f32 %v8247, %v8248
      %8253 = vadd.xlane.f32.xlu0 %v8252
      %v8254 = vpop.xlane.xlu0 %8253
      %v8255 = vmul.f32 %v8251, %v2890
      %v8256 = vmul.f32 %v8254, %v2890
      %v8257 = vadd.f32 %v8255, 1e-05
      %v8258 = vadd.f32 %v8256, 1e-05
      %v8259 = vrsqrt.pop %v8257
      %v8260 = vrsqrt.pop %v8258
      %v8261 = vmul.f32 %v8241, %v8259
      %v8262 = vmul.f32 %v8242, %v8259
      %v8263 = vmul.f32 %v8243, %v8260
      %v8264 = vmul.f32 %v8244, %v8260
      %v8265 = vld [vmem:[%s19] sm:$0x3]
      %v8267 = vlaneseq
      %v8268 = vshrl.u32 %v8267, 7
      %v8269 = vsub.s32 0, %v8268
      %v8270 = vrot.slane %v8265, %v8269
      %v8271 = vlaneseq
      %v8272 = vshrl.u32 %v8271, 7
      %v8273 = vsub.s32 1, %v8272
      %v8274 = vrot.slane %v8265, %v8273
      %v8277 = vmul.f32 %v8261, %v8270
      %v8278 = vmul.f32 %v8262, %v8274
      %v8279 = vmul.f32 %v8263, %v8270
      %v8280 = vmul.f32 %v8264, %v8274
      %v8281 = vld [vmem:[%s20] sm:$0x3]
      %v8283 = vlaneseq
      %v8284 = vshrl.u32 %v8283, 7
      %v8285 = vsub.s32 0, %v8284
      %v8286 = vrot.slane %v8281, %v8285
      %v8287 = vlaneseq
      %v8288 = vshrl.u32 %v8287, 7
      %v8289 = vsub.s32 1, %v8288
      %v8290 = vrot.slane %v8281, %v8289
      %v8293 = vadd.f32 %v8277, %v8286
      %v8294 = vadd.f32 %v8278, %v8290
      %v8295 = vadd.f32 %v8279, %v8286
      %v8296 = vadd.f32 %v8280, %v8290
      %v8297 = vpack.c.bf16 %v8295, %v8293
      %v8298 = vpack.c.bf16 %v8296, %v8294
      %v8299 = vld [vmem:[%s21] sm:$0xf]
      %v8300 = vld [vmem:[%s21 + $0x4] sm:$0xf]
      %v8301 = vld [vmem:[%s21 + $0x8] sm:$0xf]
      %v8302 = vld [vmem:[%s21 + $0xc] sm:$0xf]
      %v8303 = vld [vmem:[%s21 + $0x10] sm:$0xf]
      %v8304 = vld [vmem:[%s21 + $0x14] sm:$0xf]
      %v8305 = vld [vmem:[%s21 + $0x18] sm:$0xf]
      %v8306 = vld [vmem:[%s21 + $0x1c] sm:$0xf]
      %v8307 = vld [vmem:[%s21 + $0x20] sm:$0xf]
      %v8308 = vld [vmem:[%s21 + $0x24] sm:$0xf]
      %v8309 = vld [vmem:[%s21 + $0x28] sm:$0xf]
      %v8310 = vld [vmem:[%s21 + $0x2c] sm:$0xf]
      %v8311 = vld [vmem:[%s21 + $0x30] sm:$0xf]
      %v8312 = vld [vmem:[%s21 + $0x34] sm:$0xf]
      %v8313 = vld [vmem:[%s21 + $0x38] sm:$0xf]
      %v8314 = vld [vmem:[%s21 + $0x3c] sm:$0xf]
      %v8315 = vld [vmem:[%s21 + $0x40] sm:$0xf]
      %v8316 = vld [vmem:[%s21 + $0x44] sm:$0xf]
      %v8317 = vld [vmem:[%s21 + $0x48] sm:$0xf]
      %v8318 = vld [vmem:[%s21 + $0x4c] sm:$0xf]
      %v8319 = vld [vmem:[%s21 + $0x50] sm:$0xf]
      %v8320 = vld [vmem:[%s21 + $0x54] sm:$0xf]
      %v8321 = vld [vmem:[%s21 + $0x58] sm:$0xf]
      %v8322 = vld [vmem:[%s21 + $0x5c] sm:$0xf]
      %v8323 = vld [vmem:[%s21 + $0x60] sm:$0xf]
      %v8324 = vld [vmem:[%s21 + $0x64] sm:$0xf]
      %v8325 = vld [vmem:[%s21 + $0x68] sm:$0xf]
      %v8326 = vld [vmem:[%s21 + $0x6c] sm:$0xf]
      %v8327 = vld [vmem:[%s21 + $0x70] sm:$0xf]
      %v8328 = vld [vmem:[%s21 + $0x74] sm:$0xf]
      %v8329 = vld [vmem:[%s21 + $0x78] sm:$0xf]
      %v8330 = vld [vmem:[%s21 + $0x7c] sm:$0xf]
      %v8331 = vld [vmem:[%s22] sm:$0x1]
      %v8333 = vlaneseq
      %v8334 = vshrl.u32 %v8333, 7
      %v8335 = vsub.s32 0, %v8334
      %v8336 = vrot.slane %v8331, %v8335
      %v8370 = vunpack.c.l.b16 %v8299
      %v8371 = vunpack.c.l.b16 %v8300
      %v8372 = vunpack.c.l.b16 %v8301
      %v8373 = vunpack.c.l.b16 %v8302
      %v8374 = vunpack.c.l.b16 %v8303
      %v8375 = vunpack.c.l.b16 %v8304
      %v8376 = vunpack.c.l.b16 %v8305
      %v8377 = vunpack.c.l.b16 %v8306
      %v8378 = vunpack.c.l.b16 %v8307
      %v8379 = vunpack.c.l.b16 %v8308
      %v8380 = vunpack.c.l.b16 %v8309
      %v8381 = vunpack.c.l.b16 %v8310
      %v8382 = vunpack.c.l.b16 %v8311
      %v8383 = vunpack.c.l.b16 %v8312
      %v8384 = vunpack.c.l.b16 %v8313
      %v8385 = vunpack.c.l.b16 %v8314
      %v8386 = vunpack.c.l.b16 %v8315
      %v8387 = vunpack.c.l.b16 %v8316
      %v8388 = vunpack.c.l.b16 %v8317
      %v8389 = vunpack.c.l.b16 %v8318
      %v8390 = vunpack.c.l.b16 %v8319
      %v8391 = vunpack.c.l.b16 %v8320
      %v8392 = vunpack.c.l.b16 %v8321
      %v8393 = vunpack.c.l.b16 %v8322
      %v8394 = vunpack.c.l.b16 %v8323
      %v8395 = vunpack.c.l.b16 %v8324
      %v8396 = vunpack.c.l.b16 %v8325
      %v8397 = vunpack.c.l.b16 %v8326
      %v8398 = vunpack.c.l.b16 %v8327
      %v8399 = vunpack.c.l.b16 %v8328
      %v8400 = vunpack.c.l.b16 %v8329
      %v8401 = vunpack.c.l.b16 %v8330
      %v8402 = vpack.c.b16 %v8371, %v8370
      %v8403 = vpack.c.b16 %v8373, %v8372
      %v8404 = vpack.c.b16 %v8375, %v8374
      %v8405 = vpack.c.b16 %v8377, %v8376
      %v8406 = vpack.c.b16 %v8379, %v8378
      %v8407 = vpack.c.b16 %v8381, %v8380
      %v8408 = vpack.c.b16 %v8383, %v8382
      %v8409 = vpack.c.b16 %v8385, %v8384
      %v8410 = vpack.c.b16 %v8387, %v8386
      %v8411 = vpack.c.b16 %v8389, %v8388
      %v8412 = vpack.c.b16 %v8391, %v8390
      %v8413 = vpack.c.b16 %v8393, %v8392
      %v8414 = vpack.c.b16 %v8395, %v8394
      %v8415 = vpack.c.b16 %v8397, %v8396
      %v8416 = vpack.c.b16 %v8399, %v8398
      %v8417 = vpack.c.b16 %v8401, %v8400
      %8434 = vmatprep.subr.bf16.mxu0 0
      %8435 = vmatpush1.bf16.msra.mxu0 %v8409
      %8436 = vmatprep.subr.bf16.mxu0 0
      %8437 = vmatpush1.bf16.msra.mxu0 %v8408
      %8438 = vmatprep.subr.bf16.mxu0 0
      %8439 = vmatpush1.bf16.msra.mxu0 %v8407
      %8440 = vmatprep.subr.bf16.mxu0 0
      %8441 = vmatpush1.bf16.msra.mxu0 %v8406
      %8442 = vmatprep.subr.bf16.mxu0 0
      %8443 = vmatpush1.bf16.msra.mxu0 %v8405
      %8444 = vmatprep.subr.bf16.mxu0 0
      %8445 = vmatpush1.bf16.msra.mxu0 %v8404
      %8446 = vmatprep.subr.bf16.mxu0 0
      %8447 = vmatpush1.bf16.msra.mxu0 %v8403
      %8448 = vmatprep.subr.bf16.mxu0 0
      %8449 = vmatpush1.bf16.msra.mxu0 %v8402
      %8450 = vmatprep.subr.bf16.mxu0 0
      %8451 = vmatpush2.bf16.msra.mxu0 %v8417
      %8452 = vmatprep.subr.bf16.mxu0 0
      %8453 = vmatpush2.bf16.msra.mxu0 %v8416
      %8454 = vmatprep.subr.bf16.mxu0 0
      %8455 = vmatpush2.bf16.msra.mxu0 %v8415
      %8456 = vmatprep.subr.bf16.mxu0 0
      %8457 = vmatpush2.bf16.msra.mxu0 %v8414
      %8458 = vmatprep.subr.bf16.mxu0 0
      %8459 = vmatpush2.bf16.msra.mxu0 %v8413
      %8460 = vmatprep.subr.bf16.mxu0 0
      %8461 = vmatpush2.bf16.msra.mxu0 %v8412
      %8462 = vmatprep.subr.bf16.mxu0 0
      %8463 = vmatpush2.bf16.msra.mxu0 %v8411
      %8464 = vmatprep.subr.bf16.mxu0 0
      %8465 = vmatpush2.bf16.msra.mxu0 %v8410
      %8466 = vmatprep.mubr.bf16.mxu0 %v8298
      %8467 = vmatmul.mubr.bf16.gmra.mxu0 %v8297
      %v8468 = vpop.f32.mrf.mxu0
      %v8469 = vadd.f32 %v8336, %v8468
      %v8470 = vpop.f32.mrf.mxu0
      %v8471 = vpop.f32.mrf.mxu0
      %v8472 = vadd.f32 %v8336, %v8471
      %v8473 = vpop.f32.mrf.mxu0
      %8474 = vdwg.mxu0
      %vm8475 = vcmask 80896
      %8476 = vst.msk [vmem:[%s710] sm:$0xff] %vm8475, %v8469
      %8477 = vst.msk [vmem:[%s710 + $0x8] sm:$0xff] %vm8475, %v8472
      %s8478 = smul.u32 2, %s34
      %p8479 = scmp.lt.s32.totalorder %s8478, 3
      %s8480 = scalar_select %p8479, %s8478, 3
      %s8481 = smul.addr %s8480, 8
      %s8482 = scalar_lea.vmem %s23, %s8481
      // Predicated region
      $region113: #{stgcn_forward.1} parent=111 // pred_check
        %p8483 = pneg %p540
      $region114: #{stgcn_forward.1} parent=111 // pred_check_branch
        %8485 = sbr.rel (%p8483) target = $region116
      $region115: #{stgcn_forward.1} parent=111 // pred_region
        %s8486 = smul.u32 2, %s34
      $region116: #{stgcn_forward.1} parent=111 // pred_fallthru
        _
    $region112: #{stgcn_forward.1} parent=5 // pred_fallthru
      _
    %p8487 = scmp.le.s32.totalorder 2, %s29
    // Predicated region
    $region117: #{stgcn_forward.1} parent=5 // pred_check
      %p8488 = pneg %p8487
    $region118: #{stgcn_forward.1} parent=5 // pred_check_branch
      %8490 = sbr.rel (%p8488) target = $region120
    $region119: #{stgcn_forward.1} parent=5 // pred_region
      %s8491 = ssub.s32 %s29, 2
      // Predicated region
      $region121: #{stgcn_forward.1} parent=119 // pred_check
        %p8492 = pneg %p546
      $region122: #{stgcn_forward.1} parent=119 // pred_check_branch
        %8494 = sbr.rel (%p8492) target = $region124
      $region123: #{stgcn_forward.1} parent=119 // pred_region
        %s8495 = smul.u32 2, %s35
        %p8496 = scmp.lt.s32.totalorder %s8495, 3
        %s8497 = scalar_select %p8496, %s8495, 3
        %s8498 = smul.addr %s8497, 8
        %s8499 = scalar_lea.vmem %s23, %s8498
      $region124: #{stgcn_forward.1} parent=119 // pred_fallthru
        _
    $region120: #{stgcn_forward.1} parent=5 // pred_fallthru
      _
  $region6: #{stgcn_forward.1} parent=0 // loop_footer
    %s33 = sadd.s32 1, %s29
  $region7: #{stgcn_forward.1} parent=0 // loop_footer_branch
    %28 = sbr.rel target = $region3
  $region8: #{stgcn_forward.1} parent=0 // loop_exit
    _

</llo_original>
